<compile_context>
chip_gen: v7x
topology: tpu7x:2x2x1
jax: 0.10.0
libtpu: 0.0.40
codegen_flags: <defaults>
</compile_context>

<pallas_src>
import functools
import math

import jax
import jax.numpy as jnp
from jax.experimental import pallas as pl
from jax.experimental.pallas import tpu as pltpu


_LANE = 128
_LIN_TILE = 512          # row tile for node-level linear layers
_EDGE_TILE = 256         # target-node tile for the edge (attention/kmax) path
_VMEM_LIMIT = 32 * 1024 * 1024
_ACT_DTYPE = jnp.bfloat16


# ---------------------------------------------------------------------------
# helpers
# ---------------------------------------------------------------------------
def _round_up(v, m):
    return (v + m - 1) // m * m


def _row_tile(n, target):
    """Row tile: multiple of 16 (bf16 sublane pack), capped near n."""
    return min(target, _round_up(n, 16))


def _pad_cols(x, cp):
    n, c = x.shape
    if c == cp:
        return x
    return jnp.zeros((n, cp), x.dtype).at[:, :c].set(x)


def _bn_params(stats, n_rows, eps=1e-5):
    """stats: [8, Cp] f32 with row0=sum(y), row1=sum(y*y) over real rows."""
    mean = stats[0:1] / n_rows
    var = jnp.maximum(stats[1:2] / n_rows - mean * mean, 0.0)
    inv = jax.lax.rsqrt(var + eps)
    # padded channel columns have sum==sumsq==0 -> mean 0, normalized value 0.
    return mean, inv


# ---------------------------------------------------------------------------
# Pallas kernel 1: tiled linear  (optional BN+ReLU prologue, ReLU epilogue,
#                                 optional BN-statistics accumulation output)
# ---------------------------------------------------------------------------
def _linear_kernel(relu, with_bn, with_stats, n_real, tn, *refs):
    idx = 0
    x_ref = refs[idx]; idx += 1
    w_ref = refs[idx]; idx += 1
    b_ref = refs[idx]; idx += 1
    if with_bn:
        mu_ref = refs[idx]; idx += 1
        inv_ref = refs[idx]; idx += 1
    o_ref = refs[idx]; idx += 1
    if with_stats:
        stats_ref = refs[idx]; idx += 1

    if with_bn:
        x = x_ref[...].astype(jnp.float32)
        x = jnp.maximum((x - mu_ref[...]) * inv_ref[...], 0.0)   # BN+ReLU prologue
    else:
        x = x_ref[...]

    y = jnp.dot(x.astype(jnp.bfloat16), w_ref[...],
                preferred_element_type=jnp.float32) + b_ref[...]

    if with_stats:
        # per-column sum / sum-of-squares over the REAL rows of this tile,
        # accumulated into a tiny [8, Cp] output across the whole grid.
        row0 = pl.program_id(0) * tn
        ridx = jax.lax.broadcasted_iota(jnp.int32, y.shape, 0) + row0
        ym = jnp.where(ridx < n_real, y, 0.0)
        s1 = jnp.sum(ym, axis=0, keepdims=True)
        s2 = jnp.sum(ym * ym, axis=0, keepdims=True)
        srow = jax.lax.broadcasted_iota(jnp.int32, stats_ref.shape, 0)
        upd = jnp.where(srow == 0, s1, 0.0) + jnp.where(srow == 1, s2, 0.0)

        @pl.when(pl.program_id(0) == 0)
        def _():
            stats_ref[...] = jnp.zeros_like(stats_ref)
        stats_ref[...] += upd

    if relu:
        y = jnp.maximum(y, 0.0)
    o_ref[...] = y.astype(o_ref.dtype)


def pallas_linear(x, Wp, bp=None, *, relu=False, stats=False, bn=None,
                  out_dtype=_ACT_DTYPE):
    """x: [N, Cin_p]; Wp: [Cin_p, Cout_p] bf16; bp: [1, Cout_p] f32 or None.
    bn=(mean, inv_std) applies BatchNorm+ReLU to the INPUT tile before matmul.
    stats=True additionally returns [8, Cout_p] f32 (row0 sum, row1 sumsq)."""
    N, Cin_p = x.shape
    Cout_p = Wp.shape[1]
    TN = _row_tile(N, _LIN_TILE)
    grid = (pl.cdiv(N, TN),)
    if bp is None:
        bp = jnp.zeros((1, Cout_p), jnp.float32)

    in_arrays = [x, Wp, bp]
    in_specs = [
        pl.BlockSpec((TN, Cin_p), lambda i: (i, 0)),
        pl.BlockSpec((Cin_p, Cout_p), lambda i: (0, 0)),
        pl.BlockSpec((1, Cout_p), lambda i: (0, 0)),
    ]
    if bn is not None:
        mu, inv = bn
        in_arrays += [mu, inv]
        in_specs += [pl.BlockSpec((1, Cin_p), lambda i: (0, 0)),
                     pl.BlockSpec((1, Cin_p), lambda i: (0, 0))]

    out_shape = [jax.ShapeDtypeStruct((N, Cout_p), out_dtype)]
    out_specs = [pl.BlockSpec((TN, Cout_p), lambda i: (i, 0))]
    if stats:
        out_shape.append(jax.ShapeDtypeStruct((8, Cout_p), jnp.float32))
        out_specs.append(pl.BlockSpec((8, Cout_p), lambda i: (0, 0)))

    kernel = functools.partial(_linear_kernel, relu, bn is not None, stats, N, TN)
    return pl.pallas_call(
        kernel,
        out_shape=tuple(out_shape) if stats else out_shape[0],
        grid=grid,
        in_specs=in_specs,
        out_specs=tuple(out_specs) if stats else out_specs[0],
        compiler_params=pltpu.CompilerParams(
            dimension_semantics=("arbitrary",) if stats else ("parallel",),
            vmem_limit_bytes=_VMEM_LIMIT),
    )(*in_arrays)


# ---------------------------------------------------------------------------
# Pallas kernel 2: fused edge path for PointTransformerConv
#   pos_nn layer-2 + attn_nn (2 layers) + msg = x_j + delta + per-target softmax
#   aggregation, all in one kernel (no logits/msg HBM round trip).
# ---------------------------------------------------------------------------
def _edge_attn_kernel(k_real, pwd_ref, adiff_ref, xj_ref,
                      b1_ref, w2_ref, b2_ref, w3_ref, b3_ref, w4_ref, b4_ref,
                      o_ref):
    tm, kp, hp = pwd_ref.shape
    cp = adiff_ref.shape[2]
    te = tm * kp

    # pos_nn layer-1 matmul was hoisted per-node; only its bias+ReLU is per-edge.
    pwd = pwd_ref[...].astype(jnp.float32).reshape(te, hp)
    h1 = jnp.maximum(pwd + b1_ref[...], 0.0)
    delta = jnp.dot(h1.astype(jnp.bfloat16), w2_ref[...],
                    preferred_element_type=jnp.float32) + b2_ref[...]
    delta = jnp.maximum(delta, 0.0)                               # pos_nn output

    adiff = adiff_ref[...].astype(jnp.float32).reshape(te, cp)
    h2 = jnp.dot((adiff + delta).astype(jnp.bfloat16), w3_ref[...],
                 preferred_element_type=jnp.float32) + b3_ref[...]
    h2 = jnp.maximum(h2, 0.0)
    logits = jnp.dot(h2.astype(jnp.bfloat16), w4_ref[...],
                     preferred_element_type=jnp.float32) + b4_ref[...]
    logits = jnp.maximum(logits, 0.0).reshape(tm, kp, cp)         # attn_nn output
    msg = (xj_ref[...].astype(jnp.float32).reshape(te, cp) + delta).reshape(tm, kp, cp)

    # per-target softmax over the (masked) K axis, then weighted sum.
    kidx = jax.lax.broadcasted_iota(jnp.int32, (kp, cp), 0)
    logits = jnp.where((kidx < k_real)[None], logits, -1e30)
    m = jnp.max(logits, axis=1, keepdims=True)
    e = jnp.exp(logits - m)
    denom = jnp.sum(e, axis=1, keepdims=True)
    alpha = e * pl.reciprocal(denom, approx=True)
    o_ref[...] = jnp.sum(alpha * msg, axis=1).astype(o_ref.dtype)


def pallas_edge_attention(pwdiff, adiff, xj, pos_nn, attn_nn, k_real):
    """pwdiff: [M, K1p, Hp]; adiff, xj: [M, K1p, Cp] (bf16) -> [M, Cp] bf16."""
    M, K1p, Hp = pwdiff.shape
    Cp = adiff.shape[-1]
    TM = _row_tile(M, _EDGE_TILE)
    b1 = pos_nn[0]["b"]
    W2, b2 = pos_nn[1]["W"], pos_nn[1]["b"]
    W3, b3 = attn_nn[0]["W"], attn_nn[0]["b"]
    W4, b4 = attn_nn[1]["W"], attn_nn[1]["b"]
    return pl.pallas_call(
        functools.partial(_edge_attn_kernel, k_real),
        out_shape=jax.ShapeDtypeStruct((M, Cp), _ACT_DTYPE),
        grid=(pl.cdiv(M, TM),),
        in_specs=[
            pl.BlockSpec((TM, K1p, Hp), lambda i: (i, 0, 0)),
            pl.BlockSpec((TM, K1p, Cp), lambda i: (i, 0, 0)),
            pl.BlockSpec((TM, K1p, Cp), lambda i: (i, 0, 0)),
            pl.BlockSpec((1, Hp), lambda i: (0, 0)),
            pl.BlockSpec((Hp, Cp), lambda i: (0, 0)),
            pl.BlockSpec((1, Cp), lambda i: (0, 0)),
            pl.BlockSpec((Cp, Hp), lambda i: (0, 0)),
            pl.BlockSpec((1, Hp), lambda i: (0, 0)),
            pl.BlockSpec((Hp, Cp), lambda i: (0, 0)),
            pl.BlockSpec((1, Cp), lambda i: (0, 0)),
        ],
        out_specs=pl.BlockSpec((TM, Cp), lambda i: (i, 0)),
        compiler_params=pltpu.CompilerParams(
            dimension_semantics=("parallel",), vmem_limit_bytes=_VMEM_LIMIT),
    )(pwdiff, adiff, xj, b1, W2, b2, W3, b3, W4, b4)


# ---------------------------------------------------------------------------
# Pallas kernel 3: k-NN max pooling (TransitionDown) with fused BN+ReLU epilogue
#   (max commutes with the monotone normalize+ReLU, so it is applied after max)
# ---------------------------------------------------------------------------
def _kmax_kernel(k_real, x_ref, mu_ref, inv_ref, o_ref):
    x = x_ref[...].astype(jnp.float32)                            # [TM, Kp, Cp]
    kp, cp = x.shape[1], x.shape[2]
    kidx = jax.lax.broadcasted_iota(jnp.int32, (kp, cp), 0)
    x = jnp.where((kidx < k_real)[None], x, -3.0e38)
    m = jnp.max(x, axis=1)
    o_ref[...] = jnp.maximum((m - mu_ref[...]) * inv_ref[...], 0.0).astype(o_ref.dtype)


def pallas_kmax_bn_relu(x_gath, k_real, mu, inv):
    M, Kp, Cp = x_gath.shape
    TM = _row_tile(M, _EDGE_TILE)
    return pl.pallas_call(
        functools.partial(_kmax_kernel, k_real),
        out_shape=jax.ShapeDtypeStruct((M, Cp), _ACT_DTYPE),
        grid=(pl.cdiv(M, TM),),
        in_specs=[pl.BlockSpec((TM, Kp, Cp), lambda i: (i, 0, 0)),
                  pl.BlockSpec((1, Cp), lambda i: (0, 0)),
                  pl.BlockSpec((1, Cp), lambda i: (0, 0))],
        out_specs=pl.BlockSpec((TM, Cp), lambda i: (i, 0)),
        compiler_params=pltpu.CompilerParams(
            dimension_semantics=("parallel",), vmem_limit_bytes=_VMEM_LIMIT),
    )(x_gath, mu, inv)


# ---------------------------------------------------------------------------
# Pallas kernel 4: standalone BN apply + ReLU (used where no consumer kernel
# can absorb it, e.g. before knn_interpolate / residual add)
# ---------------------------------------------------------------------------
def _bn_relu_kernel(y_ref, mu_ref, inv_ref, o_ref):
    y = y_ref[...].astype(jnp.float32)
    o_ref[...] = jnp.maximum((y - mu_ref[...]) * inv_ref[...], 0.0).astype(o_ref.dtype)


def pallas_bn_relu(y, mu, inv):
    N, Cp = y.shape
    TN = _row_tile(N, _LIN_TILE)
    return pl.pallas_call(
        _bn_relu_kernel,
        out_shape=jax.ShapeDtypeStruct((N, Cp), _ACT_DTYPE),
        grid=(pl.cdiv(N, TN),),
        in_specs=[pl.BlockSpec((TN, Cp), lambda i: (i, 0)),
                  pl.BlockSpec((1, Cp), lambda i: (0, 0)),
                  pl.BlockSpec((1, Cp), lambda i: (0, 0))],
        out_specs=pl.BlockSpec((TN, Cp), lambda i: (i, 0)),
        compiler_params=pltpu.CompilerParams(
            dimension_semantics=("parallel",), vmem_limit_bytes=_VMEM_LIMIT),
    )(y, mu, inv)


# ---------------------------------------------------------------------------
# plain-JAX glue: MLP driver, knn, fps, gather  (graph bookkeeping)
# ---------------------------------------------------------------------------
def mlp_forward(layers, x, norm, plain_last, final_f32=False):
    """torch_geometric.nn.MLP forward on channel-padded tensors."""
    n = len(layers)
    for i, layer in enumerate(layers):
        last = i == n - 1
        if last and plain_last:
            x = pallas_linear(x, layer["W"], layer["b"],
                              out_dtype=jnp.float32 if final_f32 else _ACT_DTYPE)
        elif norm:
            y, stats = pallas_linear(x, layer["W"], layer["b"], stats=True)
            mu, inv = _bn_params(stats, y.shape[0])
            x = pallas_bn_relu(y, mu, inv)
        else:
            x = pallas_linear(x, layer["W"], layer["b"], relu=True)
    return x


def pairwise_sqdist(a, b):
    # TODO(synk): O(N^2) f32 materialization; tile the distance/top-k for large N.
    diff = a[:, :, None, :] - b[:, None, :, :]
    return jnp.sum(diff * diff, axis=-1)


def knn_graph_dense(pos_b, k):
    """per-sample knn graph (loop=False): [B, N, k] neighbor (source) indices."""
    B, N, _ = pos_b.shape
    d = pairwise_sqdist(pos_b, pos_b)
    d = d + jnp.eye(N, dtype=d.dtype)[None] * 1e30
    _, idx = jax.lax.top_k(-d, k)
    return idx


def knn_dense(src_pos, qry_pos, k):
    d = pairwise_sqdist(qry_pos, src_pos)
    _, idx = jax.lax.top_k(-d, k)
    return idx


def fps_dense(pos_b, n_sub):
    """farthest point sampling per sample.
    TODO(synk): PyG fps uses a random start point (random_start=True); here the
    start is deterministically the first point of each sample."""
    d = pairwise_sqdist(pos_b, pos_b)

    def one(d_s):
        idxs = jnp.zeros((n_sub,), dtype=jnp.int32)
        min_d = d_s[0]

        def body(i, carry):
            md, ix = carry
            nxt = jnp.argmax(md).astype(jnp.int32)
            ix = ix.at[i].set(nxt)
            md = jnp.minimum(md, d_s[nxt])
            return (md, ix)

        _, idxs = jax.lax.fori_loop(1, n_sub, body, (min_d, idxs))
        return idxs

    return jax.vmap(one)(d)


def _gather(arr, idx):
    """arr: [B, N, C], idx: [B, M, K] -> [B, M, K, C]."""
    return jax.vmap(lambda a, i: a[i])(arr, idx)


# ---------------------------------------------------------------------------
# model blocks (feature tensors are channel-padded bf16, lane-multiple widths)
# ---------------------------------------------------------------------------
def transformer_block_fwd(p, x_b, pos_b, nbr_idx, in_bn=None):
    """lin_in(+optional fused BN prologue)+relu -> PointTransformerConv -> lin_out+relu."""
    B, N, Cin_p = x_b.shape
    Cp = p["lin_out"]["W"].shape[1]
    Hp = p["pos_nn"][0]["W"].shape[1]

    x = pallas_linear(x_b.reshape(B * N, Cin_p), p["lin_in"]["W"], p["lin_in"]["b"],
                      relu=True, bn=in_bn)

    # fused lin / lin_src / lin_dst: one matmul, x read once
    fused = pallas_linear(x, p["lin_cat"]["W"], None)             # [B*N, 3*Cp] bf16
    x_lin = fused[:, 0 * Cp:1 * Cp].reshape(B, N, Cp)
    a_src = fused[:, 1 * Cp:2 * Cp].reshape(B, N, Cp)
    a_dst = fused[:, 2 * Cp:3 * Cp].reshape(B, N, Cp)

    # pos_nn layer-1 hoisted per node: (pos_i - pos_j) @ W1 == pos_i@W1 - pos_j@W1
    pos_pad = _pad_cols(pos_b.reshape(B * N, 3), p["pos_nn"][0]["W"].shape[0])
    pw = pallas_linear(pos_pad, p["pos_nn"][0]["W"], None).reshape(B, N, Hp)

    # knn neighbors + the self-loop PointTransformerConv re-adds
    self_idx = jnp.broadcast_to(
        jnp.arange(N, dtype=nbr_idx.dtype)[None, :, None], (B, N, 1))
    idx_full = jnp.concatenate([nbr_idx, self_idx], axis=-1)      # [B, N, K1]
    K1 = idx_full.shape[-1]
    K1p = _round_up(K1, 8)
    if K1p != K1:
        idx_full = jnp.concatenate(
            [idx_full, jnp.zeros((B, N, K1p - K1), dtype=idx_full.dtype)], axis=-1)

    # TODO(synk): the gathers still materialize [B,N,K1p,C] bf16 tensors via XLA
    # gather; an in-kernel gather (scalar-prefetch indices + per-row DMA) would
    # cut this further, but per-row DMAs are tiny at these channel widths.
    xj = _gather(x_lin, idx_full)
    aj = _gather(a_src, idx_full)
    pwj = _gather(pw, idx_full)
    adiff = a_dst[:, :, None, :] - aj
    pwdiff = pw[:, :, None, :] - pwj

    M = B * N
    out = pallas_edge_attention(pwdiff.reshape(M, K1p, Hp),
                                adiff.reshape(M, K1p, Cp),
                                xj.reshape(M, K1p, Cp),
                                p["pos_nn"], p["attn_nn"], K1)    # [M, Cp]

    out = pallas_linear(out, p["lin_out"]["W"], p["lin_out"]["b"], relu=True)
    return out.reshape(B, N, Cp)


def transition_down_fwd(p, x_b, pos_b, k, ratio=0.25):
    B, N, Cin_p = x_b.shape
    n_sub = int(math.ceil(ratio * N))
    clusters = fps_dense(pos_b, n_sub)                             # [B, n_sub]
    sub_pos = jax.vmap(lambda pb, ib: pb[ib])(pos_b, clusters)     # [B, n_sub, 3]
    nn_idx = knn_dense(pos_b, sub_pos, k)                          # [B, n_sub, k]
    Kp = _round_up(k, 8)
    if Kp != k:
        nn_idx = jnp.concatenate(
            [nn_idx, jnp.zeros((B, n_sub, Kp - k), dtype=nn_idx.dtype)], axis=-1)

    layer = p["mlp"][0]
    y, stats = pallas_linear(x_b.reshape(B * N, Cin_p), layer["W"], layer["b"],
                             stats=True)
    mu, inv = _bn_params(stats, B * N)
    Cout_p = y.shape[-1]
    x_gath = _gather(y.reshape(B, N, Cout_p), nn_idx)              # [B, n_sub, Kp, Cout_p]
    # BN+ReLU commute with max (inv_std > 0), so they are fused after the k-max.
    x_out = pallas_kmax_bn_relu(x_gath.reshape(B * n_sub, Kp, Cout_p), k, mu, inv)
    return x_out.reshape(B, n_sub, Cout_p), sub_pos


def transition_up_fwd(p, x_hi, x_sub, pos_hi, pos_sub):
    B, Ns, Cs = x_sub.shape
    _, Nh, Ch = x_hi.shape

    lsub = p["mlp_sub"][0]
    ys, stats_s = pallas_linear(x_sub.reshape(B * Ns, Cs), lsub["W"], lsub["b"],
                                stats=True)
    mu_s, inv_s = _bn_params(stats_s, B * Ns)
    xs = pallas_bn_relu(ys, mu_s, inv_s)
    Cp = xs.shape[-1]
    xs = xs.reshape(B, Ns, Cp)

    # knn_interpolate(x_sub, pos_sub, pos_hi, k=3) -- plain-JAX bookkeeping
    idx = knn_dense(pos_sub, pos_hi, 3)                            # [B, Nh, 3]
    f_j = _gather(xs, idx).astype(jnp.float32)
    p_j = _gather(pos_sub, idx)
    sqd = jnp.sum((p_j - pos_hi[:, :, None, :]) ** 2, axis=-1, keepdims=True)
    w = 1.0 / jnp.maximum(sqd, 1e-16)
    x_interp = jnp.sum(f_j * w, axis=2) / jnp.sum(w, axis=2)

    lhi = p["mlp"][0]
    yh, stats_h = pallas_linear(x_hi.reshape(B * Nh, Ch), lhi["W"], lhi["b"],
                                stats=True)
    mu_h, inv_h = _bn_params(stats_h, B * Nh)
    xh = pallas_bn_relu(yh, mu_h, inv_h).reshape(B, Nh, Cp)
    return (xh.astype(jnp.float32) + x_interp).astype(_ACT_DTYPE)


def model_forward(params, x, pos, B, dim_model, k, out_channels):
    Ntot = x.shape[0]
    Nb = Ntot // B
    n_levels = len(dim_model) - 1

    # mlp_input: linear (+ fused BN stats); the normalize+ReLU is applied as the
    # prologue of transformer_input's lin_in kernel.
    layer_in = params["mlp_input"][0]
    Cin_p = layer_in["W"].shape[0]
    x = _pad_cols(x, Cin_p)
    y, stats = pallas_linear(x, layer_in["W"], layer_in["b"], stats=True)
    in_bn = _bn_params(stats, y.shape[0])
    x_b = y.reshape(B, Nb, -1)
    pos_b = pos.reshape(B, Nb, 3)

    nbr = knn_graph_dense(pos_b, k)
    x_b = transformer_block_fwd(params["transformer_input"], x_b, pos_b, nbr,
                                in_bn=in_bn)

    out_x = [x_b]
    out_pos = [pos_b]

    for i in range(n_levels):
        x_b, pos_b = transition_down_fwd(params["transition_down"][i], x_b, pos_b, k)
        nbr = knn_graph_dense(pos_b, k)
        x_b = transformer_block_fwd(params["transformers_down"][i], x_b, pos_b, nbr)
        out_x.append(x_b)
        out_pos.append(pos_b)

    # summit
    Bc, Nc, Cc = x_b.shape
    xs = mlp_forward(params["mlp_summit"], x_b.reshape(Bc * Nc, Cc),
                     norm=False, plain_last=False)
    x_b = xs.reshape(Bc, Nc, -1)
    nbr = knn_graph_dense(pos_b, k)
    x_b = transformer_block_fwd(params["transformer_summit"], x_b, pos_b, nbr)

    for i in range(n_levels):
        x_b = transition_up_fwd(params["transition_up"][n_levels - 1 - i],
                                x_hi=out_x[-i - 2], x_sub=x_b,
                                pos_hi=out_pos[-i - 2], pos_sub=out_pos[-i - 1])
        nbr = knn_graph_dense(out_pos[-i - 2], k)
        x_b = transformer_block_fwd(params["transformers_up"][n_levels - 1 - i],
                                    x_b, out_pos[-i - 2], nbr)

    Bf, Nf, Cf = x_b.shape
    out = mlp_forward(params["mlp_output"], x_b.reshape(Bf * Nf, Cf),
                      norm=False, plain_last=True, final_f32=True)
    return out[:, :out_channels]


# ---------------------------------------------------------------------------
# deterministic parameter init (shapes match the PyTorch module); weights are
# padded ONCE here (and stored bf16) so no per-call padding or casting happens.
# ---------------------------------------------------------------------------
class KeyGen:
    def __init__(self, key):
        self.key = key

    def __call__(self):
        self.key, sub = jax.random.split(self.key)
        return sub


def init_linear(kg, fan_in, fan_out, bias=True, in_round=_LANE):
    bound = 1.0 / math.sqrt(fan_in)
    W = jax.random.uniform(kg(), (fan_in, fan_out), jnp.float32, -bound, bound)
    ip, op = _round_up(fan_in, in_round), _round_up(fan_out, _LANE)
    Wp = jnp.zeros((ip, op), jnp.float32).at[:fan_in, :fan_out].set(W)
    Wp = Wp.astype(jnp.bfloat16)
    if bias:
        b = jax.random.uniform(kg(), (fan_out,), jnp.float32, -bound, bound)
        bp = jnp.zeros((1, op), jnp.float32).at[0, :fan_out].set(b)
    else:
        bp = None
    return {"W": Wp, "b": bp}


def init_transformer_block(kg, in_c, out_c):
    p = {
        "lin_in": init_linear(kg, in_c, in_c),
        "lin_out": init_linear(kg, out_c, out_c),
        "pos_nn": [init_linear(kg, 3, 64, in_round=8), init_linear(kg, 64, out_c)],
        "attn_nn": [init_linear(kg, out_c, 64), init_linear(kg, 64, out_c)],
    }
    lin = init_linear(kg, in_c, out_c, bias=False)
    lin_src = init_linear(kg, in_c, out_c, bias=False)
    lin_dst = init_linear(kg, in_c, out_c, bias=False)
    # fused [Cin_p, 3*Cout_p] weight: one matmul instead of three
    p["lin_cat"] = {"W": jnp.concatenate([lin["W"], lin_src["W"], lin_dst["W"]], axis=1),
                    "b": None}
    return p


def init_model(kg, in_channels, out_channels, dim_model, k):
    in_channels = max(in_channels, 1)
    p = {
        "mlp_input": [init_linear(kg, in_channels, dim_model[0], in_round=8)],
        "transformer_input": init_transformer_block(kg, dim_model[0], dim_model[0]),
        "transition_down": [],
        "transformers_down": [],
        "transition_up": [],
        "transformers_up": [],
    }
    for i in range(len(dim_model) - 1):
        p["transition_down"].append({"mlp": [init_linear(kg, dim_model[i], dim_model[i + 1])]})
        p["transformers_down"].append(init_transformer_block(kg, dim_model[i + 1], dim_model[i + 1]))
        p["transition_up"].append({
            "mlp_sub": [init_linear(kg, dim_model[i + 1], dim_model[i])],
            "mlp": [init_linear(kg, dim_model[i], dim_model[i])],
        })
        p["transformers_up"].append(init_transformer_block(kg, dim_model[i], dim_model[i]))
    p["mlp_summit"] = [init_linear(kg, dim_model[-1], dim_model[-1])]
    p["transformer_summit"] = init_transformer_block(kg, dim_model[-1], dim_model[-1])
    p["mlp_output"] = [init_linear(kg, dim_model[0], 64), init_linear(kg, 64, out_channels)]
    return p


# ---------------------------------------------------------------------------
if __name__ == "__main__":
    B, Nb = 2, 32                 # 2 samples x 32 points
    in_channels, out_channels = 6, 5
    dim_model = (32, 64)          # one down/up level
    k = 4

    key = jax.random.PRNGKey(0)
    kx, kp_, kparam = jax.random.split(key, 3)
    x = jax.random.normal(kx, (B * Nb, in_channels), jnp.float32)
    pos = jax.random.normal(kp_, (B * Nb, 3), jnp.float32)

    params = init_model(KeyGen(kparam), in_channels, out_channels, dim_model, k)

    fwd = jax.jit(model_forward, static_argnums=(3, 4, 5, 6))
    out = fwd(params, x, pos, B, dim_model, k, out_channels)
    out = jax.block_until_ready(out)

    assert out.shape == (B * Nb, out_channels), out.shape
    assert bool(jnp.all(jnp.isfinite(out)))
    print("KERNEL_OK")
</pallas_src>

<mosaic_0001>
module attributes {stable_mosaic.version = 11 : i64} {
  func.func @_linear_kernel(%arg0: i32, %arg1: memref<64x8xf32, #tpu.memory_space<vmem>>, %arg2: memref<8x128xbf16, #tpu.memory_space<vmem>>, %arg3: memref<1x128xf32, #tpu.memory_space<vmem>>, %arg4: memref<64x128xbf16, #tpu.memory_space<vmem>>, %arg5: memref<8x128xf32, #tpu.memory_space<vmem>>) attributes {dimension_semantics = [#tpu.dimension_semantics<arbitrary>], iteration_bounds = array<i64: 1>, scalar_prefetch = 0 : i64, scratch_operands = 0 : i64, tpu.core_type = #tpu.core_type<tc>, window_params = [{transform_indices = @transform_0, window_bounds = array<i64: 64, 8>}, {pipeline_mode = #tpu.pipeline_mode<synchronous>, transform_indices = @transform_1, window_bounds = array<i64: 8, 128>}, {pipeline_mode = #tpu.pipeline_mode<synchronous>, transform_indices = @transform_2, window_bounds = array<i64: 1, 128>}, {transform_indices = @transform_3, window_bounds = array<i64: 64, 128>}, {pipeline_mode = #tpu.pipeline_mode<synchronous>, transform_indices = @transform_4, window_bounds = array<i64: 8, 128>}]} {
    %c0 = arith.constant 0 : index
    %c0_0 = arith.constant 0 : index
    %0 = vector.load %arg1[%c0, %c0_0] : memref<64x8xf32, #tpu.memory_space<vmem>>, vector<64x8xf32>
    %1 = arith.truncf %0 : vector<64x8xf32> to vector<64x8xbf16>
    %c0_1 = arith.constant 0 : index
    %c0_2 = arith.constant 0 : index
    %2 = vector.load %arg2[%c0_1, %c0_2] : memref<8x128xbf16, #tpu.memory_space<vmem>>, vector<8x128xbf16>
    %cst = arith.constant dense<0.000000e+00> : vector<64x128xf32>
    %3 = tpu.matmul %1, %2, %cst {dimension_numbers = #tpu.dot_dimension_numbers<[1], [0], [0], [1], [0, 0, 1, 1], [], []>} : vector<64x8xbf16>, vector<8x128xbf16>, vector<64x128xf32> -> vector<64x128xf32>
    %c0_3 = arith.constant 0 : index
    %c0_4 = arith.constant 0 : index
    %4 = vector.load %arg3[%c0_3, %c0_4] : memref<1x128xf32, #tpu.memory_space<vmem>>, vector<1x128xf32>
    %5 = vector.broadcast %4 : vector<1x128xf32> to vector<64x128xf32>
    %6 = arith.addf %3, %5 : vector<64x128xf32>
    %c64_i32 = arith.constant 64 : i32
    %7 = arith.muli %arg0, %c64_i32 : i32
    %8 = tpu.iota {dimensions = array<i32: 0>} : vector<64x128xi32>
    %9 = vector.broadcast %7 : i32 to vector<64x128xi32>
    %10 = arith.addi %8, %9 : vector<64x128xi32>
    %c64_i32_5 = arith.constant 64 : i32
    %11 = vector.broadcast %c64_i32_5 : i32 to vector<64x128xi32>
    %12 = arith.cmpi slt, %10, %11 : vector<64x128xi32>
    %cst_6 = arith.constant 0.000000e+00 : f32
    %13 = vector.broadcast %cst_6 : f32 to vector<64x128xf32>
    %14 = arith.select %12, %6, %13 : vector<64x128xi1>, vector<64x128xf32>
    %cst_7 = arith.constant dense<0.000000e+00> : vector<128xf32>
    %15 = vector.multi_reduction <add>, %14, %cst_7 [0] : vector<64x128xf32> to vector<128xf32>
    %16 = vector.shape_cast %15 : vector<128xf32> to vector<1x128xf32>
    %17 = arith.mulf %14, %14 : vector<64x128xf32>
    %cst_8 = arith.constant dense<0.000000e+00> : vector<128xf32>
    %18 = vector.multi_reduction <add>, %17, %cst_8 [0] : vector<64x128xf32> to vector<128xf32>
    %19 = vector.shape_cast %18 : vector<128xf32> to vector<1x128xf32>
    %20 = tpu.iota {dimensions = array<i32: 0>} : vector<8x128xi32>
    %c0_i32 = arith.constant 0 : i32
    %21 = vector.broadcast %c0_i32 : i32 to vector<8x128xi32>
    %22 = arith.cmpi eq, %20, %21 : vector<8x128xi32>
    %cst_9 = arith.constant 0.000000e+00 : f32
    %23 = vector.shape_cast %16 : vector<1x128xf32> to vector<1x128xf32>
    %24 = vector.broadcast %23 : vector<1x128xf32> to vector<8x128xf32>
    %25 = vector.broadcast %cst_9 : f32 to vector<8x128xf32>
    %26 = arith.select %22, %24, %25 : vector<8x128xi1>, vector<8x128xf32>
    %c1_i32 = arith.constant 1 : i32
    %27 = vector.broadcast %c1_i32 : i32 to vector<8x128xi32>
    %28 = arith.cmpi eq, %20, %27 : vector<8x128xi32>
    %cst_10 = arith.constant 0.000000e+00 : f32
    %29 = vector.shape_cast %19 : vector<1x128xf32> to vector<1x128xf32>
    %30 = vector.broadcast %29 : vector<1x128xf32> to vector<8x128xf32>
    %31 = vector.broadcast %cst_10 : f32 to vector<8x128xf32>
    %32 = arith.select %28, %30, %31 : vector<8x128xi1>, vector<8x128xf32>
    %33 = arith.addf %26, %32 : vector<8x128xf32>
    %c0_i32_11 = arith.constant 0 : i32
    %34 = arith.cmpi eq, %arg0, %c0_i32_11 : i32
    %35 = arith.extui %34 : i1 to i32
    %c0_i32_12 = arith.constant 0 : i32
    %36 = arith.cmpi ne, %35, %c0_i32_12 : i32
    scf.if %36 {
      %cst_19 = arith.constant 0.000000e+00 : f32
      %42 = vector.broadcast %cst_19 : f32 to vector<8x128xf32>
      %c0_20 = arith.constant 0 : index
      %c0_21 = arith.constant 0 : index
      %43 = vector.load %arg5[%c0_20, %c0_21] : memref<8x128xf32, #tpu.memory_space<vmem>>, vector<8x128xf32>
      tpu.vector_store %arg5[%c0_20, %c0_21], %42 {strides = array<i32>} : memref<8x128xf32, #tpu.memory_space<vmem>>, vector<8x128xf32>,
    } else {
    }
    %c0_13 = arith.constant 0 : index
    %c0_14 = arith.constant 0 : index
    %37 = vector.load %arg5[%c0_13, %c0_14] : memref<8x128xf32, #tpu.memory_space<vmem>>, vector<8x128xf32>
    %38 = arith.addf %37, %33 : vector<8x128xf32>
    %c0_15 = arith.constant 0 : index
    %c0_16 = arith.constant 0 : index
    %39 = vector.load %arg5[%c0_15, %c0_16] : memref<8x128xf32, #tpu.memory_space<vmem>>, vector<8x128xf32>
    tpu.vector_store %arg5[%c0_15, %c0_16], %38 {strides = array<i32>} : memref<8x128xf32, #tpu.memory_space<vmem>>, vector<8x128xf32>,
    %40 = arith.truncf %6 : vector<64x128xf32> to vector<64x128xbf16>
    %c0_17 = arith.constant 0 : index
    %c0_18 = arith.constant 0 : index
    %41 = vector.load %arg4[%c0_17, %c0_18] : memref<64x128xbf16, #tpu.memory_space<vmem>>, vector<64x128xbf16>
    tpu.vector_store %arg4[%c0_17, %c0_18], %40 {strides = array<i32>} : memref<64x128xbf16, #tpu.memory_space<vmem>>, vector<64x128xbf16>,
    return
  }
  func.func @transform_0(%arg0: i32) -> (i32, i32) {
    %c0_i32 = arith.constant 0 : i32
    %c0_i32_0 = arith.constant 0 : i32
    return %arg0, %c0_i32 : i32, i32
  }
  func.func @transform_1(%arg0: i32) -> (i32, i32) {
    %c0_i32 = arith.constant 0 : i32
    %c0_i32_0 = arith.constant 0 : i32
    %c0_i32_1 = arith.constant 0 : i32
    return %c0_i32, %c0_i32_0 : i32, i32
  }
  func.func @transform_2(%arg0: i32) -> (i32, i32) {
    %c0_i32 = arith.constant 0 : i32
    %c0_i32_0 = arith.constant 0 : i32
    %c0_i32_1 = arith.constant 0 : i32
    return %c0_i32, %c0_i32_0 : i32, i32
  }
  func.func @transform_3(%arg0: i32) -> (i32, i32) {
    %c0_i32 = arith.constant 0 : i32
    %c0_i32_0 = arith.constant 0 : i32
    return %arg0, %c0_i32 : i32, i32
  }
  func.func @transform_4(%arg0: i32) -> (i32, i32) {
    %c0_i32 = arith.constant 0 : i32
    %c0_i32_0 = arith.constant 0 : i32
    %c0_i32_1 = arith.constant 0 : i32
    return %c0_i32, %c0_i32_0 : i32, i32
  }
}

module attributes {stable_mosaic.version = 11 : i64} {
  func.func @_linear_kernel(%arg0: i32, %arg1: memref<64x128xbf16, #tpu.memory_space<vmem>>, %arg2: memref<128x384xbf16, #tpu.memory_space<vmem>>, %arg3: memref<1x384xf32, #tpu.memory_space<vmem>>, %arg4: memref<64x384xbf16, #tpu.memory_space<vmem>>) attributes {dimension_semantics = [#tpu.dimension_semantics<parallel>], iteration_bounds = array<i64: 1>, scalar_prefetch = 0 : i64, scratch_operands = 0 : i64, tpu.core_type = #tpu.core_type<tc>, window_params = [{transform_indices = @transform_0, window_bounds = array<i64: 64, 128>}, {pipeline_mode = #tpu.pipeline_mode<synchronous>, transform_indices = @transform_1, window_bounds = array<i64: 128, 384>}, {pipeline_mode = #tpu.pipeline_mode<synchronous>, transform_indices = @transform_2, window_bounds = array<i64: 1, 384>}, {transform_indices = @transform_3, window_bounds = array<i64: 64, 384>}]} {
    %c0 = arith.constant 0 : index
    %c0_0 = arith.constant 0 : index
    %0 = vector.load %arg1[%c0, %c0_0] : memref<64x128xbf16, #tpu.memory_space<vmem>>, vector<64x128xbf16>
    %c0_1 = arith.constant 0 : index
    %c0_2 = arith.constant 0 : index
    %1 = vector.load %arg2[%c0_1, %c0_2] : memref<128x384xbf16, #tpu.memory_space<vmem>>, vector<128x384xbf16>
    %cst = arith.constant dense<0.000000e+00> : vector<64x384xf32>
    %2 = tpu.matmul %0, %1, %cst {dimension_numbers = #tpu.dot_dimension_numbers<[1], [0], [0], [1], [0, 0, 1, 1], [], []>} : vector<64x128xbf16>, vector<128x384xbf16>, vector<64x384xf32> -> vector<64x384xf32>
    %c0_3 = arith.constant 0 : index
    %c0_4 = arith.constant 0 : index
    %3 = vector.load %arg3[%c0_3, %c0_4] : memref<1x384xf32, #tpu.memory_space<vmem>>, vector<1x384xf32>
    %4 = vector.broadcast %3 : vector<1x384xf32> to vector<64x384xf32>
    %5 = arith.addf %2, %4 : vector<64x384xf32>
    %6 = arith.truncf %5 : vector<64x384xf32> to vector<64x384xbf16>
    %c0_5 = arith.constant 0 : index
    %c0_6 = arith.constant 0 : index
    %7 = vector.load %arg4[%c0_5, %c0_6] : memref<64x384xbf16, #tpu.memory_space<vmem>>, vector<64x384xbf16>
    tpu.vector_store %arg4[%c0_5, %c0_6], %6 {strides = array<i32>} : memref<64x384xbf16, #tpu.memory_space<vmem>>, vector<64x384xbf16>,
    return
  }
  func.func @transform_0(%arg0: i32) -> (i32, i32) {
    %c0_i32 = arith.constant 0 : i32
    %c0_i32_0 = arith.constant 0 : i32
    return %arg0, %c0_i32 : i32, i32
  }
  func.func @transform_1(%arg0: i32) -> (i32, i32) {
    %c0_i32 = arith.constant 0 : i32
    %c0_i32_0 = arith.constant 0 : i32
    %c0_i32_1 = arith.constant 0 : i32
    return %c0_i32, %c0_i32_0 : i32, i32
  }
  func.func @transform_2(%arg0: i32) -> (i32, i32) {
    %c0_i32 = arith.constant 0 : i32
    %c0_i32_0 = arith.constant 0 : i32
    %c0_i32_1 = arith.constant 0 : i32
    return %c0_i32, %c0_i32_0 : i32, i32
  }
  func.func @transform_3(%arg0: i32) -> (i32, i32) {
    %c0_i32 = arith.constant 0 : i32
    %c0_i32_0 = arith.constant 0 : i32
    return %arg0, %c0_i32 : i32, i32
  }
}

module attributes {stable_mosaic.version = 11 : i64} {
  func.func @_linear_kernel(%arg0: i32, %arg1: memref<64x128xbf16, #tpu.memory_space<vmem>>, %arg2: memref<128x128xbf16, #tpu.memory_space<vmem>>, %arg3: memref<1x128xf32, #tpu.memory_space<vmem>>, %arg4: memref<1x128xf32, #tpu.memory_space<vmem>>, %arg5: memref<1x128xf32, #tpu.memory_space<vmem>>, %arg6: memref<64x128xbf16, #tpu.memory_space<vmem>>) attributes {dimension_semantics = [#tpu.dimension_semantics<parallel>], iteration_bounds = array<i64: 1>, scalar_prefetch = 0 : i64, scratch_operands = 0 : i64, tpu.core_type = #tpu.core_type<tc>, window_params = [{transform_indices = @transform_0, window_bounds = array<i64: 64, 128>}, {pipeline_mode = #tpu.pipeline_mode<synchronous>, transform_indices = @transform_1, window_bounds = array<i64: 128, 128>}, {pipeline_mode = #tpu.pipeline_mode<synchronous>, transform_indices = @transform_2, window_bounds = array<i64: 1, 128>}, {pipeline_mode = #tpu.pipeline_mode<synchronous>, transform_indices = @transform_3, window_bounds = array<i64: 1, 128>}, {pipeline_mode = #tpu.pipeline_mode<synchronous>, transform_indices = @transform_4, window_bounds = array<i64: 1, 128>}, {transform_indices = @transform_5, window_bounds = array<i64: 64, 128>}]} {
    %c0 = arith.constant 0 : index
    %c0_0 = arith.constant 0 : index
    %0 = vector.load %arg1[%c0, %c0_0] : memref<64x128xbf16, #tpu.memory_space<vmem>>, vector<64x128xbf16>
    %1 = arith.extf %0 : vector<64x128xbf16> to vector<64x128xf32>
    %c0_1 = arith.constant 0 : index
    %c0_2 = arith.constant 0 : index
    %2 = vector.load %arg4[%c0_1, %c0_2] : memref<1x128xf32, #tpu.memory_space<vmem>>, vector<1x128xf32>
    %3 = vector.broadcast %2 : vector<1x128xf32> to vector<64x128xf32>
    %4 = arith.subf %1, %3 : vector<64x128xf32>
    %c0_3 = arith.constant 0 : index
    %c0_4 = arith.constant 0 : index
    %5 = vector.load %arg5[%c0_3, %c0_4] : memref<1x128xf32, #tpu.memory_space<vmem>>, vector<1x128xf32>
    %6 = vector.broadcast %5 : vector<1x128xf32> to vector<64x128xf32>
    %7 = arith.mulf %4, %6 : vector<64x128xf32>
    %cst = arith.constant 0.000000e+00 : f32
    %8 = vector.broadcast %cst : f32 to vector<64x128xf32>
    %9 = arith.maximumf %7, %8 : vector<64x128xf32>
    %10 = arith.truncf %9 : vector<64x128xf32> to vector<64x128xbf16>
    %c0_5 = arith.constant 0 : index
    %c0_6 = arith.constant 0 : index
    %11 = vector.load %arg2[%c0_5, %c0_6] : memref<128x128xbf16, #tpu.memory_space<vmem>>, vector<128x128xbf16>
    %cst_7 = arith.constant dense<0.000000e+00> : vector<64x128xf32>
    %12 = tpu.matmul %10, %11, %cst_7 {dimension_numbers = #tpu.dot_dimension_numbers<[1], [0], [0], [1], [0, 0, 1, 1], [], []>} : vector<64x128xbf16>, vector<128x128xbf16>, vector<64x128xf32> -> vector<64x128xf32>
    %c0_8 = arith.constant 0 : index
    %c0_9 = arith.constant 0 : index
    %13 = vector.load %arg3[%c0_8, %c0_9] : memref<1x128xf32, #tpu.memory_space<vmem>>, vector<1x128xf32>
    %14 = vector.broadcast %13 : vector<1x128xf32> to vector<64x128xf32>
    %15 = arith.addf %12, %14 : vector<64x128xf32>
    %cst_10 = arith.constant 0.000000e+00 : f32
    %16 = vector.broadcast %cst_10 : f32 to vector<64x128xf32>
    %17 = arith.maximumf %15, %16 : vector<64x128xf32>
    %18 = arith.truncf %17 : vector<64x128xf32> to vector<64x128xbf16>
    %c0_11 = arith.constant 0 : index
    %c0_12 = arith.constant 0 : index
    %19 = vector.load %arg6[%c0_11, %c0_12] : memref<64x128xbf16, #tpu.memory_space<vmem>>, vector<64x128xbf16>
    tpu.vector_store %arg6[%c0_11, %c0_12], %18 {strides = array<i32>} : memref<64x128xbf16, #tpu.memory_space<vmem>>, vector<64x128xbf16>,
    return
  }
  func.func @transform_0(%arg0: i32) -> (i32, i32) {
    %c0_i32 = arith.constant 0 : i32
    %c0_i32_0 = arith.constant 0 : i32
    return %arg0, %c0_i32 : i32, i32
  }
  func.func @transform_1(%arg0: i32) -> (i32, i32) {
    %c0_i32 = arith.constant 0 : i32
    %c0_i32_0 = arith.constant 0 : i32
    %c0_i32_1 = arith.constant 0 : i32
    return %c0_i32, %c0_i32_0 : i32, i32
  }
  func.func @transform_2(%arg0: i32) -> (i32, i32) {
    %c0_i32 = arith.constant 0 : i32
    %c0_i32_0 = arith.constant 0 : i32
    %c0_i32_1 = arith.constant 0 : i32
    return %c0_i32, %c0_i32_0 : i32, i32
  }
  func.func @transform_3(%arg0: i32) -> (i32, i32) {
    %c0_i32 = arith.constant 0 : i32
    %c0_i32_0 = arith.constant 0 : i32
    %c0_i32_1 = arith.constant 0 : i32
    return %c0_i32, %c0_i32_0 : i32, i32
  }
  func.func @transform_4(%arg0: i32) -> (i32, i32) {
    %c0_i32 = arith.constant 0 : i32
    %c0_i32_0 = arith.constant 0 : i32
    %c0_i32_1 = arith.constant 0 : i32
    return %c0_i32, %c0_i32_0 : i32, i32
  }
  func.func @transform_5(%arg0: i32) -> (i32, i32) {
    %c0_i32 = arith.constant 0 : i32
    %c0_i32_0 = arith.constant 0 : i32
    return %arg0, %c0_i32 : i32, i32
  }
}

module attributes {stable_mosaic.version = 11 : i64} {
  func.func @_linear_kernel(%arg0: i32, %arg1: memref<64x8xf32, #tpu.memory_space<vmem>>, %arg2: memref<8x128xbf16, #tpu.memory_space<vmem>>, %arg3: memref<1x128xf32, #tpu.memory_space<vmem>>, %arg4: memref<64x128xbf16, #tpu.memory_space<vmem>>) attributes {dimension_semantics = [#tpu.dimension_semantics<parallel>], iteration_bounds = array<i64: 1>, scalar_prefetch = 0 : i64, scratch_operands = 0 : i64, tpu.core_type = #tpu.core_type<tc>, window_params = [{transform_indices = @transform_0, window_bounds = array<i64: 64, 8>}, {pipeline_mode = #tpu.pipeline_mode<synchronous>, transform_indices = @transform_1, window_bounds = array<i64: 8, 128>}, {pipeline_mode = #tpu.pipeline_mode<synchronous>, transform_indices = @transform_2, window_bounds = array<i64: 1, 128>}, {transform_indices = @transform_3, window_bounds = array<i64: 64, 128>}]} {
    %c0 = arith.constant 0 : index
    %c0_0 = arith.constant 0 : index
    %0 = vector.load %arg1[%c0, %c0_0] : memref<64x8xf32, #tpu.memory_space<vmem>>, vector<64x8xf32>
    %1 = arith.truncf %0 : vector<64x8xf32> to vector<64x8xbf16>
    %c0_1 = arith.constant 0 : index
    %c0_2 = arith.constant 0 : index
    %2 = vector.load %arg2[%c0_1, %c0_2] : memref<8x128xbf16, #tpu.memory_space<vmem>>, vector<8x128xbf16>
    %cst = arith.constant dense<0.000000e+00> : vector<64x128xf32>
    %3 = tpu.matmul %1, %2, %cst {dimension_numbers = #tpu.dot_dimension_numbers<[1], [0], [0], [1], [0, 0, 1, 1], [], []>} : vector<64x8xbf16>, vector<8x128xbf16>, vector<64x128xf32> -> vector<64x128xf32>
    %c0_3 = arith.constant 0 : index
    %c0_4 = arith.constant 0 : index
    %4 = vector.load %arg3[%c0_3, %c0_4] : memref<1x128xf32, #tpu.memory_space<vmem>>, vector<1x128xf32>
    %5 = vector.broadcast %4 : vector<1x128xf32> to vector<64x128xf32>
    %6 = arith.addf %3, %5 : vector<64x128xf32>
    %7 = arith.truncf %6 : vector<64x128xf32> to vector<64x128xbf16>
    %c0_5 = arith.constant 0 : index
    %c0_6 = arith.constant 0 : index
    %8 = vector.load %arg4[%c0_5, %c0_6] : memref<64x128xbf16, #tpu.memory_space<vmem>>, vector<64x128xbf16>
    tpu.vector_store %arg4[%c0_5, %c0_6], %7 {strides = array<i32>} : memref<64x128xbf16, #tpu.memory_space<vmem>>, vector<64x128xbf16>,
    return
  }
  func.func @transform_0(%arg0: i32) -> (i32, i32) {
    %c0_i32 = arith.constant 0 : i32
    %c0_i32_0 = arith.constant 0 : i32
    return %arg0, %c0_i32 : i32, i32
  }
  func.func @transform_1(%arg0: i32) -> (i32, i32) {
    %c0_i32 = arith.constant 0 : i32
    %c0_i32_0 = arith.constant 0 : i32
    %c0_i32_1 = arith.constant 0 : i32
    return %c0_i32, %c0_i32_0 : i32, i32
  }
  func.func @transform_2(%arg0: i32) -> (i32, i32) {
    %c0_i32 = arith.constant 0 : i32
    %c0_i32_0 = arith.constant 0 : i32
    %c0_i32_1 = arith.constant 0 : i32
    return %c0_i32, %c0_i32_0 : i32, i32
  }
  func.func @transform_3(%arg0: i32) -> (i32, i32) {
    %c0_i32 = arith.constant 0 : i32
    %c0_i32_0 = arith.constant 0 : i32
    return %arg0, %c0_i32 : i32, i32
  }
}

module attributes {stable_mosaic.version = 11 : i64} {
  func.func @_edge_attn_kernel(%arg0: i32, %arg1: memref<64x8x128xbf16, #tpu.memory_space<vmem>>, %arg2: memref<64x8x128xbf16, #tpu.memory_space<vmem>>, %arg3: memref<64x8x128xbf16, #tpu.memory_space<vmem>>, %arg4: memref<1x128xf32, #tpu.memory_space<vmem>>, %arg5: memref<128x128xbf16, #tpu.memory_space<vmem>>, %arg6: memref<1x128xf32, #tpu.memory_space<vmem>>, %arg7: memref<128x128xbf16, #tpu.memory_space<vmem>>, %arg8: memref<1x128xf32, #tpu.memory_space<vmem>>, %arg9: memref<128x128xbf16, #tpu.memory_space<vmem>>, %arg10: memref<1x128xf32, #tpu.memory_space<vmem>>, %arg11: memref<64x128xbf16, #tpu.memory_space<vmem>>) attributes {dimension_semantics = [#tpu.dimension_semantics<parallel>], iteration_bounds = array<i64: 1>, scalar_prefetch = 0 : i64, scratch_operands = 0 : i64, tpu.core_type = #tpu.core_type<tc>, window_params = [{transform_indices = @transform_0, window_bounds = array<i64: 64, 8, 128>}, {transform_indices = @transform_1, window_bounds = array<i64: 64, 8, 128>}, {transform_indices = @transform_2, window_bounds = array<i64: 64, 8, 128>}, {pipeline_mode = #tpu.pipeline_mode<synchronous>, transform_indices = @transform_3, window_bounds = array<i64: 1, 128>}, {pipeline_mode = #tpu.pipeline_mode<synchronous>, transform_indices = @transform_4, window_bounds = array<i64: 128, 128>}, {pipeline_mode = #tpu.pipeline_mode<synchronous>, transform_indices = @transform_5, window_bounds = array<i64: 1, 128>}, {pipeline_mode = #tpu.pipeline_mode<synchronous>, transform_indices = @transform_6, window_bounds = array<i64: 128, 128>}, {pipeline_mode = #tpu.pipeline_mode<synchronous>, transform_indices = @transform_7, window_bounds = array<i64: 1, 128>}, {pipeline_mode = #tpu.pipeline_mode<synchronous>, transform_indices = @transform_8, window_bounds = array<i64: 128, 128>}, {pipeline_mode = #tpu.pipeline_mode<synchronous>, transform_indices = @transform_9, window_bounds = array<i64: 1, 128>}, {transform_indices = @transform_10, window_bounds = array<i64: 64, 128>}]} {
    %c0 = arith.constant 0 : index
    %c0_0 = arith.constant 0 : index
    %c0_1 = arith.constant 0 : index
    %0 = vector.load %arg1[%c0, %c0_0, %c0_1] : memref<64x8x128xbf16, #tpu.memory_space<vmem>>, vector<64x8x128xbf16>
    %1 = arith.extf %0 : vector<64x8x128xbf16> to vector<64x8x128xf32>
    %2 = vector.shape_cast %1 : vector<64x8x128xf32> to vector<512x128xf32>
    %c0_2 = arith.constant 0 : index
    %c0_3 = arith.constant 0 : index
    %3 = vector.load %arg4[%c0_2, %c0_3] : memref<1x128xf32, #tpu.memory_space<vmem>>, vector<1x128xf32>
    %4 = vector.broadcast %3 : vector<1x128xf32> to vector<512x128xf32>
    %5 = arith.addf %2, %4 : vector<512x128xf32>
    %cst = arith.constant 0.000000e+00 : f32
    %6 = vector.broadcast %cst : f32 to vector<512x128xf32>
    %7 = arith.maximumf %5, %6 : vector<512x128xf32>
    %8 = arith.truncf %7 : vector<512x128xf32> to vector<512x128xbf16>
    %c0_4 = arith.constant 0 : index
    %c0_5 = arith.constant 0 : index
    %9 = vector.load %arg5[%c0_4, %c0_5] : memref<128x128xbf16, #tpu.memory_space<vmem>>, vector<128x128xbf16>
    %cst_6 = arith.constant dense<0.000000e+00> : vector<512x128xf32>
    %10 = tpu.matmul %8, %9, %cst_6 {dimension_numbers = #tpu.dot_dimension_numbers<[1], [0], [0], [1], [0, 0, 1, 1], [], []>} : vector<512x128xbf16>, vector<128x128xbf16>, vector<512x128xf32> -> vector<512x128xf32>
    %c0_7 = arith.constant 0 : index
    %c0_8 = arith.constant 0 : index
    %11 = vector.load %arg6[%c0_7, %c0_8] : memref<1x128xf32, #tpu.memory_space<vmem>>, vector<1x128xf32>
    %12 = vector.broadcast %11 : vector<1x128xf32> to vector<512x128xf32>
    %13 = arith.addf %10, %12 : vector<512x128xf32>
    %cst_9 = arith.constant 0.000000e+00 : f32
    %14 = vector.broadcast %cst_9 : f32 to vector<512x128xf32>
    %15 = arith.maximumf %13, %14 : vector<512x128xf32>
    %c0_10 = arith.constant 0 : index
    %c0_11 = arith.constant 0 : index
    %c0_12 = arith.constant 0 : index
    %16 = vector.load %arg2[%c0_10, %c0_11, %c0_12] : memref<64x8x128xbf16, #tpu.memory_space<vmem>>, vector<64x8x128xbf16>
    %17 = arith.extf %16 : vector<64x8x128xbf16> to vector<64x8x128xf32>
    %18 = vector.shape_cast %17 : vector<64x8x128xf32> to vector<512x128xf32>
    %19 = arith.addf %18, %15 : vector<512x128xf32>
    %20 = arith.truncf %19 : vector<512x128xf32> to vector<512x128xbf16>
    %c0_13 = arith.constant 0 : index
    %c0_14 = arith.constant 0 : index
    %21 = vector.load %arg7[%c0_13, %c0_14] : memref<128x128xbf16, #tpu.memory_space<vmem>>, vector<128x128xbf16>
    %cst_15 = arith.constant dense<0.000000e+00> : vector<512x128xf32>
    %22 = tpu.matmul %20, %21, %cst_15 {dimension_numbers = #tpu.dot_dimension_numbers<[1], [0], [0], [1], [0, 0, 1, 1], [], []>} : vector<512x128xbf16>, vector<128x128xbf16>, vector<512x128xf32> -> vector<512x128xf32>
    %c0_16 = arith.constant 0 : index
    %c0_17 = arith.constant 0 : index
    %23 = vector.load %arg8[%c0_16, %c0_17] : memref<1x128xf32, #tpu.memory_space<vmem>>, vector<1x128xf32>
    %24 = vector.broadcast %23 : vector<1x128xf32> to vector<512x128xf32>
    %25 = arith.addf %22, %24 : vector<512x128xf32>
    %cst_18 = arith.constant 0.000000e+00 : f32
    %26 = vector.broadcast %cst_18 : f32 to vector<512x128xf32>
    %27 = arith.maximumf %25, %26 : vector<512x128xf32>
    %28 = arith.truncf %27 : vector<512x128xf32> to vector<512x128xbf16>
    %c0_19 = arith.constant 0 : index
    %c0_20 = arith.constant 0 : index
    %29 = vector.load %arg9[%c0_19, %c0_20] : memref<128x128xbf16, #tpu.memory_space<vmem>>, vector<128x128xbf16>
    %cst_21 = arith.constant dense<0.000000e+00> : vector<512x128xf32>
    %30 = tpu.matmul %28, %29, %cst_21 {dimension_numbers = #tpu.dot_dimension_numbers<[1], [0], [0], [1], [0, 0, 1, 1], [], []>} : vector<512x128xbf16>, vector<128x128xbf16>, vector<512x128xf32> -> vector<512x128xf32>
    %c0_22 = arith.constant 0 : index
    %c0_23 = arith.constant 0 : index
    %31 = vector.load %arg10[%c0_22, %c0_23] : memref<1x128xf32, #tpu.memory_space<vmem>>, vector<1x128xf32>
    %32 = vector.broadcast %31 : vector<1x128xf32> to vector<512x128xf32>
    %33 = arith.addf %30, %32 : vector<512x128xf32>
    %cst_24 = arith.constant 0.000000e+00 : f32
    %34 = vector.broadcast %cst_24 : f32 to vector<512x128xf32>
    %35 = arith.maximumf %33, %34 : vector<512x128xf32>
    %36 = vector.shape_cast %35 : vector<512x128xf32> to vector<64x8x128xf32>
    %c0_25 = arith.constant 0 : index
    %c0_26 = arith.constant 0 : index
    %c0_27 = arith.constant 0 : index
    %37 = vector.load %arg3[%c0_25, %c0_26, %c0_27] : memref<64x8x128xbf16, #tpu.memory_space<vmem>>, vector<64x8x128xbf16>
    %38 = arith.extf %37 : vector<64x8x128xbf16> to vector<64x8x128xf32>
    %39 = vector.shape_cast %38 : vector<64x8x128xf32> to vector<512x128xf32>
    %40 = arith.addf %39, %15 : vector<512x128xf32>
    %41 = vector.shape_cast %40 : vector<512x128xf32> to vector<64x8x128xf32>
    %42 = tpu.iota {dimensions = array<i32: 0>} : vector<8x128xi32>
    %c5_i32 = arith.constant 5 : i32
    %43 = vector.broadcast %c5_i32 : i32 to vector<8x128xi32>
    %44 = arith.cmpi slt, %42, %43 : vector<8x128xi32>
    %45 = vector.shape_cast %44 : vector<8x128xi1> to vector<1x8x128xi1>
    %cst_28 = arith.constant -1.000000e+30 : f32
    %46 = vector.shape_cast %45 : vector<1x8x128xi1> to vector<1x8x128xi1>
    %47 = vector.broadcast %46 : vector<1x8x128xi1> to vector<64x8x128xi1>
    %48 = vector.broadcast %cst_28 : f32 to vector<64x8x128xf32>
    %49 = arith.select %47, %36, %48 : vector<64x8x128xi1>, vector<64x8x128xf32>
    %cst_29 = arith.constant dense<0xFF800000> : vector<64x128xf32>
    %50 = vector.multi_reduction <maximumf>, %49, %cst_29 [1] : vector<64x8x128xf32> to vector<64x128xf32>
    %51 = vector.shape_cast %50 : vector<64x128xf32> to vector<64x1x128xf32>
    %52 = vector.broadcast %51 : vector<64x1x128xf32> to vector<64x8x128xf32>
    %53 = arith.subf %49, %52 : vector<64x8x128xf32>
    %54 = math.exp %53 : vector<64x8x128xf32>
    %cst_30 = arith.constant dense<0.000000e+00> : vector<64x128xf32>
    %55 = vector.multi_reduction <add>, %54, %cst_30 [1] : vector<64x8x128xf32> to vector<64x128xf32>
    %56 = vector.shape_cast %55 : vector<64x128xf32> to vector<64x1x128xf32>
    %57 = tpu.reciprocal %56 {approx = true} : vector<64x1x128xf32> -> vector<64x1x128xf32>
    %58 = vector.broadcast %57 : vector<64x1x128xf32> to vector<64x8x128xf32>
    %59 = arith.mulf %54, %58 : vector<64x8x128xf32>
    %60 = arith.mulf %59, %41 : vector<64x8x128xf32>
    %cst_31 = arith.constant dense<0.000000e+00> : vector<64x128xf32>
    %61 = vector.multi_reduction <add>, %60, %cst_31 [1] : vector<64x8x128xf32> to vector<64x128xf32>
    %62 = arith.truncf %61 : vector<64x128xf32> to vector<64x128xbf16>
    %c0_32 = arith.constant 0 : index
    %c0_33 = arith.constant 0 : index
    %63 = vector.load %arg11[%c0_32, %c0_33] : memref<64x128xbf16, #tpu.memory_space<vmem>>, vector<64x128xbf16>
    tpu.vector_store %arg11[%c0_32, %c0_33], %62 {strides = array<i32>} : memref<64x128xbf16, #tpu.memory_space<vmem>>, vector<64x128xbf16>,
    return
  }
  func.func @transform_0(%arg0: i32) -> (i32, i32, i32) {
    %c0_i32 = arith.constant 0 : i32
    %c0_i32_0 = arith.constant 0 : i32
    %c0_i32_1 = arith.constant 0 : i32
    return %arg0, %c0_i32, %c0_i32_0 : i32, i32, i32
  }
  func.func @transform_1(%arg0: i32) -> (i32, i32, i32) {
    %c0_i32 = arith.constant 0 : i32
    %c0_i32_0 = arith.constant 0 : i32
    %c0_i32_1 = arith.constant 0 : i32
    return %arg0, %c0_i32, %c0_i32_0 : i32, i32, i32
  }
  func.func @transform_2(%arg0: i32) -> (i32, i32, i32) {
    %c0_i32 = arith.constant 0 : i32
    %c0_i32_0 = arith.constant 0 : i32
    %c0_i32_1 = arith.constant 0 : i32
    return %arg0, %c0_i32, %c0_i32_0 : i32, i32, i32
  }
  func.func @transform_3(%arg0: i32) -> (i32, i32) {
    %c0_i32 = arith.constant 0 : i32
    %c0_i32_0 = arith.constant 0 : i32
    %c0_i32_1 = arith.constant 0 : i32
    return %c0_i32, %c0_i32_0 : i32, i32
  }
  func.func @transform_4(%arg0: i32) -> (i32, i32) {
    %c0_i32 = arith.constant 0 : i32
    %c0_i32_0 = arith.constant 0 : i32
    %c0_i32_1 = arith.constant 0 : i32
    return %c0_i32, %c0_i32_0 : i32, i32
  }
  func.func @transform_5(%arg0: i32) -> (i32, i32) {
    %c0_i32 = arith.constant 0 : i32
    %c0_i32_0 = arith.constant 0 : i32
    %c0_i32_1 = arith.constant 0 : i32
    return %c0_i32, %c0_i32_0 : i32, i32
  }
  func.func @transform_6(%arg0: i32) -> (i32, i32) {
    %c0_i32 = arith.constant 0 : i32
    %c0_i32_0 = arith.constant 0 : i32
    %c0_i32_1 = arith.constant 0 : i32
    return %c0_i32, %c0_i32_0 : i32, i32
  }
  func.func @transform_7(%arg0: i32) -> (i32, i32) {
    %c0_i32 = arith.constant 0 : i32
    %c0_i32_0 = arith.constant 0 : i32
    %c0_i32_1 = arith.constant 0 : i32
    return %c0_i32, %c0_i32_0 : i32, i32
  }
  func.func @transform_8(%arg0: i32) -> (i32, i32) {
    %c0_i32 = arith.constant 0 : i32
    %c0_i32_0 = arith.constant 0 : i32
    %c0_i32_1 = arith.constant 0 : i32
    return %c0_i32, %c0_i32_0 : i32, i32
  }
  func.func @transform_9(%arg0: i32) -> (i32, i32) {
    %c0_i32 = arith.constant 0 : i32
    %c0_i32_0 = arith.constant 0 : i32
    %c0_i32_1 = arith.constant 0 : i32
    return %c0_i32, %c0_i32_0 : i32, i32
  }
  func.func @transform_10(%arg0: i32) -> (i32, i32) {
    %c0_i32 = arith.constant 0 : i32
    %c0_i32_0 = arith.constant 0 : i32
    return %arg0, %c0_i32 : i32, i32
  }
}

module attributes {stable_mosaic.version = 11 : i64} {
  func.func @_linear_kernel(%arg0: i32, %arg1: memref<64x128xbf16, #tpu.memory_space<vmem>>, %arg2: memref<128x128xbf16, #tpu.memory_space<vmem>>, %arg3: memref<1x128xf32, #tpu.memory_space<vmem>>, %arg4: memref<64x128xbf16, #tpu.memory_space<vmem>>) attributes {dimension_semantics = [#tpu.dimension_semantics<parallel>], iteration_bounds = array<i64: 1>, scalar_prefetch = 0 : i64, scratch_operands = 0 : i64, tpu.core_type = #tpu.core_type<tc>, window_params = [{transform_indices = @transform_0, window_bounds = array<i64: 64, 128>}, {pipeline_mode = #tpu.pipeline_mode<synchronous>, transform_indices = @transform_1, window_bounds = array<i64: 128, 128>}, {pipeline_mode = #tpu.pipeline_mode<synchronous>, transform_indices = @transform_2, window_bounds = array<i64: 1, 128>}, {transform_indices = @transform_3, window_bounds = array<i64: 64, 128>}]} {
    %c0 = arith.constant 0 : index
    %c0_0 = arith.constant 0 : index
    %0 = vector.load %arg1[%c0, %c0_0] : memref<64x128xbf16, #tpu.memory_space<vmem>>, vector<64x128xbf16>
    %c0_1 = arith.constant 0 : index
    %c0_2 = arith.constant 0 : index
    %1 = vector.load %arg2[%c0_1, %c0_2] : memref<128x128xbf16, #tpu.memory_space<vmem>>, vector<128x128xbf16>
    %cst = arith.constant dense<0.000000e+00> : vector<64x128xf32>
    %2 = tpu.matmul %0, %1, %cst {dimension_numbers = #tpu.dot_dimension_numbers<[1], [0], [0], [1], [0, 0, 1, 1], [], []>} : vector<64x128xbf16>, vector<128x128xbf16>, vector<64x128xf32> -> vector<64x128xf32>
    %c0_3 = arith.constant 0 : index
    %c0_4 = arith.constant 0 : index
    %3 = vector.load %arg3[%c0_3, %c0_4] : memref<1x128xf32, #tpu.memory_space<vmem>>, vector<1x128xf32>
    %4 = vector.broadcast %3 : vector<1x128xf32> to vector<64x128xf32>
    %5 = arith.addf %2, %4 : vector<64x128xf32>
    %cst_5 = arith.constant 0.000000e+00 : f32
    %6 = vector.broadcast %cst_5 : f32 to vector<64x128xf32>
    %7 = arith.maximumf %5, %6 : vector<64x128xf32>
    %8 = arith.truncf %7 : vector<64x128xf32> to vector<64x128xbf16>
    %c0_6 = arith.constant 0 : index
    %c0_7 = arith.constant 0 : index
    %9 = vector.load %arg4[%c0_6, %c0_7] : memref<64x128xbf16, #tpu.memory_space<vmem>>, vector<64x128xbf16>
    tpu.vector_store %arg4[%c0_6, %c0_7], %8 {strides = array<i32>} : memref<64x128xbf16, #tpu.memory_space<vmem>>, vector<64x128xbf16>,
    return
  }
  func.func @transform_0(%arg0: i32) -> (i32, i32) {
    %c0_i32 = arith.constant 0 : i32
    %c0_i32_0 = arith.constant 0 : i32
    return %arg0, %c0_i32 : i32, i32
  }
  func.func @transform_1(%arg0: i32) -> (i32, i32) {
    %c0_i32 = arith.constant 0 : i32
    %c0_i32_0 = arith.constant 0 : i32
    %c0_i32_1 = arith.constant 0 : i32
    return %c0_i32, %c0_i32_0 : i32, i32
  }
  func.func @transform_2(%arg0: i32) -> (i32, i32) {
    %c0_i32 = arith.constant 0 : i32
    %c0_i32_0 = arith.constant 0 : i32
    %c0_i32_1 = arith.constant 0 : i32
    return %c0_i32, %c0_i32_0 : i32, i32
  }
  func.func @transform_3(%arg0: i32) -> (i32, i32) {
    %c0_i32 = arith.constant 0 : i32
    %c0_i32_0 = arith.constant 0 : i32
    return %arg0, %c0_i32 : i32, i32
  }
}

module attributes {stable_mosaic.version = 11 : i64} {
  func.func @_linear_kernel(%arg0: i32, %arg1: memref<64x128xbf16, #tpu.memory_space<vmem>>, %arg2: memref<128x128xbf16, #tpu.memory_space<vmem>>, %arg3: memref<1x128xf32, #tpu.memory_space<vmem>>, %arg4: memref<64x128xbf16, #tpu.memory_space<vmem>>, %arg5: memref<8x128xf32, #tpu.memory_space<vmem>>) attributes {dimension_semantics = [#tpu.dimension_semantics<arbitrary>], iteration_bounds = array<i64: 1>, scalar_prefetch = 0 : i64, scratch_operands = 0 : i64, tpu.core_type = #tpu.core_type<tc>, window_params = [{transform_indices = @transform_0, window_bounds = array<i64: 64, 128>}, {pipeline_mode = #tpu.pipeline_mode<synchronous>, transform_indices = @transform_1, window_bounds = array<i64: 128, 128>}, {pipeline_mode = #tpu.pipeline_mode<synchronous>, transform_indices = @transform_2, window_bounds = array<i64: 1, 128>}, {transform_indices = @transform_3, window_bounds = array<i64: 64, 128>}, {pipeline_mode = #tpu.pipeline_mode<synchronous>, transform_indices = @transform_4, window_bounds = array<i64: 8, 128>}]} {
    %c0 = arith.constant 0 : index
    %c0_0 = arith.constant 0 : index
    %0 = vector.load %arg1[%c0, %c0_0] : memref<64x128xbf16, #tpu.memory_space<vmem>>, vector<64x128xbf16>
    %c0_1 = arith.constant 0 : index
    %c0_2 = arith.constant 0 : index
    %1 = vector.load %arg2[%c0_1, %c0_2] : memref<128x128xbf16, #tpu.memory_space<vmem>>, vector<128x128xbf16>
    %cst = arith.constant dense<0.000000e+00> : vector<64x128xf32>
    %2 = tpu.matmul %0, %1, %cst {dimension_numbers = #tpu.dot_dimension_numbers<[1], [0], [0], [1], [0, 0, 1, 1], [], []>} : vector<64x128xbf16>, vector<128x128xbf16>, vector<64x128xf32> -> vector<64x128xf32>
    %c0_3 = arith.constant 0 : index
    %c0_4 = arith.constant 0 : index
    %3 = vector.load %arg3[%c0_3, %c0_4] : memref<1x128xf32, #tpu.memory_space<vmem>>, vector<1x128xf32>
    %4 = vector.broadcast %3 : vector<1x128xf32> to vector<64x128xf32>
    %5 = arith.addf %2, %4 : vector<64x128xf32>
    %c64_i32 = arith.constant 64 : i32
    %6 = arith.muli %arg0, %c64_i32 : i32
    %7 = tpu.iota {dimensions = array<i32: 0>} : vector<64x128xi32>
    %8 = vector.broadcast %6 : i32 to vector<64x128xi32>
    %9 = arith.addi %7, %8 : vector<64x128xi32>
    %c64_i32_5 = arith.constant 64 : i32
    %10 = vector.broadcast %c64_i32_5 : i32 to vector<64x128xi32>
    %11 = arith.cmpi slt, %9, %10 : vector<64x128xi32>
    %cst_6 = arith.constant 0.000000e+00 : f32
    %12 = vector.broadcast %cst_6 : f32 to vector<64x128xf32>
    %13 = arith.select %11, %5, %12 : vector<64x128xi1>, vector<64x128xf32>
    %cst_7 = arith.constant dense<0.000000e+00> : vector<128xf32>
    %14 = vector.multi_reduction <add>, %13, %cst_7 [0] : vector<64x128xf32> to vector<128xf32>
    %15 = vector.shape_cast %14 : vector<128xf32> to vector<1x128xf32>
    %16 = arith.mulf %13, %13 : vector<64x128xf32>
    %cst_8 = arith.constant dense<0.000000e+00> : vector<128xf32>
    %17 = vector.multi_reduction <add>, %16, %cst_8 [0] : vector<64x128xf32> to vector<128xf32>
    %18 = vector.shape_cast %17 : vector<128xf32> to vector<1x128xf32>
    %19 = tpu.iota {dimensions = array<i32: 0>} : vector<8x128xi32>
    %c0_i32 = arith.constant 0 : i32
    %20 = vector.broadcast %c0_i32 : i32 to vector<8x128xi32>
    %21 = arith.cmpi eq, %19, %20 : vector<8x128xi32>
    %cst_9 = arith.constant 0.000000e+00 : f32
    %22 = vector.shape_cast %15 : vector<1x128xf32> to vector<1x128xf32>
    %23 = vector.broadcast %22 : vector<1x128xf32> to vector<8x128xf32>
    %24 = vector.broadcast %cst_9 : f32 to vector<8x128xf32>
    %25 = arith.select %21, %23, %24 : vector<8x128xi1>, vector<8x128xf32>
    %c1_i32 = arith.constant 1 : i32
    %26 = vector.broadcast %c1_i32 : i32 to vector<8x128xi32>
    %27 = arith.cmpi eq, %19, %26 : vector<8x128xi32>
    %cst_10 = arith.constant 0.000000e+00 : f32
    %28 = vector.shape_cast %18 : vector<1x128xf32> to vector<1x128xf32>
    %29 = vector.broadcast %28 : vector<1x128xf32> to vector<8x128xf32>
    %30 = vector.broadcast %cst_10 : f32 to vector<8x128xf32>
    %31 = arith.select %27, %29, %30 : vector<8x128xi1>, vector<8x128xf32>
    %32 = arith.addf %25, %31 : vector<8x128xf32>
    %c0_i32_11 = arith.constant 0 : i32
    %33 = arith.cmpi eq, %arg0, %c0_i32_11 : i32
    %34 = arith.extui %33 : i1 to i32
    %c0_i32_12 = arith.constant 0 : i32
    %35 = arith.cmpi ne, %34, %c0_i32_12 : i32
    scf.if %35 {
      %cst_19 = arith.constant 0.000000e+00 : f32
      %41 = vector.broadcast %cst_19 : f32 to vector<8x128xf32>
      %c0_20 = arith.constant 0 : index
      %c0_21 = arith.constant 0 : index
      %42 = vector.load %arg5[%c0_20, %c0_21] : memref<8x128xf32, #tpu.memory_space<vmem>>, vector<8x128xf32>
      tpu.vector_store %arg5[%c0_20, %c0_21], %41 {strides = array<i32>} : memref<8x128xf32, #tpu.memory_space<vmem>>, vector<8x128xf32>,
    } else {
    }
    %c0_13 = arith.constant 0 : index
    %c0_14 = arith.constant 0 : index
    %36 = vector.load %arg5[%c0_13, %c0_14] : memref<8x128xf32, #tpu.memory_space<vmem>>, vector<8x128xf32>
    %37 = arith.addf %36, %32 : vector<8x128xf32>
    %c0_15 = arith.constant 0 : index
    %c0_16 = arith.constant 0 : index
    %38 = vector.load %arg5[%c0_15, %c0_16] : memref<8x128xf32, #tpu.memory_space<vmem>>, vector<8x128xf32>
    tpu.vector_store %arg5[%c0_15, %c0_16], %37 {strides = array<i32>} : memref<8x128xf32, #tpu.memory_space<vmem>>, vector<8x128xf32>,
    %39 = arith.truncf %5 : vector<64x128xf32> to vector<64x128xbf16>
    %c0_17 = arith.constant 0 : index
    %c0_18 = arith.constant 0 : index
    %40 = vector.load %arg4[%c0_17, %c0_18] : memref<64x128xbf16, #tpu.memory_space<vmem>>, vector<64x128xbf16>
    tpu.vector_store %arg4[%c0_17, %c0_18], %39 {strides = array<i32>} : memref<64x128xbf16, #tpu.memory_space<vmem>>, vector<64x128xbf16>,
    return
  }
  func.func @transform_0(%arg0: i32) -> (i32, i32) {
    %c0_i32 = arith.constant 0 : i32
    %c0_i32_0 = arith.constant 0 : i32
    return %arg0, %c0_i32 : i32, i32
  }
  func.func @transform_1(%arg0: i32) -> (i32, i32) {
    %c0_i32 = arith.constant 0 : i32
    %c0_i32_0 = arith.constant 0 : i32
    %c0_i32_1 = arith.constant 0 : i32
    return %c0_i32, %c0_i32_0 : i32, i32
  }
  func.func @transform_2(%arg0: i32) -> (i32, i32) {
    %c0_i32 = arith.constant 0 : i32
    %c0_i32_0 = arith.constant 0 : i32
    %c0_i32_1 = arith.constant 0 : i32
    return %c0_i32, %c0_i32_0 : i32, i32
  }
  func.func @transform_3(%arg0: i32) -> (i32, i32) {
    %c0_i32 = arith.constant 0 : i32
    %c0_i32_0 = arith.constant 0 : i32
    return %arg0, %c0_i32 : i32, i32
  }
  func.func @transform_4(%arg0: i32) -> (i32, i32) {
    %c0_i32 = arith.constant 0 : i32
    %c0_i32_0 = arith.constant 0 : i32
    %c0_i32_1 = arith.constant 0 : i32
    return %c0_i32, %c0_i32_0 : i32, i32
  }
}

module attributes {stable_mosaic.version = 11 : i64} {
  func.func @_bn_relu_kernel(%arg0: i32, %arg1: memref<64x128xbf16, #tpu.memory_space<vmem>>, %arg2: memref<1x128xf32, #tpu.memory_space<vmem>>, %arg3: memref<1x128xf32, #tpu.memory_space<vmem>>, %arg4: memref<64x128xbf16, #tpu.memory_space<vmem>>) attributes {dimension_semantics = [#tpu.dimension_semantics<parallel>], iteration_bounds = array<i64: 1>, scalar_prefetch = 0 : i64, scratch_operands = 0 : i64, tpu.core_type = #tpu.core_type<tc>, window_params = [{transform_indices = @transform_0, window_bounds = array<i64: 64, 128>}, {pipeline_mode = #tpu.pipeline_mode<synchronous>, transform_indices = @transform_1, window_bounds = array<i64: 1, 128>}, {pipeline_mode = #tpu.pipeline_mode<synchronous>, transform_indices = @transform_2, window_bounds = array<i64: 1, 128>}, {transform_indices = @transform_3, window_bounds = array<i64: 64, 128>}]} {
    %c0 = arith.constant 0 : index
    %c0_0 = arith.constant 0 : index
    %0 = vector.load %arg1[%c0, %c0_0] : memref<64x128xbf16, #tpu.memory_space<vmem>>, vector<64x128xbf16>
    %1 = arith.extf %0 : vector<64x128xbf16> to vector<64x128xf32>
    %c0_1 = arith.constant 0 : index
    %c0_2 = arith.constant 0 : index
    %2 = vector.load %arg2[%c0_1, %c0_2] : memref<1x128xf32, #tpu.memory_space<vmem>>, vector<1x128xf32>
    %3 = vector.broadcast %2 : vector<1x128xf32> to vector<64x128xf32>
    %4 = arith.subf %1, %3 : vector<64x128xf32>
    %c0_3 = arith.constant 0 : index
    %c0_4 = arith.constant 0 : index
    %5 = vector.load %arg3[%c0_3, %c0_4] : memref<1x128xf32, #tpu.memory_space<vmem>>, vector<1x128xf32>
    %6 = vector.broadcast %5 : vector<1x128xf32> to vector<64x128xf32>
    %7 = arith.mulf %4, %6 : vector<64x128xf32>
    %cst = arith.constant 0.000000e+00 : f32
    %8 = vector.broadcast %cst : f32 to vector<64x128xf32>
    %9 = arith.maximumf %7, %8 : vector<64x128xf32>
    %10 = arith.truncf %9 : vector<64x128xf32> to vector<64x128xbf16>
    %c0_5 = arith.constant 0 : index
    %c0_6 = arith.constant 0 : index
    %11 = vector.load %arg4[%c0_5, %c0_6] : memref<64x128xbf16, #tpu.memory_space<vmem>>, vector<64x128xbf16>
    tpu.vector_store %arg4[%c0_5, %c0_6], %10 {strides = array<i32>} : memref<64x128xbf16, #tpu.memory_space<vmem>>, vector<64x128xbf16>,
    return
  }
  func.func @transform_0(%arg0: i32) -> (i32, i32) {
    %c0_i32 = arith.constant 0 : i32
    %c0_i32_0 = arith.constant 0 : i32
    return %arg0, %c0_i32 : i32, i32
  }
  func.func @transform_1(%arg0: i32) -> (i32, i32) {
    %c0_i32 = arith.constant 0 : i32
    %c0_i32_0 = arith.constant 0 : i32
    %c0_i32_1 = arith.constant 0 : i32
    return %c0_i32, %c0_i32_0 : i32, i32
  }
  func.func @transform_2(%arg0: i32) -> (i32, i32) {
    %c0_i32 = arith.constant 0 : i32
    %c0_i32_0 = arith.constant 0 : i32
    %c0_i32_1 = arith.constant 0 : i32
    return %c0_i32, %c0_i32_0 : i32, i32
  }
  func.func @transform_3(%arg0: i32) -> (i32, i32) {
    %c0_i32 = arith.constant 0 : i32
    %c0_i32_0 = arith.constant 0 : i32
    return %arg0, %c0_i32 : i32, i32
  }
}

module attributes {stable_mosaic.version = 11 : i64} {
  func.func @_kmax_kernel(%arg0: i32, %arg1: memref<16x8x128xbf16, #tpu.memory_space<vmem>>, %arg2: memref<1x128xf32, #tpu.memory_space<vmem>>, %arg3: memref<1x128xf32, #tpu.memory_space<vmem>>, %arg4: memref<16x128xbf16, #tpu.memory_space<vmem>>) attributes {dimension_semantics = [#tpu.dimension_semantics<parallel>], iteration_bounds = array<i64: 1>, scalar_prefetch = 0 : i64, scratch_operands = 0 : i64, tpu.core_type = #tpu.core_type<tc>, window_params = [{transform_indices = @transform_0, window_bounds = array<i64: 16, 8, 128>}, {pipeline_mode = #tpu.pipeline_mode<synchronous>, transform_indices = @transform_1, window_bounds = array<i64: 1, 128>}, {pipeline_mode = #tpu.pipeline_mode<synchronous>, transform_indices = @transform_2, window_bounds = array<i64: 1, 128>}, {transform_indices = @transform_3, window_bounds = array<i64: 16, 128>}]} {
    %c0 = arith.constant 0 : index
    %c0_0 = arith.constant 0 : index
    %c0_1 = arith.constant 0 : index
    %0 = vector.load %arg1[%c0, %c0_0, %c0_1] : memref<16x8x128xbf16, #tpu.memory_space<vmem>>, vector<16x8x128xbf16>
    %1 = arith.extf %0 : vector<16x8x128xbf16> to vector<16x8x128xf32>
    %2 = tpu.iota {dimensions = array<i32: 0>} : vector<8x128xi32>
    %c4_i32 = arith.constant 4 : i32
    %3 = vector.broadcast %c4_i32 : i32 to vector<8x128xi32>
    %4 = arith.cmpi slt, %2, %3 : vector<8x128xi32>
    %5 = vector.shape_cast %4 : vector<8x128xi1> to vector<1x8x128xi1>
    %cst = arith.constant -3.000000e+38 : f32
    %6 = vector.shape_cast %5 : vector<1x8x128xi1> to vector<1x8x128xi1>
    %7 = vector.broadcast %6 : vector<1x8x128xi1> to vector<16x8x128xi1>
    %8 = vector.broadcast %cst : f32 to vector<16x8x128xf32>
    %9 = arith.select %7, %1, %8 : vector<16x8x128xi1>, vector<16x8x128xf32>
    %cst_2 = arith.constant dense<0xFF800000> : vector<16x128xf32>
    %10 = vector.multi_reduction <maximumf>, %9, %cst_2 [1] : vector<16x8x128xf32> to vector<16x128xf32>
    %c0_3 = arith.constant 0 : index
    %c0_4 = arith.constant 0 : index
    %11 = vector.load %arg2[%c0_3, %c0_4] : memref<1x128xf32, #tpu.memory_space<vmem>>, vector<1x128xf32>
    %12 = vector.broadcast %11 : vector<1x128xf32> to vector<16x128xf32>
    %13 = arith.subf %10, %12 : vector<16x128xf32>
    %c0_5 = arith.constant 0 : index
    %c0_6 = arith.constant 0 : index
    %14 = vector.load %arg3[%c0_5, %c0_6] : memref<1x128xf32, #tpu.memory_space<vmem>>, vector<1x128xf32>
    %15 = vector.broadcast %14 : vector<1x128xf32> to vector<16x128xf32>
    %16 = arith.mulf %13, %15 : vector<16x128xf32>
    %cst_7 = arith.constant 0.000000e+00 : f32
    %17 = vector.broadcast %cst_7 : f32 to vector<16x128xf32>
    %18 = arith.maximumf %16, %17 : vector<16x128xf32>
    %19 = arith.truncf %18 : vector<16x128xf32> to vector<16x128xbf16>
    %c0_8 = arith.constant 0 : index
    %c0_9 = arith.constant 0 : index
    %20 = vector.load %arg4[%c0_8, %c0_9] : memref<16x128xbf16, #tpu.memory_space<vmem>>, vector<16x128xbf16>
    tpu.vector_store %arg4[%c0_8, %c0_9], %19 {strides = array<i32>} : memref<16x128xbf16, #tpu.memory_space<vmem>>, vector<16x128xbf16>,
    return
  }
  func.func @transform_0(%arg0: i32) -> (i32, i32, i32) {
    %c0_i32 = arith.constant 0 : i32
    %c0_i32_0 = arith.constant 0 : i32
    %c0_i32_1 = arith.constant 0 : i32
    return %arg0, %c0_i32, %c0_i32_0 : i32, i32, i32
  }
  func.func @transform_1(%arg0: i32) -> (i32, i32) {
    %c0_i32 = arith.constant 0 : i32
    %c0_i32_0 = arith.constant 0 : i32
    %c0_i32_1 = arith.constant 0 : i32
    return %c0_i32, %c0_i32_0 : i32, i32
  }
  func.func @transform_2(%arg0: i32) -> (i32, i32) {
    %c0_i32 = arith.constant 0 : i32
    %c0_i32_0 = arith.constant 0 : i32
    %c0_i32_1 = arith.constant 0 : i32
    return %c0_i32, %c0_i32_0 : i32, i32
  }
  func.func @transform_3(%arg0: i32) -> (i32, i32) {
    %c0_i32 = arith.constant 0 : i32
    %c0_i32_0 = arith.constant 0 : i32
    return %arg0, %c0_i32 : i32, i32
  }
}

module attributes {stable_mosaic.version = 11 : i64} {
  func.func @_linear_kernel(%arg0: i32, %arg1: memref<16x128xbf16, #tpu.memory_space<vmem>>, %arg2: memref<128x128xbf16, #tpu.memory_space<vmem>>, %arg3: memref<1x128xf32, #tpu.memory_space<vmem>>, %arg4: memref<16x128xbf16, #tpu.memory_space<vmem>>) attributes {dimension_semantics = [#tpu.dimension_semantics<parallel>], iteration_bounds = array<i64: 1>, scalar_prefetch = 0 : i64, scratch_operands = 0 : i64, tpu.core_type = #tpu.core_type<tc>, window_params = [{transform_indices = @transform_0, window_bounds = array<i64: 16, 128>}, {pipeline_mode = #tpu.pipeline_mode<synchronous>, transform_indices = @transform_1, window_bounds = array<i64: 128, 128>}, {pipeline_mode = #tpu.pipeline_mode<synchronous>, transform_indices = @transform_2, window_bounds = array<i64: 1, 128>}, {transform_indices = @transform_3, window_bounds = array<i64: 16, 128>}]} {
    %c0 = arith.constant 0 : index
    %c0_0 = arith.constant 0 : index
    %0 = vector.load %arg1[%c0, %c0_0] : memref<16x128xbf16, #tpu.memory_space<vmem>>, vector<16x128xbf16>
    %c0_1 = arith.constant 0 : index
    %c0_2 = arith.constant 0 : index
    %1 = vector.load %arg2[%c0_1, %c0_2] : memref<128x128xbf16, #tpu.memory_space<vmem>>, vector<128x128xbf16>
    %cst = arith.constant dense<0.000000e+00> : vector<16x128xf32>
    %2 = tpu.matmul %0, %1, %cst {dimension_numbers = #tpu.dot_dimension_numbers<[1], [0], [0], [1], [0, 0, 1, 1], [], []>} : vector<16x128xbf16>, vector<128x128xbf16>, vector<16x128xf32> -> vector<16x128xf32>
    %c0_3 = arith.constant 0 : index
    %c0_4 = arith.constant 0 : index
    %3 = vector.load %arg3[%c0_3, %c0_4] : memref<1x128xf32, #tpu.memory_space<vmem>>, vector<1x128xf32>
    %4 = vector.broadcast %3 : vector<1x128xf32> to vector<16x128xf32>
    %5 = arith.addf %2, %4 : vector<16x128xf32>
    %cst_5 = arith.constant 0.000000e+00 : f32
    %6 = vector.broadcast %cst_5 : f32 to vector<16x128xf32>
    %7 = arith.maximumf %5, %6 : vector<16x128xf32>
    %8 = arith.truncf %7 : vector<16x128xf32> to vector<16x128xbf16>
    %c0_6 = arith.constant 0 : index
    %c0_7 = arith.constant 0 : index
    %9 = vector.load %arg4[%c0_6, %c0_7] : memref<16x128xbf16, #tpu.memory_space<vmem>>, vector<16x128xbf16>
    tpu.vector_store %arg4[%c0_6, %c0_7], %8 {strides = array<i32>} : memref<16x128xbf16, #tpu.memory_space<vmem>>, vector<16x128xbf16>,
    return
  }
  func.func @transform_0(%arg0: i32) -> (i32, i32) {
    %c0_i32 = arith.constant 0 : i32
    %c0_i32_0 = arith.constant 0 : i32
    return %arg0, %c0_i32 : i32, i32
  }
  func.func @transform_1(%arg0: i32) -> (i32, i32) {
    %c0_i32 = arith.constant 0 : i32
    %c0_i32_0 = arith.constant 0 : i32
    %c0_i32_1 = arith.constant 0 : i32
    return %c0_i32, %c0_i32_0 : i32, i32
  }
  func.func @transform_2(%arg0: i32) -> (i32, i32) {
    %c0_i32 = arith.constant 0 : i32
    %c0_i32_0 = arith.constant 0 : i32
    %c0_i32_1 = arith.constant 0 : i32
    return %c0_i32, %c0_i32_0 : i32, i32
  }
  func.func @transform_3(%arg0: i32) -> (i32, i32) {
    %c0_i32 = arith.constant 0 : i32
    %c0_i32_0 = arith.constant 0 : i32
    return %arg0, %c0_i32 : i32, i32
  }
}

module attributes {stable_mosaic.version = 11 : i64} {
  func.func @_linear_kernel(%arg0: i32, %arg1: memref<16x128xbf16, #tpu.memory_space<vmem>>, %arg2: memref<128x384xbf16, #tpu.memory_space<vmem>>, %arg3: memref<1x384xf32, #tpu.memory_space<vmem>>, %arg4: memref<16x384xbf16, #tpu.memory_space<vmem>>) attributes {dimension_semantics = [#tpu.dimension_semantics<parallel>], iteration_bounds = array<i64: 1>, scalar_prefetch = 0 : i64, scratch_operands = 0 : i64, tpu.core_type = #tpu.core_type<tc>, window_params = [{transform_indices = @transform_0, window_bounds = array<i64: 16, 128>}, {pipeline_mode = #tpu.pipeline_mode<synchronous>, transform_indices = @transform_1, window_bounds = array<i64: 128, 384>}, {pipeline_mode = #tpu.pipeline_mode<synchronous>, transform_indices = @transform_2, window_bounds = array<i64: 1, 384>}, {transform_indices = @transform_3, window_bounds = array<i64: 16, 384>}]} {
    %c0 = arith.constant 0 : index
    %c0_0 = arith.constant 0 : index
    %0 = vector.load %arg1[%c0, %c0_0] : memref<16x128xbf16, #tpu.memory_space<vmem>>, vector<16x128xbf16>
    %c0_1 = arith.constant 0 : index
    %c0_2 = arith.constant 0 : index
    %1 = vector.load %arg2[%c0_1, %c0_2] : memref<128x384xbf16, #tpu.memory_space<vmem>>, vector<128x384xbf16>
    %cst = arith.constant dense<0.000000e+00> : vector<16x384xf32>
    %2 = tpu.matmul %0, %1, %cst {dimension_numbers = #tpu.dot_dimension_numbers<[1], [0], [0], [1], [0, 0, 1, 1], [], []>} : vector<16x128xbf16>, vector<128x384xbf16>, vector<16x384xf32> -> vector<16x384xf32>
    %c0_3 = arith.constant 0 : index
    %c0_4 = arith.constant 0 : index
    %3 = vector.load %arg3[%c0_3, %c0_4] : memref<1x384xf32, #tpu.memory_space<vmem>>, vector<1x384xf32>
    %4 = vector.broadcast %3 : vector<1x384xf32> to vector<16x384xf32>
    %5 = arith.addf %2, %4 : vector<16x384xf32>
    %6 = arith.truncf %5 : vector<16x384xf32> to vector<16x384xbf16>
    %c0_5 = arith.constant 0 : index
    %c0_6 = arith.constant 0 : index
    %7 = vector.load %arg4[%c0_5, %c0_6] : memref<16x384xbf16, #tpu.memory_space<vmem>>, vector<16x384xbf16>
    tpu.vector_store %arg4[%c0_5, %c0_6], %6 {strides = array<i32>} : memref<16x384xbf16, #tpu.memory_space<vmem>>, vector<16x384xbf16>,
    return
  }
  func.func @transform_0(%arg0: i32) -> (i32, i32) {
    %c0_i32 = arith.constant 0 : i32
    %c0_i32_0 = arith.constant 0 : i32
    return %arg0, %c0_i32 : i32, i32
  }
  func.func @transform_1(%arg0: i32) -> (i32, i32) {
    %c0_i32 = arith.constant 0 : i32
    %c0_i32_0 = arith.constant 0 : i32
    %c0_i32_1 = arith.constant 0 : i32
    return %c0_i32, %c0_i32_0 : i32, i32
  }
  func.func @transform_2(%arg0: i32) -> (i32, i32) {
    %c0_i32 = arith.constant 0 : i32
    %c0_i32_0 = arith.constant 0 : i32
    %c0_i32_1 = arith.constant 0 : i32
    return %c0_i32, %c0_i32_0 : i32, i32
  }
  func.func @transform_3(%arg0: i32) -> (i32, i32) {
    %c0_i32 = arith.constant 0 : i32
    %c0_i32_0 = arith.constant 0 : i32
    return %arg0, %c0_i32 : i32, i32
  }
}

module attributes {stable_mosaic.version = 11 : i64} {
  func.func @_linear_kernel(%arg0: i32, %arg1: memref<16x128xbf16, #tpu.memory_space<vmem>>, %arg2: memref<128x128xbf16, #tpu.memory_space<vmem>>, %arg3: memref<1x128xf32, #tpu.memory_space<vmem>>, %arg4: memref<16x128xbf16, #tpu.memory_space<vmem>>, %arg5: memref<8x128xf32, #tpu.memory_space<vmem>>) attributes {dimension_semantics = [#tpu.dimension_semantics<arbitrary>], iteration_bounds = array<i64: 1>, scalar_prefetch = 0 : i64, scratch_operands = 0 : i64, tpu.core_type = #tpu.core_type<tc>, window_params = [{transform_indices = @transform_0, window_bounds = array<i64: 16, 128>}, {pipeline_mode = #tpu.pipeline_mode<synchronous>, transform_indices = @transform_1, window_bounds = array<i64: 128, 128>}, {pipeline_mode = #tpu.pipeline_mode<synchronous>, transform_indices = @transform_2, window_bounds = array<i64: 1, 128>}, {transform_indices = @transform_3, window_bounds = array<i64: 16, 128>}, {pipeline_mode = #tpu.pipeline_mode<synchronous>, transform_indices = @transform_4, window_bounds = array<i64: 8, 128>}]} {
    %c0 = arith.constant 0 : index
    %c0_0 = arith.constant 0 : index
    %0 = vector.load %arg1[%c0, %c0_0] : memref<16x128xbf16, #tpu.memory_space<vmem>>, vector<16x128xbf16>
    %c0_1 = arith.constant 0 : index
    %c0_2 = arith.constant 0 : index
    %1 = vector.load %arg2[%c0_1, %c0_2] : memref<128x128xbf16, #tpu.memory_space<vmem>>, vector<128x128xbf16>
    %cst = arith.constant dense<0.000000e+00> : vector<16x128xf32>
    %2 = tpu.matmul %0, %1, %cst {dimension_numbers = #tpu.dot_dimension_numbers<[1], [0], [0], [1], [0, 0, 1, 1], [], []>} : vector<16x128xbf16>, vector<128x128xbf16>, vector<16x128xf32> -> vector<16x128xf32>
    %c0_3 = arith.constant 0 : index
    %c0_4 = arith.constant 0 : index
    %3 = vector.load %arg3[%c0_3, %c0_4] : memref<1x128xf32, #tpu.memory_space<vmem>>, vector<1x128xf32>
    %4 = vector.broadcast %3 : vector<1x128xf32> to vector<16x128xf32>
    %5 = arith.addf %2, %4 : vector<16x128xf32>
    %c16_i32 = arith.constant 16 : i32
    %6 = arith.muli %arg0, %c16_i32 : i32
    %7 = tpu.iota {dimensions = array<i32: 0>} : vector<16x128xi32>
    %8 = vector.broadcast %6 : i32 to vector<16x128xi32>
    %9 = arith.addi %7, %8 : vector<16x128xi32>
    %c16_i32_5 = arith.constant 16 : i32
    %10 = vector.broadcast %c16_i32_5 : i32 to vector<16x128xi32>
    %11 = arith.cmpi slt, %9, %10 : vector<16x128xi32>
    %cst_6 = arith.constant 0.000000e+00 : f32
    %12 = vector.broadcast %cst_6 : f32 to vector<16x128xf32>
    %13 = arith.select %11, %5, %12 : vector<16x128xi1>, vector<16x128xf32>
    %cst_7 = arith.constant dense<0.000000e+00> : vector<128xf32>
    %14 = vector.multi_reduction <add>, %13, %cst_7 [0] : vector<16x128xf32> to vector<128xf32>
    %15 = vector.shape_cast %14 : vector<128xf32> to vector<1x128xf32>
    %16 = arith.mulf %13, %13 : vector<16x128xf32>
    %cst_8 = arith.constant dense<0.000000e+00> : vector<128xf32>
    %17 = vector.multi_reduction <add>, %16, %cst_8 [0] : vector<16x128xf32> to vector<128xf32>
    %18 = vector.shape_cast %17 : vector<128xf32> to vector<1x128xf32>
    %19 = tpu.iota {dimensions = array<i32: 0>} : vector<8x128xi32>
    %c0_i32 = arith.constant 0 : i32
    %20 = vector.broadcast %c0_i32 : i32 to vector<8x128xi32>
    %21 = arith.cmpi eq, %19, %20 : vector<8x128xi32>
    %cst_9 = arith.constant 0.000000e+00 : f32
    %22 = vector.shape_cast %15 : vector<1x128xf32> to vector<1x128xf32>
    %23 = vector.broadcast %22 : vector<1x128xf32> to vector<8x128xf32>
    %24 = vector.broadcast %cst_9 : f32 to vector<8x128xf32>
    %25 = arith.select %21, %23, %24 : vector<8x128xi1>, vector<8x128xf32>
    %c1_i32 = arith.constant 1 : i32
    %26 = vector.broadcast %c1_i32 : i32 to vector<8x128xi32>
    %27 = arith.cmpi eq, %19, %26 : vector<8x128xi32>
    %cst_10 = arith.constant 0.000000e+00 : f32
    %28 = vector.shape_cast %18 : vector<1x128xf32> to vector<1x128xf32>
    %29 = vector.broadcast %28 : vector<1x128xf32> to vector<8x128xf32>
    %30 = vector.broadcast %cst_10 : f32 to vector<8x128xf32>
    %31 = arith.select %27, %29, %30 : vector<8x128xi1>, vector<8x128xf32>
    %32 = arith.addf %25, %31 : vector<8x128xf32>
    %c0_i32_11 = arith.constant 0 : i32
    %33 = arith.cmpi eq, %arg0, %c0_i32_11 : i32
    %34 = arith.extui %33 : i1 to i32
    %c0_i32_12 = arith.constant 0 : i32
    %35 = arith.cmpi ne, %34, %c0_i32_12 : i32
    scf.if %35 {
      %cst_19 = arith.constant 0.000000e+00 : f32
      %41 = vector.broadcast %cst_19 : f32 to vector<8x128xf32>
      %c0_20 = arith.constant 0 : index
      %c0_21 = arith.constant 0 : index
      %42 = vector.load %arg5[%c0_20, %c0_21] : memref<8x128xf32, #tpu.memory_space<vmem>>, vector<8x128xf32>
      tpu.vector_store %arg5[%c0_20, %c0_21], %41 {strides = array<i32>} : memref<8x128xf32, #tpu.memory_space<vmem>>, vector<8x128xf32>,
    } else {
    }
    %c0_13 = arith.constant 0 : index
    %c0_14 = arith.constant 0 : index
    %36 = vector.load %arg5[%c0_13, %c0_14] : memref<8x128xf32, #tpu.memory_space<vmem>>, vector<8x128xf32>
    %37 = arith.addf %36, %32 : vector<8x128xf32>
    %c0_15 = arith.constant 0 : index
    %c0_16 = arith.constant 0 : index
    %38 = vector.load %arg5[%c0_15, %c0_16] : memref<8x128xf32, #tpu.memory_space<vmem>>, vector<8x128xf32>
    tpu.vector_store %arg5[%c0_15, %c0_16], %37 {strides = array<i32>} : memref<8x128xf32, #tpu.memory_space<vmem>>, vector<8x128xf32>,
    %39 = arith.truncf %5 : vector<16x128xf32> to vector<16x128xbf16>
    %c0_17 = arith.constant 0 : index
    %c0_18 = arith.constant 0 : index
    %40 = vector.load %arg4[%c0_17, %c0_18] : memref<16x128xbf16, #tpu.memory_space<vmem>>, vector<16x128xbf16>
    tpu.vector_store %arg4[%c0_17, %c0_18], %39 {strides = array<i32>} : memref<16x128xbf16, #tpu.memory_space<vmem>>, vector<16x128xbf16>,
    return
  }
  func.func @transform_0(%arg0: i32) -> (i32, i32) {
    %c0_i32 = arith.constant 0 : i32
    %c0_i32_0 = arith.constant 0 : i32
    return %arg0, %c0_i32 : i32, i32
  }
  func.func @transform_1(%arg0: i32) -> (i32, i32) {
    %c0_i32 = arith.constant 0 : i32
    %c0_i32_0 = arith.constant 0 : i32
    %c0_i32_1 = arith.constant 0 : i32
    return %c0_i32, %c0_i32_0 : i32, i32
  }
  func.func @transform_2(%arg0: i32) -> (i32, i32) {
    %c0_i32 = arith.constant 0 : i32
    %c0_i32_0 = arith.constant 0 : i32
    %c0_i32_1 = arith.constant 0 : i32
    return %c0_i32, %c0_i32_0 : i32, i32
  }
  func.func @transform_3(%arg0: i32) -> (i32, i32) {
    %c0_i32 = arith.constant 0 : i32
    %c0_i32_0 = arith.constant 0 : i32
    return %arg0, %c0_i32 : i32, i32
  }
  func.func @transform_4(%arg0: i32) -> (i32, i32) {
    %c0_i32 = arith.constant 0 : i32
    %c0_i32_0 = arith.constant 0 : i32
    %c0_i32_1 = arith.constant 0 : i32
    return %c0_i32, %c0_i32_0 : i32, i32
  }
}

module attributes {stable_mosaic.version = 11 : i64} {
  func.func @_linear_kernel(%arg0: i32, %arg1: memref<16x8xf32, #tpu.memory_space<vmem>>, %arg2: memref<8x128xbf16, #tpu.memory_space<vmem>>, %arg3: memref<1x128xf32, #tpu.memory_space<vmem>>, %arg4: memref<16x128xbf16, #tpu.memory_space<vmem>>) attributes {dimension_semantics = [#tpu.dimension_semantics<parallel>], iteration_bounds = array<i64: 1>, scalar_prefetch = 0 : i64, scratch_operands = 0 : i64, tpu.core_type = #tpu.core_type<tc>, window_params = [{transform_indices = @transform_0, window_bounds = array<i64: 16, 8>}, {pipeline_mode = #tpu.pipeline_mode<synchronous>, transform_indices = @transform_1, window_bounds = array<i64: 8, 128>}, {pipeline_mode = #tpu.pipeline_mode<synchronous>, transform_indices = @transform_2, window_bounds = array<i64: 1, 128>}, {transform_indices = @transform_3, window_bounds = array<i64: 16, 128>}]} {
    %c0 = arith.constant 0 : index
    %c0_0 = arith.constant 0 : index
    %0 = vector.load %arg1[%c0, %c0_0] : memref<16x8xf32, #tpu.memory_space<vmem>>, vector<16x8xf32>
    %1 = arith.truncf %0 : vector<16x8xf32> to vector<16x8xbf16>
    %c0_1 = arith.constant 0 : index
    %c0_2 = arith.constant 0 : index
    %2 = vector.load %arg2[%c0_1, %c0_2] : memref<8x128xbf16, #tpu.memory_space<vmem>>, vector<8x128xbf16>
    %cst = arith.constant dense<0.000000e+00> : vector<16x128xf32>
    %3 = tpu.matmul %1, %2, %cst {dimension_numbers = #tpu.dot_dimension_numbers<[1], [0], [0], [1], [0, 0, 1, 1], [], []>} : vector<16x8xbf16>, vector<8x128xbf16>, vector<16x128xf32> -> vector<16x128xf32>
    %c0_3 = arith.constant 0 : index
    %c0_4 = arith.constant 0 : index
    %4 = vector.load %arg3[%c0_3, %c0_4] : memref<1x128xf32, #tpu.memory_space<vmem>>, vector<1x128xf32>
    %5 = vector.broadcast %4 : vector<1x128xf32> to vector<16x128xf32>
    %6 = arith.addf %3, %5 : vector<16x128xf32>
    %7 = arith.truncf %6 : vector<16x128xf32> to vector<16x128xbf16>
    %c0_5 = arith.constant 0 : index
    %c0_6 = arith.constant 0 : index
    %8 = vector.load %arg4[%c0_5, %c0_6] : memref<16x128xbf16, #tpu.memory_space<vmem>>, vector<16x128xbf16>
    tpu.vector_store %arg4[%c0_5, %c0_6], %7 {strides = array<i32>} : memref<16x128xbf16, #tpu.memory_space<vmem>>, vector<16x128xbf16>,
    return
  }
  func.func @transform_0(%arg0: i32) -> (i32, i32) {
    %c0_i32 = arith.constant 0 : i32
    %c0_i32_0 = arith.constant 0 : i32
    return %arg0, %c0_i32 : i32, i32
  }
  func.func @transform_1(%arg0: i32) -> (i32, i32) {
    %c0_i32 = arith.constant 0 : i32
    %c0_i32_0 = arith.constant 0 : i32
    %c0_i32_1 = arith.constant 0 : i32
    return %c0_i32, %c0_i32_0 : i32, i32
  }
  func.func @transform_2(%arg0: i32) -> (i32, i32) {
    %c0_i32 = arith.constant 0 : i32
    %c0_i32_0 = arith.constant 0 : i32
    %c0_i32_1 = arith.constant 0 : i32
    return %c0_i32, %c0_i32_0 : i32, i32
  }
  func.func @transform_3(%arg0: i32) -> (i32, i32) {
    %c0_i32 = arith.constant 0 : i32
    %c0_i32_0 = arith.constant 0 : i32
    return %arg0, %c0_i32 : i32, i32
  }
}

module attributes {stable_mosaic.version = 11 : i64} {
  func.func @_edge_attn_kernel(%arg0: i32, %arg1: memref<16x8x128xbf16, #tpu.memory_space<vmem>>, %arg2: memref<16x8x128xbf16, #tpu.memory_space<vmem>>, %arg3: memref<16x8x128xbf16, #tpu.memory_space<vmem>>, %arg4: memref<1x128xf32, #tpu.memory_space<vmem>>, %arg5: memref<128x128xbf16, #tpu.memory_space<vmem>>, %arg6: memref<1x128xf32, #tpu.memory_space<vmem>>, %arg7: memref<128x128xbf16, #tpu.memory_space<vmem>>, %arg8: memref<1x128xf32, #tpu.memory_space<vmem>>, %arg9: memref<128x128xbf16, #tpu.memory_space<vmem>>, %arg10: memref<1x128xf32, #tpu.memory_space<vmem>>, %arg11: memref<16x128xbf16, #tpu.memory_space<vmem>>) attributes {dimension_semantics = [#tpu.dimension_semantics<parallel>], iteration_bounds = array<i64: 1>, scalar_prefetch = 0 : i64, scratch_operands = 0 : i64, tpu.core_type = #tpu.core_type<tc>, window_params = [{transform_indices = @transform_0, window_bounds = array<i64: 16, 8, 128>}, {transform_indices = @transform_1, window_bounds = array<i64: 16, 8, 128>}, {transform_indices = @transform_2, window_bounds = array<i64: 16, 8, 128>}, {pipeline_mode = #tpu.pipeline_mode<synchronous>, transform_indices = @transform_3, window_bounds = array<i64: 1, 128>}, {pipeline_mode = #tpu.pipeline_mode<synchronous>, transform_indices = @transform_4, window_bounds = array<i64: 128, 128>}, {pipeline_mode = #tpu.pipeline_mode<synchronous>, transform_indices = @transform_5, window_bounds = array<i64: 1, 128>}, {pipeline_mode = #tpu.pipeline_mode<synchronous>, transform_indices = @transform_6, window_bounds = array<i64: 128, 128>}, {pipeline_mode = #tpu.pipeline_mode<synchronous>, transform_indices = @transform_7, window_bounds = array<i64: 1, 128>}, {pipeline_mode = #tpu.pipeline_mode<synchronous>, transform_indices = @transform_8, window_bounds = array<i64: 128, 128>}, {pipeline_mode = #tpu.pipeline_mode<synchronous>, transform_indices = @transform_9, window_bounds = array<i64: 1, 128>}, {transform_indices = @transform_10, window_bounds = array<i64: 16, 128>}]} {
    %c0 = arith.constant 0 : index
    %c0_0 = arith.constant 0 : index
    %c0_1 = arith.constant 0 : index
    %0 = vector.load %arg1[%c0, %c0_0, %c0_1] : memref<16x8x128xbf16, #tpu.memory_space<vmem>>, vector<16x8x128xbf16>
    %1 = arith.extf %0 : vector<16x8x128xbf16> to vector<16x8x128xf32>
    %2 = vector.shape_cast %1 : vector<16x8x128xf32> to vector<128x128xf32>
    %c0_2 = arith.constant 0 : index
    %c0_3 = arith.constant 0 : index
    %3 = vector.load %arg4[%c0_2, %c0_3] : memref<1x128xf32, #tpu.memory_space<vmem>>, vector<1x128xf32>
    %4 = vector.broadcast %3 : vector<1x128xf32> to vector<128x128xf32>
    %5 = arith.addf %2, %4 : vector<128x128xf32>
    %cst = arith.constant 0.000000e+00 : f32
    %6 = vector.broadcast %cst : f32 to vector<128x128xf32>
    %7 = arith.maximumf %5, %6 : vector<128x128xf32>
    %8 = arith.truncf %7 : vector<128x128xf32> to vector<128x128xbf16>
    %c0_4 = arith.constant 0 : index
    %c0_5 = arith.constant 0 : index
    %9 = vector.load %arg5[%c0_4, %c0_5] : memref<128x128xbf16, #tpu.memory_space<vmem>>, vector<128x128xbf16>
    %cst_6 = arith.constant dense<0.000000e+00> : vector<128x128xf32>
    %10 = tpu.matmul %8, %9, %cst_6 {dimension_numbers = #tpu.dot_dimension_numbers<[1], [0], [0], [1], [0, 0, 1, 1], [], []>} : vector<128x128xbf16>, vector<128x128xbf16>, vector<128x128xf32> -> vector<128x128xf32>
    %c0_7 = arith.constant 0 : index
    %c0_8 = arith.constant 0 : index
    %11 = vector.load %arg6[%c0_7, %c0_8] : memref<1x128xf32, #tpu.memory_space<vmem>>, vector<1x128xf32>
    %12 = vector.broadcast %11 : vector<1x128xf32> to vector<128x128xf32>
    %13 = arith.addf %10, %12 : vector<128x128xf32>
    %cst_9 = arith.constant 0.000000e+00 : f32
    %14 = vector.broadcast %cst_9 : f32 to vector<128x128xf32>
    %15 = arith.maximumf %13, %14 : vector<128x128xf32>
    %c0_10 = arith.constant 0 : index
    %c0_11 = arith.constant 0 : index
    %c0_12 = arith.constant 0 : index
    %16 = vector.load %arg2[%c0_10, %c0_11, %c0_12] : memref<16x8x128xbf16, #tpu.memory_space<vmem>>, vector<16x8x128xbf16>
    %17 = arith.extf %16 : vector<16x8x128xbf16> to vector<16x8x128xf32>
    %18 = vector.shape_cast %17 : vector<16x8x128xf32> to vector<128x128xf32>
    %19 = arith.addf %18, %15 : vector<128x128xf32>
    %20 = arith.truncf %19 : vector<128x128xf32> to vector<128x128xbf16>
    %c0_13 = arith.constant 0 : index
    %c0_14 = arith.constant 0 : index
    %21 = vector.load %arg7[%c0_13, %c0_14] : memref<128x128xbf16, #tpu.memory_space<vmem>>, vector<128x128xbf16>
    %cst_15 = arith.constant dense<0.000000e+00> : vector<128x128xf32>
    %22 = tpu.matmul %20, %21, %cst_15 {dimension_numbers = #tpu.dot_dimension_numbers<[1], [0], [0], [1], [0, 0, 1, 1], [], []>} : vector<128x128xbf16>, vector<128x128xbf16>, vector<128x128xf32> -> vector<128x128xf32>
    %c0_16 = arith.constant 0 : index
    %c0_17 = arith.constant 0 : index
    %23 = vector.load %arg8[%c0_16, %c0_17] : memref<1x128xf32, #tpu.memory_space<vmem>>, vector<1x128xf32>
    %24 = vector.broadcast %23 : vector<1x128xf32> to vector<128x128xf32>
    %25 = arith.addf %22, %24 : vector<128x128xf32>
    %cst_18 = arith.constant 0.000000e+00 : f32
    %26 = vector.broadcast %cst_18 : f32 to vector<128x128xf32>
    %27 = arith.maximumf %25, %26 : vector<128x128xf32>
    %28 = arith.truncf %27 : vector<128x128xf32> to vector<128x128xbf16>
    %c0_19 = arith.constant 0 : index
    %c0_20 = arith.constant 0 : index
    %29 = vector.load %arg9[%c0_19, %c0_20] : memref<128x128xbf16, #tpu.memory_space<vmem>>, vector<128x128xbf16>
    %cst_21 = arith.constant dense<0.000000e+00> : vector<128x128xf32>
    %30 = tpu.matmul %28, %29, %cst_21 {dimension_numbers = #tpu.dot_dimension_numbers<[1], [0], [0], [1], [0, 0, 1, 1], [], []>} : vector<128x128xbf16>, vector<128x128xbf16>, vector<128x128xf32> -> vector<128x128xf32>
    %c0_22 = arith.constant 0 : index
    %c0_23 = arith.constant 0 : index
    %31 = vector.load %arg10[%c0_22, %c0_23] : memref<1x128xf32, #tpu.memory_space<vmem>>, vector<1x128xf32>
    %32 = vector.broadcast %31 : vector<1x128xf32> to vector<128x128xf32>
    %33 = arith.addf %30, %32 : vector<128x128xf32>
    %cst_24 = arith.constant 0.000000e+00 : f32
    %34 = vector.broadcast %cst_24 : f32 to vector<128x128xf32>
    %35 = arith.maximumf %33, %34 : vector<128x128xf32>
    %36 = vector.shape_cast %35 : vector<128x128xf32> to vector<16x8x128xf32>
    %c0_25 = arith.constant 0 : index
    %c0_26 = arith.constant 0 : index
    %c0_27 = arith.constant 0 : index
    %37 = vector.load %arg3[%c0_25, %c0_26, %c0_27] : memref<16x8x128xbf16, #tpu.memory_space<vmem>>, vector<16x8x128xbf16>
    %38 = arith.extf %37 : vector<16x8x128xbf16> to vector<16x8x128xf32>
    %39 = vector.shape_cast %38 : vector<16x8x128xf32> to vector<128x128xf32>
    %40 = arith.addf %39, %15 : vector<128x128xf32>
    %41 = vector.shape_cast %40 : vector<128x128xf32> to vector<16x8x128xf32>
    %42 = tpu.iota {dimensions = array<i32: 0>} : vector<8x128xi32>
    %c5_i32 = arith.constant 5 : i32
    %43 = vector.broadcast %c5_i32 : i32 to vector<8x128xi32>
    %44 = arith.cmpi slt, %42, %43 : vector<8x128xi32>
    %45 = vector.shape_cast %44 : vector<8x128xi1> to vector<1x8x128xi1>
    %cst_28 = arith.constant -1.000000e+30 : f32
    %46 = vector.shape_cast %45 : vector<1x8x128xi1> to vector<1x8x128xi1>
    %47 = vector.broadcast %46 : vector<1x8x128xi1> to vector<16x8x128xi1>
    %48 = vector.broadcast %cst_28 : f32 to vector<16x8x128xf32>
    %49 = arith.select %47, %36, %48 : vector<16x8x128xi1>, vector<16x8x128xf32>
    %cst_29 = arith.constant dense<0xFF800000> : vector<16x128xf32>
    %50 = vector.multi_reduction <maximumf>, %49, %cst_29 [1] : vector<16x8x128xf32> to vector<16x128xf32>
    %51 = vector.shape_cast %50 : vector<16x128xf32> to vector<16x1x128xf32>
    %52 = vector.broadcast %51 : vector<16x1x128xf32> to vector<16x8x128xf32>
    %53 = arith.subf %49, %52 : vector<16x8x128xf32>
    %54 = math.exp %53 : vector<16x8x128xf32>
    %cst_30 = arith.constant dense<0.000000e+00> : vector<16x128xf32>
    %55 = vector.multi_reduction <add>, %54, %cst_30 [1] : vector<16x8x128xf32> to vector<16x128xf32>
    %56 = vector.shape_cast %55 : vector<16x128xf32> to vector<16x1x128xf32>
    %57 = tpu.reciprocal %56 {approx = true} : vector<16x1x128xf32> -> vector<16x1x128xf32>
    %58 = vector.broadcast %57 : vector<16x1x128xf32> to vector<16x8x128xf32>
    %59 = arith.mulf %54, %58 : vector<16x8x128xf32>
    %60 = arith.mulf %59, %41 : vector<16x8x128xf32>
    %cst_31 = arith.constant dense<0.000000e+00> : vector<16x128xf32>
    %61 = vector.multi_reduction <add>, %60, %cst_31 [1] : vector<16x8x128xf32> to vector<16x128xf32>
    %62 = arith.truncf %61 : vector<16x128xf32> to vector<16x128xbf16>
    %c0_32 = arith.constant 0 : index
    %c0_33 = arith.constant 0 : index
    %63 = vector.load %arg11[%c0_32, %c0_33] : memref<16x128xbf16, #tpu.memory_space<vmem>>, vector<16x128xbf16>
    tpu.vector_store %arg11[%c0_32, %c0_33], %62 {strides = array<i32>} : memref<16x128xbf16, #tpu.memory_space<vmem>>, vector<16x128xbf16>,
    return
  }
  func.func @transform_0(%arg0: i32) -> (i32, i32, i32) {
    %c0_i32 = arith.constant 0 : i32
    %c0_i32_0 = arith.constant 0 : i32
    %c0_i32_1 = arith.constant 0 : i32
    return %arg0, %c0_i32, %c0_i32_0 : i32, i32, i32
  }
  func.func @transform_1(%arg0: i32) -> (i32, i32, i32) {
    %c0_i32 = arith.constant 0 : i32
    %c0_i32_0 = arith.constant 0 : i32
    %c0_i32_1 = arith.constant 0 : i32
    return %arg0, %c0_i32, %c0_i32_0 : i32, i32, i32
  }
  func.func @transform_2(%arg0: i32) -> (i32, i32, i32) {
    %c0_i32 = arith.constant 0 : i32
    %c0_i32_0 = arith.constant 0 : i32
    %c0_i32_1 = arith.constant 0 : i32
    return %arg0, %c0_i32, %c0_i32_0 : i32, i32, i32
  }
  func.func @transform_3(%arg0: i32) -> (i32, i32) {
    %c0_i32 = arith.constant 0 : i32
    %c0_i32_0 = arith.constant 0 : i32
    %c0_i32_1 = arith.constant 0 : i32
    return %c0_i32, %c0_i32_0 : i32, i32
  }
  func.func @transform_4(%arg0: i32) -> (i32, i32) {
    %c0_i32 = arith.constant 0 : i32
    %c0_i32_0 = arith.constant 0 : i32
    %c0_i32_1 = arith.constant 0 : i32
    return %c0_i32, %c0_i32_0 : i32, i32
  }
  func.func @transform_5(%arg0: i32) -> (i32, i32) {
    %c0_i32 = arith.constant 0 : i32
    %c0_i32_0 = arith.constant 0 : i32
    %c0_i32_1 = arith.constant 0 : i32
    return %c0_i32, %c0_i32_0 : i32, i32
  }
  func.func @transform_6(%arg0: i32) -> (i32, i32) {
    %c0_i32 = arith.constant 0 : i32
    %c0_i32_0 = arith.constant 0 : i32
    %c0_i32_1 = arith.constant 0 : i32
    return %c0_i32, %c0_i32_0 : i32, i32
  }
  func.func @transform_7(%arg0: i32) -> (i32, i32) {
    %c0_i32 = arith.constant 0 : i32
    %c0_i32_0 = arith.constant 0 : i32
    %c0_i32_1 = arith.constant 0 : i32
    return %c0_i32, %c0_i32_0 : i32, i32
  }
  func.func @transform_8(%arg0: i32) -> (i32, i32) {
    %c0_i32 = arith.constant 0 : i32
    %c0_i32_0 = arith.constant 0 : i32
    %c0_i32_1 = arith.constant 0 : i32
    return %c0_i32, %c0_i32_0 : i32, i32
  }
  func.func @transform_9(%arg0: i32) -> (i32, i32) {
    %c0_i32 = arith.constant 0 : i32
    %c0_i32_0 = arith.constant 0 : i32
    %c0_i32_1 = arith.constant 0 : i32
    return %c0_i32, %c0_i32_0 : i32, i32
  }
  func.func @transform_10(%arg0: i32) -> (i32, i32) {
    %c0_i32 = arith.constant 0 : i32
    %c0_i32_0 = arith.constant 0 : i32
    return %arg0, %c0_i32 : i32, i32
  }
}

module attributes {stable_mosaic.version = 11 : i64} {
  func.func @_bn_relu_kernel(%arg0: i32, %arg1: memref<16x128xbf16, #tpu.memory_space<vmem>>, %arg2: memref<1x128xf32, #tpu.memory_space<vmem>>, %arg3: memref<1x128xf32, #tpu.memory_space<vmem>>, %arg4: memref<16x128xbf16, #tpu.memory_space<vmem>>) attributes {dimension_semantics = [#tpu.dimension_semantics<parallel>], iteration_bounds = array<i64: 1>, scalar_prefetch = 0 : i64, scratch_operands = 0 : i64, tpu.core_type = #tpu.core_type<tc>, window_params = [{transform_indices = @transform_0, window_bounds = array<i64: 16, 128>}, {pipeline_mode = #tpu.pipeline_mode<synchronous>, transform_indices = @transform_1, window_bounds = array<i64: 1, 128>}, {pipeline_mode = #tpu.pipeline_mode<synchronous>, transform_indices = @transform_2, window_bounds = array<i64: 1, 128>}, {transform_indices = @transform_3, window_bounds = array<i64: 16, 128>}]} {
    %c0 = arith.constant 0 : index
    %c0_0 = arith.constant 0 : index
    %0 = vector.load %arg1[%c0, %c0_0] : memref<16x128xbf16, #tpu.memory_space<vmem>>, vector<16x128xbf16>
    %1 = arith.extf %0 : vector<16x128xbf16> to vector<16x128xf32>
    %c0_1 = arith.constant 0 : index
    %c0_2 = arith.constant 0 : index
    %2 = vector.load %arg2[%c0_1, %c0_2] : memref<1x128xf32, #tpu.memory_space<vmem>>, vector<1x128xf32>
    %3 = vector.broadcast %2 : vector<1x128xf32> to vector<16x128xf32>
    %4 = arith.subf %1, %3 : vector<16x128xf32>
    %c0_3 = arith.constant 0 : index
    %c0_4 = arith.constant 0 : index
    %5 = vector.load %arg3[%c0_3, %c0_4] : memref<1x128xf32, #tpu.memory_space<vmem>>, vector<1x128xf32>
    %6 = vector.broadcast %5 : vector<1x128xf32> to vector<16x128xf32>
    %7 = arith.mulf %4, %6 : vector<16x128xf32>
    %cst = arith.constant 0.000000e+00 : f32
    %8 = vector.broadcast %cst : f32 to vector<16x128xf32>
    %9 = arith.maximumf %7, %8 : vector<16x128xf32>
    %10 = arith.truncf %9 : vector<16x128xf32> to vector<16x128xbf16>
    %c0_5 = arith.constant 0 : index
    %c0_6 = arith.constant 0 : index
    %11 = vector.load %arg4[%c0_5, %c0_6] : memref<16x128xbf16, #tpu.memory_space<vmem>>, vector<16x128xbf16>
    tpu.vector_store %arg4[%c0_5, %c0_6], %10 {strides = array<i32>} : memref<16x128xbf16, #tpu.memory_space<vmem>>, vector<16x128xbf16>,
    return
  }
  func.func @transform_0(%arg0: i32) -> (i32, i32) {
    %c0_i32 = arith.constant 0 : i32
    %c0_i32_0 = arith.constant 0 : i32
    return %arg0, %c0_i32 : i32, i32
  }
  func.func @transform_1(%arg0: i32) -> (i32, i32) {
    %c0_i32 = arith.constant 0 : i32
    %c0_i32_0 = arith.constant 0 : i32
    %c0_i32_1 = arith.constant 0 : i32
    return %c0_i32, %c0_i32_0 : i32, i32
  }
  func.func @transform_2(%arg0: i32) -> (i32, i32) {
    %c0_i32 = arith.constant 0 : i32
    %c0_i32_0 = arith.constant 0 : i32
    %c0_i32_1 = arith.constant 0 : i32
    return %c0_i32, %c0_i32_0 : i32, i32
  }
  func.func @transform_3(%arg0: i32) -> (i32, i32) {
    %c0_i32 = arith.constant 0 : i32
    %c0_i32_0 = arith.constant 0 : i32
    return %arg0, %c0_i32 : i32, i32
  }
}

module attributes {stable_mosaic.version = 11 : i64} {
  func.func @_linear_kernel(%arg0: i32, %arg1: memref<64x128xbf16, #tpu.memory_space<vmem>>, %arg2: memref<128x128xbf16, #tpu.memory_space<vmem>>, %arg3: memref<1x128xf32, #tpu.memory_space<vmem>>, %arg4: memref<64x128xf32, #tpu.memory_space<vmem>>) attributes {dimension_semantics = [#tpu.dimension_semantics<parallel>], iteration_bounds = array<i64: 1>, scalar_prefetch = 0 : i64, scratch_operands = 0 : i64, tpu.core_type = #tpu.core_type<tc>, window_params = [{transform_indices = @transform_0, window_bounds = array<i64: 64, 128>}, {pipeline_mode = #tpu.pipeline_mode<synchronous>, transform_indices = @transform_1, window_bounds = array<i64: 128, 128>}, {pipeline_mode = #tpu.pipeline_mode<synchronous>, transform_indices = @transform_2, window_bounds = array<i64: 1, 128>}, {transform_indices = @transform_3, window_bounds = array<i64: 64, 128>}]} {
    %c0 = arith.constant 0 : index
    %c0_0 = arith.constant 0 : index
    %0 = vector.load %arg1[%c0, %c0_0] : memref<64x128xbf16, #tpu.memory_space<vmem>>, vector<64x128xbf16>
    %c0_1 = arith.constant 0 : index
    %c0_2 = arith.constant 0 : index
    %1 = vector.load %arg2[%c0_1, %c0_2] : memref<128x128xbf16, #tpu.memory_space<vmem>>, vector<128x128xbf16>
    %cst = arith.constant dense<0.000000e+00> : vector<64x128xf32>
    %2 = tpu.matmul %0, %1, %cst {dimension_numbers = #tpu.dot_dimension_numbers<[1], [0], [0], [1], [0, 0, 1, 1], [], []>} : vector<64x128xbf16>, vector<128x128xbf16>, vector<64x128xf32> -> vector<64x128xf32>
    %c0_3 = arith.constant 0 : index
    %c0_4 = arith.constant 0 : index
    %3 = vector.load %arg3[%c0_3, %c0_4] : memref<1x128xf32, #tpu.memory_space<vmem>>, vector<1x128xf32>
    %4 = vector.broadcast %3 : vector<1x128xf32> to vector<64x128xf32>
    %5 = arith.addf %2, %4 : vector<64x128xf32>
    %c0_5 = arith.constant 0 : index
    %c0_6 = arith.constant 0 : index
    %6 = vector.load %arg4[%c0_5, %c0_6] : memref<64x128xf32, #tpu.memory_space<vmem>>, vector<64x128xf32>
    tpu.vector_store %arg4[%c0_5, %c0_6], %5 {strides = array<i32>} : memref<64x128xf32, #tpu.memory_space<vmem>>, vector<64x128xf32>,
    return
  }
  func.func @transform_0(%arg0: i32) -> (i32, i32) {
    %c0_i32 = arith.constant 0 : i32
    %c0_i32_0 = arith.constant 0 : i32
    return %arg0, %c0_i32 : i32, i32
  }
  func.func @transform_1(%arg0: i32) -> (i32, i32) {
    %c0_i32 = arith.constant 0 : i32
    %c0_i32_0 = arith.constant 0 : i32
    %c0_i32_1 = arith.constant 0 : i32
    return %c0_i32, %c0_i32_0 : i32, i32
  }
  func.func @transform_2(%arg0: i32) -> (i32, i32) {
    %c0_i32 = arith.constant 0 : i32
    %c0_i32_0 = arith.constant 0 : i32
    %c0_i32_1 = arith.constant 0 : i32
    return %c0_i32, %c0_i32_0 : i32, i32
  }
  func.func @transform_3(%arg0: i32) -> (i32, i32) {
    %c0_i32 = arith.constant 0 : i32
    %c0_i32_0 = arith.constant 0 : i32
    return %arg0, %c0_i32 : i32, i32
  }
}

</mosaic_0001>

<llo_original>
// kernel: model_forward.31
$region0: #{model_forward.31}
  #allocation0 [shape = 'u32[]', space=smem, size = 0x4, offset = 0x4, fixed_abs, tag = 'smem constant byte address 0x4 - core index']
  #allocation1 [shape = 'u32[144,128]{1,0:T(1,128)}', space=vmem, size = 0x12000, scoped, tag = 'internal scratch']
  %s0 = inlined_call_operand.vmem [shape: bf16[64,128], index: 0, kind: input, shape index: {}]
  %s1 = inlined_call_operand.vmem [shape: bf16[128,128], index: 1, kind: input, shape index: {}]
  %s2 = inlined_call_operand.vmem [shape: f32[1,128], index: 2, kind: input, shape index: {}]
  %s3 = inlined_call_operand.vmem [shape: f32[1,128], index: 3, kind: input, shape index: {}]
  %s4 = inlined_call_operand.vmem [shape: f32[1,128], index: 4, kind: input, shape index: {}]
  %s5 = inlined_call_operand.vmem [shape: bf16[64,128], index: 5, kind: output, shape index: {}]
  %s6 = sld [smem:[#allocation0]]
  $region30: #{model_forward.31} parent=0
    _
  %s8 = ssub.s32 1, %s6
  %s9 = scalar_select 0, %s8, %s6
  // Predicated region
  $region2: #{model_forward.31} parent=0 // pred_check
    _
  $region3: #{model_forward.31} parent=0 // pred_check_branch
    %11 = sbr.rel (0) target = $region5
  $region4: #{model_forward.31} parent=0 // pred_region
    _
  $region5: #{model_forward.31} parent=0 // pred_fallthru
    _
  // Predicated region
  $region6: #{model_forward.31} parent=0 // pred_check
    _
  $region7: #{model_forward.31} parent=0 // pred_check_branch
    %13 = sbr.rel (0) target = $region9
  $region8: #{model_forward.31} parent=0 // pred_region
    _
  $region9: #{model_forward.31} parent=0 // pred_fallthru
    _
  // Predicated region
  $region10: #{model_forward.31} parent=0 // pred_check
    _
  $region11: #{model_forward.31} parent=0 // pred_check_branch
    %15 = sbr.rel (0) target = $region13
  $region12: #{model_forward.31} parent=0 // pred_region
    _
  $region13: #{model_forward.31} parent=0 // pred_fallthru
    _
  // Predicated region
  $region14: #{model_forward.31} parent=0 // pred_check
    _
  $region15: #{model_forward.31} parent=0 // pred_check_branch
    %17 = sbr.rel (0) target = $region17
  $region16: #{model_forward.31} parent=0 // pred_region
    _
  $region17: #{model_forward.31} parent=0 // pred_fallthru
    _
  // Predicated region
  $region18: #{model_forward.31} parent=0 // pred_check
    _
  $region19: #{model_forward.31} parent=0 // pred_check_branch
    %19 = sbr.rel (0) target = $region21
  $region20: #{model_forward.31} parent=0 // pred_region
    _
  $region21: #{model_forward.31} parent=0 // pred_fallthru
    _
  %v21 = vld [vmem:[%s0] sm:$0xf]
  %v22 = vld [vmem:[%s0 + $0x4] sm:$0xf]
  %v23 = vld [vmem:[%s0 + $0x8] sm:$0xf]
  %v24 = vld [vmem:[%s0 + $0xc] sm:$0xf]
  %v25 = vld [vmem:[%s0 + $0x10] sm:$0xf]
  %v26 = vld [vmem:[%s0 + $0x14] sm:$0xf]
  %v27 = vld [vmem:[%s0 + $0x18] sm:$0xf]
  %v28 = vld [vmem:[%s0 + $0x1c] sm:$0xf]
  %v29 = vunpack.c.l.bf16 %v21
  %v30 = vunpack.c.l.bf16 %v22
  %v31 = vunpack.c.l.bf16 %v23
  %v32 = vunpack.c.l.bf16 %v24
  %v33 = vunpack.c.l.bf16 %v25
  %v34 = vunpack.c.l.bf16 %v26
  %v35 = vunpack.c.l.bf16 %v27
  %v36 = vunpack.c.l.bf16 %v28
  %v37 = vld [vmem:[%s3] sm:$0x1]
  %v39 = vlaneseq
  %v40 = vshrl.u32 %v39, 7
  %v41 = vsub.s32 0, %v40
  %v42 = vrot.slane %v37, %v41
  %v44 = vsub.f32 %v29, %v42
  %v45 = vsub.f32 %v30, %v42
  %v46 = vsub.f32 %v31, %v42
  %v47 = vsub.f32 %v32, %v42
  %v48 = vsub.f32 %v33, %v42
  %v49 = vsub.f32 %v34, %v42
  %v50 = vsub.f32 %v35, %v42
  %v51 = vsub.f32 %v36, %v42
  %v52 = vld [vmem:[%s4] sm:$0x1]
  %v54 = vlaneseq
  %v55 = vshrl.u32 %v54, 7
  %v56 = vsub.s32 0, %v55
  %v57 = vrot.slane %v52, %v56
  %v59 = vmul.f32 %v44, %v57
  %v60 = vmul.f32 %v45, %v57
  %v61 = vmul.f32 %v46, %v57
  %v62 = vmul.f32 %v47, %v57
  %v63 = vmul.f32 %v48, %v57
  %v64 = vmul.f32 %v49, %v57
  %v65 = vmul.f32 %v50, %v57
  %v66 = vmul.f32 %v51, %v57
  %v67 = vmax.f32 %v59, 0.0
  %v68 = vmax.f32 %v60, 0.0
  %v69 = vmax.f32 %v61, 0.0
  %v70 = vmax.f32 %v62, 0.0
  %v71 = vmax.f32 %v63, 0.0
  %v72 = vmax.f32 %v64, 0.0
  %v73 = vmax.f32 %v65, 0.0
  %v74 = vmax.f32 %v66, 0.0
  %v75 = vpack.c.bf16 %v68, %v67
  %v76 = vpack.c.bf16 %v70, %v69
  %v77 = vpack.c.bf16 %v72, %v71
  %v78 = vpack.c.bf16 %v74, %v73
  %v79 = vld [vmem:[%s1] sm:$0xf]
  %v80 = vld [vmem:[%s1 + $0x4] sm:$0xf]
  %v81 = vld [vmem:[%s1 + $0x8] sm:$0xf]
  %v82 = vld [vmem:[%s1 + $0xc] sm:$0xf]
  %v83 = vld [vmem:[%s1 + $0x10] sm:$0xf]
  %v84 = vld [vmem:[%s1 + $0x14] sm:$0xf]
  %v85 = vld [vmem:[%s1 + $0x18] sm:$0xf]
  %v86 = vld [vmem:[%s1 + $0x1c] sm:$0xf]
  %v87 = vld [vmem:[%s1 + $0x20] sm:$0xf]
  %v88 = vld [vmem:[%s1 + $0x24] sm:$0xf]
  %v89 = vld [vmem:[%s1 + $0x28] sm:$0xf]
  %v90 = vld [vmem:[%s1 + $0x2c] sm:$0xf]
  %v91 = vld [vmem:[%s1 + $0x30] sm:$0xf]
  %v92 = vld [vmem:[%s1 + $0x34] sm:$0xf]
  %v93 = vld [vmem:[%s1 + $0x38] sm:$0xf]
  %v94 = vld [vmem:[%s1 + $0x3c] sm:$0xf]
  %v95 = vld [vmem:[%s2] sm:$0x1]
  %v97 = vlaneseq
  %v98 = vshrl.u32 %v97, 7
  %v99 = vsub.s32 0, %v98
  %v100 = vrot.slane %v95, %v99
  %v118 = vunpack.c.l.b16 %v79
  %v119 = vunpack.c.l.b16 %v80
  %v120 = vunpack.c.l.b16 %v81
  %v121 = vunpack.c.l.b16 %v82
  %v122 = vunpack.c.l.b16 %v83
  %v123 = vunpack.c.l.b16 %v84
  %v124 = vunpack.c.l.b16 %v85
  %v125 = vunpack.c.l.b16 %v86
  %v126 = vunpack.c.l.b16 %v87
  %v127 = vunpack.c.l.b16 %v88
  %v128 = vunpack.c.l.b16 %v89
  %v129 = vunpack.c.l.b16 %v90
  %v130 = vunpack.c.l.b16 %v91
  %v131 = vunpack.c.l.b16 %v92
  %v132 = vunpack.c.l.b16 %v93
  %v133 = vunpack.c.l.b16 %v94
  %v134 = vpack.c.b16 %v119, %v118
  %v135 = vpack.c.b16 %v121, %v120
  %v136 = vpack.c.b16 %v123, %v122
  %v137 = vpack.c.b16 %v125, %v124
  %v138 = vpack.c.b16 %v127, %v126
  %v139 = vpack.c.b16 %v129, %v128
  %v140 = vpack.c.b16 %v131, %v130
  %v141 = vpack.c.b16 %v133, %v132
  %150 = vmatprep.subr.bf16.mxu0 0
  %151 = vmatpush1.bf16.msra.mxu0 %v134
  %152 = vmatprep.subr.bf16.mxu0 0
  %153 = vmatpush1.bf16.msra.mxu0 %v135
  %154 = vmatprep.subr.bf16.mxu0 0
  %155 = vmatpush1.bf16.msra.mxu0 %v136
  %156 = vmatprep.subr.bf16.mxu0 0
  %157 = vmatpush1.bf16.msra.mxu0 %v137
  %158 = vmatprep.subr.bf16.mxu0 0
  %159 = vmatpush1.bf16.msra.mxu0 %v138
  %160 = vmatprep.subr.bf16.mxu0 0
  %161 = vmatpush1.bf16.msra.mxu0 %v139
  %162 = vmatprep.subr.bf16.mxu0 0
  %163 = vmatpush1.bf16.msra.mxu0 %v140
  %164 = vmatprep.subr.bf16.mxu0 0
  %165 = vmatpush1.bf16.msra.mxu0 %v141
  %166 = vmatprep.subr.bf16.mxu0 0
  %167 = vmatpush1.bf16.msra.mxu0 0
  %168 = vmatprep.subr.bf16.mxu0 0
  %169 = vmatpush1.bf16.msra.mxu0 0
  %170 = vmatprep.subr.bf16.mxu0 0
  %171 = vmatpush1.bf16.msra.mxu0 0
  %172 = vmatprep.subr.bf16.mxu0 0
  %173 = vmatpush1.bf16.msra.mxu0 0
  %174 = vmatprep.subr.bf16.mxu0 0
  %175 = vmatpush1.bf16.msra.mxu0 0
  %176 = vmatprep.subr.bf16.mxu0 0
  %177 = vmatpush1.bf16.msra.mxu0 0
  %178 = vmatprep.subr.bf16.mxu0 0
  %179 = vmatpush1.bf16.msra.mxu0 0
  %180 = vmatprep.subr.bf16.mxu0 0
  %181 = vmatpush1.bf16.msra.mxu0 0
  %182 = vmatprep.mubr.bf16.mxu0 0
  %183 = vmatmul.mubr.bf16.gmra.mrb[0].mxu0 %v75
  %v184 = vpop.f32.mrb[0].mxu0
  %v185 = vadd.f32 %v100, %v184
  %v186 = vpop.f32.mrb[0].mxu0
  %v187 = vpop.f32.mrb[0].mxu0
  %v188 = vadd.f32 %v100, %v187
  %v189 = vpop.f32.mrb[0].mxu0
  %190 = vmatprep.mubr.bf16.mxu0 0
  %191 = vmatmul.mubr.bf16.gmra.mrb[0].mxu0 %v76
  %v192 = vpop.f32.mrb[0].mxu0
  %v193 = vadd.f32 %v100, %v192
  %v194 = vpop.f32.mrb[0].mxu0
  %v195 = vpop.f32.mrb[0].mxu0
  %v196 = vadd.f32 %v100, %v195
  %v197 = vpop.f32.mrb[0].mxu0
  %198 = vmatprep.mubr.bf16.mxu0 0
  %199 = vmatmul.mubr.bf16.gmra.mrb[0].mxu0 %v77
  %v200 = vpop.f32.mrb[0].mxu0
  %v201 = vadd.f32 %v100, %v200
  %v202 = vpop.f32.mrb[0].mxu0
  %v203 = vpop.f32.mrb[0].mxu0
  %v204 = vadd.f32 %v100, %v203
  %v205 = vpop.f32.mrb[0].mxu0
  %206 = vmatprep.mubr.bf16.mxu0 0
  %207 = vmatmul.mubr.bf16.gmra.mrb[0].mxu0 %v78
  %v208 = vpop.f32.mrb[0].mxu0
  %v209 = vadd.f32 %v100, %v208
  %v210 = vpop.f32.mrb[0].mxu0
  %v211 = vpop.f32.mrb[0].mxu0
  %v212 = vadd.f32 %v100, %v211
  %v213 = vpop.f32.mrb[0].mxu0
  %214 = vdwg.mxu0
  %v215 = vmax.f32 %v185, 0.0
  %v216 = vmax.f32 %v188, 0.0
  %v217 = vmax.f32 %v193, 0.0
  %v218 = vmax.f32 %v196, 0.0
  %v219 = vmax.f32 %v201, 0.0
  %v220 = vmax.f32 %v204, 0.0
  %v221 = vmax.f32 %v209, 0.0
  %v222 = vmax.f32 %v212, 0.0
  %v223 = vpack.c.bf16 %v216, %v215
  %v224 = vpack.c.bf16 %v218, %v217
  %v225 = vpack.c.bf16 %v220, %v219
  %v226 = vpack.c.bf16 %v222, %v221
  %v231 = vunpack.c.l.b16 %v223
  %v232 = vunpack.c.h.b16 %v223
  %v233 = vunpack.c.l.b16 %v224
  %v234 = vunpack.c.h.b16 %v224
  %v235 = vunpack.c.l.b16 %v225
  %v236 = vunpack.c.h.b16 %v225
  %v237 = vunpack.c.l.b16 %v226
  %v238 = vunpack.c.h.b16 %v226
  %v239 = vpack.c.b16 %v231, %v231
  %v240 = vpack.c.b16 %v232, %v232
  %v241 = vpack.c.b16 %v233, %v233
  %v242 = vpack.c.b16 %v234, %v234
  %v243 = vpack.c.b16 %v235, %v235
  %v244 = vpack.c.b16 %v236, %v236
  %v245 = vpack.c.b16 %v237, %v237
  %v246 = vpack.c.b16 %v238, %v238
  %255 = vst [vmem:[%s5] sm:$0xf] %v239
  %256 = vst [vmem:[%s5 + $0x4] sm:$0xf] %v240
  %257 = vst [vmem:[%s5 + $0x8] sm:$0xf] %v241
  %258 = vst [vmem:[%s5 + $0xc] sm:$0xf] %v242
  %259 = vst [vmem:[%s5 + $0x10] sm:$0xf] %v243
  %260 = vst [vmem:[%s5 + $0x14] sm:$0xf] %v244
  %261 = vst [vmem:[%s5 + $0x18] sm:$0xf] %v245
  %262 = vst [vmem:[%s5 + $0x1c] sm:$0xf] %v246
  // Predicated region
  $region22: #{model_forward.31} parent=0 // pred_check
    _
  $region23: #{model_forward.31} parent=0 // pred_check_branch
    %264 = sbr.rel (0) target = $region25
  $region24: #{model_forward.31} parent=0 // pred_region
    _
  $region25: #{model_forward.31} parent=0 // pred_fallthru
    _
  // Predicated region
  $region26: #{model_forward.31} parent=0 // pred_check
    _
  $region27: #{model_forward.31} parent=0 // pred_check_branch
    %266 = sbr.rel (0) target = $region29
  $region28: #{model_forward.31} parent=0 // pred_region
    _
  $region29: #{model_forward.31} parent=0 // pred_fallthru
    _

// kernel: model_forward.30
$region0: #{model_forward.30}
  #allocation0 [shape = 'u32[]', space=smem, size = 0x4, offset = 0x4, fixed_abs, tag = 'smem constant byte address 0x4 - core index']
  #allocation1 [shape = 'u32[144,128]{1,0:T(1,128)}', space=vmem, size = 0x12000, scoped, tag = 'internal scratch']
  %s0 = inlined_call_operand.vmem [shape: f32[64,8], index: 0, kind: input, shape index: {}]
  %s1 = inlined_call_operand.vmem [shape: bf16[8,128], index: 1, kind: input, shape index: {}]
  %s2 = inlined_call_operand.vmem [shape: f32[1,128], index: 2, kind: input, shape index: {}]
  %s3 = inlined_call_operand.vmem [shape: bf16[64,128], index: 3, kind: output, shape index: {0}]
  %s4 = inlined_call_operand.vmem [shape: f32[8,128], index: 4, kind: output, shape index: {1}]
  %5 = xla_tuple %s3, %s4
  %s6 = sld [smem:[#allocation0]]
  $region34: #{model_forward.30} parent=0
    _
  %s8 = ssub.s32 1, %s6
  %s9 = scalar_select 0, %s8, %s6
  // Predicated region
  $region2: #{model_forward.30} parent=0 // pred_check
    _
  $region3: #{model_forward.30} parent=0 // pred_check_branch
    %11 = sbr.rel (0) target = $region5
  $region4: #{model_forward.30} parent=0 // pred_region
    _
  $region5: #{model_forward.30} parent=0 // pred_fallthru
    _
  // Predicated region
  $region6: #{model_forward.30} parent=0 // pred_check
    _
  $region7: #{model_forward.30} parent=0 // pred_check_branch
    %13 = sbr.rel (0) target = $region9
  $region8: #{model_forward.30} parent=0 // pred_region
    _
  $region9: #{model_forward.30} parent=0 // pred_fallthru
    _
  // Predicated region
  $region10: #{model_forward.30} parent=0 // pred_check
    _
  $region11: #{model_forward.30} parent=0 // pred_check_branch
    %15 = sbr.rel (0) target = $region13
  $region12: #{model_forward.30} parent=0 // pred_region
    _
  $region13: #{model_forward.30} parent=0 // pred_fallthru
    _
  %v17 = vld [vmem:[%s0] sm:$0xff]
  %v18 = vld [vmem:[%s0 + $0x8] sm:$0xff]
  %v19 = vld [vmem:[%s0 + $0x10] sm:$0xff]
  %v20 = vld [vmem:[%s0 + $0x18] sm:$0xff]
  %v21 = vld [vmem:[%s0 + $0x20] sm:$0xff]
  %v22 = vld [vmem:[%s0 + $0x28] sm:$0xff]
  %v23 = vld [vmem:[%s0 + $0x30] sm:$0xff]
  %v24 = vld [vmem:[%s0 + $0x38] sm:$0xff]
  %v25 = vpack.c.bf16 %v18, %v17
  %v26 = vpack.c.bf16 %v20, %v19
  %v27 = vpack.c.bf16 %v22, %v21
  %v28 = vpack.c.bf16 %v24, %v23
  %v29 = vld [vmem:[%s1] sm:$0xf]
  %v30 = vld [vmem:[%s2] sm:$0x1]
  %v32 = vlaneseq
  %v33 = vshrl.u32 %v32, 7
  %v34 = vsub.s32 0, %v33
  %v35 = vrot.slane %v30, %v34
  %vm37 = vcmask 64512
  %v39 = vsel %vm37, %v25, 0
  %v42 = vsel %vm37, %v26, 0
  %v45 = vsel %vm37, %v27, 0
  %v48 = vsel %vm37, %v28, 0
  %vm50 = vcmask 1043456
  %v52 = vsel %vm50, %v29, 0
  %54 = vmatprep.subr.bf16.mxu0 0
  %55 = vmatpush1.bf16.msra.mxu0 %v52
  %56 = vmatprep.subr.bf16.mxu0 0
  %57 = vmatpush1.bf16.msra.mxu0 0
  %58 = vmatprep.subr.bf16.mxu0 0
  %59 = vmatpush1.bf16.msra.mxu0 0
  %60 = vmatprep.subr.bf16.mxu0 0
  %61 = vmatpush1.bf16.msra.mxu0 0
  %62 = vmatprep.subr.bf16.mxu0 0
  %63 = vmatpush1.bf16.msra.mxu0 0
  %64 = vmatprep.subr.bf16.mxu0 0
  %65 = vmatpush1.bf16.msra.mxu0 0
  %66 = vmatprep.subr.bf16.mxu0 0
  %67 = vmatpush1.bf16.msra.mxu0 0
  %68 = vmatprep.subr.bf16.mxu0 0
  %69 = vmatpush1.bf16.msra.mxu0 0
  %70 = vmatprep.subr.bf16.mxu0 0
  %71 = vmatpush1.bf16.msra.mxu0 0
  %72 = vmatprep.subr.bf16.mxu0 0
  %73 = vmatpush1.bf16.msra.mxu0 0
  %74 = vmatprep.subr.bf16.mxu0 0
  %75 = vmatpush1.bf16.msra.mxu0 0
  %76 = vmatprep.subr.bf16.mxu0 0
  %77 = vmatpush1.bf16.msra.mxu0 0
  %78 = vmatprep.subr.bf16.mxu0 0
  %79 = vmatpush1.bf16.msra.mxu0 0
  %80 = vmatprep.subr.bf16.mxu0 0
  %81 = vmatpush1.bf16.msra.mxu0 0
  %82 = vmatprep.subr.bf16.mxu0 0
  %83 = vmatpush1.bf16.msra.mxu0 0
  %84 = vmatprep.subr.bf16.mxu0 0
  %85 = vmatpush1.bf16.msra.mxu0 0
  %86 = vmatprep.mubr.bf16.mxu0 0
  %87 = vmatmul.mubr.bf16.gmra.mrb[0].mxu0 %v39
  %v88 = vpop.f32.mrb[0].mxu0
  %v89 = vadd.f32 %v35, %v88
  %v90 = vpop.f32.mrb[0].mxu0
  %v91 = vpop.f32.mrb[0].mxu0
  %v92 = vadd.f32 %v35, %v91
  %v93 = vpop.f32.mrb[0].mxu0
  %94 = vmatprep.mubr.bf16.mxu0 0
  %95 = vmatmul.mubr.bf16.gmra.mrb[0].mxu0 %v42
  %v96 = vpop.f32.mrb[0].mxu0
  %v97 = vadd.f32 %v35, %v96
  %v98 = vpop.f32.mrb[0].mxu0
  %v99 = vpop.f32.mrb[0].mxu0
  %v100 = vadd.f32 %v35, %v99
  %v101 = vpop.f32.mrb[0].mxu0
  %102 = vmatprep.mubr.bf16.mxu0 0
  %103 = vmatmul.mubr.bf16.gmra.mrb[0].mxu0 %v45
  %v104 = vpop.f32.mrb[0].mxu0
  %v105 = vadd.f32 %v35, %v104
  %v106 = vpop.f32.mrb[0].mxu0
  %v107 = vpop.f32.mrb[0].mxu0
  %v108 = vadd.f32 %v35, %v107
  %v109 = vpop.f32.mrb[0].mxu0
  %110 = vmatprep.mubr.bf16.mxu0 0
  %111 = vmatmul.mubr.bf16.gmra.mrb[0].mxu0 %v48
  %v112 = vpop.f32.mrb[0].mxu0
  %v113 = vadd.f32 %v35, %v112
  %v114 = vpop.f32.mrb[0].mxu0
  %v115 = vpop.f32.mrb[0].mxu0
  %v116 = vadd.f32 %v35, %v115
  %v117 = vpop.f32.mrb[0].mxu0
  %118 = vdwg.mxu0
  %s119 = smul.u32 0, 64
  %v120 = vlaneseq
  %v121 = vshrl.u32 %v120, 7
  %v122 = vadd.s32 %v121, 8
  %v123 = vadd.s32 %v121, 16
  %v124 = vadd.s32 %v121, 24
  %v125 = vadd.s32 %v121, 32
  %v126 = vadd.s32 %v121, 40
  %v127 = vadd.s32 %v121, 48
  %v128 = vadd.s32 %v121, 56
  %v129 = vstv %s119
  %v130 = vadd.s32 %v121, %v129
  %v131 = vadd.s32 %v122, %v129
  %v132 = vadd.s32 %v123, %v129
  %v133 = vadd.s32 %v124, %v129
  %v134 = vadd.s32 %v125, %v129
  %v135 = vadd.s32 %v126, %v129
  %v136 = vadd.s32 %v127, %v129
  %v137 = vadd.s32 %v128, %v129
  %vm138 = vcmp.lt.s32.totalorder %v130, 64
  %vm139 = vcmp.lt.s32.totalorder %v131, 64
  %vm140 = vcmp.lt.s32.totalorder %v132, 64
  %vm141 = vcmp.lt.s32.totalorder %v133, 64
  %vm142 = vcmp.lt.s32.totalorder %v134, 64
  %vm143 = vcmp.lt.s32.totalorder %v135, 64
  %vm144 = vcmp.lt.s32.totalorder %v136, 64
  %vm145 = vcmp.lt.s32.totalorder %v137, 64
  %v146 = vsel %vm138, %v89, 0.0
  %v147 = vsel %vm139, %v92, 0.0
  %v148 = vsel %vm140, %v97, 0.0
  %v149 = vsel %vm141, %v100, 0.0
  %v150 = vsel %vm142, %v105, 0.0
  %v151 = vsel %vm143, %v108, 0.0
  %v152 = vsel %vm144, %v113, 0.0
  %v153 = vsel %vm145, %v116, 0.0
  %v154 = vadd.f32 %v146, %v147
  %v155 = vadd.f32 %v154, %v148
  %v156 = vadd.f32 %v155, %v149
  %v157 = vadd.f32 %v156, %v150
  %v158 = vadd.f32 %v157, %v151
  %v159 = vadd.f32 %v158, %v152
  %v160 = vadd.f32 %v159, %v153
  %v161 = vrot.slane %v160, 4
  %v162 = vadd.f32 %v160, %v161
  %v163 = vrot.slane %v162, 2
  %v164 = vadd.f32 %v162, %v163
  %v165 = vrot.slane %v164, 1
  %v166 = vadd.f32 %v164, %v165
  %v167 = vmul.f32 %v146, %v146
  %v168 = vmul.f32 %v147, %v147
  %v169 = vmul.f32 %v148, %v148
  %v170 = vmul.f32 %v149, %v149
  %v171 = vmul.f32 %v150, %v150
  %v172 = vmul.f32 %v151, %v151
  %v173 = vmul.f32 %v152, %v152
  %v174 = vmul.f32 %v153, %v153
  %v175 = vadd.f32 %v167, %v168
  %v176 = vadd.f32 %v175, %v169
  %v177 = vadd.f32 %v176, %v170
  %v178 = vadd.f32 %v177, %v171
  %v179 = vadd.f32 %v178, %v172
  %v180 = vadd.f32 %v179, %v173
  %v181 = vadd.f32 %v180, %v174
  %v182 = vrot.slane %v181, 4
  %v183 = vadd.f32 %v181, %v182
  %v184 = vrot.slane %v183, 2
  %v185 = vadd.f32 %v183, %v184
  %v186 = vrot.slane %v185, 1
  %v187 = vadd.f32 %v185, %v186
  %vm188 = vcmp.eq.s32.totalorder %v121, 0
  %v189 = vsel %vm188, %v166, 0.0
  %vm190 = vcmp.eq.s32.totalorder %v121, 1
  %v191 = vsel %vm190, %v187, 0.0
  %v192 = vadd.f32 %v189, %v191
  %p193 = scmp.eq.s32.totalorder 0, 0
  // Predicated region
  $region14: #{model_forward.30} parent=0 // pred_check
    %p194 = pneg %p193
  $region15: #{model_forward.30} parent=0 // pred_check_branch
    %196 = sbr.rel (%p194) target = $region17
  $region16: #{model_forward.30} parent=0 // pred_region
    %197 = vst [vmem:[%s4] sm:$0xff] 0.0
  $region17: #{model_forward.30} parent=0 // pred_fallthru
    _
  %v198 = vld [vmem:[%s4] sm:$0xff]
  %v199 = vadd.f32 %v198, %v192
  %200 = vst [vmem:[%s4] sm:$0xff] %v199
  %v201 = vpack.c.bf16 %v92, %v89
  %v202 = vpack.c.bf16 %v100, %v97
  %v203 = vpack.c.bf16 %v108, %v105
  %v204 = vpack.c.bf16 %v116, %v113
  %v209 = vunpack.c.l.b16 %v201
  %v210 = vunpack.c.h.b16 %v201
  %v211 = vunpack.c.l.b16 %v202
  %v212 = vunpack.c.h.b16 %v202
  %v213 = vunpack.c.l.b16 %v203
  %v214 = vunpack.c.h.b16 %v203
  %v215 = vunpack.c.l.b16 %v204
  %v216 = vunpack.c.h.b16 %v204
  %v217 = vpack.c.b16 %v209, %v209
  %v218 = vpack.c.b16 %v210, %v210
  %v219 = vpack.c.b16 %v211, %v211
  %v220 = vpack.c.b16 %v212, %v212
  %v221 = vpack.c.b16 %v213, %v213
  %v222 = vpack.c.b16 %v214, %v214
  %v223 = vpack.c.b16 %v215, %v215
  %v224 = vpack.c.b16 %v216, %v216
  %233 = vst [vmem:[%s3] sm:$0xf] %v217
  %234 = vst [vmem:[%s3 + $0x4] sm:$0xf] %v218
  %235 = vst [vmem:[%s3 + $0x8] sm:$0xf] %v219
  %236 = vst [vmem:[%s3 + $0xc] sm:$0xf] %v220
  %237 = vst [vmem:[%s3 + $0x10] sm:$0xf] %v221
  %238 = vst [vmem:[%s3 + $0x14] sm:$0xf] %v222
  %239 = vst [vmem:[%s3 + $0x18] sm:$0xf] %v223
  %240 = vst [vmem:[%s3 + $0x1c] sm:$0xf] %v224
  // Predicated region
  $region18: #{model_forward.30} parent=0 // pred_check
    _
  $region19: #{model_forward.30} parent=0 // pred_check_branch
    %242 = sbr.rel (0) target = $region21
  $region20: #{model_forward.30} parent=0 // pred_region
    _
  $region21: #{model_forward.30} parent=0 // pred_fallthru
    _
  // Predicated region
  $region22: #{model_forward.30} parent=0 // pred_check
    _
  $region23: #{model_forward.30} parent=0 // pred_check_branch
    %244 = sbr.rel (0) target = $region25
  $region24: #{model_forward.30} parent=0 // pred_region
    _
  $region25: #{model_forward.30} parent=0 // pred_fallthru
    _
  // Predicated region
  $region26: #{model_forward.30} parent=0 // pred_check
    _
  $region27: #{model_forward.30} parent=0 // pred_check_branch
    %246 = sbr.rel (0) target = $region29
  $region28: #{model_forward.30} parent=0 // pred_region
    _
  $region29: #{model_forward.30} parent=0 // pred_fallthru
    _
  // Predicated region
  $region30: #{model_forward.30} parent=0 // pred_check
    _
  $region31: #{model_forward.30} parent=0 // pred_check_branch
    %248 = sbr.rel (0) target = $region33
  $region32: #{model_forward.30} parent=0 // pred_region
    _
  $region33: #{model_forward.30} parent=0 // pred_fallthru
    _

// kernel: model_forward.32
$region0: #{model_forward.32}
  #allocation0 [shape = 'u32[]', space=smem, size = 0x4, offset = 0x4, fixed_abs, tag = 'smem constant byte address 0x4 - core index']
  #allocation1 [shape = 'u32[144,128]{1,0:T(1,128)}', space=vmem, size = 0x12000, scoped, tag = 'internal scratch']
  %s0 = inlined_call_operand.vmem [shape: bf16[64,128], index: 0, kind: input, shape index: {}]
  %s1 = inlined_call_operand.vmem [shape: bf16[128,384], index: 1, kind: input, shape index: {}]
  %s2 = inlined_call_operand.vmem [shape: f32[1,384], index: 2, kind: input, shape index: {}]
  %s3 = inlined_call_operand.vmem [shape: bf16[64,384], index: 3, kind: output, shape index: {}]
  %s4 = sld [smem:[#allocation0]]
  $region22: #{model_forward.32} parent=0
    _
  %s6 = ssub.s32 1, %s4
  %s7 = scalar_select 0, %s6, %s4
  // Predicated region
  $region2: #{model_forward.32} parent=0 // pred_check
    _
  $region3: #{model_forward.32} parent=0 // pred_check_branch
    %9 = sbr.rel (0) target = $region5
  $region4: #{model_forward.32} parent=0 // pred_region
    _
  $region5: #{model_forward.32} parent=0 // pred_fallthru
    _
  // Predicated region
  $region6: #{model_forward.32} parent=0 // pred_check
    _
  $region7: #{model_forward.32} parent=0 // pred_check_branch
    %11 = sbr.rel (0) target = $region9
  $region8: #{model_forward.32} parent=0 // pred_region
    _
  $region9: #{model_forward.32} parent=0 // pred_fallthru
    _
  // Predicated region
  $region10: #{model_forward.32} parent=0 // pred_check
    _
  $region11: #{model_forward.32} parent=0 // pred_check_branch
    %13 = sbr.rel (0) target = $region13
  $region12: #{model_forward.32} parent=0 // pred_region
    _
  $region13: #{model_forward.32} parent=0 // pred_fallthru
    _
  %v15 = vld [vmem:[%s0] sm:$0xf]
  %v16 = vld [vmem:[%s0 + $0x4] sm:$0xf]
  %v17 = vld [vmem:[%s0 + $0x8] sm:$0xf]
  %v18 = vld [vmem:[%s0 + $0xc] sm:$0xf]
  %v19 = vld [vmem:[%s0 + $0x10] sm:$0xf]
  %v20 = vld [vmem:[%s0 + $0x14] sm:$0xf]
  %v21 = vld [vmem:[%s0 + $0x18] sm:$0xf]
  %v22 = vld [vmem:[%s0 + $0x1c] sm:$0xf]
  %v23 = vld [vmem:[%s1] sm:$0xff]
  %v24 = vld [vmem:[%s1 + $0x8] sm:$0xf]
  %v25 = vld [vmem:[%s1 + $0xc] sm:$0xff]
  %v26 = vld [vmem:[%s1 + $0x14] sm:$0xf]
  %v27 = vld [vmem:[%s1 + $0x18] sm:$0xff]
  %v28 = vld [vmem:[%s1 + $0x20] sm:$0xf]
  %v29 = vld [vmem:[%s1 + $0x24] sm:$0xff]
  %v30 = vld [vmem:[%s1 + $0x2c] sm:$0xf]
  %v31 = vld [vmem:[%s1 + $0x30] sm:$0xff]
  %v32 = vld [vmem:[%s1 + $0x38] sm:$0xf]
  %v33 = vld [vmem:[%s1 + $0x3c] sm:$0xff]
  %v34 = vld [vmem:[%s1 + $0x44] sm:$0xf]
  %v35 = vld [vmem:[%s1 + $0x48] sm:$0xff]
  %v36 = vld [vmem:[%s1 + $0x50] sm:$0xf]
  %v37 = vld [vmem:[%s1 + $0x54] sm:$0xff]
  %v38 = vld [vmem:[%s1 + $0x5c] sm:$0xf]
  %v39 = vld [vmem:[%s1 + $0x60] sm:$0xff]
  %v40 = vld [vmem:[%s1 + $0x68] sm:$0xf]
  %v41 = vld [vmem:[%s1 + $0x6c] sm:$0xff]
  %v42 = vld [vmem:[%s1 + $0x74] sm:$0xf]
  %v43 = vld [vmem:[%s1 + $0x78] sm:$0xff]
  %v44 = vld [vmem:[%s1 + $0x80] sm:$0xf]
  %v45 = vld [vmem:[%s1 + $0x84] sm:$0xff]
  %v46 = vld [vmem:[%s1 + $0x8c] sm:$0xf]
  %v47 = vld [vmem:[%s1 + $0x90] sm:$0xff]
  %v48 = vld [vmem:[%s1 + $0x98] sm:$0xf]
  %v49 = vld [vmem:[%s1 + $0x9c] sm:$0xff]
  %v50 = vld [vmem:[%s1 + $0xa4] sm:$0xf]
  %v51 = vld [vmem:[%s1 + $0xa8] sm:$0xff]
  %v52 = vld [vmem:[%s1 + $0xb0] sm:$0xf]
  %v53 = vld [vmem:[%s1 + $0xb4] sm:$0xff]
  %v54 = vld [vmem:[%s1 + $0xbc] sm:$0xf]
  %v55 = vld [vmem:[%s2] sm:$0x7]
  %v57 = vlaneseq
  %v58 = vshrl.u32 %v57, 7
  %v59 = vsub.s32 0, %v58
  %v60 = vrot.slane %v55, %v59
  %v61 = vlaneseq
  %v62 = vshrl.u32 %v61, 7
  %v63 = vsub.s32 1, %v62
  %v64 = vrot.slane %v55, %v63
  %v65 = vlaneseq
  %v66 = vshrl.u32 %v65, 7
  %v67 = vsub.s32 2, %v66
  %v68 = vrot.slane %v55, %v67
  %v80 = vunpack.c.l.b16 %v15
  %v81 = vunpack.c.l.b16 %v16
  %v82 = vunpack.c.l.b16 %v17
  %v83 = vunpack.c.l.b16 %v18
  %v84 = vunpack.c.l.b16 %v19
  %v85 = vunpack.c.l.b16 %v20
  %v86 = vunpack.c.l.b16 %v21
  %v87 = vunpack.c.l.b16 %v22
  %v88 = vpack.c.b16 %v81, %v80
  %v89 = vpack.c.b16 %v83, %v82
  %v90 = vpack.c.b16 %v85, %v84
  %v91 = vpack.c.b16 %v87, %v86
  %v128 = vunpack.c.l.b16 %v23
  %v129 = vunpack.c.h.b16 %v23
  %v130 = vunpack.c.l.b16 %v24
  %v131 = vunpack.c.l.b16 %v25
  %v132 = vunpack.c.h.b16 %v25
  %v133 = vunpack.c.l.b16 %v26
  %v134 = vunpack.c.l.b16 %v27
  %v135 = vunpack.c.h.b16 %v27
  %v136 = vunpack.c.l.b16 %v28
  %v137 = vunpack.c.l.b16 %v29
  %v138 = vunpack.c.h.b16 %v29
  %v139 = vunpack.c.l.b16 %v30
  %v140 = vunpack.c.l.b16 %v31
  %v141 = vunpack.c.h.b16 %v31
  %v142 = vunpack.c.l.b16 %v32
  %v143 = vunpack.c.l.b16 %v33
  %v144 = vunpack.c.h.b16 %v33
  %v145 = vunpack.c.l.b16 %v34
  %v146 = vunpack.c.l.b16 %v35
  %v147 = vunpack.c.h.b16 %v35
  %v148 = vunpack.c.l.b16 %v36
  %v149 = vunpack.c.l.b16 %v37
  %v150 = vunpack.c.h.b16 %v37
  %v151 = vunpack.c.l.b16 %v38
  %v152 = vunpack.c.l.b16 %v39
  %v153 = vunpack.c.h.b16 %v39
  %v154 = vunpack.c.l.b16 %v40
  %v155 = vunpack.c.l.b16 %v41
  %v156 = vunpack.c.h.b16 %v41
  %v157 = vunpack.c.l.b16 %v42
  %v158 = vunpack.c.l.b16 %v43
  %v159 = vunpack.c.h.b16 %v43
  %v160 = vunpack.c.l.b16 %v44
  %v161 = vunpack.c.l.b16 %v45
  %v162 = vunpack.c.h.b16 %v45
  %v163 = vunpack.c.l.b16 %v46
  %v164 = vunpack.c.l.b16 %v47
  %v165 = vunpack.c.h.b16 %v47
  %v166 = vunpack.c.l.b16 %v48
  %v167 = vunpack.c.l.b16 %v49
  %v168 = vunpack.c.h.b16 %v49
  %v169 = vunpack.c.l.b16 %v50
  %v170 = vunpack.c.l.b16 %v51
  %v171 = vunpack.c.h.b16 %v51
  %v172 = vunpack.c.l.b16 %v52
  %v173 = vunpack.c.l.b16 %v53
  %v174 = vunpack.c.h.b16 %v53
  %v175 = vunpack.c.l.b16 %v54
  %v176 = vpack.c.b16 %v131, %v128
  %v177 = vpack.c.b16 %v132, %v129
  %v178 = vpack.c.b16 %v133, %v130
  %v179 = vpack.c.b16 %v137, %v134
  %v180 = vpack.c.b16 %v138, %v135
  %v181 = vpack.c.b16 %v139, %v136
  %v182 = vpack.c.b16 %v143, %v140
  %v183 = vpack.c.b16 %v144, %v141
  %v184 = vpack.c.b16 %v145, %v142
  %v185 = vpack.c.b16 %v149, %v146
  %v186 = vpack.c.b16 %v150, %v147
  %v187 = vpack.c.b16 %v151, %v148
  %v188 = vpack.c.b16 %v155, %v152
  %v189 = vpack.c.b16 %v156, %v153
  %v190 = vpack.c.b16 %v157, %v154
  %v191 = vpack.c.b16 %v161, %v158
  %v192 = vpack.c.b16 %v162, %v159
  %v193 = vpack.c.b16 %v163, %v160
  %v194 = vpack.c.b16 %v167, %v164
  %v195 = vpack.c.b16 %v168, %v165
  %v196 = vpack.c.b16 %v169, %v166
  %v197 = vpack.c.b16 %v173, %v170
  %v198 = vpack.c.b16 %v174, %v171
  %v199 = vpack.c.b16 %v175, %v172
  %224 = vmatprep.subr.bf16.mxu0 %v177
  %225 = vmatpush1.bf16.msra.mxu0 %v176
  %226 = vmatprep.subr.bf16.mxu0 %v180
  %227 = vmatpush1.bf16.msra.mxu0 %v179
  %228 = vmatprep.subr.bf16.mxu0 %v183
  %229 = vmatpush1.bf16.msra.mxu0 %v182
  %230 = vmatprep.subr.bf16.mxu0 %v186
  %231 = vmatpush1.bf16.msra.mxu0 %v185
  %232 = vmatprep.subr.bf16.mxu0 %v189
  %233 = vmatpush1.bf16.msra.mxu0 %v188
  %234 = vmatprep.subr.bf16.mxu0 %v192
  %235 = vmatpush1.bf16.msra.mxu0 %v191
  %236 = vmatprep.subr.bf16.mxu0 %v195
  %237 = vmatpush1.bf16.msra.mxu0 %v194
  %238 = vmatprep.subr.bf16.mxu0 %v198
  %239 = vmatpush1.bf16.msra.mxu0 %v197
  %240 = vmatprep.subr.bf16.mxu0 0
  %241 = vmatpush1.bf16.msra.mxu0 0
  %242 = vmatprep.subr.bf16.mxu0 0
  %243 = vmatpush1.bf16.msra.mxu0 0
  %244 = vmatprep.subr.bf16.mxu0 0
  %245 = vmatpush1.bf16.msra.mxu0 0
  %246 = vmatprep.subr.bf16.mxu0 0
  %247 = vmatpush1.bf16.msra.mxu0 0
  %248 = vmatprep.subr.bf16.mxu0 0
  %249 = vmatpush1.bf16.msra.mxu0 0
  %250 = vmatprep.subr.bf16.mxu0 0
  %251 = vmatpush1.bf16.msra.mxu0 0
  %252 = vmatprep.subr.bf16.mxu0 0
  %253 = vmatpush1.bf16.msra.mxu0 0
  %254 = vmatprep.subr.bf16.mxu0 0
  %255 = vmatpush1.bf16.msra.mxu0 0
  %256 = vmatprep.mubr.bf16.mxu0 0
  %257 = vmatmul.mubr.bf16.gmra.mrb[0].mxu0 %v88
  %v258 = vpop.f32.mrb[0].mxu0
  %v259 = vadd.f32 %v60, %v258
  %v260 = vpop.f32.mrb[0].mxu0
  %v261 = vadd.f32 %v64, %v260
  %v262 = vpop.f32.mrb[0].mxu0
  %v263 = vadd.f32 %v60, %v262
  %v264 = vpop.f32.mrb[0].mxu0
  %v265 = vadd.f32 %v64, %v264
  %266 = vmatprep.mubr.bf16.mxu0 0
  %267 = vmatmul.mubr.bf16.gmra.mrb[0].mxu0 %v89
  %v268 = vpop.f32.mrb[0].mxu0
  %v269 = vadd.f32 %v60, %v268
  %v270 = vpop.f32.mrb[0].mxu0
  %v271 = vadd.f32 %v64, %v270
  %v272 = vpop.f32.mrb[0].mxu0
  %v273 = vadd.f32 %v60, %v272
  %v274 = vpop.f32.mrb[0].mxu0
  %v275 = vadd.f32 %v64, %v274
  %276 = vmatprep.mubr.bf16.mxu0 0
  %277 = vmatmul.mubr.bf16.gmra.mrb[0].mxu0 %v90
  %v278 = vpop.f32.mrb[0].mxu0
  %v279 = vadd.f32 %v60, %v278
  %v280 = vpop.f32.mrb[0].mxu0
  %v281 = vadd.f32 %v64, %v280
  %v282 = vpop.f32.mrb[0].mxu0
  %v283 = vadd.f32 %v60, %v282
  %v284 = vpop.f32.mrb[0].mxu0
  %v285 = vadd.f32 %v64, %v284
  %286 = vmatprep.mubr.bf16.mxu0 0
  %287 = vmatmul.mubr.bf16.gmra.mrb[0].mxu0 %v91
  %v288 = vpop.f32.mrb[0].mxu0
  %v289 = vadd.f32 %v60, %v288
  %v290 = vpop.f32.mrb[0].mxu0
  %v291 = vadd.f32 %v64, %v290
  %v292 = vpop.f32.mrb[0].mxu0
  %v293 = vadd.f32 %v60, %v292
  %v294 = vpop.f32.mrb[0].mxu0
  %v295 = vadd.f32 %v64, %v294
  %296 = vdwg.mxu0
  %297 = vmatprep.subr.bf16.mxu0 0
  %298 = vmatpush1.bf16.msra.mxu0 %v178
  %299 = vmatprep.subr.bf16.mxu0 0
  %300 = vmatpush1.bf16.msra.mxu0 %v181
  %301 = vmatprep.subr.bf16.mxu0 0
  %302 = vmatpush1.bf16.msra.mxu0 %v184
  %303 = vmatprep.subr.bf16.mxu0 0
  %304 = vmatpush1.bf16.msra.mxu0 %v187
  %305 = vmatprep.subr.bf16.mxu0 0
  %306 = vmatpush1.bf16.msra.mxu0 %v190
  %307 = vmatprep.subr.bf16.mxu0 0
  %308 = vmatpush1.bf16.msra.mxu0 %v193
  %309 = vmatprep.subr.bf16.mxu0 0
  %310 = vmatpush1.bf16.msra.mxu0 %v196
  %311 = vmatprep.subr.bf16.mxu0 0
  %312 = vmatpush1.bf16.msra.mxu0 %v199
  %313 = vmatprep.subr.bf16.mxu0 0
  %314 = vmatpush1.bf16.msra.mxu0 0
  %315 = vmatprep.subr.bf16.mxu0 0
  %316 = vmatpush1.bf16.msra.mxu0 0
  %317 = vmatprep.subr.bf16.mxu0 0
  %318 = vmatpush1.bf16.msra.mxu0 0
  %319 = vmatprep.subr.bf16.mxu0 0
  %320 = vmatpush1.bf16.msra.mxu0 0
  %321 = vmatprep.subr.bf16.mxu0 0
  %322 = vmatpush1.bf16.msra.mxu0 0
  %323 = vmatprep.subr.bf16.mxu0 0
  %324 = vmatpush1.bf16.msra.mxu0 0
  %325 = vmatprep.subr.bf16.mxu0 0
  %326 = vmatpush1.bf16.msra.mxu0 0
  %327 = vmatprep.subr.bf16.mxu0 0
  %328 = vmatpush1.bf16.msra.mxu0 0
  %329 = vmatprep.mubr.bf16.mxu0 0
  %330 = vmatmul.mubr.bf16.gmra.mrb[0].mxu0 %v88
  %v331 = vpop.f32.mrb[0].mxu0
  %v332 = vadd.f32 %v68, %v331
  %v333 = vpop.f32.mrb[0].mxu0
  %v334 = vpop.f32.mrb[0].mxu0
  %v335 = vadd.f32 %v68, %v334
  %v336 = vpop.f32.mrb[0].mxu0
  %337 = vmatprep.mubr.bf16.mxu0 0
  %338 = vmatmul.mubr.bf16.gmra.mrb[0].mxu0 %v89
  %v339 = vpop.f32.mrb[0].mxu0
  %v340 = vadd.f32 %v68, %v339
  %v341 = vpop.f32.mrb[0].mxu0
  %v342 = vpop.f32.mrb[0].mxu0
  %v343 = vadd.f32 %v68, %v342
  %v344 = vpop.f32.mrb[0].mxu0
  %345 = vmatprep.mubr.bf16.mxu0 0
  %346 = vmatmul.mubr.bf16.gmra.mrb[0].mxu0 %v90
  %v347 = vpop.f32.mrb[0].mxu0
  %v348 = vadd.f32 %v68, %v347
  %v349 = vpop.f32.mrb[0].mxu0
  %v350 = vpop.f32.mrb[0].mxu0
  %v351 = vadd.f32 %v68, %v350
  %v352 = vpop.f32.mrb[0].mxu0
  %353 = vmatprep.mubr.bf16.mxu0 0
  %354 = vmatmul.mubr.bf16.gmra.mrb[0].mxu0 %v91
  %v355 = vpop.f32.mrb[0].mxu0
  %v356 = vadd.f32 %v68, %v355
  %v357 = vpop.f32.mrb[0].mxu0
  %v358 = vpop.f32.mrb[0].mxu0
  %v359 = vadd.f32 %v68, %v358
  %v360 = vpop.f32.mrb[0].mxu0
  %361 = vdwg.mxu0
  %v362 = vpack.c.bf16 %v263, %v259
  %v363 = vpack.c.bf16 %v265, %v261
  %v364 = vpack.c.bf16 %v335, %v332
  %v365 = vpack.c.bf16 %v273, %v269
  %v366 = vpack.c.bf16 %v275, %v271
  %v367 = vpack.c.bf16 %v343, %v340
  %v368 = vpack.c.bf16 %v283, %v279
  %v369 = vpack.c.bf16 %v285, %v281
  %v370 = vpack.c.bf16 %v351, %v348
  %v371 = vpack.c.bf16 %v293, %v289
  %v372 = vpack.c.bf16 %v295, %v291
  %v373 = vpack.c.bf16 %v359, %v356
  %v386 = vunpack.c.l.b16 %v362
  %v387 = vunpack.c.l.b16 %v363
  %v388 = vunpack.c.l.b16 %v364
  %v389 = vunpack.c.h.b16 %v362
  %v390 = vunpack.c.h.b16 %v363
  %v391 = vunpack.c.h.b16 %v364
  %v392 = vunpack.c.l.b16 %v365
  %v393 = vunpack.c.l.b16 %v366
  %v394 = vunpack.c.l.b16 %v367
  %v395 = vunpack.c.h.b16 %v365
  %v396 = vunpack.c.h.b16 %v366
  %v397 = vunpack.c.h.b16 %v367
  %v398 = vunpack.c.l.b16 %v368
  %v399 = vunpack.c.l.b16 %v369
  %v400 = vunpack.c.l.b16 %v370
  %v401 = vunpack.c.h.b16 %v368
  %v402 = vunpack.c.h.b16 %v369
  %v403 = vunpack.c.h.b16 %v370
  %v404 = vunpack.c.l.b16 %v371
  %v405 = vunpack.c.l.b16 %v372
  %v406 = vunpack.c.l.b16 %v373
  %v407 = vunpack.c.h.b16 %v371
  %v408 = vunpack.c.h.b16 %v372
  %v409 = vunpack.c.h.b16 %v373
  %v410 = vpack.c.b16 %v387, %v386
  %v411 = vpack.c.b16 %v388, %v388
  %v412 = vpack.c.b16 %v390, %v389
  %v413 = vpack.c.b16 %v391, %v391
  %v414 = vpack.c.b16 %v393, %v392
  %v415 = vpack.c.b16 %v394, %v394
  %v416 = vpack.c.b16 %v396, %v395
  %v417 = vpack.c.b16 %v397, %v397
  %v418 = vpack.c.b16 %v399, %v398
  %v419 = vpack.c.b16 %v400, %v400
  %v420 = vpack.c.b16 %v402, %v401
  %v421 = vpack.c.b16 %v403, %v403
  %v422 = vpack.c.b16 %v405, %v404
  %v423 = vpack.c.b16 %v406, %v406
  %v424 = vpack.c.b16 %v408, %v407
  %v425 = vpack.c.b16 %v409, %v409
  %442 = vst [vmem:[%s3] sm:$0xff] %v410
  %443 = vst [vmem:[%s3 + $0x8] sm:$0xf] %v411
  %444 = vst [vmem:[%s3 + $0xc] sm:$0xff] %v412
  %445 = vst [vmem:[%s3 + $0x14] sm:$0xf] %v413
  %446 = vst [vmem:[%s3 + $0x18] sm:$0xff] %v414
  %447 = vst [vmem:[%s3 + $0x20] sm:$0xf] %v415
  %448 = vst [vmem:[%s3 + $0x24] sm:$0xff] %v416
  %449 = vst [vmem:[%s3 + $0x2c] sm:$0xf] %v417
  %450 = vst [vmem:[%s3 + $0x30] sm:$0xff] %v418
  %451 = vst [vmem:[%s3 + $0x38] sm:$0xf] %v419
  %452 = vst [vmem:[%s3 + $0x3c] sm:$0xff] %v420
  %453 = vst [vmem:[%s3 + $0x44] sm:$0xf] %v421
  %454 = vst [vmem:[%s3 + $0x48] sm:$0xff] %v422
  %455 = vst [vmem:[%s3 + $0x50] sm:$0xf] %v423
  %456 = vst [vmem:[%s3 + $0x54] sm:$0xff] %v424
  %457 = vst [vmem:[%s3 + $0x5c] sm:$0xf] %v425
  // Predicated region
  $region14: #{model_forward.32} parent=0 // pred_check
    _
  $region15: #{model_forward.32} parent=0 // pred_check_branch
    %459 = sbr.rel (0) target = $region17
  $region16: #{model_forward.32} parent=0 // pred_region
    _
  $region17: #{model_forward.32} parent=0 // pred_fallthru
    _
  // Predicated region
  $region18: #{model_forward.32} parent=0 // pred_check
    _
  $region19: #{model_forward.32} parent=0 // pred_check_branch
    %461 = sbr.rel (0) target = $region21
  $region20: #{model_forward.32} parent=0 // pred_region
    _
  $region21: #{model_forward.32} parent=0 // pred_fallthru
    _

// kernel: model_forward.33
$region0: #{model_forward.33}
  #allocation0 [shape = 'u32[]', space=smem, size = 0x4, offset = 0x4, fixed_abs, tag = 'smem constant byte address 0x4 - core index']
  #allocation1 [shape = 'u32[144,128]{1,0:T(1,128)}', space=vmem, size = 0x12000, scoped, tag = 'internal scratch']
  %s0 = inlined_call_operand.vmem [shape: f32[64,8], index: 0, kind: input, shape index: {}]
  %s1 = inlined_call_operand.vmem [shape: bf16[8,128], index: 1, kind: input, shape index: {}]
  %s2 = inlined_call_operand.vmem [shape: f32[1,128], index: 2, kind: input, shape index: {}]
  %s3 = inlined_call_operand.vmem [shape: bf16[64,128], index: 3, kind: output, shape index: {}]
  %s4 = sld [smem:[#allocation0]]
  $region22: #{model_forward.33} parent=0
    _
  %s6 = ssub.s32 1, %s4
  %s7 = scalar_select 0, %s6, %s4
  // Predicated region
  $region2: #{model_forward.33} parent=0 // pred_check
    _
  $region3: #{model_forward.33} parent=0 // pred_check_branch
    %9 = sbr.rel (0) target = $region5
  $region4: #{model_forward.33} parent=0 // pred_region
    _
  $region5: #{model_forward.33} parent=0 // pred_fallthru
    _
  // Predicated region
  $region6: #{model_forward.33} parent=0 // pred_check
    _
  $region7: #{model_forward.33} parent=0 // pred_check_branch
    %11 = sbr.rel (0) target = $region9
  $region8: #{model_forward.33} parent=0 // pred_region
    _
  $region9: #{model_forward.33} parent=0 // pred_fallthru
    _
  // Predicated region
  $region10: #{model_forward.33} parent=0 // pred_check
    _
  $region11: #{model_forward.33} parent=0 // pred_check_branch
    %13 = sbr.rel (0) target = $region13
  $region12: #{model_forward.33} parent=0 // pred_region
    _
  $region13: #{model_forward.33} parent=0 // pred_fallthru
    _
  %v15 = vld [vmem:[%s0] sm:$0xff]
  %v16 = vld [vmem:[%s0 + $0x8] sm:$0xff]
  %v17 = vld [vmem:[%s0 + $0x10] sm:$0xff]
  %v18 = vld [vmem:[%s0 + $0x18] sm:$0xff]
  %v19 = vld [vmem:[%s0 + $0x20] sm:$0xff]
  %v20 = vld [vmem:[%s0 + $0x28] sm:$0xff]
  %v21 = vld [vmem:[%s0 + $0x30] sm:$0xff]
  %v22 = vld [vmem:[%s0 + $0x38] sm:$0xff]
  %v23 = vpack.c.bf16 %v16, %v15
  %v24 = vpack.c.bf16 %v18, %v17
  %v25 = vpack.c.bf16 %v20, %v19
  %v26 = vpack.c.bf16 %v22, %v21
  %v27 = vld [vmem:[%s1] sm:$0xf]
  %v28 = vld [vmem:[%s2] sm:$0x1]
  %v30 = vlaneseq
  %v31 = vshrl.u32 %v30, 7
  %v32 = vsub.s32 0, %v31
  %v33 = vrot.slane %v28, %v32
  %vm35 = vcmask 64512
  %v37 = vsel %vm35, %v23, 0
  %v40 = vsel %vm35, %v24, 0
  %v43 = vsel %vm35, %v25, 0
  %v46 = vsel %vm35, %v26, 0
  %vm48 = vcmask 1043456
  %v50 = vsel %vm48, %v27, 0
  %52 = vmatprep.subr.bf16.mxu0 0
  %53 = vmatpush1.bf16.msra.mxu0 %v50
  %54 = vmatprep.subr.bf16.mxu0 0
  %55 = vmatpush1.bf16.msra.mxu0 0
  %56 = vmatprep.subr.bf16.mxu0 0
  %57 = vmatpush1.bf16.msra.mxu0 0
  %58 = vmatprep.subr.bf16.mxu0 0
  %59 = vmatpush1.bf16.msra.mxu0 0
  %60 = vmatprep.subr.bf16.mxu0 0
  %61 = vmatpush1.bf16.msra.mxu0 0
  %62 = vmatprep.subr.bf16.mxu0 0
  %63 = vmatpush1.bf16.msra.mxu0 0
  %64 = vmatprep.subr.bf16.mxu0 0
  %65 = vmatpush1.bf16.msra.mxu0 0
  %66 = vmatprep.subr.bf16.mxu0 0
  %67 = vmatpush1.bf16.msra.mxu0 0
  %68 = vmatprep.subr.bf16.mxu0 0
  %69 = vmatpush1.bf16.msra.mxu0 0
  %70 = vmatprep.subr.bf16.mxu0 0
  %71 = vmatpush1.bf16.msra.mxu0 0
  %72 = vmatprep.subr.bf16.mxu0 0
  %73 = vmatpush1.bf16.msra.mxu0 0
  %74 = vmatprep.subr.bf16.mxu0 0
  %75 = vmatpush1.bf16.msra.mxu0 0
  %76 = vmatprep.subr.bf16.mxu0 0
  %77 = vmatpush1.bf16.msra.mxu0 0
  %78 = vmatprep.subr.bf16.mxu0 0
  %79 = vmatpush1.bf16.msra.mxu0 0
  %80 = vmatprep.subr.bf16.mxu0 0
  %81 = vmatpush1.bf16.msra.mxu0 0
  %82 = vmatprep.subr.bf16.mxu0 0
  %83 = vmatpush1.bf16.msra.mxu0 0
  %84 = vmatprep.mubr.bf16.mxu0 0
  %85 = vmatmul.mubr.bf16.gmra.mrb[0].mxu0 %v37
  %v86 = vpop.f32.mrb[0].mxu0
  %v87 = vadd.f32 %v33, %v86
  %v88 = vpop.f32.mrb[0].mxu0
  %v89 = vpop.f32.mrb[0].mxu0
  %v90 = vadd.f32 %v33, %v89
  %v91 = vpop.f32.mrb[0].mxu0
  %92 = vmatprep.mubr.bf16.mxu0 0
  %93 = vmatmul.mubr.bf16.gmra.mrb[0].mxu0 %v40
  %v94 = vpop.f32.mrb[0].mxu0
  %v95 = vadd.f32 %v33, %v94
  %v96 = vpop.f32.mrb[0].mxu0
  %v97 = vpop.f32.mrb[0].mxu0
  %v98 = vadd.f32 %v33, %v97
  %v99 = vpop.f32.mrb[0].mxu0
  %100 = vmatprep.mubr.bf16.mxu0 0
  %101 = vmatmul.mubr.bf16.gmra.mrb[0].mxu0 %v43
  %v102 = vpop.f32.mrb[0].mxu0
  %v103 = vadd.f32 %v33, %v102
  %v104 = vpop.f32.mrb[0].mxu0
  %v105 = vpop.f32.mrb[0].mxu0
  %v106 = vadd.f32 %v33, %v105
  %v107 = vpop.f32.mrb[0].mxu0
  %108 = vmatprep.mubr.bf16.mxu0 0
  %109 = vmatmul.mubr.bf16.gmra.mrb[0].mxu0 %v46
  %v110 = vpop.f32.mrb[0].mxu0
  %v111 = vadd.f32 %v33, %v110
  %v112 = vpop.f32.mrb[0].mxu0
  %v113 = vpop.f32.mrb[0].mxu0
  %v114 = vadd.f32 %v33, %v113
  %v115 = vpop.f32.mrb[0].mxu0
  %116 = vdwg.mxu0
  %v117 = vpack.c.bf16 %v90, %v87
  %v118 = vpack.c.bf16 %v98, %v95
  %v119 = vpack.c.bf16 %v106, %v103
  %v120 = vpack.c.bf16 %v114, %v111
  %v125 = vunpack.c.l.b16 %v117
  %v126 = vunpack.c.h.b16 %v117
  %v127 = vunpack.c.l.b16 %v118
  %v128 = vunpack.c.h.b16 %v118
  %v129 = vunpack.c.l.b16 %v119
  %v130 = vunpack.c.h.b16 %v119
  %v131 = vunpack.c.l.b16 %v120
  %v132 = vunpack.c.h.b16 %v120
  %v133 = vpack.c.b16 %v125, %v125
  %v134 = vpack.c.b16 %v126, %v126
  %v135 = vpack.c.b16 %v127, %v127
  %v136 = vpack.c.b16 %v128, %v128
  %v137 = vpack.c.b16 %v129, %v129
  %v138 = vpack.c.b16 %v130, %v130
  %v139 = vpack.c.b16 %v131, %v131
  %v140 = vpack.c.b16 %v132, %v132
  %149 = vst [vmem:[%s3] sm:$0xf] %v133
  %150 = vst [vmem:[%s3 + $0x4] sm:$0xf] %v134
  %151 = vst [vmem:[%s3 + $0x8] sm:$0xf] %v135
  %152 = vst [vmem:[%s3 + $0xc] sm:$0xf] %v136
  %153 = vst [vmem:[%s3 + $0x10] sm:$0xf] %v137
  %154 = vst [vmem:[%s3 + $0x14] sm:$0xf] %v138
  %155 = vst [vmem:[%s3 + $0x18] sm:$0xf] %v139
  %156 = vst [vmem:[%s3 + $0x1c] sm:$0xf] %v140
  // Predicated region
  $region14: #{model_forward.33} parent=0 // pred_check
    _
  $region15: #{model_forward.33} parent=0 // pred_check_branch
    %158 = sbr.rel (0) target = $region17
  $region16: #{model_forward.33} parent=0 // pred_region
    _
  $region17: #{model_forward.33} parent=0 // pred_fallthru
    _
  // Predicated region
  $region18: #{model_forward.33} parent=0 // pred_check
    _
  $region19: #{model_forward.33} parent=0 // pred_check_branch
    %160 = sbr.rel (0) target = $region21
  $region20: #{model_forward.33} parent=0 // pred_region
    _
  $region21: #{model_forward.33} parent=0 // pred_fallthru
    _

// kernel: model_forward.35
$region0: #{model_forward.35}
  #allocation0 [shape = 'u32[]', space=smem, size = 0x4, offset = 0x4, fixed_abs, tag = 'smem constant byte address 0x4 - core index']
  #allocation1 [shape = 'u32[144,128]{1,0:T(1,128)}', space=vmem, size = 0x12000, scoped, tag = 'internal scratch']
  %s0 = inlined_call_operand.vmem [shape: bf16[64,128], index: 0, kind: input, shape index: {}]
  %s1 = inlined_call_operand.vmem [shape: bf16[128,128], index: 1, kind: input, shape index: {}]
  %s2 = inlined_call_operand.vmem [shape: f32[1,128], index: 2, kind: input, shape index: {}]
  %s3 = inlined_call_operand.vmem [shape: bf16[64,128], index: 3, kind: output, shape index: {}]
  %s4 = sld [smem:[#allocation0]]
  $region22: #{model_forward.35} parent=0
    _
  %s6 = ssub.s32 1, %s4
  %s7 = scalar_select 0, %s6, %s4
  // Predicated region
  $region2: #{model_forward.35} parent=0 // pred_check
    _
  $region3: #{model_forward.35} parent=0 // pred_check_branch
    %9 = sbr.rel (0) target = $region5
  $region4: #{model_forward.35} parent=0 // pred_region
    _
  $region5: #{model_forward.35} parent=0 // pred_fallthru
    _
  // Predicated region
  $region6: #{model_forward.35} parent=0 // pred_check
    _
  $region7: #{model_forward.35} parent=0 // pred_check_branch
    %11 = sbr.rel (0) target = $region9
  $region8: #{model_forward.35} parent=0 // pred_region
    _
  $region9: #{model_forward.35} parent=0 // pred_fallthru
    _
  // Predicated region
  $region10: #{model_forward.35} parent=0 // pred_check
    _
  $region11: #{model_forward.35} parent=0 // pred_check_branch
    %13 = sbr.rel (0) target = $region13
  $region12: #{model_forward.35} parent=0 // pred_region
    _
  $region13: #{model_forward.35} parent=0 // pred_fallthru
    _
  %v15 = vld [vmem:[%s0] sm:$0xf]
  %v16 = vld [vmem:[%s0 + $0x4] sm:$0xf]
  %v17 = vld [vmem:[%s0 + $0x8] sm:$0xf]
  %v18 = vld [vmem:[%s0 + $0xc] sm:$0xf]
  %v19 = vld [vmem:[%s0 + $0x10] sm:$0xf]
  %v20 = vld [vmem:[%s0 + $0x14] sm:$0xf]
  %v21 = vld [vmem:[%s0 + $0x18] sm:$0xf]
  %v22 = vld [vmem:[%s0 + $0x1c] sm:$0xf]
  %v23 = vld [vmem:[%s1] sm:$0xf]
  %v24 = vld [vmem:[%s1 + $0x4] sm:$0xf]
  %v25 = vld [vmem:[%s1 + $0x8] sm:$0xf]
  %v26 = vld [vmem:[%s1 + $0xc] sm:$0xf]
  %v27 = vld [vmem:[%s1 + $0x10] sm:$0xf]
  %v28 = vld [vmem:[%s1 + $0x14] sm:$0xf]
  %v29 = vld [vmem:[%s1 + $0x18] sm:$0xf]
  %v30 = vld [vmem:[%s1 + $0x1c] sm:$0xf]
  %v31 = vld [vmem:[%s1 + $0x20] sm:$0xf]
  %v32 = vld [vmem:[%s1 + $0x24] sm:$0xf]
  %v33 = vld [vmem:[%s1 + $0x28] sm:$0xf]
  %v34 = vld [vmem:[%s1 + $0x2c] sm:$0xf]
  %v35 = vld [vmem:[%s1 + $0x30] sm:$0xf]
  %v36 = vld [vmem:[%s1 + $0x34] sm:$0xf]
  %v37 = vld [vmem:[%s1 + $0x38] sm:$0xf]
  %v38 = vld [vmem:[%s1 + $0x3c] sm:$0xf]
  %v39 = vld [vmem:[%s2] sm:$0x1]
  %v41 = vlaneseq
  %v42 = vshrl.u32 %v41, 7
  %v43 = vsub.s32 0, %v42
  %v44 = vrot.slane %v39, %v43
  %v54 = vunpack.c.l.b16 %v15
  %v55 = vunpack.c.l.b16 %v16
  %v56 = vunpack.c.l.b16 %v17
  %v57 = vunpack.c.l.b16 %v18
  %v58 = vunpack.c.l.b16 %v19
  %v59 = vunpack.c.l.b16 %v20
  %v60 = vunpack.c.l.b16 %v21
  %v61 = vunpack.c.l.b16 %v22
  %v62 = vpack.c.b16 %v55, %v54
  %v63 = vpack.c.b16 %v57, %v56
  %v64 = vpack.c.b16 %v59, %v58
  %v65 = vpack.c.b16 %v61, %v60
  %v86 = vunpack.c.l.b16 %v23
  %v87 = vunpack.c.l.b16 %v24
  %v88 = vunpack.c.l.b16 %v25
  %v89 = vunpack.c.l.b16 %v26
  %v90 = vunpack.c.l.b16 %v27
  %v91 = vunpack.c.l.b16 %v28
  %v92 = vunpack.c.l.b16 %v29
  %v93 = vunpack.c.l.b16 %v30
  %v94 = vunpack.c.l.b16 %v31
  %v95 = vunpack.c.l.b16 %v32
  %v96 = vunpack.c.l.b16 %v33
  %v97 = vunpack.c.l.b16 %v34
  %v98 = vunpack.c.l.b16 %v35
  %v99 = vunpack.c.l.b16 %v36
  %v100 = vunpack.c.l.b16 %v37
  %v101 = vunpack.c.l.b16 %v38
  %v102 = vpack.c.b16 %v87, %v86
  %v103 = vpack.c.b16 %v89, %v88
  %v104 = vpack.c.b16 %v91, %v90
  %v105 = vpack.c.b16 %v93, %v92
  %v106 = vpack.c.b16 %v95, %v94
  %v107 = vpack.c.b16 %v97, %v96
  %v108 = vpack.c.b16 %v99, %v98
  %v109 = vpack.c.b16 %v101, %v100
  %118 = vmatprep.subr.bf16.mxu0 0
  %119 = vmatpush1.bf16.msra.mxu0 %v102
  %120 = vmatprep.subr.bf16.mxu0 0
  %121 = vmatpush1.bf16.msra.mxu0 %v103
  %122 = vmatprep.subr.bf16.mxu0 0
  %123 = vmatpush1.bf16.msra.mxu0 %v104
  %124 = vmatprep.subr.bf16.mxu0 0
  %125 = vmatpush1.bf16.msra.mxu0 %v105
  %126 = vmatprep.subr.bf16.mxu0 0
  %127 = vmatpush1.bf16.msra.mxu0 %v106
  %128 = vmatprep.subr.bf16.mxu0 0
  %129 = vmatpush1.bf16.msra.mxu0 %v107
  %130 = vmatprep.subr.bf16.mxu0 0
  %131 = vmatpush1.bf16.msra.mxu0 %v108
  %132 = vmatprep.subr.bf16.mxu0 0
  %133 = vmatpush1.bf16.msra.mxu0 %v109
  %134 = vmatprep.subr.bf16.mxu0 0
  %135 = vmatpush1.bf16.msra.mxu0 0
  %136 = vmatprep.subr.bf16.mxu0 0
  %137 = vmatpush1.bf16.msra.mxu0 0
  %138 = vmatprep.subr.bf16.mxu0 0
  %139 = vmatpush1.bf16.msra.mxu0 0
  %140 = vmatprep.subr.bf16.mxu0 0
  %141 = vmatpush1.bf16.msra.mxu0 0
  %142 = vmatprep.subr.bf16.mxu0 0
  %143 = vmatpush1.bf16.msra.mxu0 0
  %144 = vmatprep.subr.bf16.mxu0 0
  %145 = vmatpush1.bf16.msra.mxu0 0
  %146 = vmatprep.subr.bf16.mxu0 0
  %147 = vmatpush1.bf16.msra.mxu0 0
  %148 = vmatprep.subr.bf16.mxu0 0
  %149 = vmatpush1.bf16.msra.mxu0 0
  %150 = vmatprep.mubr.bf16.mxu0 0
  %151 = vmatmul.mubr.bf16.gmra.mrb[0].mxu0 %v62
  %v152 = vpop.f32.mrb[0].mxu0
  %v153 = vadd.f32 %v44, %v152
  %v154 = vpop.f32.mrb[0].mxu0
  %v155 = vpop.f32.mrb[0].mxu0
  %v156 = vadd.f32 %v44, %v155
  %v157 = vpop.f32.mrb[0].mxu0
  %158 = vmatprep.mubr.bf16.mxu0 0
  %159 = vmatmul.mubr.bf16.gmra.mrb[0].mxu0 %v63
  %v160 = vpop.f32.mrb[0].mxu0
  %v161 = vadd.f32 %v44, %v160
  %v162 = vpop.f32.mrb[0].mxu0
  %v163 = vpop.f32.mrb[0].mxu0
  %v164 = vadd.f32 %v44, %v163
  %v165 = vpop.f32.mrb[0].mxu0
  %166 = vmatprep.mubr.bf16.mxu0 0
  %167 = vmatmul.mubr.bf16.gmra.mrb[0].mxu0 %v64
  %v168 = vpop.f32.mrb[0].mxu0
  %v169 = vadd.f32 %v44, %v168
  %v170 = vpop.f32.mrb[0].mxu0
  %v171 = vpop.f32.mrb[0].mxu0
  %v172 = vadd.f32 %v44, %v171
  %v173 = vpop.f32.mrb[0].mxu0
  %174 = vmatprep.mubr.bf16.mxu0 0
  %175 = vmatmul.mubr.bf16.gmra.mrb[0].mxu0 %v65
  %v176 = vpop.f32.mrb[0].mxu0
  %v177 = vadd.f32 %v44, %v176
  %v178 = vpop.f32.mrb[0].mxu0
  %v179 = vpop.f32.mrb[0].mxu0
  %v180 = vadd.f32 %v44, %v179
  %v181 = vpop.f32.mrb[0].mxu0
  %182 = vdwg.mxu0
  %v183 = vmax.f32 %v153, 0.0
  %v184 = vmax.f32 %v156, 0.0
  %v185 = vmax.f32 %v161, 0.0
  %v186 = vmax.f32 %v164, 0.0
  %v187 = vmax.f32 %v169, 0.0
  %v188 = vmax.f32 %v172, 0.0
  %v189 = vmax.f32 %v177, 0.0
  %v190 = vmax.f32 %v180, 0.0
  %v191 = vpack.c.bf16 %v184, %v183
  %v192 = vpack.c.bf16 %v186, %v185
  %v193 = vpack.c.bf16 %v188, %v187
  %v194 = vpack.c.bf16 %v190, %v189
  %v199 = vunpack.c.l.b16 %v191
  %v200 = vunpack.c.h.b16 %v191
  %v201 = vunpack.c.l.b16 %v192
  %v202 = vunpack.c.h.b16 %v192
  %v203 = vunpack.c.l.b16 %v193
  %v204 = vunpack.c.h.b16 %v193
  %v205 = vunpack.c.l.b16 %v194
  %v206 = vunpack.c.h.b16 %v194
  %v207 = vpack.c.b16 %v199, %v199
  %v208 = vpack.c.b16 %v200, %v200
  %v209 = vpack.c.b16 %v201, %v201
  %v210 = vpack.c.b16 %v202, %v202
  %v211 = vpack.c.b16 %v203, %v203
  %v212 = vpack.c.b16 %v204, %v204
  %v213 = vpack.c.b16 %v205, %v205
  %v214 = vpack.c.b16 %v206, %v206
  %223 = vst [vmem:[%s3] sm:$0xf] %v207
  %224 = vst [vmem:[%s3 + $0x4] sm:$0xf] %v208
  %225 = vst [vmem:[%s3 + $0x8] sm:$0xf] %v209
  %226 = vst [vmem:[%s3 + $0xc] sm:$0xf] %v210
  %227 = vst [vmem:[%s3 + $0x10] sm:$0xf] %v211
  %228 = vst [vmem:[%s3 + $0x14] sm:$0xf] %v212
  %229 = vst [vmem:[%s3 + $0x18] sm:$0xf] %v213
  %230 = vst [vmem:[%s3 + $0x1c] sm:$0xf] %v214
  // Predicated region
  $region14: #{model_forward.35} parent=0 // pred_check
    _
  $region15: #{model_forward.35} parent=0 // pred_check_branch
    %232 = sbr.rel (0) target = $region17
  $region16: #{model_forward.35} parent=0 // pred_region
    _
  $region17: #{model_forward.35} parent=0 // pred_fallthru
    _
  // Predicated region
  $region18: #{model_forward.35} parent=0 // pred_check
    _
  $region19: #{model_forward.35} parent=0 // pred_check_branch
    %234 = sbr.rel (0) target = $region21
  $region20: #{model_forward.35} parent=0 // pred_region
    _
  $region21: #{model_forward.35} parent=0 // pred_fallthru
    _

// kernel: model_forward.51
$region0: #{model_forward.51}
  #allocation0 [shape = 'u32[]', space=smem, size = 0x4, offset = 0x4, fixed_abs, tag = 'smem constant byte address 0x4 - core index']
  #allocation1 [shape = 'u32[144,128]{1,0:T(1,128)}', space=vmem, size = 0x12000, scoped, tag = 'internal scratch']
  %s0 = inlined_call_operand.vmem [shape: bf16[64,128], index: 0, kind: input, shape index: {}]
  %s1 = inlined_call_operand.vmem [shape: bf16[128,128], index: 1, kind: input, shape index: {}]
  %s2 = inlined_call_operand.vmem [shape: f32[1,128], index: 2, kind: input, shape index: {}]
  %s3 = inlined_call_operand.vmem [shape: bf16[64,128], index: 3, kind: output, shape index: {0}]
  %s4 = inlined_call_operand.vmem [shape: f32[8,128], index: 4, kind: output, shape index: {1}]
  %5 = xla_tuple %s3, %s4
  %s6 = sld [smem:[#allocation0]]
  $region34: #{model_forward.51} parent=0
    _
  %s8 = ssub.s32 1, %s6
  %s9 = scalar_select 0, %s8, %s6
  // Predicated region
  $region2: #{model_forward.51} parent=0 // pred_check
    _
  $region3: #{model_forward.51} parent=0 // pred_check_branch
    %11 = sbr.rel (0) target = $region5
  $region4: #{model_forward.51} parent=0 // pred_region
    _
  $region5: #{model_forward.51} parent=0 // pred_fallthru
    _
  // Predicated region
  $region6: #{model_forward.51} parent=0 // pred_check
    _
  $region7: #{model_forward.51} parent=0 // pred_check_branch
    %13 = sbr.rel (0) target = $region9
  $region8: #{model_forward.51} parent=0 // pred_region
    _
  $region9: #{model_forward.51} parent=0 // pred_fallthru
    _
  // Predicated region
  $region10: #{model_forward.51} parent=0 // pred_check
    _
  $region11: #{model_forward.51} parent=0 // pred_check_branch
    %15 = sbr.rel (0) target = $region13
  $region12: #{model_forward.51} parent=0 // pred_region
    _
  $region13: #{model_forward.51} parent=0 // pred_fallthru
    _
  %v17 = vld [vmem:[%s0] sm:$0xf]
  %v18 = vld [vmem:[%s0 + $0x4] sm:$0xf]
  %v19 = vld [vmem:[%s0 + $0x8] sm:$0xf]
  %v20 = vld [vmem:[%s0 + $0xc] sm:$0xf]
  %v21 = vld [vmem:[%s0 + $0x10] sm:$0xf]
  %v22 = vld [vmem:[%s0 + $0x14] sm:$0xf]
  %v23 = vld [vmem:[%s0 + $0x18] sm:$0xf]
  %v24 = vld [vmem:[%s0 + $0x1c] sm:$0xf]
  %v25 = vld [vmem:[%s1] sm:$0xf]
  %v26 = vld [vmem:[%s1 + $0x4] sm:$0xf]
  %v27 = vld [vmem:[%s1 + $0x8] sm:$0xf]
  %v28 = vld [vmem:[%s1 + $0xc] sm:$0xf]
  %v29 = vld [vmem:[%s1 + $0x10] sm:$0xf]
  %v30 = vld [vmem:[%s1 + $0x14] sm:$0xf]
  %v31 = vld [vmem:[%s1 + $0x18] sm:$0xf]
  %v32 = vld [vmem:[%s1 + $0x1c] sm:$0xf]
  %v33 = vld [vmem:[%s1 + $0x20] sm:$0xf]
  %v34 = vld [vmem:[%s1 + $0x24] sm:$0xf]
  %v35 = vld [vmem:[%s1 + $0x28] sm:$0xf]
  %v36 = vld [vmem:[%s1 + $0x2c] sm:$0xf]
  %v37 = vld [vmem:[%s1 + $0x30] sm:$0xf]
  %v38 = vld [vmem:[%s1 + $0x34] sm:$0xf]
  %v39 = vld [vmem:[%s1 + $0x38] sm:$0xf]
  %v40 = vld [vmem:[%s1 + $0x3c] sm:$0xf]
  %v41 = vld [vmem:[%s2] sm:$0x1]
  %v43 = vlaneseq
  %v44 = vshrl.u32 %v43, 7
  %v45 = vsub.s32 0, %v44
  %v46 = vrot.slane %v41, %v45
  %v56 = vunpack.c.l.b16 %v17
  %v57 = vunpack.c.l.b16 %v18
  %v58 = vunpack.c.l.b16 %v19
  %v59 = vunpack.c.l.b16 %v20
  %v60 = vunpack.c.l.b16 %v21
  %v61 = vunpack.c.l.b16 %v22
  %v62 = vunpack.c.l.b16 %v23
  %v63 = vunpack.c.l.b16 %v24
  %v64 = vpack.c.b16 %v57, %v56
  %v65 = vpack.c.b16 %v59, %v58
  %v66 = vpack.c.b16 %v61, %v60
  %v67 = vpack.c.b16 %v63, %v62
  %v88 = vunpack.c.l.b16 %v25
  %v89 = vunpack.c.l.b16 %v26
  %v90 = vunpack.c.l.b16 %v27
  %v91 = vunpack.c.l.b16 %v28
  %v92 = vunpack.c.l.b16 %v29
  %v93 = vunpack.c.l.b16 %v30
  %v94 = vunpack.c.l.b16 %v31
  %v95 = vunpack.c.l.b16 %v32
  %v96 = vunpack.c.l.b16 %v33
  %v97 = vunpack.c.l.b16 %v34
  %v98 = vunpack.c.l.b16 %v35
  %v99 = vunpack.c.l.b16 %v36
  %v100 = vunpack.c.l.b16 %v37
  %v101 = vunpack.c.l.b16 %v38
  %v102 = vunpack.c.l.b16 %v39
  %v103 = vunpack.c.l.b16 %v40
  %v104 = vpack.c.b16 %v89, %v88
  %v105 = vpack.c.b16 %v91, %v90
  %v106 = vpack.c.b16 %v93, %v92
  %v107 = vpack.c.b16 %v95, %v94
  %v108 = vpack.c.b16 %v97, %v96
  %v109 = vpack.c.b16 %v99, %v98
  %v110 = vpack.c.b16 %v101, %v100
  %v111 = vpack.c.b16 %v103, %v102
  %120 = vmatprep.subr.bf16.mxu0 0
  %121 = vmatpush1.bf16.msra.mxu0 %v104
  %122 = vmatprep.subr.bf16.mxu0 0
  %123 = vmatpush1.bf16.msra.mxu0 %v105
  %124 = vmatprep.subr.bf16.mxu0 0
  %125 = vmatpush1.bf16.msra.mxu0 %v106
  %126 = vmatprep.subr.bf16.mxu0 0
  %127 = vmatpush1.bf16.msra.mxu0 %v107
  %128 = vmatprep.subr.bf16.mxu0 0
  %129 = vmatpush1.bf16.msra.mxu0 %v108
  %130 = vmatprep.subr.bf16.mxu0 0
  %131 = vmatpush1.bf16.msra.mxu0 %v109
  %132 = vmatprep.subr.bf16.mxu0 0
  %133 = vmatpush1.bf16.msra.mxu0 %v110
  %134 = vmatprep.subr.bf16.mxu0 0
  %135 = vmatpush1.bf16.msra.mxu0 %v111
  %136 = vmatprep.subr.bf16.mxu0 0
  %137 = vmatpush1.bf16.msra.mxu0 0
  %138 = vmatprep.subr.bf16.mxu0 0
  %139 = vmatpush1.bf16.msra.mxu0 0
  %140 = vmatprep.subr.bf16.mxu0 0
  %141 = vmatpush1.bf16.msra.mxu0 0
  %142 = vmatprep.subr.bf16.mxu0 0
  %143 = vmatpush1.bf16.msra.mxu0 0
  %144 = vmatprep.subr.bf16.mxu0 0
  %145 = vmatpush1.bf16.msra.mxu0 0
  %146 = vmatprep.subr.bf16.mxu0 0
  %147 = vmatpush1.bf16.msra.mxu0 0
  %148 = vmatprep.subr.bf16.mxu0 0
  %149 = vmatpush1.bf16.msra.mxu0 0
  %150 = vmatprep.subr.bf16.mxu0 0
  %151 = vmatpush1.bf16.msra.mxu0 0
  %152 = vmatprep.mubr.bf16.mxu0 0
  %153 = vmatmul.mubr.bf16.gmra.mrb[0].mxu0 %v64
  %v154 = vpop.f32.mrb[0].mxu0
  %v155 = vadd.f32 %v46, %v154
  %v156 = vpop.f32.mrb[0].mxu0
  %v157 = vpop.f32.mrb[0].mxu0
  %v158 = vadd.f32 %v46, %v157
  %v159 = vpop.f32.mrb[0].mxu0
  %160 = vmatprep.mubr.bf16.mxu0 0
  %161 = vmatmul.mubr.bf16.gmra.mrb[0].mxu0 %v65
  %v162 = vpop.f32.mrb[0].mxu0
  %v163 = vadd.f32 %v46, %v162
  %v164 = vpop.f32.mrb[0].mxu0
  %v165 = vpop.f32.mrb[0].mxu0
  %v166 = vadd.f32 %v46, %v165
  %v167 = vpop.f32.mrb[0].mxu0
  %168 = vmatprep.mubr.bf16.mxu0 0
  %169 = vmatmul.mubr.bf16.gmra.mrb[0].mxu0 %v66
  %v170 = vpop.f32.mrb[0].mxu0
  %v171 = vadd.f32 %v46, %v170
  %v172 = vpop.f32.mrb[0].mxu0
  %v173 = vpop.f32.mrb[0].mxu0
  %v174 = vadd.f32 %v46, %v173
  %v175 = vpop.f32.mrb[0].mxu0
  %176 = vmatprep.mubr.bf16.mxu0 0
  %177 = vmatmul.mubr.bf16.gmra.mrb[0].mxu0 %v67
  %v178 = vpop.f32.mrb[0].mxu0
  %v179 = vadd.f32 %v46, %v178
  %v180 = vpop.f32.mrb[0].mxu0
  %v181 = vpop.f32.mrb[0].mxu0
  %v182 = vadd.f32 %v46, %v181
  %v183 = vpop.f32.mrb[0].mxu0
  %184 = vdwg.mxu0
  %s185 = smul.u32 0, 64
  %v186 = vlaneseq
  %v187 = vshrl.u32 %v186, 7
  %v188 = vadd.s32 %v187, 8
  %v189 = vadd.s32 %v187, 16
  %v190 = vadd.s32 %v187, 24
  %v191 = vadd.s32 %v187, 32
  %v192 = vadd.s32 %v187, 40
  %v193 = vadd.s32 %v187, 48
  %v194 = vadd.s32 %v187, 56
  %v195 = vstv %s185
  %v196 = vadd.s32 %v187, %v195
  %v197 = vadd.s32 %v188, %v195
  %v198 = vadd.s32 %v189, %v195
  %v199 = vadd.s32 %v190, %v195
  %v200 = vadd.s32 %v191, %v195
  %v201 = vadd.s32 %v192, %v195
  %v202 = vadd.s32 %v193, %v195
  %v203 = vadd.s32 %v194, %v195
  %vm204 = vcmp.lt.s32.totalorder %v196, 64
  %vm205 = vcmp.lt.s32.totalorder %v197, 64
  %vm206 = vcmp.lt.s32.totalorder %v198, 64
  %vm207 = vcmp.lt.s32.totalorder %v199, 64
  %vm208 = vcmp.lt.s32.totalorder %v200, 64
  %vm209 = vcmp.lt.s32.totalorder %v201, 64
  %vm210 = vcmp.lt.s32.totalorder %v202, 64
  %vm211 = vcmp.lt.s32.totalorder %v203, 64
  %v212 = vsel %vm204, %v155, 0.0
  %v213 = vsel %vm205, %v158, 0.0
  %v214 = vsel %vm206, %v163, 0.0
  %v215 = vsel %vm207, %v166, 0.0
  %v216 = vsel %vm208, %v171, 0.0
  %v217 = vsel %vm209, %v174, 0.0
  %v218 = vsel %vm210, %v179, 0.0
  %v219 = vsel %vm211, %v182, 0.0
  %v220 = vadd.f32 %v212, %v213
  %v221 = vadd.f32 %v220, %v214
  %v222 = vadd.f32 %v221, %v215
  %v223 = vadd.f32 %v222, %v216
  %v224 = vadd.f32 %v223, %v217
  %v225 = vadd.f32 %v224, %v218
  %v226 = vadd.f32 %v225, %v219
  %v227 = vrot.slane %v226, 4
  %v228 = vadd.f32 %v226, %v227
  %v229 = vrot.slane %v228, 2
  %v230 = vadd.f32 %v228, %v229
  %v231 = vrot.slane %v230, 1
  %v232 = vadd.f32 %v230, %v231
  %v233 = vmul.f32 %v212, %v212
  %v234 = vmul.f32 %v213, %v213
  %v235 = vmul.f32 %v214, %v214
  %v236 = vmul.f32 %v215, %v215
  %v237 = vmul.f32 %v216, %v216
  %v238 = vmul.f32 %v217, %v217
  %v239 = vmul.f32 %v218, %v218
  %v240 = vmul.f32 %v219, %v219
  %v241 = vadd.f32 %v233, %v234
  %v242 = vadd.f32 %v241, %v235
  %v243 = vadd.f32 %v242, %v236
  %v244 = vadd.f32 %v243, %v237
  %v245 = vadd.f32 %v244, %v238
  %v246 = vadd.f32 %v245, %v239
  %v247 = vadd.f32 %v246, %v240
  %v248 = vrot.slane %v247, 4
  %v249 = vadd.f32 %v247, %v248
  %v250 = vrot.slane %v249, 2
  %v251 = vadd.f32 %v249, %v250
  %v252 = vrot.slane %v251, 1
  %v253 = vadd.f32 %v251, %v252
  %vm254 = vcmp.eq.s32.totalorder %v187, 0
  %v255 = vsel %vm254, %v232, 0.0
  %vm256 = vcmp.eq.s32.totalorder %v187, 1
  %v257 = vsel %vm256, %v253, 0.0
  %v258 = vadd.f32 %v255, %v257
  %p259 = scmp.eq.s32.totalorder 0, 0
  // Predicated region
  $region14: #{model_forward.51} parent=0 // pred_check
    %p260 = pneg %p259
  $region15: #{model_forward.51} parent=0 // pred_check_branch
    %262 = sbr.rel (%p260) target = $region17
  $region16: #{model_forward.51} parent=0 // pred_region
    %263 = vst [vmem:[%s4] sm:$0xff] 0.0
  $region17: #{model_forward.51} parent=0 // pred_fallthru
    _
  %v264 = vld [vmem:[%s4] sm:$0xff]
  %v265 = vadd.f32 %v264, %v258
  %266 = vst [vmem:[%s4] sm:$0xff] %v265
  %v267 = vpack.c.bf16 %v158, %v155
  %v268 = vpack.c.bf16 %v166, %v163
  %v269 = vpack.c.bf16 %v174, %v171
  %v270 = vpack.c.bf16 %v182, %v179
  %v275 = vunpack.c.l.b16 %v267
  %v276 = vunpack.c.h.b16 %v267
  %v277 = vunpack.c.l.b16 %v268
  %v278 = vunpack.c.h.b16 %v268
  %v279 = vunpack.c.l.b16 %v269
  %v280 = vunpack.c.h.b16 %v269
  %v281 = vunpack.c.l.b16 %v270
  %v282 = vunpack.c.h.b16 %v270
  %v283 = vpack.c.b16 %v275, %v275
  %v284 = vpack.c.b16 %v276, %v276
  %v285 = vpack.c.b16 %v277, %v277
  %v286 = vpack.c.b16 %v278, %v278
  %v287 = vpack.c.b16 %v279, %v279
  %v288 = vpack.c.b16 %v280, %v280
  %v289 = vpack.c.b16 %v281, %v281
  %v290 = vpack.c.b16 %v282, %v282
  %299 = vst [vmem:[%s3] sm:$0xf] %v283
  %300 = vst [vmem:[%s3 + $0x4] sm:$0xf] %v284
  %301 = vst [vmem:[%s3 + $0x8] sm:$0xf] %v285
  %302 = vst [vmem:[%s3 + $0xc] sm:$0xf] %v286
  %303 = vst [vmem:[%s3 + $0x10] sm:$0xf] %v287
  %304 = vst [vmem:[%s3 + $0x14] sm:$0xf] %v288
  %305 = vst [vmem:[%s3 + $0x18] sm:$0xf] %v289
  %306 = vst [vmem:[%s3 + $0x1c] sm:$0xf] %v290
  // Predicated region
  $region18: #{model_forward.51} parent=0 // pred_check
    _
  $region19: #{model_forward.51} parent=0 // pred_check_branch
    %308 = sbr.rel (0) target = $region21
  $region20: #{model_forward.51} parent=0 // pred_region
    _
  $region21: #{model_forward.51} parent=0 // pred_fallthru
    _
  // Predicated region
  $region22: #{model_forward.51} parent=0 // pred_check
    _
  $region23: #{model_forward.51} parent=0 // pred_check_branch
    %310 = sbr.rel (0) target = $region25
  $region24: #{model_forward.51} parent=0 // pred_region
    _
  $region25: #{model_forward.51} parent=0 // pred_fallthru
    _
  // Predicated region
  $region26: #{model_forward.51} parent=0 // pred_check
    _
  $region27: #{model_forward.51} parent=0 // pred_check_branch
    %312 = sbr.rel (0) target = $region29
  $region28: #{model_forward.51} parent=0 // pred_region
    _
  $region29: #{model_forward.51} parent=0 // pred_fallthru
    _
  // Predicated region
  $region30: #{model_forward.51} parent=0 // pred_check
    _
  $region31: #{model_forward.51} parent=0 // pred_check_branch
    %314 = sbr.rel (0) target = $region33
  $region32: #{model_forward.51} parent=0 // pred_region
    _
  $region33: #{model_forward.51} parent=0 // pred_fallthru
    _

// kernel: model_forward.52
$region0: #{model_forward.52}
  #allocation0 [shape = 'u32[]', space=smem, size = 0x4, offset = 0x4, fixed_abs, tag = 'smem constant byte address 0x4 - core index']
  #allocation1 [shape = 'u32[144,128]{1,0:T(1,128)}', space=vmem, size = 0x12000, scoped, tag = 'internal scratch']
  %s0 = inlined_call_operand.vmem [shape: bf16[64,128], index: 0, kind: input, shape index: {}]
  %s1 = inlined_call_operand.vmem [shape: f32[1,128], index: 1, kind: input, shape index: {}]
  %s2 = inlined_call_operand.vmem [shape: f32[1,128], index: 2, kind: input, shape index: {}]
  %s3 = inlined_call_operand.vmem [shape: bf16[64,128], index: 3, kind: output, shape index: {}]
  %s4 = sld [smem:[#allocation0]]
  $region22: #{model_forward.52} parent=0
    _
  %s6 = ssub.s32 1, %s4
  %s7 = scalar_select 0, %s6, %s4
  // Predicated region
  $region2: #{model_forward.52} parent=0 // pred_check
    _
  $region3: #{model_forward.52} parent=0 // pred_check_branch
    %9 = sbr.rel (0) target = $region5
  $region4: #{model_forward.52} parent=0 // pred_region
    _
  $region5: #{model_forward.52} parent=0 // pred_fallthru
    _
  // Predicated region
  $region6: #{model_forward.52} parent=0 // pred_check
    _
  $region7: #{model_forward.52} parent=0 // pred_check_branch
    %11 = sbr.rel (0) target = $region9
  $region8: #{model_forward.52} parent=0 // pred_region
    _
  $region9: #{model_forward.52} parent=0 // pred_fallthru
    _
  // Predicated region
  $region10: #{model_forward.52} parent=0 // pred_check
    _
  $region11: #{model_forward.52} parent=0 // pred_check_branch
    %13 = sbr.rel (0) target = $region13
  $region12: #{model_forward.52} parent=0 // pred_region
    _
  $region13: #{model_forward.52} parent=0 // pred_fallthru
    _
  %v14 = vld [vmem:[%s0] sm:$0xf]
  %v15 = vld [vmem:[%s0 + $0x4] sm:$0xf]
  %v16 = vld [vmem:[%s0 + $0x8] sm:$0xf]
  %v17 = vld [vmem:[%s0 + $0xc] sm:$0xf]
  %v18 = vld [vmem:[%s0 + $0x10] sm:$0xf]
  %v19 = vld [vmem:[%s0 + $0x14] sm:$0xf]
  %v20 = vld [vmem:[%s0 + $0x18] sm:$0xf]
  %v21 = vld [vmem:[%s0 + $0x1c] sm:$0xf]
  %v22 = vunpack.c.l.bf16 %v14
  %v23 = vunpack.c.l.bf16 %v15
  %v24 = vunpack.c.l.bf16 %v16
  %v25 = vunpack.c.l.bf16 %v17
  %v26 = vunpack.c.l.bf16 %v18
  %v27 = vunpack.c.l.bf16 %v19
  %v28 = vunpack.c.l.bf16 %v20
  %v29 = vunpack.c.l.bf16 %v21
  %v30 = vld [vmem:[%s1] sm:$0x1]
  %v32 = vlaneseq
  %v33 = vshrl.u32 %v32, 7
  %v34 = vsub.s32 0, %v33
  %v35 = vrot.slane %v30, %v34
  %v37 = vsub.f32 %v22, %v35
  %v38 = vsub.f32 %v23, %v35
  %v39 = vsub.f32 %v24, %v35
  %v40 = vsub.f32 %v25, %v35
  %v41 = vsub.f32 %v26, %v35
  %v42 = vsub.f32 %v27, %v35
  %v43 = vsub.f32 %v28, %v35
  %v44 = vsub.f32 %v29, %v35
  %v45 = vld [vmem:[%s2] sm:$0x1]
  %v47 = vlaneseq
  %v48 = vshrl.u32 %v47, 7
  %v49 = vsub.s32 0, %v48
  %v50 = vrot.slane %v45, %v49
  %v52 = vmul.f32 %v37, %v50
  %v53 = vmul.f32 %v38, %v50
  %v54 = vmul.f32 %v39, %v50
  %v55 = vmul.f32 %v40, %v50
  %v56 = vmul.f32 %v41, %v50
  %v57 = vmul.f32 %v42, %v50
  %v58 = vmul.f32 %v43, %v50
  %v59 = vmul.f32 %v44, %v50
  %v60 = vmax.f32 %v52, 0.0
  %v61 = vmax.f32 %v53, 0.0
  %v62 = vmax.f32 %v54, 0.0
  %v63 = vmax.f32 %v55, 0.0
  %v64 = vmax.f32 %v56, 0.0
  %v65 = vmax.f32 %v57, 0.0
  %v66 = vmax.f32 %v58, 0.0
  %v67 = vmax.f32 %v59, 0.0
  %v68 = vpack.c.bf16 %v61, %v60
  %v69 = vpack.c.bf16 %v63, %v62
  %v70 = vpack.c.bf16 %v65, %v64
  %v71 = vpack.c.bf16 %v67, %v66
  %v76 = vunpack.c.l.b16 %v68
  %v77 = vunpack.c.h.b16 %v68
  %v78 = vunpack.c.l.b16 %v69
  %v79 = vunpack.c.h.b16 %v69
  %v80 = vunpack.c.l.b16 %v70
  %v81 = vunpack.c.h.b16 %v70
  %v82 = vunpack.c.l.b16 %v71
  %v83 = vunpack.c.h.b16 %v71
  %v84 = vpack.c.b16 %v76, %v76
  %v85 = vpack.c.b16 %v77, %v77
  %v86 = vpack.c.b16 %v78, %v78
  %v87 = vpack.c.b16 %v79, %v79
  %v88 = vpack.c.b16 %v80, %v80
  %v89 = vpack.c.b16 %v81, %v81
  %v90 = vpack.c.b16 %v82, %v82
  %v91 = vpack.c.b16 %v83, %v83
  %100 = vst [vmem:[%s3] sm:$0xf] %v84
  %101 = vst [vmem:[%s3 + $0x4] sm:$0xf] %v85
  %102 = vst [vmem:[%s3 + $0x8] sm:$0xf] %v86
  %103 = vst [vmem:[%s3 + $0xc] sm:$0xf] %v87
  %104 = vst [vmem:[%s3 + $0x10] sm:$0xf] %v88
  %105 = vst [vmem:[%s3 + $0x14] sm:$0xf] %v89
  %106 = vst [vmem:[%s3 + $0x18] sm:$0xf] %v90
  %107 = vst [vmem:[%s3 + $0x1c] sm:$0xf] %v91
  // Predicated region
  $region14: #{model_forward.52} parent=0 // pred_check
    _
  $region15: #{model_forward.52} parent=0 // pred_check_branch
    %109 = sbr.rel (0) target = $region17
  $region16: #{model_forward.52} parent=0 // pred_region
    _
  $region17: #{model_forward.52} parent=0 // pred_fallthru
    _
  // Predicated region
  $region18: #{model_forward.52} parent=0 // pred_check
    _
  $region19: #{model_forward.52} parent=0 // pred_check_branch
    %111 = sbr.rel (0) target = $region21
  $region20: #{model_forward.52} parent=0 // pred_region
    _
  $region21: #{model_forward.52} parent=0 // pred_fallthru
    _

// kernel: neg.7
$region0: #{neg.7}
  #allocation0 [shape = 's32[1]{0}', space=sflag, size = 0x4, scoped, tag = 'scoped memory for neg.7']
  %s0 = inlined_call_operand.vmem [shape: f32[2,8,32], index: 0, kind: input, shape index: {}]
  %s1 = inlined_call_operand.vmem [shape: f32[2,8,32], index: 1, kind: output, shape index: {}]
  %v2 = vld [vmem:[%s0] sm:$0xff]
  %3 = xla_tuple %v2
  %4 = xla_tuple %3
  %v5 = vxor.u32 %v2, 2147483648
  %6 = xla_tuple %v5
  %7 = vst [vmem:[%s1] sm:$0xff] %v5
  %s8 = scalar_lea.vmem %s0, 8
  %v9 = vld [vmem:[%s8] sm:$0xff]
  %10 = xla_tuple %v9
  %11 = xla_tuple %10
  %v12 = vxor.u32 %v9, 2147483648
  %13 = xla_tuple %v12
  %s14 = scalar_lea.vmem %s1, 8
  %15 = vst [vmem:[%s14] sm:$0xff] %v12

// kernel: model_forward.34
$region0: #{model_forward.34}
  #allocation0 [shape = 'u32[]', space=smem, size = 0x4, offset = 0x4, fixed_abs, tag = 'smem constant byte address 0x4 - core index']
  #allocation1 [shape = 'u32[144,128]{1,0:T(1,128)}', space=vmem, size = 0x12000, scoped, tag = 'internal scratch']
  %s0 = inlined_call_operand.vmem [shape: bf16[64,8,128], index: 0, kind: input, shape index: {}]
  %s1 = inlined_call_operand.vmem [shape: bf16[64,8,128], index: 1, kind: input, shape index: {}]
  %s2 = inlined_call_operand.vmem [shape: bf16[64,8,128], index: 2, kind: input, shape index: {}]
  %s3 = inlined_call_operand.vmem [shape: f32[1,128], index: 3, kind: input, shape index: {}]
  %s4 = inlined_call_operand.vmem [shape: bf16[128,128], index: 4, kind: input, shape index: {}]
  %s5 = inlined_call_operand.vmem [shape: f32[1,128], index: 5, kind: input, shape index: {}]
  %s6 = inlined_call_operand.vmem [shape: bf16[128,128], index: 6, kind: input, shape index: {}]
  %s7 = inlined_call_operand.vmem [shape: f32[1,128], index: 7, kind: input, shape index: {}]
  %s8 = inlined_call_operand.vmem [shape: bf16[128,128], index: 8, kind: input, shape index: {}]
  %s9 = inlined_call_operand.vmem [shape: f32[1,128], index: 9, kind: input, shape index: {}]
  %s10 = inlined_call_operand.vmem [shape: bf16[64,128], index: 10, kind: output, shape index: {}]
  %s11 = sld [smem:[#allocation0]]
  $region50: #{model_forward.34} parent=0
    _
  %s13 = ssub.s32 1, %s11
  %s14 = scalar_select 0, %s13, %s11
  // Predicated region
  $region2: #{model_forward.34} parent=0 // pred_check
    _
  $region3: #{model_forward.34} parent=0 // pred_check_branch
    %16 = sbr.rel (0) target = $region5
  $region4: #{model_forward.34} parent=0 // pred_region
    _
  $region5: #{model_forward.34} parent=0 // pred_fallthru
    _
  // Predicated region
  $region6: #{model_forward.34} parent=0 // pred_check
    _
  $region7: #{model_forward.34} parent=0 // pred_check_branch
    %18 = sbr.rel (0) target = $region9
  $region8: #{model_forward.34} parent=0 // pred_region
    _
  $region9: #{model_forward.34} parent=0 // pred_fallthru
    _
  // Predicated region
  $region10: #{model_forward.34} parent=0 // pred_check
    _
  $region11: #{model_forward.34} parent=0 // pred_check_branch
    %20 = sbr.rel (0) target = $region13
  $region12: #{model_forward.34} parent=0 // pred_region
    _
  $region13: #{model_forward.34} parent=0 // pred_fallthru
    _
  // Predicated region
  $region14: #{model_forward.34} parent=0 // pred_check
    _
  $region15: #{model_forward.34} parent=0 // pred_check_branch
    %22 = sbr.rel (0) target = $region17
  $region16: #{model_forward.34} parent=0 // pred_region
    _
  $region17: #{model_forward.34} parent=0 // pred_fallthru
    _
  // Predicated region
  $region18: #{model_forward.34} parent=0 // pred_check
    _
  $region19: #{model_forward.34} parent=0 // pred_check_branch
    %24 = sbr.rel (0) target = $region21
  $region20: #{model_forward.34} parent=0 // pred_region
    _
  $region21: #{model_forward.34} parent=0 // pred_fallthru
    _
  // Predicated region
  $region22: #{model_forward.34} parent=0 // pred_check
    _
  $region23: #{model_forward.34} parent=0 // pred_check_branch
    %26 = sbr.rel (0) target = $region25
  $region24: #{model_forward.34} parent=0 // pred_region
    _
  $region25: #{model_forward.34} parent=0 // pred_fallthru
    _
  // Predicated region
  $region26: #{model_forward.34} parent=0 // pred_check
    _
  $region27: #{model_forward.34} parent=0 // pred_check_branch
    %28 = sbr.rel (0) target = $region29
  $region28: #{model_forward.34} parent=0 // pred_region
    _
  $region29: #{model_forward.34} parent=0 // pred_fallthru
    _
  // Predicated region
  $region30: #{model_forward.34} parent=0 // pred_check
    _
  $region31: #{model_forward.34} parent=0 // pred_check_branch
    %30 = sbr.rel (0) target = $region33
  $region32: #{model_forward.34} parent=0 // pred_region
    _
  $region33: #{model_forward.34} parent=0 // pred_fallthru
    _
  // Predicated region
  $region34: #{model_forward.34} parent=0 // pred_check
    _
  $region35: #{model_forward.34} parent=0 // pred_check_branch
    %32 = sbr.rel (0) target = $region37
  $region36: #{model_forward.34} parent=0 // pred_region
    _
  $region37: #{model_forward.34} parent=0 // pred_fallthru
    _
  // Predicated region
  $region38: #{model_forward.34} parent=0 // pred_check
    _
  $region39: #{model_forward.34} parent=0 // pred_check_branch
    %34 = sbr.rel (0) target = $region41
  $region40: #{model_forward.34} parent=0 // pred_region
    _
  $region41: #{model_forward.34} parent=0 // pred_fallthru
    _
  %v36 = vld [vmem:[%s0] sm:$0xf]
  %v37 = vld [vmem:[%s0 + $0x4] sm:$0xf]
  %v38 = vld [vmem:[%s0 + $0x8] sm:$0xf]
  %v39 = vld [vmem:[%s0 + $0xc] sm:$0xf]
  %v40 = vld [vmem:[%s0 + $0x10] sm:$0xf]
  %v41 = vld [vmem:[%s0 + $0x14] sm:$0xf]
  %v42 = vld [vmem:[%s0 + $0x18] sm:$0xf]
  %v43 = vld [vmem:[%s0 + $0x1c] sm:$0xf]
  %v44 = vld [vmem:[%s0 + $0x20] sm:$0xf]
  %v45 = vld [vmem:[%s0 + $0x24] sm:$0xf]
  %v46 = vld [vmem:[%s0 + $0x28] sm:$0xf]
  %v47 = vld [vmem:[%s0 + $0x2c] sm:$0xf]
  %v48 = vld [vmem:[%s0 + $0x30] sm:$0xf]
  %v49 = vld [vmem:[%s0 + $0x34] sm:$0xf]
  %v50 = vld [vmem:[%s0 + $0x38] sm:$0xf]
  %v51 = vld [vmem:[%s0 + $0x3c] sm:$0xf]
  %v52 = vld [vmem:[%s0 + $0x40] sm:$0xf]
  %v53 = vld [vmem:[%s0 + $0x44] sm:$0xf]
  %v54 = vld [vmem:[%s0 + $0x48] sm:$0xf]
  %v55 = vld [vmem:[%s0 + $0x4c] sm:$0xf]
  %v56 = vld [vmem:[%s0 + $0x50] sm:$0xf]
  %v57 = vld [vmem:[%s0 + $0x54] sm:$0xf]
  %v58 = vld [vmem:[%s0 + $0x58] sm:$0xf]
  %v59 = vld [vmem:[%s0 + $0x5c] sm:$0xf]
  %v60 = vld [vmem:[%s0 + $0x60] sm:$0xf]
  %v61 = vld [vmem:[%s0 + $0x64] sm:$0xf]
  %v62 = vld [vmem:[%s0 + $0x68] sm:$0xf]
  %v63 = vld [vmem:[%s0 + $0x6c] sm:$0xf]
  %v64 = vld [vmem:[%s0 + $0x70] sm:$0xf]
  %v65 = vld [vmem:[%s0 + $0x74] sm:$0xf]
  %v66 = vld [vmem:[%s0 + $0x78] sm:$0xf]
  %v67 = vld [vmem:[%s0 + $0x7c] sm:$0xf]
  %v68 = vld [vmem:[%s0 + $0x80] sm:$0xf]
  %v69 = vld [vmem:[%s0 + $0x84] sm:$0xf]
  %v70 = vld [vmem:[%s0 + $0x88] sm:$0xf]
  %v71 = vld [vmem:[%s0 + $0x8c] sm:$0xf]
  %v72 = vld [vmem:[%s0 + $0x90] sm:$0xf]
  %v73 = vld [vmem:[%s0 + $0x94] sm:$0xf]
  %v74 = vld [vmem:[%s0 + $0x98] sm:$0xf]
  %v75 = vld [vmem:[%s0 + $0x9c] sm:$0xf]
  %v76 = vld [vmem:[%s0 + $0xa0] sm:$0xf]
  %v77 = vld [vmem:[%s0 + $0xa4] sm:$0xf]
  %v78 = vld [vmem:[%s0 + $0xa8] sm:$0xf]
  %v79 = vld [vmem:[%s0 + $0xac] sm:$0xf]
  %v80 = vld [vmem:[%s0 + $0xb0] sm:$0xf]
  %v81 = vld [vmem:[%s0 + $0xb4] sm:$0xf]
  %v82 = vld [vmem:[%s0 + $0xb8] sm:$0xf]
  %v83 = vld [vmem:[%s0 + $0xbc] sm:$0xf]
  %v84 = vld [vmem:[%s0 + $0xc0] sm:$0xf]
  %v85 = vld [vmem:[%s0 + $0xc4] sm:$0xf]
  %v86 = vld [vmem:[%s0 + $0xc8] sm:$0xf]
  %v87 = vld [vmem:[%s0 + $0xcc] sm:$0xf]
  %v88 = vld [vmem:[%s0 + $0xd0] sm:$0xf]
  %v89 = vld [vmem:[%s0 + $0xd4] sm:$0xf]
  %v90 = vld [vmem:[%s0 + $0xd8] sm:$0xf]
  %v91 = vld [vmem:[%s0 + $0xdc] sm:$0xf]
  %v92 = vld [vmem:[%s0 + $0xe0] sm:$0xf]
  %v93 = vld [vmem:[%s0 + $0xe4] sm:$0xf]
  %v94 = vld [vmem:[%s0 + $0xe8] sm:$0xf]
  %v95 = vld [vmem:[%s0 + $0xec] sm:$0xf]
  %v96 = vld [vmem:[%s0 + $0xf0] sm:$0xf]
  %v97 = vld [vmem:[%s0 + $0xf4] sm:$0xf]
  %v98 = vld [vmem:[%s0 + $0xf8] sm:$0xf]
  %v99 = vld [vmem:[%s0 + $0xfc] sm:$0xf]
  %v100 = vunpack.c.l.bf16 %v36
  %v101 = vunpack.c.l.bf16 %v37
  %v102 = vunpack.c.l.bf16 %v38
  %v103 = vunpack.c.l.bf16 %v39
  %v104 = vunpack.c.l.bf16 %v40
  %v105 = vunpack.c.l.bf16 %v41
  %v106 = vunpack.c.l.bf16 %v42
  %v107 = vunpack.c.l.bf16 %v43
  %v108 = vunpack.c.l.bf16 %v44
  %v109 = vunpack.c.l.bf16 %v45
  %v110 = vunpack.c.l.bf16 %v46
  %v111 = vunpack.c.l.bf16 %v47
  %v112 = vunpack.c.l.bf16 %v48
  %v113 = vunpack.c.l.bf16 %v49
  %v114 = vunpack.c.l.bf16 %v50
  %v115 = vunpack.c.l.bf16 %v51
  %v116 = vunpack.c.l.bf16 %v52
  %v117 = vunpack.c.l.bf16 %v53
  %v118 = vunpack.c.l.bf16 %v54
  %v119 = vunpack.c.l.bf16 %v55
  %v120 = vunpack.c.l.bf16 %v56
  %v121 = vunpack.c.l.bf16 %v57
  %v122 = vunpack.c.l.bf16 %v58
  %v123 = vunpack.c.l.bf16 %v59
  %v124 = vunpack.c.l.bf16 %v60
  %v125 = vunpack.c.l.bf16 %v61
  %v126 = vunpack.c.l.bf16 %v62
  %v127 = vunpack.c.l.bf16 %v63
  %v128 = vunpack.c.l.bf16 %v64
  %v129 = vunpack.c.l.bf16 %v65
  %v130 = vunpack.c.l.bf16 %v66
  %v131 = vunpack.c.l.bf16 %v67
  %v132 = vunpack.c.l.bf16 %v68
  %v133 = vunpack.c.l.bf16 %v69
  %v134 = vunpack.c.l.bf16 %v70
  %v135 = vunpack.c.l.bf16 %v71
  %v136 = vunpack.c.l.bf16 %v72
  %v137 = vunpack.c.l.bf16 %v73
  %v138 = vunpack.c.l.bf16 %v74
  %v139 = vunpack.c.l.bf16 %v75
  %v140 = vunpack.c.l.bf16 %v76
  %v141 = vunpack.c.l.bf16 %v77
  %v142 = vunpack.c.l.bf16 %v78
  %v143 = vunpack.c.l.bf16 %v79
  %v144 = vunpack.c.l.bf16 %v80
  %v145 = vunpack.c.l.bf16 %v81
  %v146 = vunpack.c.l.bf16 %v82
  %v147 = vunpack.c.l.bf16 %v83
  %v148 = vunpack.c.l.bf16 %v84
  %v149 = vunpack.c.l.bf16 %v85
  %v150 = vunpack.c.l.bf16 %v86
  %v151 = vunpack.c.l.bf16 %v87
  %v152 = vunpack.c.l.bf16 %v88
  %v153 = vunpack.c.l.bf16 %v89
  %v154 = vunpack.c.l.bf16 %v90
  %v155 = vunpack.c.l.bf16 %v91
  %v156 = vunpack.c.l.bf16 %v92
  %v157 = vunpack.c.l.bf16 %v93
  %v158 = vunpack.c.l.bf16 %v94
  %v159 = vunpack.c.l.bf16 %v95
  %v160 = vunpack.c.l.bf16 %v96
  %v161 = vunpack.c.l.bf16 %v97
  %v162 = vunpack.c.l.bf16 %v98
  %v163 = vunpack.c.l.bf16 %v99
  %v164 = vld [vmem:[%s3] sm:$0x1]
  %v166 = vlaneseq
  %v167 = vshrl.u32 %v166, 7
  %v168 = vsub.s32 0, %v167
  %v169 = vrot.slane %v164, %v168
  %v171 = vadd.f32 %v100, %v169
  %v172 = vadd.f32 %v101, %v169
  %v173 = vadd.f32 %v102, %v169
  %v174 = vadd.f32 %v103, %v169
  %v175 = vadd.f32 %v104, %v169
  %v176 = vadd.f32 %v105, %v169
  %v177 = vadd.f32 %v106, %v169
  %v178 = vadd.f32 %v107, %v169
  %v179 = vadd.f32 %v108, %v169
  %v180 = vadd.f32 %v109, %v169
  %v181 = vadd.f32 %v110, %v169
  %v182 = vadd.f32 %v111, %v169
  %v183 = vadd.f32 %v112, %v169
  %v184 = vadd.f32 %v113, %v169
  %v185 = vadd.f32 %v114, %v169
  %v186 = vadd.f32 %v115, %v169
  %v187 = vadd.f32 %v116, %v169
  %v188 = vadd.f32 %v117, %v169
  %v189 = vadd.f32 %v118, %v169
  %v190 = vadd.f32 %v119, %v169
  %v191 = vadd.f32 %v120, %v169
  %v192 = vadd.f32 %v121, %v169
  %v193 = vadd.f32 %v122, %v169
  %v194 = vadd.f32 %v123, %v169
  %v195 = vadd.f32 %v124, %v169
  %v196 = vadd.f32 %v125, %v169
  %v197 = vadd.f32 %v126, %v169
  %v198 = vadd.f32 %v127, %v169
  %v199 = vadd.f32 %v128, %v169
  %v200 = vadd.f32 %v129, %v169
  %v201 = vadd.f32 %v130, %v169
  %v202 = vadd.f32 %v131, %v169
  %v203 = vadd.f32 %v132, %v169
  %v204 = vadd.f32 %v133, %v169
  %v205 = vadd.f32 %v134, %v169
  %v206 = vadd.f32 %v135, %v169
  %v207 = vadd.f32 %v136, %v169
  %v208 = vadd.f32 %v137, %v169
  %v209 = vadd.f32 %v138, %v169
  %v210 = vadd.f32 %v139, %v169
  %v211 = vadd.f32 %v140, %v169
  %v212 = vadd.f32 %v141, %v169
  %v213 = vadd.f32 %v142, %v169
  %v214 = vadd.f32 %v143, %v169
  %v215 = vadd.f32 %v144, %v169
  %v216 = vadd.f32 %v145, %v169
  %v217 = vadd.f32 %v146, %v169
  %v218 = vadd.f32 %v147, %v169
  %v219 = vadd.f32 %v148, %v169
  %v220 = vadd.f32 %v149, %v169
  %v221 = vadd.f32 %v150, %v169
  %v222 = vadd.f32 %v151, %v169
  %v223 = vadd.f32 %v152, %v169
  %v224 = vadd.f32 %v153, %v169
  %v225 = vadd.f32 %v154, %v169
  %v226 = vadd.f32 %v155, %v169
  %v227 = vadd.f32 %v156, %v169
  %v228 = vadd.f32 %v157, %v169
  %v229 = vadd.f32 %v158, %v169
  %v230 = vadd.f32 %v159, %v169
  %v231 = vadd.f32 %v160, %v169
  %v232 = vadd.f32 %v161, %v169
  %v233 = vadd.f32 %v162, %v169
  %v234 = vadd.f32 %v163, %v169
  %v235 = vmax.f32 %v171, 0.0
  %v236 = vmax.f32 %v172, 0.0
  %v237 = vmax.f32 %v173, 0.0
  %v238 = vmax.f32 %v174, 0.0
  %v239 = vmax.f32 %v175, 0.0
  %v240 = vmax.f32 %v176, 0.0
  %v241 = vmax.f32 %v177, 0.0
  %v242 = vmax.f32 %v178, 0.0
  %v243 = vmax.f32 %v179, 0.0
  %v244 = vmax.f32 %v180, 0.0
  %v245 = vmax.f32 %v181, 0.0
  %v246 = vmax.f32 %v182, 0.0
  %v247 = vmax.f32 %v183, 0.0
  %v248 = vmax.f32 %v184, 0.0
  %v249 = vmax.f32 %v185, 0.0
  %v250 = vmax.f32 %v186, 0.0
  %v251 = vmax.f32 %v187, 0.0
  %v252 = vmax.f32 %v188, 0.0
  %v253 = vmax.f32 %v189, 0.0
  %v254 = vmax.f32 %v190, 0.0
  %v255 = vmax.f32 %v191, 0.0
  %v256 = vmax.f32 %v192, 0.0
  %v257 = vmax.f32 %v193, 0.0
  %v258 = vmax.f32 %v194, 0.0
  %v259 = vmax.f32 %v195, 0.0
  %v260 = vmax.f32 %v196, 0.0
  %v261 = vmax.f32 %v197, 0.0
  %v262 = vmax.f32 %v198, 0.0
  %v263 = vmax.f32 %v199, 0.0
  %v264 = vmax.f32 %v200, 0.0
  %v265 = vmax.f32 %v201, 0.0
  %v266 = vmax.f32 %v202, 0.0
  %v267 = vmax.f32 %v203, 0.0
  %v268 = vmax.f32 %v204, 0.0
  %v269 = vmax.f32 %v205, 0.0
  %v270 = vmax.f32 %v206, 0.0
  %v271 = vmax.f32 %v207, 0.0
  %v272 = vmax.f32 %v208, 0.0
  %v273 = vmax.f32 %v209, 0.0
  %v274 = vmax.f32 %v210, 0.0
  %v275 = vmax.f32 %v211, 0.0
  %v276 = vmax.f32 %v212, 0.0
  %v277 = vmax.f32 %v213, 0.0
  %v278 = vmax.f32 %v214, 0.0
  %v279 = vmax.f32 %v215, 0.0
  %v280 = vmax.f32 %v216, 0.0
  %v281 = vmax.f32 %v217, 0.0
  %v282 = vmax.f32 %v218, 0.0
  %v283 = vmax.f32 %v219, 0.0
  %v284 = vmax.f32 %v220, 0.0
  %v285 = vmax.f32 %v221, 0.0
  %v286 = vmax.f32 %v222, 0.0
  %v287 = vmax.f32 %v223, 0.0
  %v288 = vmax.f32 %v224, 0.0
  %v289 = vmax.f32 %v225, 0.0
  %v290 = vmax.f32 %v226, 0.0
  %v291 = vmax.f32 %v227, 0.0
  %v292 = vmax.f32 %v228, 0.0
  %v293 = vmax.f32 %v229, 0.0
  %v294 = vmax.f32 %v230, 0.0
  %v295 = vmax.f32 %v231, 0.0
  %v296 = vmax.f32 %v232, 0.0
  %v297 = vmax.f32 %v233, 0.0
  %v298 = vmax.f32 %v234, 0.0
  %v299 = vpack.c.bf16 %v236, %v235
  %v300 = vpack.c.bf16 %v238, %v237
  %v301 = vpack.c.bf16 %v240, %v239
  %v302 = vpack.c.bf16 %v242, %v241
  %v303 = vpack.c.bf16 %v244, %v243
  %v304 = vpack.c.bf16 %v246, %v245
  %v305 = vpack.c.bf16 %v248, %v247
  %v306 = vpack.c.bf16 %v250, %v249
  %v307 = vpack.c.bf16 %v252, %v251
  %v308 = vpack.c.bf16 %v254, %v253
  %v309 = vpack.c.bf16 %v256, %v255
  %v310 = vpack.c.bf16 %v258, %v257
  %v311 = vpack.c.bf16 %v260, %v259
  %v312 = vpack.c.bf16 %v262, %v261
  %v313 = vpack.c.bf16 %v264, %v263
  %v314 = vpack.c.bf16 %v266, %v265
  %v315 = vpack.c.bf16 %v268, %v267
  %v316 = vpack.c.bf16 %v270, %v269
  %v317 = vpack.c.bf16 %v272, %v271
  %v318 = vpack.c.bf16 %v274, %v273
  %v319 = vpack.c.bf16 %v276, %v275
  %v320 = vpack.c.bf16 %v278, %v277
  %v321 = vpack.c.bf16 %v280, %v279
  %v322 = vpack.c.bf16 %v282, %v281
  %v323 = vpack.c.bf16 %v284, %v283
  %v324 = vpack.c.bf16 %v286, %v285
  %v325 = vpack.c.bf16 %v288, %v287
  %v326 = vpack.c.bf16 %v290, %v289
  %v327 = vpack.c.bf16 %v292, %v291
  %v328 = vpack.c.bf16 %v294, %v293
  %v329 = vpack.c.bf16 %v296, %v295
  %v330 = vpack.c.bf16 %v298, %v297
  %v331 = vld [vmem:[%s4] sm:$0xf]
  %v332 = vld [vmem:[%s4 + $0x4] sm:$0xf]
  %v333 = vld [vmem:[%s4 + $0x8] sm:$0xf]
  %v334 = vld [vmem:[%s4 + $0xc] sm:$0xf]
  %v335 = vld [vmem:[%s4 + $0x10] sm:$0xf]
  %v336 = vld [vmem:[%s4 + $0x14] sm:$0xf]
  %v337 = vld [vmem:[%s4 + $0x18] sm:$0xf]
  %v338 = vld [vmem:[%s4 + $0x1c] sm:$0xf]
  %v339 = vld [vmem:[%s4 + $0x20] sm:$0xf]
  %v340 = vld [vmem:[%s4 + $0x24] sm:$0xf]
  %v341 = vld [vmem:[%s4 + $0x28] sm:$0xf]
  %v342 = vld [vmem:[%s4 + $0x2c] sm:$0xf]
  %v343 = vld [vmem:[%s4 + $0x30] sm:$0xf]
  %v344 = vld [vmem:[%s4 + $0x34] sm:$0xf]
  %v345 = vld [vmem:[%s4 + $0x38] sm:$0xf]
  %v346 = vld [vmem:[%s4 + $0x3c] sm:$0xf]
  %v347 = vld [vmem:[%s5] sm:$0x1]
  %v349 = vlaneseq
  %v350 = vshrl.u32 %v349, 7
  %v351 = vsub.s32 0, %v350
  %v352 = vrot.slane %v347, %v351
  %v370 = vunpack.c.l.b16 %v331
  %v371 = vunpack.c.l.b16 %v332
  %v372 = vunpack.c.l.b16 %v333
  %v373 = vunpack.c.l.b16 %v334
  %v374 = vunpack.c.l.b16 %v335
  %v375 = vunpack.c.l.b16 %v336
  %v376 = vunpack.c.l.b16 %v337
  %v377 = vunpack.c.l.b16 %v338
  %v378 = vunpack.c.l.b16 %v339
  %v379 = vunpack.c.l.b16 %v340
  %v380 = vunpack.c.l.b16 %v341
  %v381 = vunpack.c.l.b16 %v342
  %v382 = vunpack.c.l.b16 %v343
  %v383 = vunpack.c.l.b16 %v344
  %v384 = vunpack.c.l.b16 %v345
  %v385 = vunpack.c.l.b16 %v346
  %v386 = vpack.c.b16 %v371, %v370
  %v387 = vpack.c.b16 %v373, %v372
  %v388 = vpack.c.b16 %v375, %v374
  %v389 = vpack.c.b16 %v377, %v376
  %v390 = vpack.c.b16 %v379, %v378
  %v391 = vpack.c.b16 %v381, %v380
  %v392 = vpack.c.b16 %v383, %v382
  %v393 = vpack.c.b16 %v385, %v384
  %402 = vmatprep.subr.bf16.mxu0 0
  %403 = vmatpush1.bf16.msra.mxu0 %v386
  %404 = vmatprep.subr.bf16.mxu0 0
  %405 = vmatpush1.bf16.msra.mxu0 %v387
  %406 = vmatprep.subr.bf16.mxu0 0
  %407 = vmatpush1.bf16.msra.mxu0 %v388
  %408 = vmatprep.subr.bf16.mxu0 0
  %409 = vmatpush1.bf16.msra.mxu0 %v389
  %410 = vmatprep.subr.bf16.mxu0 0
  %411 = vmatpush1.bf16.msra.mxu0 %v390
  %412 = vmatprep.subr.bf16.mxu0 0
  %413 = vmatpush1.bf16.msra.mxu0 %v391
  %414 = vmatprep.subr.bf16.mxu0 0
  %415 = vmatpush1.bf16.msra.mxu0 %v392
  %416 = vmatprep.subr.bf16.mxu0 0
  %417 = vmatpush1.bf16.msra.mxu0 %v393
  %418 = vmatprep.subr.bf16.mxu0 0
  %419 = vmatpush1.bf16.msra.mxu0 0
  %420 = vmatprep.subr.bf16.mxu0 0
  %421 = vmatpush1.bf16.msra.mxu0 0
  %422 = vmatprep.subr.bf16.mxu0 0
  %423 = vmatpush1.bf16.msra.mxu0 0
  %424 = vmatprep.subr.bf16.mxu0 0
  %425 = vmatpush1.bf16.msra.mxu0 0
  %426 = vmatprep.subr.bf16.mxu0 0
  %427 = vmatpush1.bf16.msra.mxu0 0
  %428 = vmatprep.subr.bf16.mxu0 0
  %429 = vmatpush1.bf16.msra.mxu0 0
  %430 = vmatprep.subr.bf16.mxu0 0
  %431 = vmatpush1.bf16.msra.mxu0 0
  %432 = vmatprep.subr.bf16.mxu0 0
  %433 = vmatpush1.bf16.msra.mxu0 0
  %434 = vmatprep.mubr.bf16.mxu0 0
  %435 = vmatmul.mubr.bf16.gmra.mrb[0].mxu0 %v299
  %v436 = vpop.f32.mrb[0].mxu0
  %v437 = vadd.f32 %v352, %v436
  %v438 = vpop.f32.mrb[0].mxu0
  %v439 = vpop.f32.mrb[0].mxu0
  %v440 = vadd.f32 %v352, %v439
  %v441 = vpop.f32.mrb[0].mxu0
  %442 = vmatprep.mubr.bf16.mxu0 0
  %443 = vmatmul.mubr.bf16.gmra.mrb[0].mxu0 %v300
  %v444 = vpop.f32.mrb[0].mxu0
  %v445 = vadd.f32 %v352, %v444
  %v446 = vpop.f32.mrb[0].mxu0
  %v447 = vpop.f32.mrb[0].mxu0
  %v448 = vadd.f32 %v352, %v447
  %v449 = vpop.f32.mrb[0].mxu0
  %450 = vmatprep.mubr.bf16.mxu0 0
  %451 = vmatmul.mubr.bf16.gmra.mrb[0].mxu0 %v301
  %v452 = vpop.f32.mrb[0].mxu0
  %v453 = vadd.f32 %v352, %v452
  %v454 = vpop.f32.mrb[0].mxu0
  %v455 = vpop.f32.mrb[0].mxu0
  %v456 = vadd.f32 %v352, %v455
  %v457 = vpop.f32.mrb[0].mxu0
  %458 = vmatprep.mubr.bf16.mxu0 0
  %459 = vmatmul.mubr.bf16.gmra.mrb[0].mxu0 %v302
  %v460 = vpop.f32.mrb[0].mxu0
  %v461 = vadd.f32 %v352, %v460
  %v462 = vpop.f32.mrb[0].mxu0
  %v463 = vpop.f32.mrb[0].mxu0
  %v464 = vadd.f32 %v352, %v463
  %v465 = vpop.f32.mrb[0].mxu0
  %466 = vmatprep.mubr.bf16.mxu0 0
  %467 = vmatmul.mubr.bf16.gmra.mrb[0].mxu0 %v303
  %v468 = vpop.f32.mrb[0].mxu0
  %v469 = vadd.f32 %v352, %v468
  %v470 = vpop.f32.mrb[0].mxu0
  %v471 = vpop.f32.mrb[0].mxu0
  %v472 = vadd.f32 %v352, %v471
  %v473 = vpop.f32.mrb[0].mxu0
  %474 = vmatprep.mubr.bf16.mxu0 0
  %475 = vmatmul.mubr.bf16.gmra.mrb[0].mxu0 %v304
  %v476 = vpop.f32.mrb[0].mxu0
  %v477 = vadd.f32 %v352, %v476
  %v478 = vpop.f32.mrb[0].mxu0
  %v479 = vpop.f32.mrb[0].mxu0
  %v480 = vadd.f32 %v352, %v479
  %v481 = vpop.f32.mrb[0].mxu0
  %482 = vmatprep.mubr.bf16.mxu0 0
  %483 = vmatmul.mubr.bf16.gmra.mrb[0].mxu0 %v305
  %v484 = vpop.f32.mrb[0].mxu0
  %v485 = vadd.f32 %v352, %v484
  %v486 = vpop.f32.mrb[0].mxu0
  %v487 = vpop.f32.mrb[0].mxu0
  %v488 = vadd.f32 %v352, %v487
  %v489 = vpop.f32.mrb[0].mxu0
  %490 = vmatprep.mubr.bf16.mxu0 0
  %491 = vmatmul.mubr.bf16.gmra.mrb[0].mxu0 %v306
  %v492 = vpop.f32.mrb[0].mxu0
  %v493 = vadd.f32 %v352, %v492
  %v494 = vpop.f32.mrb[0].mxu0
  %v495 = vpop.f32.mrb[0].mxu0
  %v496 = vadd.f32 %v352, %v495
  %v497 = vpop.f32.mrb[0].mxu0
  %498 = vmatprep.mubr.bf16.mxu0 0
  %499 = vmatmul.mubr.bf16.gmra.mrb[0].mxu0 %v307
  %v500 = vpop.f32.mrb[0].mxu0
  %v501 = vadd.f32 %v352, %v500
  %v502 = vpop.f32.mrb[0].mxu0
  %v503 = vpop.f32.mrb[0].mxu0
  %v504 = vadd.f32 %v352, %v503
  %v505 = vpop.f32.mrb[0].mxu0
  %506 = vmatprep.mubr.bf16.mxu0 0
  %507 = vmatmul.mubr.bf16.gmra.mrb[0].mxu0 %v308
  %v508 = vpop.f32.mrb[0].mxu0
  %v509 = vadd.f32 %v352, %v508
  %v510 = vpop.f32.mrb[0].mxu0
  %v511 = vpop.f32.mrb[0].mxu0
  %v512 = vadd.f32 %v352, %v511
  %v513 = vpop.f32.mrb[0].mxu0
  %514 = vmatprep.mubr.bf16.mxu0 0
  %515 = vmatmul.mubr.bf16.gmra.mrb[0].mxu0 %v309
  %v516 = vpop.f32.mrb[0].mxu0
  %v517 = vadd.f32 %v352, %v516
  %v518 = vpop.f32.mrb[0].mxu0
  %v519 = vpop.f32.mrb[0].mxu0
  %v520 = vadd.f32 %v352, %v519
  %v521 = vpop.f32.mrb[0].mxu0
  %522 = vmatprep.mubr.bf16.mxu0 0
  %523 = vmatmul.mubr.bf16.gmra.mrb[0].mxu0 %v310
  %v524 = vpop.f32.mrb[0].mxu0
  %v525 = vadd.f32 %v352, %v524
  %v526 = vpop.f32.mrb[0].mxu0
  %v527 = vpop.f32.mrb[0].mxu0
  %v528 = vadd.f32 %v352, %v527
  %v529 = vpop.f32.mrb[0].mxu0
  %530 = vmatprep.mubr.bf16.mxu0 0
  %531 = vmatmul.mubr.bf16.gmra.mrb[0].mxu0 %v311
  %v532 = vpop.f32.mrb[0].mxu0
  %v533 = vadd.f32 %v352, %v532
  %v534 = vpop.f32.mrb[0].mxu0
  %v535 = vpop.f32.mrb[0].mxu0
  %v536 = vadd.f32 %v352, %v535
  %v537 = vpop.f32.mrb[0].mxu0
  %538 = vmatprep.mubr.bf16.mxu0 0
  %539 = vmatmul.mubr.bf16.gmra.mrb[0].mxu0 %v312
  %v540 = vpop.f32.mrb[0].mxu0
  %v541 = vadd.f32 %v352, %v540
  %v542 = vpop.f32.mrb[0].mxu0
  %v543 = vpop.f32.mrb[0].mxu0
  %v544 = vadd.f32 %v352, %v543
  %v545 = vpop.f32.mrb[0].mxu0
  %546 = vmatprep.mubr.bf16.mxu0 0
  %547 = vmatmul.mubr.bf16.gmra.mrb[0].mxu0 %v313
  %v548 = vpop.f32.mrb[0].mxu0
  %v549 = vadd.f32 %v352, %v548
  %v550 = vpop.f32.mrb[0].mxu0
  %v551 = vpop.f32.mrb[0].mxu0
  %v552 = vadd.f32 %v352, %v551
  %v553 = vpop.f32.mrb[0].mxu0
  %554 = vmatprep.mubr.bf16.mxu0 0
  %555 = vmatmul.mubr.bf16.gmra.mrb[0].mxu0 %v314
  %v556 = vpop.f32.mrb[0].mxu0
  %v557 = vadd.f32 %v352, %v556
  %v558 = vpop.f32.mrb[0].mxu0
  %v559 = vpop.f32.mrb[0].mxu0
  %v560 = vadd.f32 %v352, %v559
  %v561 = vpop.f32.mrb[0].mxu0
  %562 = vmatprep.mubr.bf16.mxu0 0
  %563 = vmatmul.mubr.bf16.gmra.mrb[0].mxu0 %v315
  %v564 = vpop.f32.mrb[0].mxu0
  %v565 = vadd.f32 %v352, %v564
  %v566 = vpop.f32.mrb[0].mxu0
  %v567 = vpop.f32.mrb[0].mxu0
  %v568 = vadd.f32 %v352, %v567
  %v569 = vpop.f32.mrb[0].mxu0
  %570 = vmatprep.mubr.bf16.mxu0 0
  %571 = vmatmul.mubr.bf16.gmra.mrb[0].mxu0 %v316
  %v572 = vpop.f32.mrb[0].mxu0
  %v573 = vadd.f32 %v352, %v572
  %v574 = vpop.f32.mrb[0].mxu0
  %v575 = vpop.f32.mrb[0].mxu0
  %v576 = vadd.f32 %v352, %v575
  %v577 = vpop.f32.mrb[0].mxu0
  %578 = vmatprep.mubr.bf16.mxu0 0
  %579 = vmatmul.mubr.bf16.gmra.mrb[0].mxu0 %v317
  %v580 = vpop.f32.mrb[0].mxu0
  %v581 = vadd.f32 %v352, %v580
  %v582 = vpop.f32.mrb[0].mxu0
  %v583 = vpop.f32.mrb[0].mxu0
  %v584 = vadd.f32 %v352, %v583
  %v585 = vpop.f32.mrb[0].mxu0
  %586 = vmatprep.mubr.bf16.mxu0 0
  %587 = vmatmul.mubr.bf16.gmra.mrb[0].mxu0 %v318
  %v588 = vpop.f32.mrb[0].mxu0
  %v589 = vadd.f32 %v352, %v588
  %v590 = vpop.f32.mrb[0].mxu0
  %v591 = vpop.f32.mrb[0].mxu0
  %v592 = vadd.f32 %v352, %v591
  %v593 = vpop.f32.mrb[0].mxu0
  %594 = vmatprep.mubr.bf16.mxu0 0
  %595 = vmatmul.mubr.bf16.gmra.mrb[0].mxu0 %v319
  %v596 = vpop.f32.mrb[0].mxu0
  %v597 = vadd.f32 %v352, %v596
  %v598 = vpop.f32.mrb[0].mxu0
  %v599 = vpop.f32.mrb[0].mxu0
  %v600 = vadd.f32 %v352, %v599
  %v601 = vpop.f32.mrb[0].mxu0
  %602 = vmatprep.mubr.bf16.mxu0 0
  %603 = vmatmul.mubr.bf16.gmra.mrb[0].mxu0 %v320
  %v604 = vpop.f32.mrb[0].mxu0
  %v605 = vadd.f32 %v352, %v604
  %v606 = vpop.f32.mrb[0].mxu0
  %v607 = vpop.f32.mrb[0].mxu0
  %v608 = vadd.f32 %v352, %v607
  %v609 = vpop.f32.mrb[0].mxu0
  %610 = vmatprep.mubr.bf16.mxu0 0
  %611 = vmatmul.mubr.bf16.gmra.mrb[0].mxu0 %v321
  %v612 = vpop.f32.mrb[0].mxu0
  %v613 = vadd.f32 %v352, %v612
  %v614 = vpop.f32.mrb[0].mxu0
  %v615 = vpop.f32.mrb[0].mxu0
  %v616 = vadd.f32 %v352, %v615
  %v617 = vpop.f32.mrb[0].mxu0
  %618 = vmatprep.mubr.bf16.mxu0 0
  %619 = vmatmul.mubr.bf16.gmra.mrb[0].mxu0 %v322
  %v620 = vpop.f32.mrb[0].mxu0
  %v621 = vadd.f32 %v352, %v620
  %v622 = vpop.f32.mrb[0].mxu0
  %v623 = vpop.f32.mrb[0].mxu0
  %v624 = vadd.f32 %v352, %v623
  %v625 = vpop.f32.mrb[0].mxu0
  %626 = vmatprep.mubr.bf16.mxu0 0
  %627 = vmatmul.mubr.bf16.gmra.mrb[0].mxu0 %v323
  %v628 = vpop.f32.mrb[0].mxu0
  %v629 = vadd.f32 %v352, %v628
  %v630 = vpop.f32.mrb[0].mxu0
  %v631 = vpop.f32.mrb[0].mxu0
  %v632 = vadd.f32 %v352, %v631
  %v633 = vpop.f32.mrb[0].mxu0
  %634 = vmatprep.mubr.bf16.mxu0 0
  %635 = vmatmul.mubr.bf16.gmra.mrb[0].mxu0 %v324
  %v636 = vpop.f32.mrb[0].mxu0
  %v637 = vadd.f32 %v352, %v636
  %v638 = vpop.f32.mrb[0].mxu0
  %v639 = vpop.f32.mrb[0].mxu0
  %v640 = vadd.f32 %v352, %v639
  %v641 = vpop.f32.mrb[0].mxu0
  %642 = vmatprep.mubr.bf16.mxu0 0
  %643 = vmatmul.mubr.bf16.gmra.mrb[0].mxu0 %v325
  %v644 = vpop.f32.mrb[0].mxu0
  %v645 = vadd.f32 %v352, %v644
  %v646 = vpop.f32.mrb[0].mxu0
  %v647 = vpop.f32.mrb[0].mxu0
  %v648 = vadd.f32 %v352, %v647
  %v649 = vpop.f32.mrb[0].mxu0
  %650 = vmatprep.mubr.bf16.mxu0 0
  %651 = vmatmul.mubr.bf16.gmra.mrb[0].mxu0 %v326
  %v652 = vpop.f32.mrb[0].mxu0
  %v653 = vadd.f32 %v352, %v652
  %v654 = vpop.f32.mrb[0].mxu0
  %v655 = vpop.f32.mrb[0].mxu0
  %v656 = vadd.f32 %v352, %v655
  %v657 = vpop.f32.mrb[0].mxu0
  %658 = vmatprep.mubr.bf16.mxu0 0
  %659 = vmatmul.mubr.bf16.gmra.mrb[0].mxu0 %v327
  %v660 = vpop.f32.mrb[0].mxu0
  %v661 = vadd.f32 %v352, %v660
  %v662 = vpop.f32.mrb[0].mxu0
  %v663 = vpop.f32.mrb[0].mxu0
  %v664 = vadd.f32 %v352, %v663
  %v665 = vpop.f32.mrb[0].mxu0
  %666 = vmatprep.mubr.bf16.mxu0 0
  %667 = vmatmul.mubr.bf16.gmra.mrb[0].mxu0 %v328
  %v668 = vpop.f32.mrb[0].mxu0
  %v669 = vadd.f32 %v352, %v668
  %v670 = vpop.f32.mrb[0].mxu0
  %v671 = vpop.f32.mrb[0].mxu0
  %v672 = vadd.f32 %v352, %v671
  %v673 = vpop.f32.mrb[0].mxu0
  %674 = vmatprep.mubr.bf16.mxu0 0
  %675 = vmatmul.mubr.bf16.gmra.mrb[0].mxu0 %v329
  %v676 = vpop.f32.mrb[0].mxu0
  %v677 = vadd.f32 %v352, %v676
  %v678 = vpop.f32.mrb[0].mxu0
  %v679 = vpop.f32.mrb[0].mxu0
  %v680 = vadd.f32 %v352, %v679
  %v681 = vpop.f32.mrb[0].mxu0
  %682 = vmatprep.mubr.bf16.mxu0 0
  %683 = vmatmul.mubr.bf16.gmra.mrb[0].mxu0 %v330
  %v684 = vpop.f32.mrb[0].mxu0
  %v685 = vadd.f32 %v352, %v684
  %v686 = vpop.f32.mrb[0].mxu0
  %v687 = vpop.f32.mrb[0].mxu0
  %v688 = vadd.f32 %v352, %v687
  %v689 = vpop.f32.mrb[0].mxu0
  %690 = vdwg.mxu0
  %v691 = vmax.f32 %v437, 0.0
  %v692 = vmax.f32 %v440, 0.0
  %v693 = vmax.f32 %v445, 0.0
  %v694 = vmax.f32 %v448, 0.0
  %v695 = vmax.f32 %v453, 0.0
  %v696 = vmax.f32 %v456, 0.0
  %v697 = vmax.f32 %v461, 0.0
  %v698 = vmax.f32 %v464, 0.0
  %v699 = vmax.f32 %v469, 0.0
  %v700 = vmax.f32 %v472, 0.0
  %v701 = vmax.f32 %v477, 0.0
  %v702 = vmax.f32 %v480, 0.0
  %v703 = vmax.f32 %v485, 0.0
  %v704 = vmax.f32 %v488, 0.0
  %v705 = vmax.f32 %v493, 0.0
  %v706 = vmax.f32 %v496, 0.0
  %v707 = vmax.f32 %v501, 0.0
  %v708 = vmax.f32 %v504, 0.0
  %v709 = vmax.f32 %v509, 0.0
  %v710 = vmax.f32 %v512, 0.0
  %v711 = vmax.f32 %v517, 0.0
  %v712 = vmax.f32 %v520, 0.0
  %v713 = vmax.f32 %v525, 0.0
  %v714 = vmax.f32 %v528, 0.0
  %v715 = vmax.f32 %v533, 0.0
  %v716 = vmax.f32 %v536, 0.0
  %v717 = vmax.f32 %v541, 0.0
  %v718 = vmax.f32 %v544, 0.0
  %v719 = vmax.f32 %v549, 0.0
  %v720 = vmax.f32 %v552, 0.0
  %v721 = vmax.f32 %v557, 0.0
  %v722 = vmax.f32 %v560, 0.0
  %v723 = vmax.f32 %v565, 0.0
  %v724 = vmax.f32 %v568, 0.0
  %v725 = vmax.f32 %v573, 0.0
  %v726 = vmax.f32 %v576, 0.0
  %v727 = vmax.f32 %v581, 0.0
  %v728 = vmax.f32 %v584, 0.0
  %v729 = vmax.f32 %v589, 0.0
  %v730 = vmax.f32 %v592, 0.0
  %v731 = vmax.f32 %v597, 0.0
  %v732 = vmax.f32 %v600, 0.0
  %v733 = vmax.f32 %v605, 0.0
  %v734 = vmax.f32 %v608, 0.0
  %v735 = vmax.f32 %v613, 0.0
  %v736 = vmax.f32 %v616, 0.0
  %v737 = vmax.f32 %v621, 0.0
  %v738 = vmax.f32 %v624, 0.0
  %v739 = vmax.f32 %v629, 0.0
  %v740 = vmax.f32 %v632, 0.0
  %v741 = vmax.f32 %v637, 0.0
  %v742 = vmax.f32 %v640, 0.0
  %v743 = vmax.f32 %v645, 0.0
  %v744 = vmax.f32 %v648, 0.0
  %v745 = vmax.f32 %v653, 0.0
  %v746 = vmax.f32 %v656, 0.0
  %v747 = vmax.f32 %v661, 0.0
  %v748 = vmax.f32 %v664, 0.0
  %v749 = vmax.f32 %v669, 0.0
  %v750 = vmax.f32 %v672, 0.0
  %v751 = vmax.f32 %v677, 0.0
  %v752 = vmax.f32 %v680, 0.0
  %v753 = vmax.f32 %v685, 0.0
  %v754 = vmax.f32 %v688, 0.0
  %v755 = vld [vmem:[%s1] sm:$0xf]
  %v756 = vld [vmem:[%s1 + $0x4] sm:$0xf]
  %v757 = vld [vmem:[%s1 + $0x8] sm:$0xf]
  %v758 = vld [vmem:[%s1 + $0xc] sm:$0xf]
  %v759 = vld [vmem:[%s1 + $0x10] sm:$0xf]
  %v760 = vld [vmem:[%s1 + $0x14] sm:$0xf]
  %v761 = vld [vmem:[%s1 + $0x18] sm:$0xf]
  %v762 = vld [vmem:[%s1 + $0x1c] sm:$0xf]
  %v763 = vld [vmem:[%s1 + $0x20] sm:$0xf]
  %v764 = vld [vmem:[%s1 + $0x24] sm:$0xf]
  %v765 = vld [vmem:[%s1 + $0x28] sm:$0xf]
  %v766 = vld [vmem:[%s1 + $0x2c] sm:$0xf]
  %v767 = vld [vmem:[%s1 + $0x30] sm:$0xf]
  %v768 = vld [vmem:[%s1 + $0x34] sm:$0xf]
  %v769 = vld [vmem:[%s1 + $0x38] sm:$0xf]
  %v770 = vld [vmem:[%s1 + $0x3c] sm:$0xf]
  %v771 = vld [vmem:[%s1 + $0x40] sm:$0xf]
  %v772 = vld [vmem:[%s1 + $0x44] sm:$0xf]
  %v773 = vld [vmem:[%s1 + $0x48] sm:$0xf]
  %v774 = vld [vmem:[%s1 + $0x4c] sm:$0xf]
  %v775 = vld [vmem:[%s1 + $0x50] sm:$0xf]
  %v776 = vld [vmem:[%s1 + $0x54] sm:$0xf]
  %v777 = vld [vmem:[%s1 + $0x58] sm:$0xf]
  %v778 = vld [vmem:[%s1 + $0x5c] sm:$0xf]
  %v779 = vld [vmem:[%s1 + $0x60] sm:$0xf]
  %v780 = vld [vmem:[%s1 + $0x64] sm:$0xf]
  %v781 = vld [vmem:[%s1 + $0x68] sm:$0xf]
  %v782 = vld [vmem:[%s1 + $0x6c] sm:$0xf]
  %v783 = vld [vmem:[%s1 + $0x70] sm:$0xf]
  %v784 = vld [vmem:[%s1 + $0x74] sm:$0xf]
  %v785 = vld [vmem:[%s1 + $0x78] sm:$0xf]
  %v786 = vld [vmem:[%s1 + $0x7c] sm:$0xf]
  %v787 = vld [vmem:[%s1 + $0x80] sm:$0xf]
  %v788 = vld [vmem:[%s1 + $0x84] sm:$0xf]
  %v789 = vld [vmem:[%s1 + $0x88] sm:$0xf]
  %v790 = vld [vmem:[%s1 + $0x8c] sm:$0xf]
  %v791 = vld [vmem:[%s1 + $0x90] sm:$0xf]
  %v792 = vld [vmem:[%s1 + $0x94] sm:$0xf]
  %v793 = vld [vmem:[%s1 + $0x98] sm:$0xf]
  %v794 = vld [vmem:[%s1 + $0x9c] sm:$0xf]
  %v795 = vld [vmem:[%s1 + $0xa0] sm:$0xf]
  %v796 = vld [vmem:[%s1 + $0xa4] sm:$0xf]
  %v797 = vld [vmem:[%s1 + $0xa8] sm:$0xf]
  %v798 = vld [vmem:[%s1 + $0xac] sm:$0xf]
  %v799 = vld [vmem:[%s1 + $0xb0] sm:$0xf]
  %v800 = vld [vmem:[%s1 + $0xb4] sm:$0xf]
  %v801 = vld [vmem:[%s1 + $0xb8] sm:$0xf]
  %v802 = vld [vmem:[%s1 + $0xbc] sm:$0xf]
  %v803 = vld [vmem:[%s1 + $0xc0] sm:$0xf]
  %v804 = vld [vmem:[%s1 + $0xc4] sm:$0xf]
  %v805 = vld [vmem:[%s1 + $0xc8] sm:$0xf]
  %v806 = vld [vmem:[%s1 + $0xcc] sm:$0xf]
  %v807 = vld [vmem:[%s1 + $0xd0] sm:$0xf]
  %v808 = vld [vmem:[%s1 + $0xd4] sm:$0xf]
  %v809 = vld [vmem:[%s1 + $0xd8] sm:$0xf]
  %v810 = vld [vmem:[%s1 + $0xdc] sm:$0xf]
  %v811 = vld [vmem:[%s1 + $0xe0] sm:$0xf]
  %v812 = vld [vmem:[%s1 + $0xe4] sm:$0xf]
  %v813 = vld [vmem:[%s1 + $0xe8] sm:$0xf]
  %v814 = vld [vmem:[%s1 + $0xec] sm:$0xf]
  %v815 = vld [vmem:[%s1 + $0xf0] sm:$0xf]
  %v816 = vld [vmem:[%s1 + $0xf4] sm:$0xf]
  %v817 = vld [vmem:[%s1 + $0xf8] sm:$0xf]
  %v818 = vld [vmem:[%s1 + $0xfc] sm:$0xf]
  %v819 = vunpack.c.l.bf16 %v755
  %v820 = vunpack.c.l.bf16 %v756
  %v821 = vunpack.c.l.bf16 %v757
  %v822 = vunpack.c.l.bf16 %v758
  %v823 = vunpack.c.l.bf16 %v759
  %v824 = vunpack.c.l.bf16 %v760
  %v825 = vunpack.c.l.bf16 %v761
  %v826 = vunpack.c.l.bf16 %v762
  %v827 = vunpack.c.l.bf16 %v763
  %v828 = vunpack.c.l.bf16 %v764
  %v829 = vunpack.c.l.bf16 %v765
  %v830 = vunpack.c.l.bf16 %v766
  %v831 = vunpack.c.l.bf16 %v767
  %v832 = vunpack.c.l.bf16 %v768
  %v833 = vunpack.c.l.bf16 %v769
  %v834 = vunpack.c.l.bf16 %v770
  %v835 = vunpack.c.l.bf16 %v771
  %v836 = vunpack.c.l.bf16 %v772
  %v837 = vunpack.c.l.bf16 %v773
  %v838 = vunpack.c.l.bf16 %v774
  %v839 = vunpack.c.l.bf16 %v775
  %v840 = vunpack.c.l.bf16 %v776
  %v841 = vunpack.c.l.bf16 %v777
  %v842 = vunpack.c.l.bf16 %v778
  %v843 = vunpack.c.l.bf16 %v779
  %v844 = vunpack.c.l.bf16 %v780
  %v845 = vunpack.c.l.bf16 %v781
  %v846 = vunpack.c.l.bf16 %v782
  %v847 = vunpack.c.l.bf16 %v783
  %v848 = vunpack.c.l.bf16 %v784
  %v849 = vunpack.c.l.bf16 %v785
  %v850 = vunpack.c.l.bf16 %v786
  %v851 = vunpack.c.l.bf16 %v787
  %v852 = vunpack.c.l.bf16 %v788
  %v853 = vunpack.c.l.bf16 %v789
  %v854 = vunpack.c.l.bf16 %v790
  %v855 = vunpack.c.l.bf16 %v791
  %v856 = vunpack.c.l.bf16 %v792
  %v857 = vunpack.c.l.bf16 %v793
  %v858 = vunpack.c.l.bf16 %v794
  %v859 = vunpack.c.l.bf16 %v795
  %v860 = vunpack.c.l.bf16 %v796
  %v861 = vunpack.c.l.bf16 %v797
  %v862 = vunpack.c.l.bf16 %v798
  %v863 = vunpack.c.l.bf16 %v799
  %v864 = vunpack.c.l.bf16 %v800
  %v865 = vunpack.c.l.bf16 %v801
  %v866 = vunpack.c.l.bf16 %v802
  %v867 = vunpack.c.l.bf16 %v803
  %v868 = vunpack.c.l.bf16 %v804
  %v869 = vunpack.c.l.bf16 %v805
  %v870 = vunpack.c.l.bf16 %v806
  %v871 = vunpack.c.l.bf16 %v807
  %v872 = vunpack.c.l.bf16 %v808
  %v873 = vunpack.c.l.bf16 %v809
  %v874 = vunpack.c.l.bf16 %v810
  %v875 = vunpack.c.l.bf16 %v811
  %v876 = vunpack.c.l.bf16 %v812
  %v877 = vunpack.c.l.bf16 %v813
  %v878 = vunpack.c.l.bf16 %v814
  %v879 = vunpack.c.l.bf16 %v815
  %v880 = vunpack.c.l.bf16 %v816
  %v881 = vunpack.c.l.bf16 %v817
  %v882 = vunpack.c.l.bf16 %v818
  %v883 = vadd.f32 %v819, %v691
  %v884 = vadd.f32 %v820, %v692
  %v885 = vadd.f32 %v821, %v693
  %v886 = vadd.f32 %v822, %v694
  %v887 = vadd.f32 %v823, %v695
  %v888 = vadd.f32 %v824, %v696
  %v889 = vadd.f32 %v825, %v697
  %v890 = vadd.f32 %v826, %v698
  %v891 = vadd.f32 %v827, %v699
  %v892 = vadd.f32 %v828, %v700
  %v893 = vadd.f32 %v829, %v701
  %v894 = vadd.f32 %v830, %v702
  %v895 = vadd.f32 %v831, %v703
  %v896 = vadd.f32 %v832, %v704
  %v897 = vadd.f32 %v833, %v705
  %v898 = vadd.f32 %v834, %v706
  %v899 = vadd.f32 %v835, %v707
  %v900 = vadd.f32 %v836, %v708
  %v901 = vadd.f32 %v837, %v709
  %v902 = vadd.f32 %v838, %v710
  %v903 = vadd.f32 %v839, %v711
  %v904 = vadd.f32 %v840, %v712
  %v905 = vadd.f32 %v841, %v713
  %v906 = vadd.f32 %v842, %v714
  %v907 = vadd.f32 %v843, %v715
  %v908 = vadd.f32 %v844, %v716
  %v909 = vadd.f32 %v845, %v717
  %v910 = vadd.f32 %v846, %v718
  %v911 = vadd.f32 %v847, %v719
  %v912 = vadd.f32 %v848, %v720
  %v913 = vadd.f32 %v849, %v721
  %v914 = vadd.f32 %v850, %v722
  %v915 = vadd.f32 %v851, %v723
  %v916 = vadd.f32 %v852, %v724
  %v917 = vadd.f32 %v853, %v725
  %v918 = vadd.f32 %v854, %v726
  %v919 = vadd.f32 %v855, %v727
  %v920 = vadd.f32 %v856, %v728
  %v921 = vadd.f32 %v857, %v729
  %v922 = vadd.f32 %v858, %v730
  %v923 = vadd.f32 %v859, %v731
  %v924 = vadd.f32 %v860, %v732
  %v925 = vadd.f32 %v861, %v733
  %v926 = vadd.f32 %v862, %v734
  %v927 = vadd.f32 %v863, %v735
  %v928 = vadd.f32 %v864, %v736
  %v929 = vadd.f32 %v865, %v737
  %v930 = vadd.f32 %v866, %v738
  %v931 = vadd.f32 %v867, %v739
  %v932 = vadd.f32 %v868, %v740
  %v933 = vadd.f32 %v869, %v741
  %v934 = vadd.f32 %v870, %v742
  %v935 = vadd.f32 %v871, %v743
  %v936 = vadd.f32 %v872, %v744
  %v937 = vadd.f32 %v873, %v745
  %v938 = vadd.f32 %v874, %v746
  %v939 = vadd.f32 %v875, %v747
  %v940 = vadd.f32 %v876, %v748
  %v941 = vadd.f32 %v877, %v749
  %v942 = vadd.f32 %v878, %v750
  %v943 = vadd.f32 %v879, %v751
  %v944 = vadd.f32 %v880, %v752
  %v945 = vadd.f32 %v881, %v753
  %v946 = vadd.f32 %v882, %v754
  %v947 = vpack.c.bf16 %v884, %v883
  %v948 = vpack.c.bf16 %v886, %v885
  %v949 = vpack.c.bf16 %v888, %v887
  %v950 = vpack.c.bf16 %v890, %v889
  %v951 = vpack.c.bf16 %v892, %v891
  %v952 = vpack.c.bf16 %v894, %v893
  %v953 = vpack.c.bf16 %v896, %v895
  %v954 = vpack.c.bf16 %v898, %v897
  %v955 = vpack.c.bf16 %v900, %v899
  %v956 = vpack.c.bf16 %v902, %v901
  %v957 = vpack.c.bf16 %v904, %v903
  %v958 = vpack.c.bf16 %v906, %v905
  %v959 = vpack.c.bf16 %v908, %v907
  %v960 = vpack.c.bf16 %v910, %v909
  %v961 = vpack.c.bf16 %v912, %v911
  %v962 = vpack.c.bf16 %v914, %v913
  %v963 = vpack.c.bf16 %v916, %v915
  %v964 = vpack.c.bf16 %v918, %v917
  %v965 = vpack.c.bf16 %v920, %v919
  %v966 = vpack.c.bf16 %v922, %v921
  %v967 = vpack.c.bf16 %v924, %v923
  %v968 = vpack.c.bf16 %v926, %v925
  %v969 = vpack.c.bf16 %v928, %v927
  %v970 = vpack.c.bf16 %v930, %v929
  %v971 = vpack.c.bf16 %v932, %v931
  %v972 = vpack.c.bf16 %v934, %v933
  %v973 = vpack.c.bf16 %v936, %v935
  %v974 = vpack.c.bf16 %v938, %v937
  %v975 = vpack.c.bf16 %v940, %v939
  %v976 = vpack.c.bf16 %v942, %v941
  %v977 = vpack.c.bf16 %v944, %v943
  %v978 = vpack.c.bf16 %v946, %v945
  %v979 = vld [vmem:[%s6] sm:$0xf]
  %v980 = vld [vmem:[%s6 + $0x4] sm:$0xf]
  %v981 = vld [vmem:[%s6 + $0x8] sm:$0xf]
  %v982 = vld [vmem:[%s6 + $0xc] sm:$0xf]
  %v983 = vld [vmem:[%s6 + $0x10] sm:$0xf]
  %v984 = vld [vmem:[%s6 + $0x14] sm:$0xf]
  %v985 = vld [vmem:[%s6 + $0x18] sm:$0xf]
  %v986 = vld [vmem:[%s6 + $0x1c] sm:$0xf]
  %v987 = vld [vmem:[%s6 + $0x20] sm:$0xf]
  %v988 = vld [vmem:[%s6 + $0x24] sm:$0xf]
  %v989 = vld [vmem:[%s6 + $0x28] sm:$0xf]
  %v990 = vld [vmem:[%s6 + $0x2c] sm:$0xf]
  %v991 = vld [vmem:[%s6 + $0x30] sm:$0xf]
  %v992 = vld [vmem:[%s6 + $0x34] sm:$0xf]
  %v993 = vld [vmem:[%s6 + $0x38] sm:$0xf]
  %v994 = vld [vmem:[%s6 + $0x3c] sm:$0xf]
  %v995 = vld [vmem:[%s7] sm:$0x1]
  %v997 = vlaneseq
  %v998 = vshrl.u32 %v997, 7
  %v999 = vsub.s32 0, %v998
  %v1000 = vrot.slane %v995, %v999
  %v1018 = vunpack.c.l.b16 %v979
  %v1019 = vunpack.c.l.b16 %v980
  %v1020 = vunpack.c.l.b16 %v981
  %v1021 = vunpack.c.l.b16 %v982
  %v1022 = vunpack.c.l.b16 %v983
  %v1023 = vunpack.c.l.b16 %v984
  %v1024 = vunpack.c.l.b16 %v985
  %v1025 = vunpack.c.l.b16 %v986
  %v1026 = vunpack.c.l.b16 %v987
  %v1027 = vunpack.c.l.b16 %v988
  %v1028 = vunpack.c.l.b16 %v989
  %v1029 = vunpack.c.l.b16 %v990
  %v1030 = vunpack.c.l.b16 %v991
  %v1031 = vunpack.c.l.b16 %v992
  %v1032 = vunpack.c.l.b16 %v993
  %v1033 = vunpack.c.l.b16 %v994
  %v1034 = vpack.c.b16 %v1019, %v1018
  %v1035 = vpack.c.b16 %v1021, %v1020
  %v1036 = vpack.c.b16 %v1023, %v1022
  %v1037 = vpack.c.b16 %v1025, %v1024
  %v1038 = vpack.c.b16 %v1027, %v1026
  %v1039 = vpack.c.b16 %v1029, %v1028
  %v1040 = vpack.c.b16 %v1031, %v1030
  %v1041 = vpack.c.b16 %v1033, %v1032
  %1050 = vmatprep.subr.bf16.mxu0 0
  %1051 = vmatpush1.bf16.msra.mxu0 %v1034
  %1052 = vmatprep.subr.bf16.mxu0 0
  %1053 = vmatpush1.bf16.msra.mxu0 %v1035
  %1054 = vmatprep.subr.bf16.mxu0 0
  %1055 = vmatpush1.bf16.msra.mxu0 %v1036
  %1056 = vmatprep.subr.bf16.mxu0 0
  %1057 = vmatpush1.bf16.msra.mxu0 %v1037
  %1058 = vmatprep.subr.bf16.mxu0 0
  %1059 = vmatpush1.bf16.msra.mxu0 %v1038
  %1060 = vmatprep.subr.bf16.mxu0 0
  %1061 = vmatpush1.bf16.msra.mxu0 %v1039
  %1062 = vmatprep.subr.bf16.mxu0 0
  %1063 = vmatpush1.bf16.msra.mxu0 %v1040
  %1064 = vmatprep.subr.bf16.mxu0 0
  %1065 = vmatpush1.bf16.msra.mxu0 %v1041
  %1066 = vmatprep.subr.bf16.mxu0 0
  %1067 = vmatpush1.bf16.msra.mxu0 0
  %1068 = vmatprep.subr.bf16.mxu0 0
  %1069 = vmatpush1.bf16.msra.mxu0 0
  %1070 = vmatprep.subr.bf16.mxu0 0
  %1071 = vmatpush1.bf16.msra.mxu0 0
  %1072 = vmatprep.subr.bf16.mxu0 0
  %1073 = vmatpush1.bf16.msra.mxu0 0
  %1074 = vmatprep.subr.bf16.mxu0 0
  %1075 = vmatpush1.bf16.msra.mxu0 0
  %1076 = vmatprep.subr.bf16.mxu0 0
  %1077 = vmatpush1.bf16.msra.mxu0 0
  %1078 = vmatprep.subr.bf16.mxu0 0
  %1079 = vmatpush1.bf16.msra.mxu0 0
  %1080 = vmatprep.subr.bf16.mxu0 0
  %1081 = vmatpush1.bf16.msra.mxu0 0
  %1082 = vmatprep.mubr.bf16.mxu0 0
  %1083 = vmatmul.mubr.bf16.gmra.mrb[0].mxu0 %v947
  %v1084 = vpop.f32.mrb[0].mxu0
  %v1085 = vadd.f32 %v1000, %v1084
  %v1086 = vpop.f32.mrb[0].mxu0
  %v1087 = vpop.f32.mrb[0].mxu0
  %v1088 = vadd.f32 %v1000, %v1087
  %v1089 = vpop.f32.mrb[0].mxu0
  %1090 = vmatprep.mubr.bf16.mxu0 0
  %1091 = vmatmul.mubr.bf16.gmra.mrb[0].mxu0 %v948
  %v1092 = vpop.f32.mrb[0].mxu0
  %v1093 = vadd.f32 %v1000, %v1092
  %v1094 = vpop.f32.mrb[0].mxu0
  %v1095 = vpop.f32.mrb[0].mxu0
  %v1096 = vadd.f32 %v1000, %v1095
  %v1097 = vpop.f32.mrb[0].mxu0
  %1098 = vmatprep.mubr.bf16.mxu0 0
  %1099 = vmatmul.mubr.bf16.gmra.mrb[0].mxu0 %v949
  %v1100 = vpop.f32.mrb[0].mxu0
  %v1101 = vadd.f32 %v1000, %v1100
  %v1102 = vpop.f32.mrb[0].mxu0
  %v1103 = vpop.f32.mrb[0].mxu0
  %v1104 = vadd.f32 %v1000, %v1103
  %v1105 = vpop.f32.mrb[0].mxu0
  %1106 = vmatprep.mubr.bf16.mxu0 0
  %1107 = vmatmul.mubr.bf16.gmra.mrb[0].mxu0 %v950
  %v1108 = vpop.f32.mrb[0].mxu0
  %v1109 = vadd.f32 %v1000, %v1108
  %v1110 = vpop.f32.mrb[0].mxu0
  %v1111 = vpop.f32.mrb[0].mxu0
  %v1112 = vadd.f32 %v1000, %v1111
  %v1113 = vpop.f32.mrb[0].mxu0
  %1114 = vmatprep.mubr.bf16.mxu0 0
  %1115 = vmatmul.mubr.bf16.gmra.mrb[0].mxu0 %v951
  %v1116 = vpop.f32.mrb[0].mxu0
  %v1117 = vadd.f32 %v1000, %v1116
  %v1118 = vpop.f32.mrb[0].mxu0
  %v1119 = vpop.f32.mrb[0].mxu0
  %v1120 = vadd.f32 %v1000, %v1119
  %v1121 = vpop.f32.mrb[0].mxu0
  %1122 = vmatprep.mubr.bf16.mxu0 0
  %1123 = vmatmul.mubr.bf16.gmra.mrb[0].mxu0 %v952
  %v1124 = vpop.f32.mrb[0].mxu0
  %v1125 = vadd.f32 %v1000, %v1124
  %v1126 = vpop.f32.mrb[0].mxu0
  %v1127 = vpop.f32.mrb[0].mxu0
  %v1128 = vadd.f32 %v1000, %v1127
  %v1129 = vpop.f32.mrb[0].mxu0
  %1130 = vmatprep.mubr.bf16.mxu0 0
  %1131 = vmatmul.mubr.bf16.gmra.mrb[0].mxu0 %v953
  %v1132 = vpop.f32.mrb[0].mxu0
  %v1133 = vadd.f32 %v1000, %v1132
  %v1134 = vpop.f32.mrb[0].mxu0
  %v1135 = vpop.f32.mrb[0].mxu0
  %v1136 = vadd.f32 %v1000, %v1135
  %v1137 = vpop.f32.mrb[0].mxu0
  %1138 = vmatprep.mubr.bf16.mxu0 0
  %1139 = vmatmul.mubr.bf16.gmra.mrb[0].mxu0 %v954
  %v1140 = vpop.f32.mrb[0].mxu0
  %v1141 = vadd.f32 %v1000, %v1140
  %v1142 = vpop.f32.mrb[0].mxu0
  %v1143 = vpop.f32.mrb[0].mxu0
  %v1144 = vadd.f32 %v1000, %v1143
  %v1145 = vpop.f32.mrb[0].mxu0
  %1146 = vmatprep.mubr.bf16.mxu0 0
  %1147 = vmatmul.mubr.bf16.gmra.mrb[0].mxu0 %v955
  %v1148 = vpop.f32.mrb[0].mxu0
  %v1149 = vadd.f32 %v1000, %v1148
  %v1150 = vpop.f32.mrb[0].mxu0
  %v1151 = vpop.f32.mrb[0].mxu0
  %v1152 = vadd.f32 %v1000, %v1151
  %v1153 = vpop.f32.mrb[0].mxu0
  %1154 = vmatprep.mubr.bf16.mxu0 0
  %1155 = vmatmul.mubr.bf16.gmra.mrb[0].mxu0 %v956
  %v1156 = vpop.f32.mrb[0].mxu0
  %v1157 = vadd.f32 %v1000, %v1156
  %v1158 = vpop.f32.mrb[0].mxu0
  %v1159 = vpop.f32.mrb[0].mxu0
  %v1160 = vadd.f32 %v1000, %v1159
  %v1161 = vpop.f32.mrb[0].mxu0
  %1162 = vmatprep.mubr.bf16.mxu0 0
  %1163 = vmatmul.mubr.bf16.gmra.mrb[0].mxu0 %v957
  %v1164 = vpop.f32.mrb[0].mxu0
  %v1165 = vadd.f32 %v1000, %v1164
  %v1166 = vpop.f32.mrb[0].mxu0
  %v1167 = vpop.f32.mrb[0].mxu0
  %v1168 = vadd.f32 %v1000, %v1167
  %v1169 = vpop.f32.mrb[0].mxu0
  %1170 = vmatprep.mubr.bf16.mxu0 0
  %1171 = vmatmul.mubr.bf16.gmra.mrb[0].mxu0 %v958
  %v1172 = vpop.f32.mrb[0].mxu0
  %v1173 = vadd.f32 %v1000, %v1172
  %v1174 = vpop.f32.mrb[0].mxu0
  %v1175 = vpop.f32.mrb[0].mxu0
  %v1176 = vadd.f32 %v1000, %v1175
  %v1177 = vpop.f32.mrb[0].mxu0
  %1178 = vmatprep.mubr.bf16.mxu0 0
  %1179 = vmatmul.mubr.bf16.gmra.mrb[0].mxu0 %v959
  %v1180 = vpop.f32.mrb[0].mxu0
  %v1181 = vadd.f32 %v1000, %v1180
  %v1182 = vpop.f32.mrb[0].mxu0
  %v1183 = vpop.f32.mrb[0].mxu0
  %v1184 = vadd.f32 %v1000, %v1183
  %v1185 = vpop.f32.mrb[0].mxu0
  %1186 = vmatprep.mubr.bf16.mxu0 0
  %1187 = vmatmul.mubr.bf16.gmra.mrb[0].mxu0 %v960
  %v1188 = vpop.f32.mrb[0].mxu0
  %v1189 = vadd.f32 %v1000, %v1188
  %v1190 = vpop.f32.mrb[0].mxu0
  %v1191 = vpop.f32.mrb[0].mxu0
  %v1192 = vadd.f32 %v1000, %v1191
  %v1193 = vpop.f32.mrb[0].mxu0
  %1194 = vmatprep.mubr.bf16.mxu0 0
  %1195 = vmatmul.mubr.bf16.gmra.mrb[0].mxu0 %v961
  %v1196 = vpop.f32.mrb[0].mxu0
  %v1197 = vadd.f32 %v1000, %v1196
  %v1198 = vpop.f32.mrb[0].mxu0
  %v1199 = vpop.f32.mrb[0].mxu0
  %v1200 = vadd.f32 %v1000, %v1199
  %v1201 = vpop.f32.mrb[0].mxu0
  %1202 = vmatprep.mubr.bf16.mxu0 0
  %1203 = vmatmul.mubr.bf16.gmra.mrb[0].mxu0 %v962
  %v1204 = vpop.f32.mrb[0].mxu0
  %v1205 = vadd.f32 %v1000, %v1204
  %v1206 = vpop.f32.mrb[0].mxu0
  %v1207 = vpop.f32.mrb[0].mxu0
  %v1208 = vadd.f32 %v1000, %v1207
  %v1209 = vpop.f32.mrb[0].mxu0
  %1210 = vmatprep.mubr.bf16.mxu0 0
  %1211 = vmatmul.mubr.bf16.gmra.mrb[0].mxu0 %v963
  %v1212 = vpop.f32.mrb[0].mxu0
  %v1213 = vadd.f32 %v1000, %v1212
  %v1214 = vpop.f32.mrb[0].mxu0
  %v1215 = vpop.f32.mrb[0].mxu0
  %v1216 = vadd.f32 %v1000, %v1215
  %v1217 = vpop.f32.mrb[0].mxu0
  %1218 = vmatprep.mubr.bf16.mxu0 0
  %1219 = vmatmul.mubr.bf16.gmra.mrb[0].mxu0 %v964
  %v1220 = vpop.f32.mrb[0].mxu0
  %v1221 = vadd.f32 %v1000, %v1220
  %v1222 = vpop.f32.mrb[0].mxu0
  %v1223 = vpop.f32.mrb[0].mxu0
  %v1224 = vadd.f32 %v1000, %v1223
  %v1225 = vpop.f32.mrb[0].mxu0
  %1226 = vmatprep.mubr.bf16.mxu0 0
  %1227 = vmatmul.mubr.bf16.gmra.mrb[0].mxu0 %v965
  %v1228 = vpop.f32.mrb[0].mxu0
  %v1229 = vadd.f32 %v1000, %v1228
  %v1230 = vpop.f32.mrb[0].mxu0
  %v1231 = vpop.f32.mrb[0].mxu0
  %v1232 = vadd.f32 %v1000, %v1231
  %v1233 = vpop.f32.mrb[0].mxu0
  %1234 = vmatprep.mubr.bf16.mxu0 0
  %1235 = vmatmul.mubr.bf16.gmra.mrb[0].mxu0 %v966
  %v1236 = vpop.f32.mrb[0].mxu0
  %v1237 = vadd.f32 %v1000, %v1236
  %v1238 = vpop.f32.mrb[0].mxu0
  %v1239 = vpop.f32.mrb[0].mxu0
  %v1240 = vadd.f32 %v1000, %v1239
  %v1241 = vpop.f32.mrb[0].mxu0
  %1242 = vmatprep.mubr.bf16.mxu0 0
  %1243 = vmatmul.mubr.bf16.gmra.mrb[0].mxu0 %v967
  %v1244 = vpop.f32.mrb[0].mxu0
  %v1245 = vadd.f32 %v1000, %v1244
  %v1246 = vpop.f32.mrb[0].mxu0
  %v1247 = vpop.f32.mrb[0].mxu0
  %v1248 = vadd.f32 %v1000, %v1247
  %v1249 = vpop.f32.mrb[0].mxu0
  %1250 = vmatprep.mubr.bf16.mxu0 0
  %1251 = vmatmul.mubr.bf16.gmra.mrb[0].mxu0 %v968
  %v1252 = vpop.f32.mrb[0].mxu0
  %v1253 = vadd.f32 %v1000, %v1252
  %v1254 = vpop.f32.mrb[0].mxu0
  %v1255 = vpop.f32.mrb[0].mxu0
  %v1256 = vadd.f32 %v1000, %v1255
  %v1257 = vpop.f32.mrb[0].mxu0
  %1258 = vmatprep.mubr.bf16.mxu0 0
  %1259 = vmatmul.mubr.bf16.gmra.mrb[0].mxu0 %v969
  %v1260 = vpop.f32.mrb[0].mxu0
  %v1261 = vadd.f32 %v1000, %v1260
  %v1262 = vpop.f32.mrb[0].mxu0
  %v1263 = vpop.f32.mrb[0].mxu0
  %v1264 = vadd.f32 %v1000, %v1263
  %v1265 = vpop.f32.mrb[0].mxu0
  %1266 = vmatprep.mubr.bf16.mxu0 0
  %1267 = vmatmul.mubr.bf16.gmra.mrb[0].mxu0 %v970
  %v1268 = vpop.f32.mrb[0].mxu0
  %v1269 = vadd.f32 %v1000, %v1268
  %v1270 = vpop.f32.mrb[0].mxu0
  %v1271 = vpop.f32.mrb[0].mxu0
  %v1272 = vadd.f32 %v1000, %v1271
  %v1273 = vpop.f32.mrb[0].mxu0
  %1274 = vmatprep.mubr.bf16.mxu0 0
  %1275 = vmatmul.mubr.bf16.gmra.mrb[0].mxu0 %v971
  %v1276 = vpop.f32.mrb[0].mxu0
  %v1277 = vadd.f32 %v1000, %v1276
  %v1278 = vpop.f32.mrb[0].mxu0
  %v1279 = vpop.f32.mrb[0].mxu0
  %v1280 = vadd.f32 %v1000, %v1279
  %v1281 = vpop.f32.mrb[0].mxu0
  %1282 = vmatprep.mubr.bf16.mxu0 0
  %1283 = vmatmul.mubr.bf16.gmra.mrb[0].mxu0 %v972
  %v1284 = vpop.f32.mrb[0].mxu0
  %v1285 = vadd.f32 %v1000, %v1284
  %v1286 = vpop.f32.mrb[0].mxu0
  %v1287 = vpop.f32.mrb[0].mxu0
  %v1288 = vadd.f32 %v1000, %v1287
  %v1289 = vpop.f32.mrb[0].mxu0
  %1290 = vmatprep.mubr.bf16.mxu0 0
  %1291 = vmatmul.mubr.bf16.gmra.mrb[0].mxu0 %v973
  %v1292 = vpop.f32.mrb[0].mxu0
  %v1293 = vadd.f32 %v1000, %v1292
  %v1294 = vpop.f32.mrb[0].mxu0
  %v1295 = vpop.f32.mrb[0].mxu0
  %v1296 = vadd.f32 %v1000, %v1295
  %v1297 = vpop.f32.mrb[0].mxu0
  %1298 = vmatprep.mubr.bf16.mxu0 0
  %1299 = vmatmul.mubr.bf16.gmra.mrb[0].mxu0 %v974
  %v1300 = vpop.f32.mrb[0].mxu0
  %v1301 = vadd.f32 %v1000, %v1300
  %v1302 = vpop.f32.mrb[0].mxu0
  %v1303 = vpop.f32.mrb[0].mxu0
  %v1304 = vadd.f32 %v1000, %v1303
  %v1305 = vpop.f32.mrb[0].mxu0
  %1306 = vmatprep.mubr.bf16.mxu0 0
  %1307 = vmatmul.mubr.bf16.gmra.mrb[0].mxu0 %v975
  %v1308 = vpop.f32.mrb[0].mxu0
  %v1309 = vadd.f32 %v1000, %v1308
  %v1310 = vpop.f32.mrb[0].mxu0
  %v1311 = vpop.f32.mrb[0].mxu0
  %v1312 = vadd.f32 %v1000, %v1311
  %v1313 = vpop.f32.mrb[0].mxu0
  %1314 = vmatprep.mubr.bf16.mxu0 0
  %1315 = vmatmul.mubr.bf16.gmra.mrb[0].mxu0 %v976
  %v1316 = vpop.f32.mrb[0].mxu0
  %v1317 = vadd.f32 %v1000, %v1316
  %v1318 = vpop.f32.mrb[0].mxu0
  %v1319 = vpop.f32.mrb[0].mxu0
  %v1320 = vadd.f32 %v1000, %v1319
  %v1321 = vpop.f32.mrb[0].mxu0
  %1322 = vmatprep.mubr.bf16.mxu0 0
  %1323 = vmatmul.mubr.bf16.gmra.mrb[0].mxu0 %v977
  %v1324 = vpop.f32.mrb[0].mxu0
  %v1325 = vadd.f32 %v1000, %v1324
  %v1326 = vpop.f32.mrb[0].mxu0
  %v1327 = vpop.f32.mrb[0].mxu0
  %v1328 = vadd.f32 %v1000, %v1327
  %v1329 = vpop.f32.mrb[0].mxu0
  %1330 = vmatprep.mubr.bf16.mxu0 0
  %1331 = vmatmul.mubr.bf16.gmra.mrb[0].mxu0 %v978
  %v1332 = vpop.f32.mrb[0].mxu0
  %v1333 = vadd.f32 %v1000, %v1332
  %v1334 = vpop.f32.mrb[0].mxu0
  %v1335 = vpop.f32.mrb[0].mxu0
  %v1336 = vadd.f32 %v1000, %v1335
  %v1337 = vpop.f32.mrb[0].mxu0
  %1338 = vdwg.mxu0
  %v1339 = vmax.f32 %v1085, 0.0
  %v1340 = vmax.f32 %v1088, 0.0
  %v1341 = vmax.f32 %v1093, 0.0
  %v1342 = vmax.f32 %v1096, 0.0
  %v1343 = vmax.f32 %v1101, 0.0
  %v1344 = vmax.f32 %v1104, 0.0
  %v1345 = vmax.f32 %v1109, 0.0
  %v1346 = vmax.f32 %v1112, 0.0
  %v1347 = vmax.f32 %v1117, 0.0
  %v1348 = vmax.f32 %v1120, 0.0
  %v1349 = vmax.f32 %v1125, 0.0
  %v1350 = vmax.f32 %v1128, 0.0
  %v1351 = vmax.f32 %v1133, 0.0
  %v1352 = vmax.f32 %v1136, 0.0
  %v1353 = vmax.f32 %v1141, 0.0
  %v1354 = vmax.f32 %v1144, 0.0
  %v1355 = vmax.f32 %v1149, 0.0
  %v1356 = vmax.f32 %v1152, 0.0
  %v1357 = vmax.f32 %v1157, 0.0
  %v1358 = vmax.f32 %v1160, 0.0
  %v1359 = vmax.f32 %v1165, 0.0
  %v1360 = vmax.f32 %v1168, 0.0
  %v1361 = vmax.f32 %v1173, 0.0
  %v1362 = vmax.f32 %v1176, 0.0
  %v1363 = vmax.f32 %v1181, 0.0
  %v1364 = vmax.f32 %v1184, 0.0
  %v1365 = vmax.f32 %v1189, 0.0
  %v1366 = vmax.f32 %v1192, 0.0
  %v1367 = vmax.f32 %v1197, 0.0
  %v1368 = vmax.f32 %v1200, 0.0
  %v1369 = vmax.f32 %v1205, 0.0
  %v1370 = vmax.f32 %v1208, 0.0
  %v1371 = vmax.f32 %v1213, 0.0
  %v1372 = vmax.f32 %v1216, 0.0
  %v1373 = vmax.f32 %v1221, 0.0
  %v1374 = vmax.f32 %v1224, 0.0
  %v1375 = vmax.f32 %v1229, 0.0
  %v1376 = vmax.f32 %v1232, 0.0
  %v1377 = vmax.f32 %v1237, 0.0
  %v1378 = vmax.f32 %v1240, 0.0
  %v1379 = vmax.f32 %v1245, 0.0
  %v1380 = vmax.f32 %v1248, 0.0
  %v1381 = vmax.f32 %v1253, 0.0
  %v1382 = vmax.f32 %v1256, 0.0
  %v1383 = vmax.f32 %v1261, 0.0
  %v1384 = vmax.f32 %v1264, 0.0
  %v1385 = vmax.f32 %v1269, 0.0
  %v1386 = vmax.f32 %v1272, 0.0
  %v1387 = vmax.f32 %v1277, 0.0
  %v1388 = vmax.f32 %v1280, 0.0
  %v1389 = vmax.f32 %v1285, 0.0
  %v1390 = vmax.f32 %v1288, 0.0
  %v1391 = vmax.f32 %v1293, 0.0
  %v1392 = vmax.f32 %v1296, 0.0
  %v1393 = vmax.f32 %v1301, 0.0
  %v1394 = vmax.f32 %v1304, 0.0
  %v1395 = vmax.f32 %v1309, 0.0
  %v1396 = vmax.f32 %v1312, 0.0
  %v1397 = vmax.f32 %v1317, 0.0
  %v1398 = vmax.f32 %v1320, 0.0
  %v1399 = vmax.f32 %v1325, 0.0
  %v1400 = vmax.f32 %v1328, 0.0
  %v1401 = vmax.f32 %v1333, 0.0
  %v1402 = vmax.f32 %v1336, 0.0
  %v1403 = vpack.c.bf16 %v1340, %v1339
  %v1404 = vpack.c.bf16 %v1342, %v1341
  %v1405 = vpack.c.bf16 %v1344, %v1343
  %v1406 = vpack.c.bf16 %v1346, %v1345
  %v1407 = vpack.c.bf16 %v1348, %v1347
  %v1408 = vpack.c.bf16 %v1350, %v1349
  %v1409 = vpack.c.bf16 %v1352, %v1351
  %v1410 = vpack.c.bf16 %v1354, %v1353
  %v1411 = vpack.c.bf16 %v1356, %v1355
  %v1412 = vpack.c.bf16 %v1358, %v1357
  %v1413 = vpack.c.bf16 %v1360, %v1359
  %v1414 = vpack.c.bf16 %v1362, %v1361
  %v1415 = vpack.c.bf16 %v1364, %v1363
  %v1416 = vpack.c.bf16 %v1366, %v1365
  %v1417 = vpack.c.bf16 %v1368, %v1367
  %v1418 = vpack.c.bf16 %v1370, %v1369
  %v1419 = vpack.c.bf16 %v1372, %v1371
  %v1420 = vpack.c.bf16 %v1374, %v1373
  %v1421 = vpack.c.bf16 %v1376, %v1375
  %v1422 = vpack.c.bf16 %v1378, %v1377
  %v1423 = vpack.c.bf16 %v1380, %v1379
  %v1424 = vpack.c.bf16 %v1382, %v1381
  %v1425 = vpack.c.bf16 %v1384, %v1383
  %v1426 = vpack.c.bf16 %v1386, %v1385
  %v1427 = vpack.c.bf16 %v1388, %v1387
  %v1428 = vpack.c.bf16 %v1390, %v1389
  %v1429 = vpack.c.bf16 %v1392, %v1391
  %v1430 = vpack.c.bf16 %v1394, %v1393
  %v1431 = vpack.c.bf16 %v1396, %v1395
  %v1432 = vpack.c.bf16 %v1398, %v1397
  %v1433 = vpack.c.bf16 %v1400, %v1399
  %v1434 = vpack.c.bf16 %v1402, %v1401
  %v1435 = vld [vmem:[%s8] sm:$0xf]
  %v1436 = vld [vmem:[%s8 + $0x4] sm:$0xf]
  %v1437 = vld [vmem:[%s8 + $0x8] sm:$0xf]
  %v1438 = vld [vmem:[%s8 + $0xc] sm:$0xf]
  %v1439 = vld [vmem:[%s8 + $0x10] sm:$0xf]
  %v1440 = vld [vmem:[%s8 + $0x14] sm:$0xf]
  %v1441 = vld [vmem:[%s8 + $0x18] sm:$0xf]
  %v1442 = vld [vmem:[%s8 + $0x1c] sm:$0xf]
  %v1443 = vld [vmem:[%s8 + $0x20] sm:$0xf]
  %v1444 = vld [vmem:[%s8 + $0x24] sm:$0xf]
  %v1445 = vld [vmem:[%s8 + $0x28] sm:$0xf]
  %v1446 = vld [vmem:[%s8 + $0x2c] sm:$0xf]
  %v1447 = vld [vmem:[%s8 + $0x30] sm:$0xf]
  %v1448 = vld [vmem:[%s8 + $0x34] sm:$0xf]
  %v1449 = vld [vmem:[%s8 + $0x38] sm:$0xf]
  %v1450 = vld [vmem:[%s8 + $0x3c] sm:$0xf]
  %v1451 = vld [vmem:[%s9] sm:$0x1]
  %v1453 = vlaneseq
  %v1454 = vshrl.u32 %v1453, 7
  %v1455 = vsub.s32 0, %v1454
  %v1456 = vrot.slane %v1451, %v1455
  %v1474 = vunpack.c.l.b16 %v1435
  %v1475 = vunpack.c.l.b16 %v1436
  %v1476 = vunpack.c.l.b16 %v1437
  %v1477 = vunpack.c.l.b16 %v1438
  %v1478 = vunpack.c.l.b16 %v1439
  %v1479 = vunpack.c.l.b16 %v1440
  %v1480 = vunpack.c.l.b16 %v1441
  %v1481 = vunpack.c.l.b16 %v1442
  %v1482 = vunpack.c.l.b16 %v1443
  %v1483 = vunpack.c.l.b16 %v1444
  %v1484 = vunpack.c.l.b16 %v1445
  %v1485 = vunpack.c.l.b16 %v1446
  %v1486 = vunpack.c.l.b16 %v1447
  %v1487 = vunpack.c.l.b16 %v1448
  %v1488 = vunpack.c.l.b16 %v1449
  %v1489 = vunpack.c.l.b16 %v1450
  %v1490 = vpack.c.b16 %v1475, %v1474
  %v1491 = vpack.c.b16 %v1477, %v1476
  %v1492 = vpack.c.b16 %v1479, %v1478
  %v1493 = vpack.c.b16 %v1481, %v1480
  %v1494 = vpack.c.b16 %v1483, %v1482
  %v1495 = vpack.c.b16 %v1485, %v1484
  %v1496 = vpack.c.b16 %v1487, %v1486
  %v1497 = vpack.c.b16 %v1489, %v1488
  %1506 = vmatprep.subr.bf16.mxu0 0
  %1507 = vmatpush1.bf16.msra.mxu0 %v1490
  %1508 = vmatprep.subr.bf16.mxu0 0
  %1509 = vmatpush1.bf16.msra.mxu0 %v1491
  %1510 = vmatprep.subr.bf16.mxu0 0
  %1511 = vmatpush1.bf16.msra.mxu0 %v1492
  %1512 = vmatprep.subr.bf16.mxu0 0
  %1513 = vmatpush1.bf16.msra.mxu0 %v1493
  %1514 = vmatprep.subr.bf16.mxu0 0
  %1515 = vmatpush1.bf16.msra.mxu0 %v1494
  %1516 = vmatprep.subr.bf16.mxu0 0
  %1517 = vmatpush1.bf16.msra.mxu0 %v1495
  %1518 = vmatprep.subr.bf16.mxu0 0
  %1519 = vmatpush1.bf16.msra.mxu0 %v1496
  %1520 = vmatprep.subr.bf16.mxu0 0
  %1521 = vmatpush1.bf16.msra.mxu0 %v1497
  %1522 = vmatprep.subr.bf16.mxu0 0
  %1523 = vmatpush1.bf16.msra.mxu0 0
  %1524 = vmatprep.subr.bf16.mxu0 0
  %1525 = vmatpush1.bf16.msra.mxu0 0
  %1526 = vmatprep.subr.bf16.mxu0 0
  %1527 = vmatpush1.bf16.msra.mxu0 0
  %1528 = vmatprep.subr.bf16.mxu0 0
  %1529 = vmatpush1.bf16.msra.mxu0 0
  %1530 = vmatprep.subr.bf16.mxu0 0
  %1531 = vmatpush1.bf16.msra.mxu0 0
  %1532 = vmatprep.subr.bf16.mxu0 0
  %1533 = vmatpush1.bf16.msra.mxu0 0
  %1534 = vmatprep.subr.bf16.mxu0 0
  %1535 = vmatpush1.bf16.msra.mxu0 0
  %1536 = vmatprep.subr.bf16.mxu0 0
  %1537 = vmatpush1.bf16.msra.mxu0 0
  %1538 = vmatprep.mubr.bf16.mxu0 0
  %1539 = vmatmul.mubr.bf16.gmra.mrb[0].mxu0 %v1403
  %v1540 = vpop.f32.mrb[0].mxu0
  %v1541 = vadd.f32 %v1456, %v1540
  %v1542 = vpop.f32.mrb[0].mxu0
  %v1543 = vpop.f32.mrb[0].mxu0
  %v1544 = vadd.f32 %v1456, %v1543
  %v1545 = vpop.f32.mrb[0].mxu0
  %1546 = vmatprep.mubr.bf16.mxu0 0
  %1547 = vmatmul.mubr.bf16.gmra.mrb[0].mxu0 %v1404
  %v1548 = vpop.f32.mrb[0].mxu0
  %v1549 = vadd.f32 %v1456, %v1548
  %v1550 = vpop.f32.mrb[0].mxu0
  %v1551 = vpop.f32.mrb[0].mxu0
  %v1552 = vadd.f32 %v1456, %v1551
  %v1553 = vpop.f32.mrb[0].mxu0
  %1554 = vmatprep.mubr.bf16.mxu0 0
  %1555 = vmatmul.mubr.bf16.gmra.mrb[0].mxu0 %v1405
  %v1556 = vpop.f32.mrb[0].mxu0
  %v1557 = vadd.f32 %v1456, %v1556
  %v1558 = vpop.f32.mrb[0].mxu0
  %v1559 = vpop.f32.mrb[0].mxu0
  %v1560 = vadd.f32 %v1456, %v1559
  %v1561 = vpop.f32.mrb[0].mxu0
  %1562 = vmatprep.mubr.bf16.mxu0 0
  %1563 = vmatmul.mubr.bf16.gmra.mrb[0].mxu0 %v1406
  %v1564 = vpop.f32.mrb[0].mxu0
  %v1565 = vadd.f32 %v1456, %v1564
  %v1566 = vpop.f32.mrb[0].mxu0
  %v1567 = vpop.f32.mrb[0].mxu0
  %v1568 = vadd.f32 %v1456, %v1567
  %v1569 = vpop.f32.mrb[0].mxu0
  %1570 = vmatprep.mubr.bf16.mxu0 0
  %1571 = vmatmul.mubr.bf16.gmra.mrb[0].mxu0 %v1407
  %v1572 = vpop.f32.mrb[0].mxu0
  %v1573 = vadd.f32 %v1456, %v1572
  %v1574 = vpop.f32.mrb[0].mxu0
  %v1575 = vpop.f32.mrb[0].mxu0
  %v1576 = vadd.f32 %v1456, %v1575
  %v1577 = vpop.f32.mrb[0].mxu0
  %1578 = vmatprep.mubr.bf16.mxu0 0
  %1579 = vmatmul.mubr.bf16.gmra.mrb[0].mxu0 %v1408
  %v1580 = vpop.f32.mrb[0].mxu0
  %v1581 = vadd.f32 %v1456, %v1580
  %v1582 = vpop.f32.mrb[0].mxu0
  %v1583 = vpop.f32.mrb[0].mxu0
  %v1584 = vadd.f32 %v1456, %v1583
  %v1585 = vpop.f32.mrb[0].mxu0
  %1586 = vmatprep.mubr.bf16.mxu0 0
  %1587 = vmatmul.mubr.bf16.gmra.mrb[0].mxu0 %v1409
  %v1588 = vpop.f32.mrb[0].mxu0
  %v1589 = vadd.f32 %v1456, %v1588
  %v1590 = vpop.f32.mrb[0].mxu0
  %v1591 = vpop.f32.mrb[0].mxu0
  %v1592 = vadd.f32 %v1456, %v1591
  %v1593 = vpop.f32.mrb[0].mxu0
  %1594 = vmatprep.mubr.bf16.mxu0 0
  %1595 = vmatmul.mubr.bf16.gmra.mrb[0].mxu0 %v1410
  %v1596 = vpop.f32.mrb[0].mxu0
  %v1597 = vadd.f32 %v1456, %v1596
  %v1598 = vpop.f32.mrb[0].mxu0
  %v1599 = vpop.f32.mrb[0].mxu0
  %v1600 = vadd.f32 %v1456, %v1599
  %v1601 = vpop.f32.mrb[0].mxu0
  %1602 = vmatprep.mubr.bf16.mxu0 0
  %1603 = vmatmul.mubr.bf16.gmra.mrb[0].mxu0 %v1411
  %v1604 = vpop.f32.mrb[0].mxu0
  %v1605 = vadd.f32 %v1456, %v1604
  %v1606 = vpop.f32.mrb[0].mxu0
  %v1607 = vpop.f32.mrb[0].mxu0
  %v1608 = vadd.f32 %v1456, %v1607
  %v1609 = vpop.f32.mrb[0].mxu0
  %1610 = vmatprep.mubr.bf16.mxu0 0
  %1611 = vmatmul.mubr.bf16.gmra.mrb[0].mxu0 %v1412
  %v1612 = vpop.f32.mrb[0].mxu0
  %v1613 = vadd.f32 %v1456, %v1612
  %v1614 = vpop.f32.mrb[0].mxu0
  %v1615 = vpop.f32.mrb[0].mxu0
  %v1616 = vadd.f32 %v1456, %v1615
  %v1617 = vpop.f32.mrb[0].mxu0
  %1618 = vmatprep.mubr.bf16.mxu0 0
  %1619 = vmatmul.mubr.bf16.gmra.mrb[0].mxu0 %v1413
  %v1620 = vpop.f32.mrb[0].mxu0
  %v1621 = vadd.f32 %v1456, %v1620
  %v1622 = vpop.f32.mrb[0].mxu0
  %v1623 = vpop.f32.mrb[0].mxu0
  %v1624 = vadd.f32 %v1456, %v1623
  %v1625 = vpop.f32.mrb[0].mxu0
  %1626 = vmatprep.mubr.bf16.mxu0 0
  %1627 = vmatmul.mubr.bf16.gmra.mrb[0].mxu0 %v1414
  %v1628 = vpop.f32.mrb[0].mxu0
  %v1629 = vadd.f32 %v1456, %v1628
  %v1630 = vpop.f32.mrb[0].mxu0
  %v1631 = vpop.f32.mrb[0].mxu0
  %v1632 = vadd.f32 %v1456, %v1631
  %v1633 = vpop.f32.mrb[0].mxu0
  %1634 = vmatprep.mubr.bf16.mxu0 0
  %1635 = vmatmul.mubr.bf16.gmra.mrb[0].mxu0 %v1415
  %v1636 = vpop.f32.mrb[0].mxu0
  %v1637 = vadd.f32 %v1456, %v1636
  %v1638 = vpop.f32.mrb[0].mxu0
  %v1639 = vpop.f32.mrb[0].mxu0
  %v1640 = vadd.f32 %v1456, %v1639
  %v1641 = vpop.f32.mrb[0].mxu0
  %1642 = vmatprep.mubr.bf16.mxu0 0
  %1643 = vmatmul.mubr.bf16.gmra.mrb[0].mxu0 %v1416
  %v1644 = vpop.f32.mrb[0].mxu0
  %v1645 = vadd.f32 %v1456, %v1644
  %v1646 = vpop.f32.mrb[0].mxu0
  %v1647 = vpop.f32.mrb[0].mxu0
  %v1648 = vadd.f32 %v1456, %v1647
  %v1649 = vpop.f32.mrb[0].mxu0
  %1650 = vmatprep.mubr.bf16.mxu0 0
  %1651 = vmatmul.mubr.bf16.gmra.mrb[0].mxu0 %v1417
  %v1652 = vpop.f32.mrb[0].mxu0
  %v1653 = vadd.f32 %v1456, %v1652
  %v1654 = vpop.f32.mrb[0].mxu0
  %v1655 = vpop.f32.mrb[0].mxu0
  %v1656 = vadd.f32 %v1456, %v1655
  %v1657 = vpop.f32.mrb[0].mxu0
  %1658 = vmatprep.mubr.bf16.mxu0 0
  %1659 = vmatmul.mubr.bf16.gmra.mrb[0].mxu0 %v1418
  %v1660 = vpop.f32.mrb[0].mxu0
  %v1661 = vadd.f32 %v1456, %v1660
  %v1662 = vpop.f32.mrb[0].mxu0
  %v1663 = vpop.f32.mrb[0].mxu0
  %v1664 = vadd.f32 %v1456, %v1663
  %v1665 = vpop.f32.mrb[0].mxu0
  %1666 = vmatprep.mubr.bf16.mxu0 0
  %1667 = vmatmul.mubr.bf16.gmra.mrb[0].mxu0 %v1419
  %v1668 = vpop.f32.mrb[0].mxu0
  %v1669 = vadd.f32 %v1456, %v1668
  %v1670 = vpop.f32.mrb[0].mxu0
  %v1671 = vpop.f32.mrb[0].mxu0
  %v1672 = vadd.f32 %v1456, %v1671
  %v1673 = vpop.f32.mrb[0].mxu0
  %1674 = vmatprep.mubr.bf16.mxu0 0
  %1675 = vmatmul.mubr.bf16.gmra.mrb[0].mxu0 %v1420
  %v1676 = vpop.f32.mrb[0].mxu0
  %v1677 = vadd.f32 %v1456, %v1676
  %v1678 = vpop.f32.mrb[0].mxu0
  %v1679 = vpop.f32.mrb[0].mxu0
  %v1680 = vadd.f32 %v1456, %v1679
  %v1681 = vpop.f32.mrb[0].mxu0
  %1682 = vmatprep.mubr.bf16.mxu0 0
  %1683 = vmatmul.mubr.bf16.gmra.mrb[0].mxu0 %v1421
  %v1684 = vpop.f32.mrb[0].mxu0
  %v1685 = vadd.f32 %v1456, %v1684
  %v1686 = vpop.f32.mrb[0].mxu0
  %v1687 = vpop.f32.mrb[0].mxu0
  %v1688 = vadd.f32 %v1456, %v1687
  %v1689 = vpop.f32.mrb[0].mxu0
  %1690 = vmatprep.mubr.bf16.mxu0 0
  %1691 = vmatmul.mubr.bf16.gmra.mrb[0].mxu0 %v1422
  %v1692 = vpop.f32.mrb[0].mxu0
  %v1693 = vadd.f32 %v1456, %v1692
  %v1694 = vpop.f32.mrb[0].mxu0
  %v1695 = vpop.f32.mrb[0].mxu0
  %v1696 = vadd.f32 %v1456, %v1695
  %v1697 = vpop.f32.mrb[0].mxu0
  %1698 = vmatprep.mubr.bf16.mxu0 0
  %1699 = vmatmul.mubr.bf16.gmra.mrb[0].mxu0 %v1423
  %v1700 = vpop.f32.mrb[0].mxu0
  %v1701 = vadd.f32 %v1456, %v1700
  %v1702 = vpop.f32.mrb[0].mxu0
  %v1703 = vpop.f32.mrb[0].mxu0
  %v1704 = vadd.f32 %v1456, %v1703
  %v1705 = vpop.f32.mrb[0].mxu0
  %1706 = vmatprep.mubr.bf16.mxu0 0
  %1707 = vmatmul.mubr.bf16.gmra.mrb[0].mxu0 %v1424
  %v1708 = vpop.f32.mrb[0].mxu0
  %v1709 = vadd.f32 %v1456, %v1708
  %v1710 = vpop.f32.mrb[0].mxu0
  %v1711 = vpop.f32.mrb[0].mxu0
  %v1712 = vadd.f32 %v1456, %v1711
  %v1713 = vpop.f32.mrb[0].mxu0
  %1714 = vmatprep.mubr.bf16.mxu0 0
  %1715 = vmatmul.mubr.bf16.gmra.mrb[0].mxu0 %v1425
  %v1716 = vpop.f32.mrb[0].mxu0
  %v1717 = vadd.f32 %v1456, %v1716
  %v1718 = vpop.f32.mrb[0].mxu0
  %v1719 = vpop.f32.mrb[0].mxu0
  %v1720 = vadd.f32 %v1456, %v1719
  %v1721 = vpop.f32.mrb[0].mxu0
  %1722 = vmatprep.mubr.bf16.mxu0 0
  %1723 = vmatmul.mubr.bf16.gmra.mrb[0].mxu0 %v1426
  %v1724 = vpop.f32.mrb[0].mxu0
  %v1725 = vadd.f32 %v1456, %v1724
  %v1726 = vpop.f32.mrb[0].mxu0
  %v1727 = vpop.f32.mrb[0].mxu0
  %v1728 = vadd.f32 %v1456, %v1727
  %v1729 = vpop.f32.mrb[0].mxu0
  %1730 = vmatprep.mubr.bf16.mxu0 0
  %1731 = vmatmul.mubr.bf16.gmra.mrb[0].mxu0 %v1427
  %v1732 = vpop.f32.mrb[0].mxu0
  %v1733 = vadd.f32 %v1456, %v1732
  %v1734 = vpop.f32.mrb[0].mxu0
  %v1735 = vpop.f32.mrb[0].mxu0
  %v1736 = vadd.f32 %v1456, %v1735
  %v1737 = vpop.f32.mrb[0].mxu0
  %1738 = vmatprep.mubr.bf16.mxu0 0
  %1739 = vmatmul.mubr.bf16.gmra.mrb[0].mxu0 %v1428
  %v1740 = vpop.f32.mrb[0].mxu0
  %v1741 = vadd.f32 %v1456, %v1740
  %v1742 = vpop.f32.mrb[0].mxu0
  %v1743 = vpop.f32.mrb[0].mxu0
  %v1744 = vadd.f32 %v1456, %v1743
  %v1745 = vpop.f32.mrb[0].mxu0
  %1746 = vmatprep.mubr.bf16.mxu0 0
  %1747 = vmatmul.mubr.bf16.gmra.mrb[0].mxu0 %v1429
  %v1748 = vpop.f32.mrb[0].mxu0
  %v1749 = vadd.f32 %v1456, %v1748
  %v1750 = vpop.f32.mrb[0].mxu0
  %v1751 = vpop.f32.mrb[0].mxu0
  %v1752 = vadd.f32 %v1456, %v1751
  %v1753 = vpop.f32.mrb[0].mxu0
  %1754 = vmatprep.mubr.bf16.mxu0 0
  %1755 = vmatmul.mubr.bf16.gmra.mrb[0].mxu0 %v1430
  %v1756 = vpop.f32.mrb[0].mxu0
  %v1757 = vadd.f32 %v1456, %v1756
  %v1758 = vpop.f32.mrb[0].mxu0
  %v1759 = vpop.f32.mrb[0].mxu0
  %v1760 = vadd.f32 %v1456, %v1759
  %v1761 = vpop.f32.mrb[0].mxu0
  %1762 = vmatprep.mubr.bf16.mxu0 0
  %1763 = vmatmul.mubr.bf16.gmra.mrb[0].mxu0 %v1431
  %v1764 = vpop.f32.mrb[0].mxu0
  %v1765 = vadd.f32 %v1456, %v1764
  %v1766 = vpop.f32.mrb[0].mxu0
  %v1767 = vpop.f32.mrb[0].mxu0
  %v1768 = vadd.f32 %v1456, %v1767
  %v1769 = vpop.f32.mrb[0].mxu0
  %1770 = vmatprep.mubr.bf16.mxu0 0
  %1771 = vmatmul.mubr.bf16.gmra.mrb[0].mxu0 %v1432
  %v1772 = vpop.f32.mrb[0].mxu0
  %v1773 = vadd.f32 %v1456, %v1772
  %v1774 = vpop.f32.mrb[0].mxu0
  %v1775 = vpop.f32.mrb[0].mxu0
  %v1776 = vadd.f32 %v1456, %v1775
  %v1777 = vpop.f32.mrb[0].mxu0
  %1778 = vmatprep.mubr.bf16.mxu0 0
  %1779 = vmatmul.mubr.bf16.gmra.mrb[0].mxu0 %v1433
  %v1780 = vpop.f32.mrb[0].mxu0
  %v1781 = vadd.f32 %v1456, %v1780
  %v1782 = vpop.f32.mrb[0].mxu0
  %v1783 = vpop.f32.mrb[0].mxu0
  %v1784 = vadd.f32 %v1456, %v1783
  %v1785 = vpop.f32.mrb[0].mxu0
  %1786 = vmatprep.mubr.bf16.mxu0 0
  %1787 = vmatmul.mubr.bf16.gmra.mrb[0].mxu0 %v1434
  %v1788 = vpop.f32.mrb[0].mxu0
  %v1789 = vadd.f32 %v1456, %v1788
  %v1790 = vpop.f32.mrb[0].mxu0
  %v1791 = vpop.f32.mrb[0].mxu0
  %v1792 = vadd.f32 %v1456, %v1791
  %v1793 = vpop.f32.mrb[0].mxu0
  %1794 = vdwg.mxu0
  %v1795 = vmax.f32 %v1541, 0.0
  %v1796 = vmax.f32 %v1544, 0.0
  %v1797 = vmax.f32 %v1549, 0.0
  %v1798 = vmax.f32 %v1552, 0.0
  %v1799 = vmax.f32 %v1557, 0.0
  %v1800 = vmax.f32 %v1560, 0.0
  %v1801 = vmax.f32 %v1565, 0.0
  %v1802 = vmax.f32 %v1568, 0.0
  %v1803 = vmax.f32 %v1573, 0.0
  %v1804 = vmax.f32 %v1576, 0.0
  %v1805 = vmax.f32 %v1581, 0.0
  %v1806 = vmax.f32 %v1584, 0.0
  %v1807 = vmax.f32 %v1589, 0.0
  %v1808 = vmax.f32 %v1592, 0.0
  %v1809 = vmax.f32 %v1597, 0.0
  %v1810 = vmax.f32 %v1600, 0.0
  %v1811 = vmax.f32 %v1605, 0.0
  %v1812 = vmax.f32 %v1608, 0.0
  %v1813 = vmax.f32 %v1613, 0.0
  %v1814 = vmax.f32 %v1616, 0.0
  %v1815 = vmax.f32 %v1621, 0.0
  %v1816 = vmax.f32 %v1624, 0.0
  %v1817 = vmax.f32 %v1629, 0.0
  %v1818 = vmax.f32 %v1632, 0.0
  %v1819 = vmax.f32 %v1637, 0.0
  %v1820 = vmax.f32 %v1640, 0.0
  %v1821 = vmax.f32 %v1645, 0.0
  %v1822 = vmax.f32 %v1648, 0.0
  %v1823 = vmax.f32 %v1653, 0.0
  %v1824 = vmax.f32 %v1656, 0.0
  %v1825 = vmax.f32 %v1661, 0.0
  %v1826 = vmax.f32 %v1664, 0.0
  %v1827 = vmax.f32 %v1669, 0.0
  %v1828 = vmax.f32 %v1672, 0.0
  %v1829 = vmax.f32 %v1677, 0.0
  %v1830 = vmax.f32 %v1680, 0.0
  %v1831 = vmax.f32 %v1685, 0.0
  %v1832 = vmax.f32 %v1688, 0.0
  %v1833 = vmax.f32 %v1693, 0.0
  %v1834 = vmax.f32 %v1696, 0.0
  %v1835 = vmax.f32 %v1701, 0.0
  %v1836 = vmax.f32 %v1704, 0.0
  %v1837 = vmax.f32 %v1709, 0.0
  %v1838 = vmax.f32 %v1712, 0.0
  %v1839 = vmax.f32 %v1717, 0.0
  %v1840 = vmax.f32 %v1720, 0.0
  %v1841 = vmax.f32 %v1725, 0.0
  %v1842 = vmax.f32 %v1728, 0.0
  %v1843 = vmax.f32 %v1733, 0.0
  %v1844 = vmax.f32 %v1736, 0.0
  %v1845 = vmax.f32 %v1741, 0.0
  %v1846 = vmax.f32 %v1744, 0.0
  %v1847 = vmax.f32 %v1749, 0.0
  %v1848 = vmax.f32 %v1752, 0.0
  %v1849 = vmax.f32 %v1757, 0.0
  %v1850 = vmax.f32 %v1760, 0.0
  %v1851 = vmax.f32 %v1765, 0.0
  %v1852 = vmax.f32 %v1768, 0.0
  %v1853 = vmax.f32 %v1773, 0.0
  %v1854 = vmax.f32 %v1776, 0.0
  %v1855 = vmax.f32 %v1781, 0.0
  %v1856 = vmax.f32 %v1784, 0.0
  %v1857 = vmax.f32 %v1789, 0.0
  %v1858 = vmax.f32 %v1792, 0.0
  %v1859 = vld [vmem:[%s2] sm:$0xf]
  %v1860 = vld [vmem:[%s2 + $0x4] sm:$0xf]
  %v1861 = vld [vmem:[%s2 + $0x8] sm:$0xf]
  %v1862 = vld [vmem:[%s2 + $0xc] sm:$0xf]
  %v1863 = vld [vmem:[%s2 + $0x10] sm:$0xf]
  %v1864 = vld [vmem:[%s2 + $0x14] sm:$0xf]
  %v1865 = vld [vmem:[%s2 + $0x18] sm:$0xf]
  %v1866 = vld [vmem:[%s2 + $0x1c] sm:$0xf]
  %v1867 = vld [vmem:[%s2 + $0x20] sm:$0xf]
  %v1868 = vld [vmem:[%s2 + $0x24] sm:$0xf]
  %v1869 = vld [vmem:[%s2 + $0x28] sm:$0xf]
  %v1870 = vld [vmem:[%s2 + $0x2c] sm:$0xf]
  %v1871 = vld [vmem:[%s2 + $0x30] sm:$0xf]
  %v1872 = vld [vmem:[%s2 + $0x34] sm:$0xf]
  %v1873 = vld [vmem:[%s2 + $0x38] sm:$0xf]
  %v1874 = vld [vmem:[%s2 + $0x3c] sm:$0xf]
  %v1875 = vld [vmem:[%s2 + $0x40] sm:$0xf]
  %v1876 = vld [vmem:[%s2 + $0x44] sm:$0xf]
  %v1877 = vld [vmem:[%s2 + $0x48] sm:$0xf]
  %v1878 = vld [vmem:[%s2 + $0x4c] sm:$0xf]
  %v1879 = vld [vmem:[%s2 + $0x50] sm:$0xf]
  %v1880 = vld [vmem:[%s2 + $0x54] sm:$0xf]
  %v1881 = vld [vmem:[%s2 + $0x58] sm:$0xf]
  %v1882 = vld [vmem:[%s2 + $0x5c] sm:$0xf]
  %v1883 = vld [vmem:[%s2 + $0x60] sm:$0xf]
  %v1884 = vld [vmem:[%s2 + $0x64] sm:$0xf]
  %v1885 = vld [vmem:[%s2 + $0x68] sm:$0xf]
  %v1886 = vld [vmem:[%s2 + $0x6c] sm:$0xf]
  %v1887 = vld [vmem:[%s2 + $0x70] sm:$0xf]
  %v1888 = vld [vmem:[%s2 + $0x74] sm:$0xf]
  %v1889 = vld [vmem:[%s2 + $0x78] sm:$0xf]
  %v1890 = vld [vmem:[%s2 + $0x7c] sm:$0xf]
  %v1891 = vld [vmem:[%s2 + $0x80] sm:$0xf]
  %v1892 = vld [vmem:[%s2 + $0x84] sm:$0xf]
  %v1893 = vld [vmem:[%s2 + $0x88] sm:$0xf]
  %v1894 = vld [vmem:[%s2 + $0x8c] sm:$0xf]
  %v1895 = vld [vmem:[%s2 + $0x90] sm:$0xf]
  %v1896 = vld [vmem:[%s2 + $0x94] sm:$0xf]
  %v1897 = vld [vmem:[%s2 + $0x98] sm:$0xf]
  %v1898 = vld [vmem:[%s2 + $0x9c] sm:$0xf]
  %v1899 = vld [vmem:[%s2 + $0xa0] sm:$0xf]
  %v1900 = vld [vmem:[%s2 + $0xa4] sm:$0xf]
  %v1901 = vld [vmem:[%s2 + $0xa8] sm:$0xf]
  %v1902 = vld [vmem:[%s2 + $0xac] sm:$0xf]
  %v1903 = vld [vmem:[%s2 + $0xb0] sm:$0xf]
  %v1904 = vld [vmem:[%s2 + $0xb4] sm:$0xf]
  %v1905 = vld [vmem:[%s2 + $0xb8] sm:$0xf]
  %v1906 = vld [vmem:[%s2 + $0xbc] sm:$0xf]
  %v1907 = vld [vmem:[%s2 + $0xc0] sm:$0xf]
  %v1908 = vld [vmem:[%s2 + $0xc4] sm:$0xf]
  %v1909 = vld [vmem:[%s2 + $0xc8] sm:$0xf]
  %v1910 = vld [vmem:[%s2 + $0xcc] sm:$0xf]
  %v1911 = vld [vmem:[%s2 + $0xd0] sm:$0xf]
  %v1912 = vld [vmem:[%s2 + $0xd4] sm:$0xf]
  %v1913 = vld [vmem:[%s2 + $0xd8] sm:$0xf]
  %v1914 = vld [vmem:[%s2 + $0xdc] sm:$0xf]
  %v1915 = vld [vmem:[%s2 + $0xe0] sm:$0xf]
  %v1916 = vld [vmem:[%s2 + $0xe4] sm:$0xf]
  %v1917 = vld [vmem:[%s2 + $0xe8] sm:$0xf]
  %v1918 = vld [vmem:[%s2 + $0xec] sm:$0xf]
  %v1919 = vld [vmem:[%s2 + $0xf0] sm:$0xf]
  %v1920 = vld [vmem:[%s2 + $0xf4] sm:$0xf]
  %v1921 = vld [vmem:[%s2 + $0xf8] sm:$0xf]
  %v1922 = vld [vmem:[%s2 + $0xfc] sm:$0xf]
  %v1923 = vunpack.c.l.bf16 %v1859
  %v1924 = vunpack.c.l.bf16 %v1860
  %v1925 = vunpack.c.l.bf16 %v1861
  %v1926 = vunpack.c.l.bf16 %v1862
  %v1927 = vunpack.c.l.bf16 %v1863
  %v1928 = vunpack.c.l.bf16 %v1864
  %v1929 = vunpack.c.l.bf16 %v1865
  %v1930 = vunpack.c.l.bf16 %v1866
  %v1931 = vunpack.c.l.bf16 %v1867
  %v1932 = vunpack.c.l.bf16 %v1868
  %v1933 = vunpack.c.l.bf16 %v1869
  %v1934 = vunpack.c.l.bf16 %v1870
  %v1935 = vunpack.c.l.bf16 %v1871
  %v1936 = vunpack.c.l.bf16 %v1872
  %v1937 = vunpack.c.l.bf16 %v1873
  %v1938 = vunpack.c.l.bf16 %v1874
  %v1939 = vunpack.c.l.bf16 %v1875
  %v1940 = vunpack.c.l.bf16 %v1876
  %v1941 = vunpack.c.l.bf16 %v1877
  %v1942 = vunpack.c.l.bf16 %v1878
  %v1943 = vunpack.c.l.bf16 %v1879
  %v1944 = vunpack.c.l.bf16 %v1880
  %v1945 = vunpack.c.l.bf16 %v1881
  %v1946 = vunpack.c.l.bf16 %v1882
  %v1947 = vunpack.c.l.bf16 %v1883
  %v1948 = vunpack.c.l.bf16 %v1884
  %v1949 = vunpack.c.l.bf16 %v1885
  %v1950 = vunpack.c.l.bf16 %v1886
  %v1951 = vunpack.c.l.bf16 %v1887
  %v1952 = vunpack.c.l.bf16 %v1888
  %v1953 = vunpack.c.l.bf16 %v1889
  %v1954 = vunpack.c.l.bf16 %v1890
  %v1955 = vunpack.c.l.bf16 %v1891
  %v1956 = vunpack.c.l.bf16 %v1892
  %v1957 = vunpack.c.l.bf16 %v1893
  %v1958 = vunpack.c.l.bf16 %v1894
  %v1959 = vunpack.c.l.bf16 %v1895
  %v1960 = vunpack.c.l.bf16 %v1896
  %v1961 = vunpack.c.l.bf16 %v1897
  %v1962 = vunpack.c.l.bf16 %v1898
  %v1963 = vunpack.c.l.bf16 %v1899
  %v1964 = vunpack.c.l.bf16 %v1900
  %v1965 = vunpack.c.l.bf16 %v1901
  %v1966 = vunpack.c.l.bf16 %v1902
  %v1967 = vunpack.c.l.bf16 %v1903
  %v1968 = vunpack.c.l.bf16 %v1904
  %v1969 = vunpack.c.l.bf16 %v1905
  %v1970 = vunpack.c.l.bf16 %v1906
  %v1971 = vunpack.c.l.bf16 %v1907
  %v1972 = vunpack.c.l.bf16 %v1908
  %v1973 = vunpack.c.l.bf16 %v1909
  %v1974 = vunpack.c.l.bf16 %v1910
  %v1975 = vunpack.c.l.bf16 %v1911
  %v1976 = vunpack.c.l.bf16 %v1912
  %v1977 = vunpack.c.l.bf16 %v1913
  %v1978 = vunpack.c.l.bf16 %v1914
  %v1979 = vunpack.c.l.bf16 %v1915
  %v1980 = vunpack.c.l.bf16 %v1916
  %v1981 = vunpack.c.l.bf16 %v1917
  %v1982 = vunpack.c.l.bf16 %v1918
  %v1983 = vunpack.c.l.bf16 %v1919
  %v1984 = vunpack.c.l.bf16 %v1920
  %v1985 = vunpack.c.l.bf16 %v1921
  %v1986 = vunpack.c.l.bf16 %v1922
  %v1987 = vadd.f32 %v1923, %v691
  %v1988 = vadd.f32 %v1924, %v692
  %v1989 = vadd.f32 %v1925, %v693
  %v1990 = vadd.f32 %v1926, %v694
  %v1991 = vadd.f32 %v1927, %v695
  %v1992 = vadd.f32 %v1928, %v696
  %v1993 = vadd.f32 %v1929, %v697
  %v1994 = vadd.f32 %v1930, %v698
  %v1995 = vadd.f32 %v1931, %v699
  %v1996 = vadd.f32 %v1932, %v700
  %v1997 = vadd.f32 %v1933, %v701
  %v1998 = vadd.f32 %v1934, %v702
  %v1999 = vadd.f32 %v1935, %v703
  %v2000 = vadd.f32 %v1936, %v704
  %v2001 = vadd.f32 %v1937, %v705
  %v2002 = vadd.f32 %v1938, %v706
  %v2003 = vadd.f32 %v1939, %v707
  %v2004 = vadd.f32 %v1940, %v708
  %v2005 = vadd.f32 %v1941, %v709
  %v2006 = vadd.f32 %v1942, %v710
  %v2007 = vadd.f32 %v1943, %v711
  %v2008 = vadd.f32 %v1944, %v712
  %v2009 = vadd.f32 %v1945, %v713
  %v2010 = vadd.f32 %v1946, %v714
  %v2011 = vadd.f32 %v1947, %v715
  %v2012 = vadd.f32 %v1948, %v716
  %v2013 = vadd.f32 %v1949, %v717
  %v2014 = vadd.f32 %v1950, %v718
  %v2015 = vadd.f32 %v1951, %v719
  %v2016 = vadd.f32 %v1952, %v720
  %v2017 = vadd.f32 %v1953, %v721
  %v2018 = vadd.f32 %v1954, %v722
  %v2019 = vadd.f32 %v1955, %v723
  %v2020 = vadd.f32 %v1956, %v724
  %v2021 = vadd.f32 %v1957, %v725
  %v2022 = vadd.f32 %v1958, %v726
  %v2023 = vadd.f32 %v1959, %v727
  %v2024 = vadd.f32 %v1960, %v728
  %v2025 = vadd.f32 %v1961, %v729
  %v2026 = vadd.f32 %v1962, %v730
  %v2027 = vadd.f32 %v1963, %v731
  %v2028 = vadd.f32 %v1964, %v732
  %v2029 = vadd.f32 %v1965, %v733
  %v2030 = vadd.f32 %v1966, %v734
  %v2031 = vadd.f32 %v1967, %v735
  %v2032 = vadd.f32 %v1968, %v736
  %v2033 = vadd.f32 %v1969, %v737
  %v2034 = vadd.f32 %v1970, %v738
  %v2035 = vadd.f32 %v1971, %v739
  %v2036 = vadd.f32 %v1972, %v740
  %v2037 = vadd.f32 %v1973, %v741
  %v2038 = vadd.f32 %v1974, %v742
  %v2039 = vadd.f32 %v1975, %v743
  %v2040 = vadd.f32 %v1976, %v744
  %v2041 = vadd.f32 %v1977, %v745
  %v2042 = vadd.f32 %v1978, %v746
  %v2043 = vadd.f32 %v1979, %v747
  %v2044 = vadd.f32 %v1980, %v748
  %v2045 = vadd.f32 %v1981, %v749
  %v2046 = vadd.f32 %v1982, %v750
  %v2047 = vadd.f32 %v1983, %v751
  %v2048 = vadd.f32 %v1984, %v752
  %v2049 = vadd.f32 %v1985, %v753
  %v2050 = vadd.f32 %v1986, %v754
  %v2051 = vlaneseq
  %v2052 = vshrl.u32 %v2051, 7
  %vm2053 = vcmp.lt.s32.totalorder %v2052, 5
  %v2054 = vsel %vm2053, 1, 0
  %vm2055 = vcmp.eq.s32.totalorder %v2054, 1
  %v2056 = vsel %vm2055, %v1795, -1e+30
  %v2057 = vsel %vm2055, %v1796, -1e+30
  %v2058 = vsel %vm2055, %v1797, -1e+30
  %v2059 = vsel %vm2055, %v1798, -1e+30
  %v2060 = vsel %vm2055, %v1799, -1e+30
  %v2061 = vsel %vm2055, %v1800, -1e+30
  %v2062 = vsel %vm2055, %v1801, -1e+30
  %v2063 = vsel %vm2055, %v1802, -1e+30
  %v2064 = vsel %vm2055, %v1803, -1e+30
  %v2065 = vsel %vm2055, %v1804, -1e+30
  %v2066 = vsel %vm2055, %v1805, -1e+30
  %v2067 = vsel %vm2055, %v1806, -1e+30
  %v2068 = vsel %vm2055, %v1807, -1e+30
  %v2069 = vsel %vm2055, %v1808, -1e+30
  %v2070 = vsel %vm2055, %v1809, -1e+30
  %v2071 = vsel %vm2055, %v1810, -1e+30
  %v2072 = vsel %vm2055, %v1811, -1e+30
  %v2073 = vsel %vm2055, %v1812, -1e+30
  %v2074 = vsel %vm2055, %v1813, -1e+30
  %v2075 = vsel %vm2055, %v1814, -1e+30
  %v2076 = vsel %vm2055, %v1815, -1e+30
  %v2077 = vsel %vm2055, %v1816, -1e+30
  %v2078 = vsel %vm2055, %v1817, -1e+30
  %v2079 = vsel %vm2055, %v1818, -1e+30
  %v2080 = vsel %vm2055, %v1819, -1e+30
  %v2081 = vsel %vm2055, %v1820, -1e+30
  %v2082 = vsel %vm2055, %v1821, -1e+30
  %v2083 = vsel %vm2055, %v1822, -1e+30
  %v2084 = vsel %vm2055, %v1823, -1e+30
  %v2085 = vsel %vm2055, %v1824, -1e+30
  %v2086 = vsel %vm2055, %v1825, -1e+30
  %v2087 = vsel %vm2055, %v1826, -1e+30
  %v2088 = vsel %vm2055, %v1827, -1e+30
  %v2089 = vsel %vm2055, %v1828, -1e+30
  %v2090 = vsel %vm2055, %v1829, -1e+30
  %v2091 = vsel %vm2055, %v1830, -1e+30
  %v2092 = vsel %vm2055, %v1831, -1e+30
  %v2093 = vsel %vm2055, %v1832, -1e+30
  %v2094 = vsel %vm2055, %v1833, -1e+30
  %v2095 = vsel %vm2055, %v1834, -1e+30
  %v2096 = vsel %vm2055, %v1835, -1e+30
  %v2097 = vsel %vm2055, %v1836, -1e+30
  %v2098 = vsel %vm2055, %v1837, -1e+30
  %v2099 = vsel %vm2055, %v1838, -1e+30
  %v2100 = vsel %vm2055, %v1839, -1e+30
  %v2101 = vsel %vm2055, %v1840, -1e+30
  %v2102 = vsel %vm2055, %v1841, -1e+30
  %v2103 = vsel %vm2055, %v1842, -1e+30
  %v2104 = vsel %vm2055, %v1843, -1e+30
  %v2105 = vsel %vm2055, %v1844, -1e+30
  %v2106 = vsel %vm2055, %v1845, -1e+30
  %v2107 = vsel %vm2055, %v1846, -1e+30
  %v2108 = vsel %vm2055, %v1847, -1e+30
  %v2109 = vsel %vm2055, %v1848, -1e+30
  %v2110 = vsel %vm2055, %v1849, -1e+30
  %v2111 = vsel %vm2055, %v1850, -1e+30
  %v2112 = vsel %vm2055, %v1851, -1e+30
  %v2113 = vsel %vm2055, %v1852, -1e+30
  %v2114 = vsel %vm2055, %v1853, -1e+30
  %v2115 = vsel %vm2055, %v1854, -1e+30
  %v2116 = vsel %vm2055, %v1855, -1e+30
  %v2117 = vsel %vm2055, %v1856, -1e+30
  %v2118 = vsel %vm2055, %v1857, -1e+30
  %v2119 = vsel %vm2055, %v1858, -1e+30
  %v2120 = vrot.slane %v2056, 4
  %v2121 = vmax.f32 %v2056, %v2120
  %v2122 = vrot.slane %v2121, 2
  %v2123 = vmax.f32 %v2121, %v2122
  %v2124 = vrot.slane %v2123, 1
  %v2125 = vmax.f32 %v2123, %v2124
  %v2126 = vrot.slane %v2057, 4
  %v2127 = vmax.f32 %v2057, %v2126
  %v2128 = vrot.slane %v2127, 2
  %v2129 = vmax.f32 %v2127, %v2128
  %v2130 = vrot.slane %v2129, 1
  %v2131 = vmax.f32 %v2129, %v2130
  %v2132 = vrot.slane %v2058, 4
  %v2133 = vmax.f32 %v2058, %v2132
  %v2134 = vrot.slane %v2133, 2
  %v2135 = vmax.f32 %v2133, %v2134
  %v2136 = vrot.slane %v2135, 1
  %v2137 = vmax.f32 %v2135, %v2136
  %v2138 = vrot.slane %v2059, 4
  %v2139 = vmax.f32 %v2059, %v2138
  %v2140 = vrot.slane %v2139, 2
  %v2141 = vmax.f32 %v2139, %v2140
  %v2142 = vrot.slane %v2141, 1
  %v2143 = vmax.f32 %v2141, %v2142
  %v2144 = vrot.slane %v2060, 4
  %v2145 = vmax.f32 %v2060, %v2144
  %v2146 = vrot.slane %v2145, 2
  %v2147 = vmax.f32 %v2145, %v2146
  %v2148 = vrot.slane %v2147, 1
  %v2149 = vmax.f32 %v2147, %v2148
  %v2150 = vrot.slane %v2061, 4
  %v2151 = vmax.f32 %v2061, %v2150
  %v2152 = vrot.slane %v2151, 2
  %v2153 = vmax.f32 %v2151, %v2152
  %v2154 = vrot.slane %v2153, 1
  %v2155 = vmax.f32 %v2153, %v2154
  %v2156 = vrot.slane %v2062, 4
  %v2157 = vmax.f32 %v2062, %v2156
  %v2158 = vrot.slane %v2157, 2
  %v2159 = vmax.f32 %v2157, %v2158
  %v2160 = vrot.slane %v2159, 1
  %v2161 = vmax.f32 %v2159, %v2160
  %v2162 = vrot.slane %v2063, 4
  %v2163 = vmax.f32 %v2063, %v2162
  %v2164 = vrot.slane %v2163, 2
  %v2165 = vmax.f32 %v2163, %v2164
  %v2166 = vrot.slane %v2165, 1
  %v2167 = vmax.f32 %v2165, %v2166
  %v2168 = vrot.slane %v2064, 4
  %v2169 = vmax.f32 %v2064, %v2168
  %v2170 = vrot.slane %v2169, 2
  %v2171 = vmax.f32 %v2169, %v2170
  %v2172 = vrot.slane %v2171, 1
  %v2173 = vmax.f32 %v2171, %v2172
  %v2174 = vrot.slane %v2065, 4
  %v2175 = vmax.f32 %v2065, %v2174
  %v2176 = vrot.slane %v2175, 2
  %v2177 = vmax.f32 %v2175, %v2176
  %v2178 = vrot.slane %v2177, 1
  %v2179 = vmax.f32 %v2177, %v2178
  %v2180 = vrot.slane %v2066, 4
  %v2181 = vmax.f32 %v2066, %v2180
  %v2182 = vrot.slane %v2181, 2
  %v2183 = vmax.f32 %v2181, %v2182
  %v2184 = vrot.slane %v2183, 1
  %v2185 = vmax.f32 %v2183, %v2184
  %v2186 = vrot.slane %v2067, 4
  %v2187 = vmax.f32 %v2067, %v2186
  %v2188 = vrot.slane %v2187, 2
  %v2189 = vmax.f32 %v2187, %v2188
  %v2190 = vrot.slane %v2189, 1
  %v2191 = vmax.f32 %v2189, %v2190
  %v2192 = vrot.slane %v2068, 4
  %v2193 = vmax.f32 %v2068, %v2192
  %v2194 = vrot.slane %v2193, 2
  %v2195 = vmax.f32 %v2193, %v2194
  %v2196 = vrot.slane %v2195, 1
  %v2197 = vmax.f32 %v2195, %v2196
  %v2198 = vrot.slane %v2069, 4
  %v2199 = vmax.f32 %v2069, %v2198
  %v2200 = vrot.slane %v2199, 2
  %v2201 = vmax.f32 %v2199, %v2200
  %v2202 = vrot.slane %v2201, 1
  %v2203 = vmax.f32 %v2201, %v2202
  %v2204 = vrot.slane %v2070, 4
  %v2205 = vmax.f32 %v2070, %v2204
  %v2206 = vrot.slane %v2205, 2
  %v2207 = vmax.f32 %v2205, %v2206
  %v2208 = vrot.slane %v2207, 1
  %v2209 = vmax.f32 %v2207, %v2208
  %v2210 = vrot.slane %v2071, 4
  %v2211 = vmax.f32 %v2071, %v2210
  %v2212 = vrot.slane %v2211, 2
  %v2213 = vmax.f32 %v2211, %v2212
  %v2214 = vrot.slane %v2213, 1
  %v2215 = vmax.f32 %v2213, %v2214
  %v2216 = vrot.slane %v2072, 4
  %v2217 = vmax.f32 %v2072, %v2216
  %v2218 = vrot.slane %v2217, 2
  %v2219 = vmax.f32 %v2217, %v2218
  %v2220 = vrot.slane %v2219, 1
  %v2221 = vmax.f32 %v2219, %v2220
  %v2222 = vrot.slane %v2073, 4
  %v2223 = vmax.f32 %v2073, %v2222
  %v2224 = vrot.slane %v2223, 2
  %v2225 = vmax.f32 %v2223, %v2224
  %v2226 = vrot.slane %v2225, 1
  %v2227 = vmax.f32 %v2225, %v2226
  %v2228 = vrot.slane %v2074, 4
  %v2229 = vmax.f32 %v2074, %v2228
  %v2230 = vrot.slane %v2229, 2
  %v2231 = vmax.f32 %v2229, %v2230
  %v2232 = vrot.slane %v2231, 1
  %v2233 = vmax.f32 %v2231, %v2232
  %v2234 = vrot.slane %v2075, 4
  %v2235 = vmax.f32 %v2075, %v2234
  %v2236 = vrot.slane %v2235, 2
  %v2237 = vmax.f32 %v2235, %v2236
  %v2238 = vrot.slane %v2237, 1
  %v2239 = vmax.f32 %v2237, %v2238
  %v2240 = vrot.slane %v2076, 4
  %v2241 = vmax.f32 %v2076, %v2240
  %v2242 = vrot.slane %v2241, 2
  %v2243 = vmax.f32 %v2241, %v2242
  %v2244 = vrot.slane %v2243, 1
  %v2245 = vmax.f32 %v2243, %v2244
  %v2246 = vrot.slane %v2077, 4
  %v2247 = vmax.f32 %v2077, %v2246
  %v2248 = vrot.slane %v2247, 2
  %v2249 = vmax.f32 %v2247, %v2248
  %v2250 = vrot.slane %v2249, 1
  %v2251 = vmax.f32 %v2249, %v2250
  %v2252 = vrot.slane %v2078, 4
  %v2253 = vmax.f32 %v2078, %v2252
  %v2254 = vrot.slane %v2253, 2
  %v2255 = vmax.f32 %v2253, %v2254
  %v2256 = vrot.slane %v2255, 1
  %v2257 = vmax.f32 %v2255, %v2256
  %v2258 = vrot.slane %v2079, 4
  %v2259 = vmax.f32 %v2079, %v2258
  %v2260 = vrot.slane %v2259, 2
  %v2261 = vmax.f32 %v2259, %v2260
  %v2262 = vrot.slane %v2261, 1
  %v2263 = vmax.f32 %v2261, %v2262
  %v2264 = vrot.slane %v2080, 4
  %v2265 = vmax.f32 %v2080, %v2264
  %v2266 = vrot.slane %v2265, 2
  %v2267 = vmax.f32 %v2265, %v2266
  %v2268 = vrot.slane %v2267, 1
  %v2269 = vmax.f32 %v2267, %v2268
  %v2270 = vrot.slane %v2081, 4
  %v2271 = vmax.f32 %v2081, %v2270
  %v2272 = vrot.slane %v2271, 2
  %v2273 = vmax.f32 %v2271, %v2272
  %v2274 = vrot.slane %v2273, 1
  %v2275 = vmax.f32 %v2273, %v2274
  %v2276 = vrot.slane %v2082, 4
  %v2277 = vmax.f32 %v2082, %v2276
  %v2278 = vrot.slane %v2277, 2
  %v2279 = vmax.f32 %v2277, %v2278
  %v2280 = vrot.slane %v2279, 1
  %v2281 = vmax.f32 %v2279, %v2280
  %v2282 = vrot.slane %v2083, 4
  %v2283 = vmax.f32 %v2083, %v2282
  %v2284 = vrot.slane %v2283, 2
  %v2285 = vmax.f32 %v2283, %v2284
  %v2286 = vrot.slane %v2285, 1
  %v2287 = vmax.f32 %v2285, %v2286
  %v2288 = vrot.slane %v2084, 4
  %v2289 = vmax.f32 %v2084, %v2288
  %v2290 = vrot.slane %v2289, 2
  %v2291 = vmax.f32 %v2289, %v2290
  %v2292 = vrot.slane %v2291, 1
  %v2293 = vmax.f32 %v2291, %v2292
  %v2294 = vrot.slane %v2085, 4
  %v2295 = vmax.f32 %v2085, %v2294
  %v2296 = vrot.slane %v2295, 2
  %v2297 = vmax.f32 %v2295, %v2296
  %v2298 = vrot.slane %v2297, 1
  %v2299 = vmax.f32 %v2297, %v2298
  %v2300 = vrot.slane %v2086, 4
  %v2301 = vmax.f32 %v2086, %v2300
  %v2302 = vrot.slane %v2301, 2
  %v2303 = vmax.f32 %v2301, %v2302
  %v2304 = vrot.slane %v2303, 1
  %v2305 = vmax.f32 %v2303, %v2304
  %v2306 = vrot.slane %v2087, 4
  %v2307 = vmax.f32 %v2087, %v2306
  %v2308 = vrot.slane %v2307, 2
  %v2309 = vmax.f32 %v2307, %v2308
  %v2310 = vrot.slane %v2309, 1
  %v2311 = vmax.f32 %v2309, %v2310
  %v2312 = vrot.slane %v2088, 4
  %v2313 = vmax.f32 %v2088, %v2312
  %v2314 = vrot.slane %v2313, 2
  %v2315 = vmax.f32 %v2313, %v2314
  %v2316 = vrot.slane %v2315, 1
  %v2317 = vmax.f32 %v2315, %v2316
  %v2318 = vrot.slane %v2089, 4
  %v2319 = vmax.f32 %v2089, %v2318
  %v2320 = vrot.slane %v2319, 2
  %v2321 = vmax.f32 %v2319, %v2320
  %v2322 = vrot.slane %v2321, 1
  %v2323 = vmax.f32 %v2321, %v2322
  %v2324 = vrot.slane %v2090, 4
  %v2325 = vmax.f32 %v2090, %v2324
  %v2326 = vrot.slane %v2325, 2
  %v2327 = vmax.f32 %v2325, %v2326
  %v2328 = vrot.slane %v2327, 1
  %v2329 = vmax.f32 %v2327, %v2328
  %v2330 = vrot.slane %v2091, 4
  %v2331 = vmax.f32 %v2091, %v2330
  %v2332 = vrot.slane %v2331, 2
  %v2333 = vmax.f32 %v2331, %v2332
  %v2334 = vrot.slane %v2333, 1
  %v2335 = vmax.f32 %v2333, %v2334
  %v2336 = vrot.slane %v2092, 4
  %v2337 = vmax.f32 %v2092, %v2336
  %v2338 = vrot.slane %v2337, 2
  %v2339 = vmax.f32 %v2337, %v2338
  %v2340 = vrot.slane %v2339, 1
  %v2341 = vmax.f32 %v2339, %v2340
  %v2342 = vrot.slane %v2093, 4
  %v2343 = vmax.f32 %v2093, %v2342
  %v2344 = vrot.slane %v2343, 2
  %v2345 = vmax.f32 %v2343, %v2344
  %v2346 = vrot.slane %v2345, 1
  %v2347 = vmax.f32 %v2345, %v2346
  %v2348 = vrot.slane %v2094, 4
  %v2349 = vmax.f32 %v2094, %v2348
  %v2350 = vrot.slane %v2349, 2
  %v2351 = vmax.f32 %v2349, %v2350
  %v2352 = vrot.slane %v2351, 1
  %v2353 = vmax.f32 %v2351, %v2352
  %v2354 = vrot.slane %v2095, 4
  %v2355 = vmax.f32 %v2095, %v2354
  %v2356 = vrot.slane %v2355, 2
  %v2357 = vmax.f32 %v2355, %v2356
  %v2358 = vrot.slane %v2357, 1
  %v2359 = vmax.f32 %v2357, %v2358
  %v2360 = vrot.slane %v2096, 4
  %v2361 = vmax.f32 %v2096, %v2360
  %v2362 = vrot.slane %v2361, 2
  %v2363 = vmax.f32 %v2361, %v2362
  %v2364 = vrot.slane %v2363, 1
  %v2365 = vmax.f32 %v2363, %v2364
  %v2366 = vrot.slane %v2097, 4
  %v2367 = vmax.f32 %v2097, %v2366
  %v2368 = vrot.slane %v2367, 2
  %v2369 = vmax.f32 %v2367, %v2368
  %v2370 = vrot.slane %v2369, 1
  %v2371 = vmax.f32 %v2369, %v2370
  %v2372 = vrot.slane %v2098, 4
  %v2373 = vmax.f32 %v2098, %v2372
  %v2374 = vrot.slane %v2373, 2
  %v2375 = vmax.f32 %v2373, %v2374
  %v2376 = vrot.slane %v2375, 1
  %v2377 = vmax.f32 %v2375, %v2376
  %v2378 = vrot.slane %v2099, 4
  %v2379 = vmax.f32 %v2099, %v2378
  %v2380 = vrot.slane %v2379, 2
  %v2381 = vmax.f32 %v2379, %v2380
  %v2382 = vrot.slane %v2381, 1
  %v2383 = vmax.f32 %v2381, %v2382
  %v2384 = vrot.slane %v2100, 4
  %v2385 = vmax.f32 %v2100, %v2384
  %v2386 = vrot.slane %v2385, 2
  %v2387 = vmax.f32 %v2385, %v2386
  %v2388 = vrot.slane %v2387, 1
  %v2389 = vmax.f32 %v2387, %v2388
  %v2390 = vrot.slane %v2101, 4
  %v2391 = vmax.f32 %v2101, %v2390
  %v2392 = vrot.slane %v2391, 2
  %v2393 = vmax.f32 %v2391, %v2392
  %v2394 = vrot.slane %v2393, 1
  %v2395 = vmax.f32 %v2393, %v2394
  %v2396 = vrot.slane %v2102, 4
  %v2397 = vmax.f32 %v2102, %v2396
  %v2398 = vrot.slane %v2397, 2
  %v2399 = vmax.f32 %v2397, %v2398
  %v2400 = vrot.slane %v2399, 1
  %v2401 = vmax.f32 %v2399, %v2400
  %v2402 = vrot.slane %v2103, 4
  %v2403 = vmax.f32 %v2103, %v2402
  %v2404 = vrot.slane %v2403, 2
  %v2405 = vmax.f32 %v2403, %v2404
  %v2406 = vrot.slane %v2405, 1
  %v2407 = vmax.f32 %v2405, %v2406
  %v2408 = vrot.slane %v2104, 4
  %v2409 = vmax.f32 %v2104, %v2408
  %v2410 = vrot.slane %v2409, 2
  %v2411 = vmax.f32 %v2409, %v2410
  %v2412 = vrot.slane %v2411, 1
  %v2413 = vmax.f32 %v2411, %v2412
  %v2414 = vrot.slane %v2105, 4
  %v2415 = vmax.f32 %v2105, %v2414
  %v2416 = vrot.slane %v2415, 2
  %v2417 = vmax.f32 %v2415, %v2416
  %v2418 = vrot.slane %v2417, 1
  %v2419 = vmax.f32 %v2417, %v2418
  %v2420 = vrot.slane %v2106, 4
  %v2421 = vmax.f32 %v2106, %v2420
  %v2422 = vrot.slane %v2421, 2
  %v2423 = vmax.f32 %v2421, %v2422
  %v2424 = vrot.slane %v2423, 1
  %v2425 = vmax.f32 %v2423, %v2424
  %v2426 = vrot.slane %v2107, 4
  %v2427 = vmax.f32 %v2107, %v2426
  %v2428 = vrot.slane %v2427, 2
  %v2429 = vmax.f32 %v2427, %v2428
  %v2430 = vrot.slane %v2429, 1
  %v2431 = vmax.f32 %v2429, %v2430
  %v2432 = vrot.slane %v2108, 4
  %v2433 = vmax.f32 %v2108, %v2432
  %v2434 = vrot.slane %v2433, 2
  %v2435 = vmax.f32 %v2433, %v2434
  %v2436 = vrot.slane %v2435, 1
  %v2437 = vmax.f32 %v2435, %v2436
  %v2438 = vrot.slane %v2109, 4
  %v2439 = vmax.f32 %v2109, %v2438
  %v2440 = vrot.slane %v2439, 2
  %v2441 = vmax.f32 %v2439, %v2440
  %v2442 = vrot.slane %v2441, 1
  %v2443 = vmax.f32 %v2441, %v2442
  %v2444 = vrot.slane %v2110, 4
  %v2445 = vmax.f32 %v2110, %v2444
  %v2446 = vrot.slane %v2445, 2
  %v2447 = vmax.f32 %v2445, %v2446
  %v2448 = vrot.slane %v2447, 1
  %v2449 = vmax.f32 %v2447, %v2448
  %v2450 = vrot.slane %v2111, 4
  %v2451 = vmax.f32 %v2111, %v2450
  %v2452 = vrot.slane %v2451, 2
  %v2453 = vmax.f32 %v2451, %v2452
  %v2454 = vrot.slane %v2453, 1
  %v2455 = vmax.f32 %v2453, %v2454
  %v2456 = vrot.slane %v2112, 4
  %v2457 = vmax.f32 %v2112, %v2456
  %v2458 = vrot.slane %v2457, 2
  %v2459 = vmax.f32 %v2457, %v2458
  %v2460 = vrot.slane %v2459, 1
  %v2461 = vmax.f32 %v2459, %v2460
  %v2462 = vrot.slane %v2113, 4
  %v2463 = vmax.f32 %v2113, %v2462
  %v2464 = vrot.slane %v2463, 2
  %v2465 = vmax.f32 %v2463, %v2464
  %v2466 = vrot.slane %v2465, 1
  %v2467 = vmax.f32 %v2465, %v2466
  %v2468 = vrot.slane %v2114, 4
  %v2469 = vmax.f32 %v2114, %v2468
  %v2470 = vrot.slane %v2469, 2
  %v2471 = vmax.f32 %v2469, %v2470
  %v2472 = vrot.slane %v2471, 1
  %v2473 = vmax.f32 %v2471, %v2472
  %v2474 = vrot.slane %v2115, 4
  %v2475 = vmax.f32 %v2115, %v2474
  %v2476 = vrot.slane %v2475, 2
  %v2477 = vmax.f32 %v2475, %v2476
  %v2478 = vrot.slane %v2477, 1
  %v2479 = vmax.f32 %v2477, %v2478
  %v2480 = vrot.slane %v2116, 4
  %v2481 = vmax.f32 %v2116, %v2480
  %v2482 = vrot.slane %v2481, 2
  %v2483 = vmax.f32 %v2481, %v2482
  %v2484 = vrot.slane %v2483, 1
  %v2485 = vmax.f32 %v2483, %v2484
  %v2486 = vrot.slane %v2117, 4
  %v2487 = vmax.f32 %v2117, %v2486
  %v2488 = vrot.slane %v2487, 2
  %v2489 = vmax.f32 %v2487, %v2488
  %v2490 = vrot.slane %v2489, 1
  %v2491 = vmax.f32 %v2489, %v2490
  %v2492 = vrot.slane %v2118, 4
  %v2493 = vmax.f32 %v2118, %v2492
  %v2494 = vrot.slane %v2493, 2
  %v2495 = vmax.f32 %v2493, %v2494
  %v2496 = vrot.slane %v2495, 1
  %v2497 = vmax.f32 %v2495, %v2496
  %v2498 = vrot.slane %v2119, 4
  %v2499 = vmax.f32 %v2119, %v2498
  %v2500 = vrot.slane %v2499, 2
  %v2501 = vmax.f32 %v2499, %v2500
  %v2502 = vrot.slane %v2501, 1
  %v2503 = vmax.f32 %v2501, %v2502
  %v2504 = vsub.f32 %v2056, %v2125
  %v2505 = vsub.f32 %v2057, %v2131
  %v2506 = vsub.f32 %v2058, %v2137
  %v2507 = vsub.f32 %v2059, %v2143
  %v2508 = vsub.f32 %v2060, %v2149
  %v2509 = vsub.f32 %v2061, %v2155
  %v2510 = vsub.f32 %v2062, %v2161
  %v2511 = vsub.f32 %v2063, %v2167
  %v2512 = vsub.f32 %v2064, %v2173
  %v2513 = vsub.f32 %v2065, %v2179
  %v2514 = vsub.f32 %v2066, %v2185
  %v2515 = vsub.f32 %v2067, %v2191
  %v2516 = vsub.f32 %v2068, %v2197
  %v2517 = vsub.f32 %v2069, %v2203
  %v2518 = vsub.f32 %v2070, %v2209
  %v2519 = vsub.f32 %v2071, %v2215
  %v2520 = vsub.f32 %v2072, %v2221
  %v2521 = vsub.f32 %v2073, %v2227
  %v2522 = vsub.f32 %v2074, %v2233
  %v2523 = vsub.f32 %v2075, %v2239
  %v2524 = vsub.f32 %v2076, %v2245
  %v2525 = vsub.f32 %v2077, %v2251
  %v2526 = vsub.f32 %v2078, %v2257
  %v2527 = vsub.f32 %v2079, %v2263
  %v2528 = vsub.f32 %v2080, %v2269
  %v2529 = vsub.f32 %v2081, %v2275
  %v2530 = vsub.f32 %v2082, %v2281
  %v2531 = vsub.f32 %v2083, %v2287
  %v2532 = vsub.f32 %v2084, %v2293
  %v2533 = vsub.f32 %v2085, %v2299
  %v2534 = vsub.f32 %v2086, %v2305
  %v2535 = vsub.f32 %v2087, %v2311
  %v2536 = vsub.f32 %v2088, %v2317
  %v2537 = vsub.f32 %v2089, %v2323
  %v2538 = vsub.f32 %v2090, %v2329
  %v2539 = vsub.f32 %v2091, %v2335
  %v2540 = vsub.f32 %v2092, %v2341
  %v2541 = vsub.f32 %v2093, %v2347
  %v2542 = vsub.f32 %v2094, %v2353
  %v2543 = vsub.f32 %v2095, %v2359
  %v2544 = vsub.f32 %v2096, %v2365
  %v2545 = vsub.f32 %v2097, %v2371
  %v2546 = vsub.f32 %v2098, %v2377
  %v2547 = vsub.f32 %v2099, %v2383
  %v2548 = vsub.f32 %v2100, %v2389
  %v2549 = vsub.f32 %v2101, %v2395
  %v2550 = vsub.f32 %v2102, %v2401
  %v2551 = vsub.f32 %v2103, %v2407
  %v2552 = vsub.f32 %v2104, %v2413
  %v2553 = vsub.f32 %v2105, %v2419
  %v2554 = vsub.f32 %v2106, %v2425
  %v2555 = vsub.f32 %v2107, %v2431
  %v2556 = vsub.f32 %v2108, %v2437
  %v2557 = vsub.f32 %v2109, %v2443
  %v2558 = vsub.f32 %v2110, %v2449
  %v2559 = vsub.f32 %v2111, %v2455
  %v2560 = vsub.f32 %v2112, %v2461
  %v2561 = vsub.f32 %v2113, %v2467
  %v2562 = vsub.f32 %v2114, %v2473
  %v2563 = vsub.f32 %v2115, %v2479
  %v2564 = vsub.f32 %v2116, %v2485
  %v2565 = vsub.f32 %v2117, %v2491
  %v2566 = vsub.f32 %v2118, %v2497
  %v2567 = vsub.f32 %v2119, %v2503
  %v2568 = vmul.f32 %v2504, 1.442695
  %v2569 = vpow.pop %v2568
  %v2570 = vmul.f32 %v2505, 1.442695
  %v2571 = vpow.pop %v2570
  %v2572 = vmul.f32 %v2506, 1.442695
  %v2573 = vpow.pop %v2572
  %v2574 = vmul.f32 %v2507, 1.442695
  %v2575 = vpow.pop %v2574
  %v2576 = vmul.f32 %v2508, 1.442695
  %v2577 = vpow.pop %v2576
  %v2578 = vmul.f32 %v2509, 1.442695
  %v2579 = vpow.pop %v2578
  %v2580 = vmul.f32 %v2510, 1.442695
  %v2581 = vpow.pop %v2580
  %v2582 = vmul.f32 %v2511, 1.442695
  %v2583 = vpow.pop %v2582
  %v2584 = vmul.f32 %v2512, 1.442695
  %v2585 = vpow.pop %v2584
  %v2586 = vmul.f32 %v2513, 1.442695
  %v2587 = vpow.pop %v2586
  %v2588 = vmul.f32 %v2514, 1.442695
  %v2589 = vpow.pop %v2588
  %v2590 = vmul.f32 %v2515, 1.442695
  %v2591 = vpow.pop %v2590
  %v2592 = vmul.f32 %v2516, 1.442695
  %v2593 = vpow.pop %v2592
  %v2594 = vmul.f32 %v2517, 1.442695
  %v2595 = vpow.pop %v2594
  %v2596 = vmul.f32 %v2518, 1.442695
  %v2597 = vpow.pop %v2596
  %v2598 = vmul.f32 %v2519, 1.442695
  %v2599 = vpow.pop %v2598
  %v2600 = vmul.f32 %v2520, 1.442695
  %v2601 = vpow.pop %v2600
  %v2602 = vmul.f32 %v2521, 1.442695
  %v2603 = vpow.pop %v2602
  %v2604 = vmul.f32 %v2522, 1.442695
  %v2605 = vpow.pop %v2604
  %v2606 = vmul.f32 %v2523, 1.442695
  %v2607 = vpow.pop %v2606
  %v2608 = vmul.f32 %v2524, 1.442695
  %v2609 = vpow.pop %v2608
  %v2610 = vmul.f32 %v2525, 1.442695
  %v2611 = vpow.pop %v2610
  %v2612 = vmul.f32 %v2526, 1.442695
  %v2613 = vpow.pop %v2612
  %v2614 = vmul.f32 %v2527, 1.442695
  %v2615 = vpow.pop %v2614
  %v2616 = vmul.f32 %v2528, 1.442695
  %v2617 = vpow.pop %v2616
  %v2618 = vmul.f32 %v2529, 1.442695
  %v2619 = vpow.pop %v2618
  %v2620 = vmul.f32 %v2530, 1.442695
  %v2621 = vpow.pop %v2620
  %v2622 = vmul.f32 %v2531, 1.442695
  %v2623 = vpow.pop %v2622
  %v2624 = vmul.f32 %v2532, 1.442695
  %v2625 = vpow.pop %v2624
  %v2626 = vmul.f32 %v2533, 1.442695
  %v2627 = vpow.pop %v2626
  %v2628 = vmul.f32 %v2534, 1.442695
  %v2629 = vpow.pop %v2628
  %v2630 = vmul.f32 %v2535, 1.442695
  %v2631 = vpow.pop %v2630
  %v2632 = vmul.f32 %v2536, 1.442695
  %v2633 = vpow.pop %v2632
  %v2634 = vmul.f32 %v2537, 1.442695
  %v2635 = vpow.pop %v2634
  %v2636 = vmul.f32 %v2538, 1.442695
  %v2637 = vpow.pop %v2636
  %v2638 = vmul.f32 %v2539, 1.442695
  %v2639 = vpow.pop %v2638
  %v2640 = vmul.f32 %v2540, 1.442695
  %v2641 = vpow.pop %v2640
  %v2642 = vmul.f32 %v2541, 1.442695
  %v2643 = vpow.pop %v2642
  %v2644 = vmul.f32 %v2542, 1.442695
  %v2645 = vpow.pop %v2644
  %v2646 = vmul.f32 %v2543, 1.442695
  %v2647 = vpow.pop %v2646
  %v2648 = vmul.f32 %v2544, 1.442695
  %v2649 = vpow.pop %v2648
  %v2650 = vmul.f32 %v2545, 1.442695
  %v2651 = vpow.pop %v2650
  %v2652 = vmul.f32 %v2546, 1.442695
  %v2653 = vpow.pop %v2652
  %v2654 = vmul.f32 %v2547, 1.442695
  %v2655 = vpow.pop %v2654
  %v2656 = vmul.f32 %v2548, 1.442695
  %v2657 = vpow.pop %v2656
  %v2658 = vmul.f32 %v2549, 1.442695
  %v2659 = vpow.pop %v2658
  %v2660 = vmul.f32 %v2550, 1.442695
  %v2661 = vpow.pop %v2660
  %v2662 = vmul.f32 %v2551, 1.442695
  %v2663 = vpow.pop %v2662
  %v2664 = vmul.f32 %v2552, 1.442695
  %v2665 = vpow.pop %v2664
  %v2666 = vmul.f32 %v2553, 1.442695
  %v2667 = vpow.pop %v2666
  %v2668 = vmul.f32 %v2554, 1.442695
  %v2669 = vpow.pop %v2668
  %v2670 = vmul.f32 %v2555, 1.442695
  %v2671 = vpow.pop %v2670
  %v2672 = vmul.f32 %v2556, 1.442695
  %v2673 = vpow.pop %v2672
  %v2674 = vmul.f32 %v2557, 1.442695
  %v2675 = vpow.pop %v2674
  %v2676 = vmul.f32 %v2558, 1.442695
  %v2677 = vpow.pop %v2676
  %v2678 = vmul.f32 %v2559, 1.442695
  %v2679 = vpow.pop %v2678
  %v2680 = vmul.f32 %v2560, 1.442695
  %v2681 = vpow.pop %v2680
  %v2682 = vmul.f32 %v2561, 1.442695
  %v2683 = vpow.pop %v2682
  %v2684 = vmul.f32 %v2562, 1.442695
  %v2685 = vpow.pop %v2684
  %v2686 = vmul.f32 %v2563, 1.442695
  %v2687 = vpow.pop %v2686
  %v2688 = vmul.f32 %v2564, 1.442695
  %v2689 = vpow.pop %v2688
  %v2690 = vmul.f32 %v2565, 1.442695
  %v2691 = vpow.pop %v2690
  %v2692 = vmul.f32 %v2566, 1.442695
  %v2693 = vpow.pop %v2692
  %v2694 = vmul.f32 %v2567, 1.442695
  %v2695 = vpow.pop %v2694
  %v2696 = vrot.slane %v2569, 4
  %v2697 = vadd.f32 %v2569, %v2696
  %v2698 = vrot.slane %v2697, 2
  %v2699 = vadd.f32 %v2697, %v2698
  %v2700 = vrot.slane %v2699, 1
  %v2701 = vadd.f32 %v2699, %v2700
  %v2702 = vrot.slane %v2571, 4
  %v2703 = vadd.f32 %v2571, %v2702
  %v2704 = vrot.slane %v2703, 2
  %v2705 = vadd.f32 %v2703, %v2704
  %v2706 = vrot.slane %v2705, 1
  %v2707 = vadd.f32 %v2705, %v2706
  %v2708 = vrot.slane %v2573, 4
  %v2709 = vadd.f32 %v2573, %v2708
  %v2710 = vrot.slane %v2709, 2
  %v2711 = vadd.f32 %v2709, %v2710
  %v2712 = vrot.slane %v2711, 1
  %v2713 = vadd.f32 %v2711, %v2712
  %v2714 = vrot.slane %v2575, 4
  %v2715 = vadd.f32 %v2575, %v2714
  %v2716 = vrot.slane %v2715, 2
  %v2717 = vadd.f32 %v2715, %v2716
  %v2718 = vrot.slane %v2717, 1
  %v2719 = vadd.f32 %v2717, %v2718
  %v2720 = vrot.slane %v2577, 4
  %v2721 = vadd.f32 %v2577, %v2720
  %v2722 = vrot.slane %v2721, 2
  %v2723 = vadd.f32 %v2721, %v2722
  %v2724 = vrot.slane %v2723, 1
  %v2725 = vadd.f32 %v2723, %v2724
  %v2726 = vrot.slane %v2579, 4
  %v2727 = vadd.f32 %v2579, %v2726
  %v2728 = vrot.slane %v2727, 2
  %v2729 = vadd.f32 %v2727, %v2728
  %v2730 = vrot.slane %v2729, 1
  %v2731 = vadd.f32 %v2729, %v2730
  %v2732 = vrot.slane %v2581, 4
  %v2733 = vadd.f32 %v2581, %v2732
  %v2734 = vrot.slane %v2733, 2
  %v2735 = vadd.f32 %v2733, %v2734
  %v2736 = vrot.slane %v2735, 1
  %v2737 = vadd.f32 %v2735, %v2736
  %v2738 = vrot.slane %v2583, 4
  %v2739 = vadd.f32 %v2583, %v2738
  %v2740 = vrot.slane %v2739, 2
  %v2741 = vadd.f32 %v2739, %v2740
  %v2742 = vrot.slane %v2741, 1
  %v2743 = vadd.f32 %v2741, %v2742
  %v2744 = vrot.slane %v2585, 4
  %v2745 = vadd.f32 %v2585, %v2744
  %v2746 = vrot.slane %v2745, 2
  %v2747 = vadd.f32 %v2745, %v2746
  %v2748 = vrot.slane %v2747, 1
  %v2749 = vadd.f32 %v2747, %v2748
  %v2750 = vrot.slane %v2587, 4
  %v2751 = vadd.f32 %v2587, %v2750
  %v2752 = vrot.slane %v2751, 2
  %v2753 = vadd.f32 %v2751, %v2752
  %v2754 = vrot.slane %v2753, 1
  %v2755 = vadd.f32 %v2753, %v2754
  %v2756 = vrot.slane %v2589, 4
  %v2757 = vadd.f32 %v2589, %v2756
  %v2758 = vrot.slane %v2757, 2
  %v2759 = vadd.f32 %v2757, %v2758
  %v2760 = vrot.slane %v2759, 1
  %v2761 = vadd.f32 %v2759, %v2760
  %v2762 = vrot.slane %v2591, 4
  %v2763 = vadd.f32 %v2591, %v2762
  %v2764 = vrot.slane %v2763, 2
  %v2765 = vadd.f32 %v2763, %v2764
  %v2766 = vrot.slane %v2765, 1
  %v2767 = vadd.f32 %v2765, %v2766
  %v2768 = vrot.slane %v2593, 4
  %v2769 = vadd.f32 %v2593, %v2768
  %v2770 = vrot.slane %v2769, 2
  %v2771 = vadd.f32 %v2769, %v2770
  %v2772 = vrot.slane %v2771, 1
  %v2773 = vadd.f32 %v2771, %v2772
  %v2774 = vrot.slane %v2595, 4
  %v2775 = vadd.f32 %v2595, %v2774
  %v2776 = vrot.slane %v2775, 2
  %v2777 = vadd.f32 %v2775, %v2776
  %v2778 = vrot.slane %v2777, 1
  %v2779 = vadd.f32 %v2777, %v2778
  %v2780 = vrot.slane %v2597, 4
  %v2781 = vadd.f32 %v2597, %v2780
  %v2782 = vrot.slane %v2781, 2
  %v2783 = vadd.f32 %v2781, %v2782
  %v2784 = vrot.slane %v2783, 1
  %v2785 = vadd.f32 %v2783, %v2784
  %v2786 = vrot.slane %v2599, 4
  %v2787 = vadd.f32 %v2599, %v2786
  %v2788 = vrot.slane %v2787, 2
  %v2789 = vadd.f32 %v2787, %v2788
  %v2790 = vrot.slane %v2789, 1
  %v2791 = vadd.f32 %v2789, %v2790
  %v2792 = vrot.slane %v2601, 4
  %v2793 = vadd.f32 %v2601, %v2792
  %v2794 = vrot.slane %v2793, 2
  %v2795 = vadd.f32 %v2793, %v2794
  %v2796 = vrot.slane %v2795, 1
  %v2797 = vadd.f32 %v2795, %v2796
  %v2798 = vrot.slane %v2603, 4
  %v2799 = vadd.f32 %v2603, %v2798
  %v2800 = vrot.slane %v2799, 2
  %v2801 = vadd.f32 %v2799, %v2800
  %v2802 = vrot.slane %v2801, 1
  %v2803 = vadd.f32 %v2801, %v2802
  %v2804 = vrot.slane %v2605, 4
  %v2805 = vadd.f32 %v2605, %v2804
  %v2806 = vrot.slane %v2805, 2
  %v2807 = vadd.f32 %v2805, %v2806
  %v2808 = vrot.slane %v2807, 1
  %v2809 = vadd.f32 %v2807, %v2808
  %v2810 = vrot.slane %v2607, 4
  %v2811 = vadd.f32 %v2607, %v2810
  %v2812 = vrot.slane %v2811, 2
  %v2813 = vadd.f32 %v2811, %v2812
  %v2814 = vrot.slane %v2813, 1
  %v2815 = vadd.f32 %v2813, %v2814
  %v2816 = vrot.slane %v2609, 4
  %v2817 = vadd.f32 %v2609, %v2816
  %v2818 = vrot.slane %v2817, 2
  %v2819 = vadd.f32 %v2817, %v2818
  %v2820 = vrot.slane %v2819, 1
  %v2821 = vadd.f32 %v2819, %v2820
  %v2822 = vrot.slane %v2611, 4
  %v2823 = vadd.f32 %v2611, %v2822
  %v2824 = vrot.slane %v2823, 2
  %v2825 = vadd.f32 %v2823, %v2824
  %v2826 = vrot.slane %v2825, 1
  %v2827 = vadd.f32 %v2825, %v2826
  %v2828 = vrot.slane %v2613, 4
  %v2829 = vadd.f32 %v2613, %v2828
  %v2830 = vrot.slane %v2829, 2
  %v2831 = vadd.f32 %v2829, %v2830
  %v2832 = vrot.slane %v2831, 1
  %v2833 = vadd.f32 %v2831, %v2832
  %v2834 = vrot.slane %v2615, 4
  %v2835 = vadd.f32 %v2615, %v2834
  %v2836 = vrot.slane %v2835, 2
  %v2837 = vadd.f32 %v2835, %v2836
  %v2838 = vrot.slane %v2837, 1
  %v2839 = vadd.f32 %v2837, %v2838
  %v2840 = vrot.slane %v2617, 4
  %v2841 = vadd.f32 %v2617, %v2840
  %v2842 = vrot.slane %v2841, 2
  %v2843 = vadd.f32 %v2841, %v2842
  %v2844 = vrot.slane %v2843, 1
  %v2845 = vadd.f32 %v2843, %v2844
  %v2846 = vrot.slane %v2619, 4
  %v2847 = vadd.f32 %v2619, %v2846
  %v2848 = vrot.slane %v2847, 2
  %v2849 = vadd.f32 %v2847, %v2848
  %v2850 = vrot.slane %v2849, 1
  %v2851 = vadd.f32 %v2849, %v2850
  %v2852 = vrot.slane %v2621, 4
  %v2853 = vadd.f32 %v2621, %v2852
  %v2854 = vrot.slane %v2853, 2
  %v2855 = vadd.f32 %v2853, %v2854
  %v2856 = vrot.slane %v2855, 1
  %v2857 = vadd.f32 %v2855, %v2856
  %v2858 = vrot.slane %v2623, 4
  %v2859 = vadd.f32 %v2623, %v2858
  %v2860 = vrot.slane %v2859, 2
  %v2861 = vadd.f32 %v2859, %v2860
  %v2862 = vrot.slane %v2861, 1
  %v2863 = vadd.f32 %v2861, %v2862
  %v2864 = vrot.slane %v2625, 4
  %v2865 = vadd.f32 %v2625, %v2864
  %v2866 = vrot.slane %v2865, 2
  %v2867 = vadd.f32 %v2865, %v2866
  %v2868 = vrot.slane %v2867, 1
  %v2869 = vadd.f32 %v2867, %v2868
  %v2870 = vrot.slane %v2627, 4
  %v2871 = vadd.f32 %v2627, %v2870
  %v2872 = vrot.slane %v2871, 2
  %v2873 = vadd.f32 %v2871, %v2872
  %v2874 = vrot.slane %v2873, 1
  %v2875 = vadd.f32 %v2873, %v2874
  %v2876 = vrot.slane %v2629, 4
  %v2877 = vadd.f32 %v2629, %v2876
  %v2878 = vrot.slane %v2877, 2
  %v2879 = vadd.f32 %v2877, %v2878
  %v2880 = vrot.slane %v2879, 1
  %v2881 = vadd.f32 %v2879, %v2880
  %v2882 = vrot.slane %v2631, 4
  %v2883 = vadd.f32 %v2631, %v2882
  %v2884 = vrot.slane %v2883, 2
  %v2885 = vadd.f32 %v2883, %v2884
  %v2886 = vrot.slane %v2885, 1
  %v2887 = vadd.f32 %v2885, %v2886
  %v2888 = vrot.slane %v2633, 4
  %v2889 = vadd.f32 %v2633, %v2888
  %v2890 = vrot.slane %v2889, 2
  %v2891 = vadd.f32 %v2889, %v2890
  %v2892 = vrot.slane %v2891, 1
  %v2893 = vadd.f32 %v2891, %v2892
  %v2894 = vrot.slane %v2635, 4
  %v2895 = vadd.f32 %v2635, %v2894
  %v2896 = vrot.slane %v2895, 2
  %v2897 = vadd.f32 %v2895, %v2896
  %v2898 = vrot.slane %v2897, 1
  %v2899 = vadd.f32 %v2897, %v2898
  %v2900 = vrot.slane %v2637, 4
  %v2901 = vadd.f32 %v2637, %v2900
  %v2902 = vrot.slane %v2901, 2
  %v2903 = vadd.f32 %v2901, %v2902
  %v2904 = vrot.slane %v2903, 1
  %v2905 = vadd.f32 %v2903, %v2904
  %v2906 = vrot.slane %v2639, 4
  %v2907 = vadd.f32 %v2639, %v2906
  %v2908 = vrot.slane %v2907, 2
  %v2909 = vadd.f32 %v2907, %v2908
  %v2910 = vrot.slane %v2909, 1
  %v2911 = vadd.f32 %v2909, %v2910
  %v2912 = vrot.slane %v2641, 4
  %v2913 = vadd.f32 %v2641, %v2912
  %v2914 = vrot.slane %v2913, 2
  %v2915 = vadd.f32 %v2913, %v2914
  %v2916 = vrot.slane %v2915, 1
  %v2917 = vadd.f32 %v2915, %v2916
  %v2918 = vrot.slane %v2643, 4
  %v2919 = vadd.f32 %v2643, %v2918
  %v2920 = vrot.slane %v2919, 2
  %v2921 = vadd.f32 %v2919, %v2920
  %v2922 = vrot.slane %v2921, 1
  %v2923 = vadd.f32 %v2921, %v2922
  %v2924 = vrot.slane %v2645, 4
  %v2925 = vadd.f32 %v2645, %v2924
  %v2926 = vrot.slane %v2925, 2
  %v2927 = vadd.f32 %v2925, %v2926
  %v2928 = vrot.slane %v2927, 1
  %v2929 = vadd.f32 %v2927, %v2928
  %v2930 = vrot.slane %v2647, 4
  %v2931 = vadd.f32 %v2647, %v2930
  %v2932 = vrot.slane %v2931, 2
  %v2933 = vadd.f32 %v2931, %v2932
  %v2934 = vrot.slane %v2933, 1
  %v2935 = vadd.f32 %v2933, %v2934
  %v2936 = vrot.slane %v2649, 4
  %v2937 = vadd.f32 %v2649, %v2936
  %v2938 = vrot.slane %v2937, 2
  %v2939 = vadd.f32 %v2937, %v2938
  %v2940 = vrot.slane %v2939, 1
  %v2941 = vadd.f32 %v2939, %v2940
  %v2942 = vrot.slane %v2651, 4
  %v2943 = vadd.f32 %v2651, %v2942
  %v2944 = vrot.slane %v2943, 2
  %v2945 = vadd.f32 %v2943, %v2944
  %v2946 = vrot.slane %v2945, 1
  %v2947 = vadd.f32 %v2945, %v2946
  %v2948 = vrot.slane %v2653, 4
  %v2949 = vadd.f32 %v2653, %v2948
  %v2950 = vrot.slane %v2949, 2
  %v2951 = vadd.f32 %v2949, %v2950
  %v2952 = vrot.slane %v2951, 1
  %v2953 = vadd.f32 %v2951, %v2952
  %v2954 = vrot.slane %v2655, 4
  %v2955 = vadd.f32 %v2655, %v2954
  %v2956 = vrot.slane %v2955, 2
  %v2957 = vadd.f32 %v2955, %v2956
  %v2958 = vrot.slane %v2957, 1
  %v2959 = vadd.f32 %v2957, %v2958
  %v2960 = vrot.slane %v2657, 4
  %v2961 = vadd.f32 %v2657, %v2960
  %v2962 = vrot.slane %v2961, 2
  %v2963 = vadd.f32 %v2961, %v2962
  %v2964 = vrot.slane %v2963, 1
  %v2965 = vadd.f32 %v2963, %v2964
  %v2966 = vrot.slane %v2659, 4
  %v2967 = vadd.f32 %v2659, %v2966
  %v2968 = vrot.slane %v2967, 2
  %v2969 = vadd.f32 %v2967, %v2968
  %v2970 = vrot.slane %v2969, 1
  %v2971 = vadd.f32 %v2969, %v2970
  %v2972 = vrot.slane %v2661, 4
  %v2973 = vadd.f32 %v2661, %v2972
  %v2974 = vrot.slane %v2973, 2
  %v2975 = vadd.f32 %v2973, %v2974
  %v2976 = vrot.slane %v2975, 1
  %v2977 = vadd.f32 %v2975, %v2976
  %v2978 = vrot.slane %v2663, 4
  %v2979 = vadd.f32 %v2663, %v2978
  %v2980 = vrot.slane %v2979, 2
  %v2981 = vadd.f32 %v2979, %v2980
  %v2982 = vrot.slane %v2981, 1
  %v2983 = vadd.f32 %v2981, %v2982
  %v2984 = vrot.slane %v2665, 4
  %v2985 = vadd.f32 %v2665, %v2984
  %v2986 = vrot.slane %v2985, 2
  %v2987 = vadd.f32 %v2985, %v2986
  %v2988 = vrot.slane %v2987, 1
  %v2989 = vadd.f32 %v2987, %v2988
  %v2990 = vrot.slane %v2667, 4
  %v2991 = vadd.f32 %v2667, %v2990
  %v2992 = vrot.slane %v2991, 2
  %v2993 = vadd.f32 %v2991, %v2992
  %v2994 = vrot.slane %v2993, 1
  %v2995 = vadd.f32 %v2993, %v2994
  %v2996 = vrot.slane %v2669, 4
  %v2997 = vadd.f32 %v2669, %v2996
  %v2998 = vrot.slane %v2997, 2
  %v2999 = vadd.f32 %v2997, %v2998
  %v3000 = vrot.slane %v2999, 1
  %v3001 = vadd.f32 %v2999, %v3000
  %v3002 = vrot.slane %v2671, 4
  %v3003 = vadd.f32 %v2671, %v3002
  %v3004 = vrot.slane %v3003, 2
  %v3005 = vadd.f32 %v3003, %v3004
  %v3006 = vrot.slane %v3005, 1
  %v3007 = vadd.f32 %v3005, %v3006
  %v3008 = vrot.slane %v2673, 4
  %v3009 = vadd.f32 %v2673, %v3008
  %v3010 = vrot.slane %v3009, 2
  %v3011 = vadd.f32 %v3009, %v3010
  %v3012 = vrot.slane %v3011, 1
  %v3013 = vadd.f32 %v3011, %v3012
  %v3014 = vrot.slane %v2675, 4
  %v3015 = vadd.f32 %v2675, %v3014
  %v3016 = vrot.slane %v3015, 2
  %v3017 = vadd.f32 %v3015, %v3016
  %v3018 = vrot.slane %v3017, 1
  %v3019 = vadd.f32 %v3017, %v3018
  %v3020 = vrot.slane %v2677, 4
  %v3021 = vadd.f32 %v2677, %v3020
  %v3022 = vrot.slane %v3021, 2
  %v3023 = vadd.f32 %v3021, %v3022
  %v3024 = vrot.slane %v3023, 1
  %v3025 = vadd.f32 %v3023, %v3024
  %v3026 = vrot.slane %v2679, 4
  %v3027 = vadd.f32 %v2679, %v3026
  %v3028 = vrot.slane %v3027, 2
  %v3029 = vadd.f32 %v3027, %v3028
  %v3030 = vrot.slane %v3029, 1
  %v3031 = vadd.f32 %v3029, %v3030
  %v3032 = vrot.slane %v2681, 4
  %v3033 = vadd.f32 %v2681, %v3032
  %v3034 = vrot.slane %v3033, 2
  %v3035 = vadd.f32 %v3033, %v3034
  %v3036 = vrot.slane %v3035, 1
  %v3037 = vadd.f32 %v3035, %v3036
  %v3038 = vrot.slane %v2683, 4
  %v3039 = vadd.f32 %v2683, %v3038
  %v3040 = vrot.slane %v3039, 2
  %v3041 = vadd.f32 %v3039, %v3040
  %v3042 = vrot.slane %v3041, 1
  %v3043 = vadd.f32 %v3041, %v3042
  %v3044 = vrot.slane %v2685, 4
  %v3045 = vadd.f32 %v2685, %v3044
  %v3046 = vrot.slane %v3045, 2
  %v3047 = vadd.f32 %v3045, %v3046
  %v3048 = vrot.slane %v3047, 1
  %v3049 = vadd.f32 %v3047, %v3048
  %v3050 = vrot.slane %v2687, 4
  %v3051 = vadd.f32 %v2687, %v3050
  %v3052 = vrot.slane %v3051, 2
  %v3053 = vadd.f32 %v3051, %v3052
  %v3054 = vrot.slane %v3053, 1
  %v3055 = vadd.f32 %v3053, %v3054
  %v3056 = vrot.slane %v2689, 4
  %v3057 = vadd.f32 %v2689, %v3056
  %v3058 = vrot.slane %v3057, 2
  %v3059 = vadd.f32 %v3057, %v3058
  %v3060 = vrot.slane %v3059, 1
  %v3061 = vadd.f32 %v3059, %v3060
  %v3062 = vrot.slane %v2691, 4
  %v3063 = vadd.f32 %v2691, %v3062
  %v3064 = vrot.slane %v3063, 2
  %v3065 = vadd.f32 %v3063, %v3064
  %v3066 = vrot.slane %v3065, 1
  %v3067 = vadd.f32 %v3065, %v3066
  %v3068 = vrot.slane %v2693, 4
  %v3069 = vadd.f32 %v2693, %v3068
  %v3070 = vrot.slane %v3069, 2
  %v3071 = vadd.f32 %v3069, %v3070
  %v3072 = vrot.slane %v3071, 1
  %v3073 = vadd.f32 %v3071, %v3072
  %v3074 = vrot.slane %v2695, 4
  %v3075 = vadd.f32 %v2695, %v3074
  %v3076 = vrot.slane %v3075, 2
  %v3077 = vadd.f32 %v3075, %v3076
  %v3078 = vrot.slane %v3077, 1
  %v3079 = vadd.f32 %v3077, %v3078
  %v3080 = vrcp.pop %v2701
  %v3081 = vrcp.pop %v2707
  %v3082 = vrcp.pop %v2713
  %v3083 = vrcp.pop %v2719
  %v3084 = vrcp.pop %v2725
  %v3085 = vrcp.pop %v2731
  %v3086 = vrcp.pop %v2737
  %v3087 = vrcp.pop %v2743
  %v3088 = vrcp.pop %v2749
  %v3089 = vrcp.pop %v2755
  %v3090 = vrcp.pop %v2761
  %v3091 = vrcp.pop %v2767
  %v3092 = vrcp.pop %v2773
  %v3093 = vrcp.pop %v2779
  %v3094 = vrcp.pop %v2785
  %v3095 = vrcp.pop %v2791
  %v3096 = vrcp.pop %v2797
  %v3097 = vrcp.pop %v2803
  %v3098 = vrcp.pop %v2809
  %v3099 = vrcp.pop %v2815
  %v3100 = vrcp.pop %v2821
  %v3101 = vrcp.pop %v2827
  %v3102 = vrcp.pop %v2833
  %v3103 = vrcp.pop %v2839
  %v3104 = vrcp.pop %v2845
  %v3105 = vrcp.pop %v2851
  %v3106 = vrcp.pop %v2857
  %v3107 = vrcp.pop %v2863
  %v3108 = vrcp.pop %v2869
  %v3109 = vrcp.pop %v2875
  %v3110 = vrcp.pop %v2881
  %v3111 = vrcp.pop %v2887
  %v3112 = vrcp.pop %v2893
  %v3113 = vrcp.pop %v2899
  %v3114 = vrcp.pop %v2905
  %v3115 = vrcp.pop %v2911
  %v3116 = vrcp.pop %v2917
  %v3117 = vrcp.pop %v2923
  %v3118 = vrcp.pop %v2929
  %v3119 = vrcp.pop %v2935
  %v3120 = vrcp.pop %v2941
  %v3121 = vrcp.pop %v2947
  %v3122 = vrcp.pop %v2953
  %v3123 = vrcp.pop %v2959
  %v3124 = vrcp.pop %v2965
  %v3125 = vrcp.pop %v2971
  %v3126 = vrcp.pop %v2977
  %v3127 = vrcp.pop %v2983
  %v3128 = vrcp.pop %v2989
  %v3129 = vrcp.pop %v2995
  %v3130 = vrcp.pop %v3001
  %v3131 = vrcp.pop %v3007
  %v3132 = vrcp.pop %v3013
  %v3133 = vrcp.pop %v3019
  %v3134 = vrcp.pop %v3025
  %v3135 = vrcp.pop %v3031
  %v3136 = vrcp.pop %v3037
  %v3137 = vrcp.pop %v3043
  %v3138 = vrcp.pop %v3049
  %v3139 = vrcp.pop %v3055
  %v3140 = vrcp.pop %v3061
  %v3141 = vrcp.pop %v3067
  %v3142 = vrcp.pop %v3073
  %v3143 = vrcp.pop %v3079
  %v3144 = vmul.f32 %v2569, %v3080
  %v3145 = vmul.f32 %v2571, %v3081
  %v3146 = vmul.f32 %v2573, %v3082
  %v3147 = vmul.f32 %v2575, %v3083
  %v3148 = vmul.f32 %v2577, %v3084
  %v3149 = vmul.f32 %v2579, %v3085
  %v3150 = vmul.f32 %v2581, %v3086
  %v3151 = vmul.f32 %v2583, %v3087
  %v3152 = vmul.f32 %v2585, %v3088
  %v3153 = vmul.f32 %v2587, %v3089
  %v3154 = vmul.f32 %v2589, %v3090
  %v3155 = vmul.f32 %v2591, %v3091
  %v3156 = vmul.f32 %v2593, %v3092
  %v3157 = vmul.f32 %v2595, %v3093
  %v3158 = vmul.f32 %v2597, %v3094
  %v3159 = vmul.f32 %v2599, %v3095
  %v3160 = vmul.f32 %v2601, %v3096
  %v3161 = vmul.f32 %v2603, %v3097
  %v3162 = vmul.f32 %v2605, %v3098
  %v3163 = vmul.f32 %v2607, %v3099
  %v3164 = vmul.f32 %v2609, %v3100
  %v3165 = vmul.f32 %v2611, %v3101
  %v3166 = vmul.f32 %v2613, %v3102
  %v3167 = vmul.f32 %v2615, %v3103
  %v3168 = vmul.f32 %v2617, %v3104
  %v3169 = vmul.f32 %v2619, %v3105
  %v3170 = vmul.f32 %v2621, %v3106
  %v3171 = vmul.f32 %v2623, %v3107
  %v3172 = vmul.f32 %v2625, %v3108
  %v3173 = vmul.f32 %v2627, %v3109
  %v3174 = vmul.f32 %v2629, %v3110
  %v3175 = vmul.f32 %v2631, %v3111
  %v3176 = vmul.f32 %v2633, %v3112
  %v3177 = vmul.f32 %v2635, %v3113
  %v3178 = vmul.f32 %v2637, %v3114
  %v3179 = vmul.f32 %v2639, %v3115
  %v3180 = vmul.f32 %v2641, %v3116
  %v3181 = vmul.f32 %v2643, %v3117
  %v3182 = vmul.f32 %v2645, %v3118
  %v3183 = vmul.f32 %v2647, %v3119
  %v3184 = vmul.f32 %v2649, %v3120
  %v3185 = vmul.f32 %v2651, %v3121
  %v3186 = vmul.f32 %v2653, %v3122
  %v3187 = vmul.f32 %v2655, %v3123
  %v3188 = vmul.f32 %v2657, %v3124
  %v3189 = vmul.f32 %v2659, %v3125
  %v3190 = vmul.f32 %v2661, %v3126
  %v3191 = vmul.f32 %v2663, %v3127
  %v3192 = vmul.f32 %v2665, %v3128
  %v3193 = vmul.f32 %v2667, %v3129
  %v3194 = vmul.f32 %v2669, %v3130
  %v3195 = vmul.f32 %v2671, %v3131
  %v3196 = vmul.f32 %v2673, %v3132
  %v3197 = vmul.f32 %v2675, %v3133
  %v3198 = vmul.f32 %v2677, %v3134
  %v3199 = vmul.f32 %v2679, %v3135
  %v3200 = vmul.f32 %v2681, %v3136
  %v3201 = vmul.f32 %v2683, %v3137
  %v3202 = vmul.f32 %v2685, %v3138
  %v3203 = vmul.f32 %v2687, %v3139
  %v3204 = vmul.f32 %v2689, %v3140
  %v3205 = vmul.f32 %v2691, %v3141
  %v3206 = vmul.f32 %v2693, %v3142
  %v3207 = vmul.f32 %v2695, %v3143
  %v3208 = vmul.f32 %v3144, %v1987
  %v3209 = vmul.f32 %v3145, %v1988
  %v3210 = vmul.f32 %v3146, %v1989
  %v3211 = vmul.f32 %v3147, %v1990
  %v3212 = vmul.f32 %v3148, %v1991
  %v3213 = vmul.f32 %v3149, %v1992
  %v3214 = vmul.f32 %v3150, %v1993
  %v3215 = vmul.f32 %v3151, %v1994
  %v3216 = vmul.f32 %v3152, %v1995
  %v3217 = vmul.f32 %v3153, %v1996
  %v3218 = vmul.f32 %v3154, %v1997
  %v3219 = vmul.f32 %v3155, %v1998
  %v3220 = vmul.f32 %v3156, %v1999
  %v3221 = vmul.f32 %v3157, %v2000
  %v3222 = vmul.f32 %v3158, %v2001
  %v3223 = vmul.f32 %v3159, %v2002
  %v3224 = vmul.f32 %v3160, %v2003
  %v3225 = vmul.f32 %v3161, %v2004
  %v3226 = vmul.f32 %v3162, %v2005
  %v3227 = vmul.f32 %v3163, %v2006
  %v3228 = vmul.f32 %v3164, %v2007
  %v3229 = vmul.f32 %v3165, %v2008
  %v3230 = vmul.f32 %v3166, %v2009
  %v3231 = vmul.f32 %v3167, %v2010
  %v3232 = vmul.f32 %v3168, %v2011
  %v3233 = vmul.f32 %v3169, %v2012
  %v3234 = vmul.f32 %v3170, %v2013
  %v3235 = vmul.f32 %v3171, %v2014
  %v3236 = vmul.f32 %v3172, %v2015
  %v3237 = vmul.f32 %v3173, %v2016
  %v3238 = vmul.f32 %v3174, %v2017
  %v3239 = vmul.f32 %v3175, %v2018
  %v3240 = vmul.f32 %v3176, %v2019
  %v3241 = vmul.f32 %v3177, %v2020
  %v3242 = vmul.f32 %v3178, %v2021
  %v3243 = vmul.f32 %v3179, %v2022
  %v3244 = vmul.f32 %v3180, %v2023
  %v3245 = vmul.f32 %v3181, %v2024
  %v3246 = vmul.f32 %v3182, %v2025
  %v3247 = vmul.f32 %v3183, %v2026
  %v3248 = vmul.f32 %v3184, %v2027
  %v3249 = vmul.f32 %v3185, %v2028
  %v3250 = vmul.f32 %v3186, %v2029
  %v3251 = vmul.f32 %v3187, %v2030
  %v3252 = vmul.f32 %v3188, %v2031
  %v3253 = vmul.f32 %v3189, %v2032
  %v3254 = vmul.f32 %v3190, %v2033
  %v3255 = vmul.f32 %v3191, %v2034
  %v3256 = vmul.f32 %v3192, %v2035
  %v3257 = vmul.f32 %v3193, %v2036
  %v3258 = vmul.f32 %v3194, %v2037
  %v3259 = vmul.f32 %v3195, %v2038
  %v3260 = vmul.f32 %v3196, %v2039
  %v3261 = vmul.f32 %v3197, %v2040
  %v3262 = vmul.f32 %v3198, %v2041
  %v3263 = vmul.f32 %v3199, %v2042
  %v3264 = vmul.f32 %v3200, %v2043
  %v3265 = vmul.f32 %v3201, %v2044
  %v3266 = vmul.f32 %v3202, %v2045
  %v3267 = vmul.f32 %v3203, %v2046
  %v3268 = vmul.f32 %v3204, %v2047
  %v3269 = vmul.f32 %v3205, %v2048
  %v3270 = vmul.f32 %v3206, %v2049
  %v3271 = vmul.f32 %v3207, %v2050
  %v3272 = vrot.slane %v3208, 4
  %v3273 = vadd.f32 %v3208, %v3272
  %v3274 = vrot.slane %v3273, 2
  %v3275 = vadd.f32 %v3273, %v3274
  %v3276 = vrot.slane %v3275, 1
  %v3277 = vadd.f32 %v3275, %v3276
  %v3278 = vrot.slane %v3209, 4
  %v3279 = vadd.f32 %v3209, %v3278
  %v3280 = vrot.slane %v3279, 2
  %v3281 = vadd.f32 %v3279, %v3280
  %v3282 = vrot.slane %v3281, 1
  %v3283 = vadd.f32 %v3281, %v3282
  %v3284 = vrot.slane %v3210, 4
  %v3285 = vadd.f32 %v3210, %v3284
  %v3286 = vrot.slane %v3285, 2
  %v3287 = vadd.f32 %v3285, %v3286
  %v3288 = vrot.slane %v3287, 1
  %v3289 = vadd.f32 %v3287, %v3288
  %v3290 = vrot.slane %v3211, 4
  %v3291 = vadd.f32 %v3211, %v3290
  %v3292 = vrot.slane %v3291, 2
  %v3293 = vadd.f32 %v3291, %v3292
  %v3294 = vrot.slane %v3293, 1
  %v3295 = vadd.f32 %v3293, %v3294
  %v3296 = vrot.slane %v3212, 4
  %v3297 = vadd.f32 %v3212, %v3296
  %v3298 = vrot.slane %v3297, 2
  %v3299 = vadd.f32 %v3297, %v3298
  %v3300 = vrot.slane %v3299, 1
  %v3301 = vadd.f32 %v3299, %v3300
  %v3302 = vrot.slane %v3213, 4
  %v3303 = vadd.f32 %v3213, %v3302
  %v3304 = vrot.slane %v3303, 2
  %v3305 = vadd.f32 %v3303, %v3304
  %v3306 = vrot.slane %v3305, 1
  %v3307 = vadd.f32 %v3305, %v3306
  %v3308 = vrot.slane %v3214, 4
  %v3309 = vadd.f32 %v3214, %v3308
  %v3310 = vrot.slane %v3309, 2
  %v3311 = vadd.f32 %v3309, %v3310
  %v3312 = vrot.slane %v3311, 1
  %v3313 = vadd.f32 %v3311, %v3312
  %v3314 = vrot.slane %v3215, 4
  %v3315 = vadd.f32 %v3215, %v3314
  %v3316 = vrot.slane %v3315, 2
  %v3317 = vadd.f32 %v3315, %v3316
  %v3318 = vrot.slane %v3317, 1
  %v3319 = vadd.f32 %v3317, %v3318
  %v3320 = vrot.slane %v3216, 4
  %v3321 = vadd.f32 %v3216, %v3320
  %v3322 = vrot.slane %v3321, 2
  %v3323 = vadd.f32 %v3321, %v3322
  %v3324 = vrot.slane %v3323, 1
  %v3325 = vadd.f32 %v3323, %v3324
  %v3326 = vrot.slane %v3217, 4
  %v3327 = vadd.f32 %v3217, %v3326
  %v3328 = vrot.slane %v3327, 2
  %v3329 = vadd.f32 %v3327, %v3328
  %v3330 = vrot.slane %v3329, 1
  %v3331 = vadd.f32 %v3329, %v3330
  %v3332 = vrot.slane %v3218, 4
  %v3333 = vadd.f32 %v3218, %v3332
  %v3334 = vrot.slane %v3333, 2
  %v3335 = vadd.f32 %v3333, %v3334
  %v3336 = vrot.slane %v3335, 1
  %v3337 = vadd.f32 %v3335, %v3336
  %v3338 = vrot.slane %v3219, 4
  %v3339 = vadd.f32 %v3219, %v3338
  %v3340 = vrot.slane %v3339, 2
  %v3341 = vadd.f32 %v3339, %v3340
  %v3342 = vrot.slane %v3341, 1
  %v3343 = vadd.f32 %v3341, %v3342
  %v3344 = vrot.slane %v3220, 4
  %v3345 = vadd.f32 %v3220, %v3344
  %v3346 = vrot.slane %v3345, 2
  %v3347 = vadd.f32 %v3345, %v3346
  %v3348 = vrot.slane %v3347, 1
  %v3349 = vadd.f32 %v3347, %v3348
  %v3350 = vrot.slane %v3221, 4
  %v3351 = vadd.f32 %v3221, %v3350
  %v3352 = vrot.slane %v3351, 2
  %v3353 = vadd.f32 %v3351, %v3352
  %v3354 = vrot.slane %v3353, 1
  %v3355 = vadd.f32 %v3353, %v3354
  %v3356 = vrot.slane %v3222, 4
  %v3357 = vadd.f32 %v3222, %v3356
  %v3358 = vrot.slane %v3357, 2
  %v3359 = vadd.f32 %v3357, %v3358
  %v3360 = vrot.slane %v3359, 1
  %v3361 = vadd.f32 %v3359, %v3360
  %v3362 = vrot.slane %v3223, 4
  %v3363 = vadd.f32 %v3223, %v3362
  %v3364 = vrot.slane %v3363, 2
  %v3365 = vadd.f32 %v3363, %v3364
  %v3366 = vrot.slane %v3365, 1
  %v3367 = vadd.f32 %v3365, %v3366
  %v3368 = vrot.slane %v3224, 4
  %v3369 = vadd.f32 %v3224, %v3368
  %v3370 = vrot.slane %v3369, 2
  %v3371 = vadd.f32 %v3369, %v3370
  %v3372 = vrot.slane %v3371, 1
  %v3373 = vadd.f32 %v3371, %v3372
  %v3374 = vrot.slane %v3225, 4
  %v3375 = vadd.f32 %v3225, %v3374
  %v3376 = vrot.slane %v3375, 2
  %v3377 = vadd.f32 %v3375, %v3376
  %v3378 = vrot.slane %v3377, 1
  %v3379 = vadd.f32 %v3377, %v3378
  %v3380 = vrot.slane %v3226, 4
  %v3381 = vadd.f32 %v3226, %v3380
  %v3382 = vrot.slane %v3381, 2
  %v3383 = vadd.f32 %v3381, %v3382
  %v3384 = vrot.slane %v3383, 1
  %v3385 = vadd.f32 %v3383, %v3384
  %v3386 = vrot.slane %v3227, 4
  %v3387 = vadd.f32 %v3227, %v3386
  %v3388 = vrot.slane %v3387, 2
  %v3389 = vadd.f32 %v3387, %v3388
  %v3390 = vrot.slane %v3389, 1
  %v3391 = vadd.f32 %v3389, %v3390
  %v3392 = vrot.slane %v3228, 4
  %v3393 = vadd.f32 %v3228, %v3392
  %v3394 = vrot.slane %v3393, 2
  %v3395 = vadd.f32 %v3393, %v3394
  %v3396 = vrot.slane %v3395, 1
  %v3397 = vadd.f32 %v3395, %v3396
  %v3398 = vrot.slane %v3229, 4
  %v3399 = vadd.f32 %v3229, %v3398
  %v3400 = vrot.slane %v3399, 2
  %v3401 = vadd.f32 %v3399, %v3400
  %v3402 = vrot.slane %v3401, 1
  %v3403 = vadd.f32 %v3401, %v3402
  %v3404 = vrot.slane %v3230, 4
  %v3405 = vadd.f32 %v3230, %v3404
  %v3406 = vrot.slane %v3405, 2
  %v3407 = vadd.f32 %v3405, %v3406
  %v3408 = vrot.slane %v3407, 1
  %v3409 = vadd.f32 %v3407, %v3408
  %v3410 = vrot.slane %v3231, 4
  %v3411 = vadd.f32 %v3231, %v3410
  %v3412 = vrot.slane %v3411, 2
  %v3413 = vadd.f32 %v3411, %v3412
  %v3414 = vrot.slane %v3413, 1
  %v3415 = vadd.f32 %v3413, %v3414
  %v3416 = vrot.slane %v3232, 4
  %v3417 = vadd.f32 %v3232, %v3416
  %v3418 = vrot.slane %v3417, 2
  %v3419 = vadd.f32 %v3417, %v3418
  %v3420 = vrot.slane %v3419, 1
  %v3421 = vadd.f32 %v3419, %v3420
  %v3422 = vrot.slane %v3233, 4
  %v3423 = vadd.f32 %v3233, %v3422
  %v3424 = vrot.slane %v3423, 2
  %v3425 = vadd.f32 %v3423, %v3424
  %v3426 = vrot.slane %v3425, 1
  %v3427 = vadd.f32 %v3425, %v3426
  %v3428 = vrot.slane %v3234, 4
  %v3429 = vadd.f32 %v3234, %v3428
  %v3430 = vrot.slane %v3429, 2
  %v3431 = vadd.f32 %v3429, %v3430
  %v3432 = vrot.slane %v3431, 1
  %v3433 = vadd.f32 %v3431, %v3432
  %v3434 = vrot.slane %v3235, 4
  %v3435 = vadd.f32 %v3235, %v3434
  %v3436 = vrot.slane %v3435, 2
  %v3437 = vadd.f32 %v3435, %v3436
  %v3438 = vrot.slane %v3437, 1
  %v3439 = vadd.f32 %v3437, %v3438
  %v3440 = vrot.slane %v3236, 4
  %v3441 = vadd.f32 %v3236, %v3440
  %v3442 = vrot.slane %v3441, 2
  %v3443 = vadd.f32 %v3441, %v3442
  %v3444 = vrot.slane %v3443, 1
  %v3445 = vadd.f32 %v3443, %v3444
  %v3446 = vrot.slane %v3237, 4
  %v3447 = vadd.f32 %v3237, %v3446
  %v3448 = vrot.slane %v3447, 2
  %v3449 = vadd.f32 %v3447, %v3448
  %v3450 = vrot.slane %v3449, 1
  %v3451 = vadd.f32 %v3449, %v3450
  %v3452 = vrot.slane %v3238, 4
  %v3453 = vadd.f32 %v3238, %v3452
  %v3454 = vrot.slane %v3453, 2
  %v3455 = vadd.f32 %v3453, %v3454
  %v3456 = vrot.slane %v3455, 1
  %v3457 = vadd.f32 %v3455, %v3456
  %v3458 = vrot.slane %v3239, 4
  %v3459 = vadd.f32 %v3239, %v3458
  %v3460 = vrot.slane %v3459, 2
  %v3461 = vadd.f32 %v3459, %v3460
  %v3462 = vrot.slane %v3461, 1
  %v3463 = vadd.f32 %v3461, %v3462
  %v3464 = vrot.slane %v3240, 4
  %v3465 = vadd.f32 %v3240, %v3464
  %v3466 = vrot.slane %v3465, 2
  %v3467 = vadd.f32 %v3465, %v3466
  %v3468 = vrot.slane %v3467, 1
  %v3469 = vadd.f32 %v3467, %v3468
  %v3470 = vrot.slane %v3241, 4
  %v3471 = vadd.f32 %v3241, %v3470
  %v3472 = vrot.slane %v3471, 2
  %v3473 = vadd.f32 %v3471, %v3472
  %v3474 = vrot.slane %v3473, 1
  %v3475 = vadd.f32 %v3473, %v3474
  %v3476 = vrot.slane %v3242, 4
  %v3477 = vadd.f32 %v3242, %v3476
  %v3478 = vrot.slane %v3477, 2
  %v3479 = vadd.f32 %v3477, %v3478
  %v3480 = vrot.slane %v3479, 1
  %v3481 = vadd.f32 %v3479, %v3480
  %v3482 = vrot.slane %v3243, 4
  %v3483 = vadd.f32 %v3243, %v3482
  %v3484 = vrot.slane %v3483, 2
  %v3485 = vadd.f32 %v3483, %v3484
  %v3486 = vrot.slane %v3485, 1
  %v3487 = vadd.f32 %v3485, %v3486
  %v3488 = vrot.slane %v3244, 4
  %v3489 = vadd.f32 %v3244, %v3488
  %v3490 = vrot.slane %v3489, 2
  %v3491 = vadd.f32 %v3489, %v3490
  %v3492 = vrot.slane %v3491, 1
  %v3493 = vadd.f32 %v3491, %v3492
  %v3494 = vrot.slane %v3245, 4
  %v3495 = vadd.f32 %v3245, %v3494
  %v3496 = vrot.slane %v3495, 2
  %v3497 = vadd.f32 %v3495, %v3496
  %v3498 = vrot.slane %v3497, 1
  %v3499 = vadd.f32 %v3497, %v3498
  %v3500 = vrot.slane %v3246, 4
  %v3501 = vadd.f32 %v3246, %v3500
  %v3502 = vrot.slane %v3501, 2
  %v3503 = vadd.f32 %v3501, %v3502
  %v3504 = vrot.slane %v3503, 1
  %v3505 = vadd.f32 %v3503, %v3504
  %v3506 = vrot.slane %v3247, 4
  %v3507 = vadd.f32 %v3247, %v3506
  %v3508 = vrot.slane %v3507, 2
  %v3509 = vadd.f32 %v3507, %v3508
  %v3510 = vrot.slane %v3509, 1
  %v3511 = vadd.f32 %v3509, %v3510
  %v3512 = vrot.slane %v3248, 4
  %v3513 = vadd.f32 %v3248, %v3512
  %v3514 = vrot.slane %v3513, 2
  %v3515 = vadd.f32 %v3513, %v3514
  %v3516 = vrot.slane %v3515, 1
  %v3517 = vadd.f32 %v3515, %v3516
  %v3518 = vrot.slane %v3249, 4
  %v3519 = vadd.f32 %v3249, %v3518
  %v3520 = vrot.slane %v3519, 2
  %v3521 = vadd.f32 %v3519, %v3520
  %v3522 = vrot.slane %v3521, 1
  %v3523 = vadd.f32 %v3521, %v3522
  %v3524 = vrot.slane %v3250, 4
  %v3525 = vadd.f32 %v3250, %v3524
  %v3526 = vrot.slane %v3525, 2
  %v3527 = vadd.f32 %v3525, %v3526
  %v3528 = vrot.slane %v3527, 1
  %v3529 = vadd.f32 %v3527, %v3528
  %v3530 = vrot.slane %v3251, 4
  %v3531 = vadd.f32 %v3251, %v3530
  %v3532 = vrot.slane %v3531, 2
  %v3533 = vadd.f32 %v3531, %v3532
  %v3534 = vrot.slane %v3533, 1
  %v3535 = vadd.f32 %v3533, %v3534
  %v3536 = vrot.slane %v3252, 4
  %v3537 = vadd.f32 %v3252, %v3536
  %v3538 = vrot.slane %v3537, 2
  %v3539 = vadd.f32 %v3537, %v3538
  %v3540 = vrot.slane %v3539, 1
  %v3541 = vadd.f32 %v3539, %v3540
  %v3542 = vrot.slane %v3253, 4
  %v3543 = vadd.f32 %v3253, %v3542
  %v3544 = vrot.slane %v3543, 2
  %v3545 = vadd.f32 %v3543, %v3544
  %v3546 = vrot.slane %v3545, 1
  %v3547 = vadd.f32 %v3545, %v3546
  %v3548 = vrot.slane %v3254, 4
  %v3549 = vadd.f32 %v3254, %v3548
  %v3550 = vrot.slane %v3549, 2
  %v3551 = vadd.f32 %v3549, %v3550
  %v3552 = vrot.slane %v3551, 1
  %v3553 = vadd.f32 %v3551, %v3552
  %v3554 = vrot.slane %v3255, 4
  %v3555 = vadd.f32 %v3255, %v3554
  %v3556 = vrot.slane %v3555, 2
  %v3557 = vadd.f32 %v3555, %v3556
  %v3558 = vrot.slane %v3557, 1
  %v3559 = vadd.f32 %v3557, %v3558
  %v3560 = vrot.slane %v3256, 4
  %v3561 = vadd.f32 %v3256, %v3560
  %v3562 = vrot.slane %v3561, 2
  %v3563 = vadd.f32 %v3561, %v3562
  %v3564 = vrot.slane %v3563, 1
  %v3565 = vadd.f32 %v3563, %v3564
  %v3566 = vrot.slane %v3257, 4
  %v3567 = vadd.f32 %v3257, %v3566
  %v3568 = vrot.slane %v3567, 2
  %v3569 = vadd.f32 %v3567, %v3568
  %v3570 = vrot.slane %v3569, 1
  %v3571 = vadd.f32 %v3569, %v3570
  %v3572 = vrot.slane %v3258, 4
  %v3573 = vadd.f32 %v3258, %v3572
  %v3574 = vrot.slane %v3573, 2
  %v3575 = vadd.f32 %v3573, %v3574
  %v3576 = vrot.slane %v3575, 1
  %v3577 = vadd.f32 %v3575, %v3576
  %v3578 = vrot.slane %v3259, 4
  %v3579 = vadd.f32 %v3259, %v3578
  %v3580 = vrot.slane %v3579, 2
  %v3581 = vadd.f32 %v3579, %v3580
  %v3582 = vrot.slane %v3581, 1
  %v3583 = vadd.f32 %v3581, %v3582
  %v3584 = vrot.slane %v3260, 4
  %v3585 = vadd.f32 %v3260, %v3584
  %v3586 = vrot.slane %v3585, 2
  %v3587 = vadd.f32 %v3585, %v3586
  %v3588 = vrot.slane %v3587, 1
  %v3589 = vadd.f32 %v3587, %v3588
  %v3590 = vrot.slane %v3261, 4
  %v3591 = vadd.f32 %v3261, %v3590
  %v3592 = vrot.slane %v3591, 2
  %v3593 = vadd.f32 %v3591, %v3592
  %v3594 = vrot.slane %v3593, 1
  %v3595 = vadd.f32 %v3593, %v3594
  %v3596 = vrot.slane %v3262, 4
  %v3597 = vadd.f32 %v3262, %v3596
  %v3598 = vrot.slane %v3597, 2
  %v3599 = vadd.f32 %v3597, %v3598
  %v3600 = vrot.slane %v3599, 1
  %v3601 = vadd.f32 %v3599, %v3600
  %v3602 = vrot.slane %v3263, 4
  %v3603 = vadd.f32 %v3263, %v3602
  %v3604 = vrot.slane %v3603, 2
  %v3605 = vadd.f32 %v3603, %v3604
  %v3606 = vrot.slane %v3605, 1
  %v3607 = vadd.f32 %v3605, %v3606
  %v3608 = vrot.slane %v3264, 4
  %v3609 = vadd.f32 %v3264, %v3608
  %v3610 = vrot.slane %v3609, 2
  %v3611 = vadd.f32 %v3609, %v3610
  %v3612 = vrot.slane %v3611, 1
  %v3613 = vadd.f32 %v3611, %v3612
  %v3614 = vrot.slane %v3265, 4
  %v3615 = vadd.f32 %v3265, %v3614
  %v3616 = vrot.slane %v3615, 2
  %v3617 = vadd.f32 %v3615, %v3616
  %v3618 = vrot.slane %v3617, 1
  %v3619 = vadd.f32 %v3617, %v3618
  %v3620 = vrot.slane %v3266, 4
  %v3621 = vadd.f32 %v3266, %v3620
  %v3622 = vrot.slane %v3621, 2
  %v3623 = vadd.f32 %v3621, %v3622
  %v3624 = vrot.slane %v3623, 1
  %v3625 = vadd.f32 %v3623, %v3624
  %v3626 = vrot.slane %v3267, 4
  %v3627 = vadd.f32 %v3267, %v3626
  %v3628 = vrot.slane %v3627, 2
  %v3629 = vadd.f32 %v3627, %v3628
  %v3630 = vrot.slane %v3629, 1
  %v3631 = vadd.f32 %v3629, %v3630
  %v3632 = vrot.slane %v3268, 4
  %v3633 = vadd.f32 %v3268, %v3632
  %v3634 = vrot.slane %v3633, 2
  %v3635 = vadd.f32 %v3633, %v3634
  %v3636 = vrot.slane %v3635, 1
  %v3637 = vadd.f32 %v3635, %v3636
  %v3638 = vrot.slane %v3269, 4
  %v3639 = vadd.f32 %v3269, %v3638
  %v3640 = vrot.slane %v3639, 2
  %v3641 = vadd.f32 %v3639, %v3640
  %v3642 = vrot.slane %v3641, 1
  %v3643 = vadd.f32 %v3641, %v3642
  %v3644 = vrot.slane %v3270, 4
  %v3645 = vadd.f32 %v3270, %v3644
  %v3646 = vrot.slane %v3645, 2
  %v3647 = vadd.f32 %v3645, %v3646
  %v3648 = vrot.slane %v3647, 1
  %v3649 = vadd.f32 %v3647, %v3648
  %v3650 = vrot.slane %v3271, 4
  %v3651 = vadd.f32 %v3271, %v3650
  %v3652 = vrot.slane %v3651, 2
  %v3653 = vadd.f32 %v3651, %v3652
  %v3654 = vrot.slane %v3653, 1
  %v3655 = vadd.f32 %v3653, %v3654
  %v3656 = vpack.c.bf16 %v3277, %v3277
  %v3657 = vpack.c.bf16 %v3283, %v3283
  %v3658 = vpack.c.bf16 %v3289, %v3289
  %v3659 = vpack.c.bf16 %v3295, %v3295
  %v3660 = vpack.c.bf16 %v3301, %v3301
  %v3661 = vpack.c.bf16 %v3307, %v3307
  %v3662 = vpack.c.bf16 %v3313, %v3313
  %v3663 = vpack.c.bf16 %v3319, %v3319
  %v3664 = vpack.c.bf16 %v3325, %v3325
  %v3665 = vpack.c.bf16 %v3331, %v3331
  %v3666 = vpack.c.bf16 %v3337, %v3337
  %v3667 = vpack.c.bf16 %v3343, %v3343
  %v3668 = vpack.c.bf16 %v3349, %v3349
  %v3669 = vpack.c.bf16 %v3355, %v3355
  %v3670 = vpack.c.bf16 %v3361, %v3361
  %v3671 = vpack.c.bf16 %v3367, %v3367
  %v3672 = vpack.c.bf16 %v3373, %v3373
  %v3673 = vpack.c.bf16 %v3379, %v3379
  %v3674 = vpack.c.bf16 %v3385, %v3385
  %v3675 = vpack.c.bf16 %v3391, %v3391
  %v3676 = vpack.c.bf16 %v3397, %v3397
  %v3677 = vpack.c.bf16 %v3403, %v3403
  %v3678 = vpack.c.bf16 %v3409, %v3409
  %v3679 = vpack.c.bf16 %v3415, %v3415
  %v3680 = vpack.c.bf16 %v3421, %v3421
  %v3681 = vpack.c.bf16 %v3427, %v3427
  %v3682 = vpack.c.bf16 %v3433, %v3433
  %v3683 = vpack.c.bf16 %v3439, %v3439
  %v3684 = vpack.c.bf16 %v3445, %v3445
  %v3685 = vpack.c.bf16 %v3451, %v3451
  %v3686 = vpack.c.bf16 %v3457, %v3457
  %v3687 = vpack.c.bf16 %v3463, %v3463
  %v3688 = vpack.c.bf16 %v3469, %v3469
  %v3689 = vpack.c.bf16 %v3475, %v3475
  %v3690 = vpack.c.bf16 %v3481, %v3481
  %v3691 = vpack.c.bf16 %v3487, %v3487
  %v3692 = vpack.c.bf16 %v3493, %v3493
  %v3693 = vpack.c.bf16 %v3499, %v3499
  %v3694 = vpack.c.bf16 %v3505, %v3505
  %v3695 = vpack.c.bf16 %v3511, %v3511
  %v3696 = vpack.c.bf16 %v3517, %v3517
  %v3697 = vpack.c.bf16 %v3523, %v3523
  %v3698 = vpack.c.bf16 %v3529, %v3529
  %v3699 = vpack.c.bf16 %v3535, %v3535
  %v3700 = vpack.c.bf16 %v3541, %v3541
  %v3701 = vpack.c.bf16 %v3547, %v3547
  %v3702 = vpack.c.bf16 %v3553, %v3553
  %v3703 = vpack.c.bf16 %v3559, %v3559
  %v3704 = vpack.c.bf16 %v3565, %v3565
  %v3705 = vpack.c.bf16 %v3571, %v3571
  %v3706 = vpack.c.bf16 %v3577, %v3577
  %v3707 = vpack.c.bf16 %v3583, %v3583
  %v3708 = vpack.c.bf16 %v3589, %v3589
  %v3709 = vpack.c.bf16 %v3595, %v3595
  %v3710 = vpack.c.bf16 %v3601, %v3601
  %v3711 = vpack.c.bf16 %v3607, %v3607
  %v3712 = vpack.c.bf16 %v3613, %v3613
  %v3713 = vpack.c.bf16 %v3619, %v3619
  %v3714 = vpack.c.bf16 %v3625, %v3625
  %v3715 = vpack.c.bf16 %v3631, %v3631
  %v3716 = vpack.c.bf16 %v3637, %v3637
  %v3717 = vpack.c.bf16 %v3643, %v3643
  %v3718 = vpack.c.bf16 %v3649, %v3649
  %v3719 = vpack.c.bf16 %v3655, %v3655
  %v3784 = vunpack.c.l.b16 %v3656
  %v3785 = vunpack.c.l.b16 %v3657
  %v3786 = vunpack.c.l.b16 %v3658
  %v3787 = vunpack.c.l.b16 %v3659
  %v3788 = vunpack.c.l.b16 %v3660
  %v3789 = vunpack.c.l.b16 %v3661
  %v3790 = vunpack.c.l.b16 %v3662
  %v3791 = vunpack.c.l.b16 %v3663
  %v3792 = vunpack.c.l.b16 %v3664
  %v3793 = vunpack.c.l.b16 %v3665
  %v3794 = vunpack.c.l.b16 %v3666
  %v3795 = vunpack.c.l.b16 %v3667
  %v3796 = vunpack.c.l.b16 %v3668
  %v3797 = vunpack.c.l.b16 %v3669
  %v3798 = vunpack.c.l.b16 %v3670
  %v3799 = vunpack.c.l.b16 %v3671
  %v3800 = vunpack.c.l.b16 %v3672
  %v3801 = vunpack.c.l.b16 %v3673
  %v3802 = vunpack.c.l.b16 %v3674
  %v3803 = vunpack.c.l.b16 %v3675
  %v3804 = vunpack.c.l.b16 %v3676
  %v3805 = vunpack.c.l.b16 %v3677
  %v3806 = vunpack.c.l.b16 %v3678
  %v3807 = vunpack.c.l.b16 %v3679
  %v3808 = vunpack.c.l.b16 %v3680
  %v3809 = vunpack.c.l.b16 %v3681
  %v3810 = vunpack.c.l.b16 %v3682
  %v3811 = vunpack.c.l.b16 %v3683
  %v3812 = vunpack.c.l.b16 %v3684
  %v3813 = vunpack.c.l.b16 %v3685
  %v3814 = vunpack.c.l.b16 %v3686
  %v3815 = vunpack.c.l.b16 %v3687
  %v3816 = vunpack.c.l.b16 %v3688
  %v3817 = vunpack.c.l.b16 %v3689
  %v3818 = vunpack.c.l.b16 %v3690
  %v3819 = vunpack.c.l.b16 %v3691
  %v3820 = vunpack.c.l.b16 %v3692
  %v3821 = vunpack.c.l.b16 %v3693
  %v3822 = vunpack.c.l.b16 %v3694
  %v3823 = vunpack.c.l.b16 %v3695
  %v3824 = vunpack.c.l.b16 %v3696
  %v3825 = vunpack.c.l.b16 %v3697
  %v3826 = vunpack.c.l.b16 %v3698
  %v3827 = vunpack.c.l.b16 %v3699
  %v3828 = vunpack.c.l.b16 %v3700
  %v3829 = vunpack.c.l.b16 %v3701
  %v3830 = vunpack.c.l.b16 %v3702
  %v3831 = vunpack.c.l.b16 %v3703
  %v3832 = vunpack.c.l.b16 %v3704
  %v3833 = vunpack.c.l.b16 %v3705
  %v3834 = vunpack.c.l.b16 %v3706
  %v3835 = vunpack.c.l.b16 %v3707
  %v3836 = vunpack.c.l.b16 %v3708
  %v3837 = vunpack.c.l.b16 %v3709
  %v3838 = vunpack.c.l.b16 %v3710
  %v3839 = vunpack.c.l.b16 %v3711
  %v3840 = vunpack.c.l.b16 %v3712
  %v3841 = vunpack.c.l.b16 %v3713
  %v3842 = vunpack.c.l.b16 %v3714
  %v3843 = vunpack.c.l.b16 %v3715
  %v3844 = vunpack.c.l.b16 %v3716
  %v3845 = vunpack.c.l.b16 %v3717
  %v3846 = vunpack.c.l.b16 %v3718
  %v3847 = vunpack.c.l.b16 %v3719
  %v3848 = vpack.c.b16 %v3784, %v3784
  %v3849 = vpack.c.b16 %v3785, %v3785
  %v3850 = vpack.c.b16 %v3786, %v3786
  %v3851 = vpack.c.b16 %v3787, %v3787
  %v3852 = vpack.c.b16 %v3788, %v3788
  %v3853 = vpack.c.b16 %v3789, %v3789
  %v3854 = vpack.c.b16 %v3790, %v3790
  %v3855 = vpack.c.b16 %v3791, %v3791
  %v3856 = vpack.c.b16 %v3792, %v3792
  %v3857 = vpack.c.b16 %v3793, %v3793
  %v3858 = vpack.c.b16 %v3794, %v3794
  %v3859 = vpack.c.b16 %v3795, %v3795
  %v3860 = vpack.c.b16 %v3796, %v3796
  %v3861 = vpack.c.b16 %v3797, %v3797
  %v3862 = vpack.c.b16 %v3798, %v3798
  %v3863 = vpack.c.b16 %v3799, %v3799
  %v3864 = vpack.c.b16 %v3800, %v3800
  %v3865 = vpack.c.b16 %v3801, %v3801
  %v3866 = vpack.c.b16 %v3802, %v3802
  %v3867 = vpack.c.b16 %v3803, %v3803
  %v3868 = vpack.c.b16 %v3804, %v3804
  %v3869 = vpack.c.b16 %v3805, %v3805
  %v3870 = vpack.c.b16 %v3806, %v3806
  %v3871 = vpack.c.b16 %v3807, %v3807
  %v3872 = vpack.c.b16 %v3808, %v3808
  %v3873 = vpack.c.b16 %v3809, %v3809
  %v3874 = vpack.c.b16 %v3810, %v3810
  %v3875 = vpack.c.b16 %v3811, %v3811
  %v3876 = vpack.c.b16 %v3812, %v3812
  %v3877 = vpack.c.b16 %v3813, %v3813
  %v3878 = vpack.c.b16 %v3814, %v3814
  %v3879 = vpack.c.b16 %v3815, %v3815
  %v3880 = vpack.c.b16 %v3816, %v3816
  %v3881 = vpack.c.b16 %v3817, %v3817
  %v3882 = vpack.c.b16 %v3818, %v3818
  %v3883 = vpack.c.b16 %v3819, %v3819
  %v3884 = vpack.c.b16 %v3820, %v3820
  %v3885 = vpack.c.b16 %v3821, %v3821
  %v3886 = vpack.c.b16 %v3822, %v3822
  %v3887 = vpack.c.b16 %v3823, %v3823
  %v3888 = vpack.c.b16 %v3824, %v3824
  %v3889 = vpack.c.b16 %v3825, %v3825
  %v3890 = vpack.c.b16 %v3826, %v3826
  %v3891 = vpack.c.b16 %v3827, %v3827
  %v3892 = vpack.c.b16 %v3828, %v3828
  %v3893 = vpack.c.b16 %v3829, %v3829
  %v3894 = vpack.c.b16 %v3830, %v3830
  %v3895 = vpack.c.b16 %v3831, %v3831
  %v3896 = vpack.c.b16 %v3832, %v3832
  %v3897 = vpack.c.b16 %v3833, %v3833
  %v3898 = vpack.c.b16 %v3834, %v3834
  %v3899 = vpack.c.b16 %v3835, %v3835
  %v3900 = vpack.c.b16 %v3836, %v3836
  %v3901 = vpack.c.b16 %v3837, %v3837
  %v3902 = vpack.c.b16 %v3838, %v3838
  %v3903 = vpack.c.b16 %v3839, %v3839
  %v3904 = vpack.c.b16 %v3840, %v3840
  %v3905 = vpack.c.b16 %v3841, %v3841
  %v3906 = vpack.c.b16 %v3842, %v3842
  %v3907 = vpack.c.b16 %v3843, %v3843
  %v3908 = vpack.c.b16 %v3844, %v3844
  %v3909 = vpack.c.b16 %v3845, %v3845
  %v3910 = vpack.c.b16 %v3846, %v3846
  %v3911 = vpack.c.b16 %v3847, %v3847
  %v3912 = vunpack.c.l.b16 %v3848
  %v3913 = vunpack.c.l.b16 %v3849
  %v3914 = vunpack.c.l.b16 %v3850
  %v3915 = vunpack.c.l.b16 %v3851
  %v3916 = vunpack.c.l.b16 %v3852
  %v3917 = vunpack.c.l.b16 %v3853
  %v3918 = vunpack.c.l.b16 %v3854
  %v3919 = vunpack.c.l.b16 %v3855
  %v3920 = vunpack.c.l.b16 %v3856
  %v3921 = vunpack.c.l.b16 %v3857
  %v3922 = vunpack.c.l.b16 %v3858
  %v3923 = vunpack.c.l.b16 %v3859
  %v3924 = vunpack.c.l.b16 %v3860
  %v3925 = vunpack.c.l.b16 %v3861
  %v3926 = vunpack.c.l.b16 %v3862
  %v3927 = vunpack.c.l.b16 %v3863
  %v3928 = vunpack.c.l.b16 %v3864
  %v3929 = vunpack.c.l.b16 %v3865
  %v3930 = vunpack.c.l.b16 %v3866
  %v3931 = vunpack.c.l.b16 %v3867
  %v3932 = vunpack.c.l.b16 %v3868
  %v3933 = vunpack.c.l.b16 %v3869
  %v3934 = vunpack.c.l.b16 %v3870
  %v3935 = vunpack.c.l.b16 %v3871
  %v3936 = vunpack.c.l.b16 %v3872
  %v3937 = vunpack.c.l.b16 %v3873
  %v3938 = vunpack.c.l.b16 %v3874
  %v3939 = vunpack.c.l.b16 %v3875
  %v3940 = vunpack.c.l.b16 %v3876
  %v3941 = vunpack.c.l.b16 %v3877
  %v3942 = vunpack.c.l.b16 %v3878
  %v3943 = vunpack.c.l.b16 %v3879
  %v3944 = vunpack.c.l.b16 %v3880
  %v3945 = vunpack.c.l.b16 %v3881
  %v3946 = vunpack.c.l.b16 %v3882
  %v3947 = vunpack.c.l.b16 %v3883
  %v3948 = vunpack.c.l.b16 %v3884
  %v3949 = vunpack.c.l.b16 %v3885
  %v3950 = vunpack.c.l.b16 %v3886
  %v3951 = vunpack.c.l.b16 %v3887
  %v3952 = vunpack.c.l.b16 %v3888
  %v3953 = vunpack.c.l.b16 %v3889
  %v3954 = vunpack.c.l.b16 %v3890
  %v3955 = vunpack.c.l.b16 %v3891
  %v3956 = vunpack.c.l.b16 %v3892
  %v3957 = vunpack.c.l.b16 %v3893
  %v3958 = vunpack.c.l.b16 %v3894
  %v3959 = vunpack.c.l.b16 %v3895
  %v3960 = vunpack.c.l.b16 %v3896
  %v3961 = vunpack.c.l.b16 %v3897
  %v3962 = vunpack.c.l.b16 %v3898
  %v3963 = vunpack.c.l.b16 %v3899
  %v3964 = vunpack.c.l.b16 %v3900
  %v3965 = vunpack.c.l.b16 %v3901
  %v3966 = vunpack.c.l.b16 %v3902
  %v3967 = vunpack.c.l.b16 %v3903
  %v3968 = vunpack.c.l.b16 %v3904
  %v3969 = vunpack.c.l.b16 %v3905
  %v3970 = vunpack.c.l.b16 %v3906
  %v3971 = vunpack.c.l.b16 %v3907
  %v3972 = vunpack.c.l.b16 %v3908
  %v3973 = vunpack.c.l.b16 %v3909
  %v3974 = vunpack.c.l.b16 %v3910
  %v3975 = vunpack.c.l.b16 %v3911
  %vm3976 = vcmask 1041409
  %v3977 = vsel %vm3976, %v3913, %v3912
  %vm3978 = vcmask 1042434
  %v3979 = vsel %vm3978, %v3914, %v3977
  %vm3980 = vcmask 1043459
  %v3981 = vsel %vm3980, %v3915, %v3979
  %vm3982 = vcmask 1044484
  %v3983 = vsel %vm3982, %v3916, %v3981
  %vm3984 = vcmask 1045509
  %v3985 = vsel %vm3984, %v3917, %v3983
  %vm3986 = vcmask 1046534
  %v3987 = vsel %vm3986, %v3918, %v3985
  %vm3988 = vcmask 1047559
  %v3989 = vsel %vm3988, %v3919, %v3987
  %v3990 = vsel %vm3976, %v3921, %v3920
  %v3991 = vsel %vm3978, %v3922, %v3990
  %v3992 = vsel %vm3980, %v3923, %v3991
  %v3993 = vsel %vm3982, %v3924, %v3992
  %v3994 = vsel %vm3984, %v3925, %v3993
  %v3995 = vsel %vm3986, %v3926, %v3994
  %v3996 = vsel %vm3988, %v3927, %v3995
  %v3997 = vsel %vm3976, %v3929, %v3928
  %v3998 = vsel %vm3978, %v3930, %v3997
  %v3999 = vsel %vm3980, %v3931, %v3998
  %v4000 = vsel %vm3982, %v3932, %v3999
  %v4001 = vsel %vm3984, %v3933, %v4000
  %v4002 = vsel %vm3986, %v3934, %v4001
  %v4003 = vsel %vm3988, %v3935, %v4002
  %v4004 = vsel %vm3976, %v3937, %v3936
  %v4005 = vsel %vm3978, %v3938, %v4004
  %v4006 = vsel %vm3980, %v3939, %v4005
  %v4007 = vsel %vm3982, %v3940, %v4006
  %v4008 = vsel %vm3984, %v3941, %v4007
  %v4009 = vsel %vm3986, %v3942, %v4008
  %v4010 = vsel %vm3988, %v3943, %v4009
  %v4011 = vsel %vm3976, %v3945, %v3944
  %v4012 = vsel %vm3978, %v3946, %v4011
  %v4013 = vsel %vm3980, %v3947, %v4012
  %v4014 = vsel %vm3982, %v3948, %v4013
  %v4015 = vsel %vm3984, %v3949, %v4014
  %v4016 = vsel %vm3986, %v3950, %v4015
  %v4017 = vsel %vm3988, %v3951, %v4016
  %v4018 = vsel %vm3976, %v3953, %v3952
  %v4019 = vsel %vm3978, %v3954, %v4018
  %v4020 = vsel %vm3980, %v3955, %v4019
  %v4021 = vsel %vm3982, %v3956, %v4020
  %v4022 = vsel %vm3984, %v3957, %v4021
  %v4023 = vsel %vm3986, %v3958, %v4022
  %v4024 = vsel %vm3988, %v3959, %v4023
  %v4025 = vsel %vm3976, %v3961, %v3960
  %v4026 = vsel %vm3978, %v3962, %v4025
  %v4027 = vsel %vm3980, %v3963, %v4026
  %v4028 = vsel %vm3982, %v3964, %v4027
  %v4029 = vsel %vm3984, %v3965, %v4028
  %v4030 = vsel %vm3986, %v3966, %v4029
  %v4031 = vsel %vm3988, %v3967, %v4030
  %v4032 = vsel %vm3976, %v3969, %v3968
  %v4033 = vsel %vm3978, %v3970, %v4032
  %v4034 = vsel %vm3980, %v3971, %v4033
  %v4035 = vsel %vm3982, %v3972, %v4034
  %v4036 = vsel %vm3984, %v3973, %v4035
  %v4037 = vsel %vm3986, %v3974, %v4036
  %v4038 = vsel %vm3988, %v3975, %v4037
  %v4039 = vpack.c.b16 %v3989, %v3989
  %v4040 = vpack.c.b16 %v3996, %v3996
  %v4041 = vpack.c.b16 %v4003, %v4003
  %v4042 = vpack.c.b16 %v4010, %v4010
  %v4043 = vpack.c.b16 %v4017, %v4017
  %v4044 = vpack.c.b16 %v4024, %v4024
  %v4045 = vpack.c.b16 %v4031, %v4031
  %v4046 = vpack.c.b16 %v4038, %v4038
  %4055 = vst [vmem:[%s10] sm:$0xf] %v4039
  %4056 = vst [vmem:[%s10 + $0x4] sm:$0xf] %v4040
  %4057 = vst [vmem:[%s10 + $0x8] sm:$0xf] %v4041
  %4058 = vst [vmem:[%s10 + $0xc] sm:$0xf] %v4042
  %4059 = vst [vmem:[%s10 + $0x10] sm:$0xf] %v4043
  %4060 = vst [vmem:[%s10 + $0x14] sm:$0xf] %v4044
  %4061 = vst [vmem:[%s10 + $0x18] sm:$0xf] %v4045
  %4062 = vst [vmem:[%s10 + $0x1c] sm:$0xf] %v4046
  // Predicated region
  $region42: #{model_forward.34} parent=0 // pred_check
    _
  $region43: #{model_forward.34} parent=0 // pred_check_branch
    %4064 = sbr.rel (0) target = $region45
  $region44: #{model_forward.34} parent=0 // pred_region
    _
  $region45: #{model_forward.34} parent=0 // pred_fallthru
    _
  // Predicated region
  $region46: #{model_forward.34} parent=0 // pred_check
    _
  $region47: #{model_forward.34} parent=0 // pred_check_branch
    %4066 = sbr.rel (0) target = $region49
  $region48: #{model_forward.34} parent=0 // pred_region
    _
  $region49: #{model_forward.34} parent=0 // pred_fallthru
    _

// kernel: model_forward.37
$region0: #{model_forward.37}
  #allocation0 [shape = 'u32[]', space=smem, size = 0x4, offset = 0x4, fixed_abs, tag = 'smem constant byte address 0x4 - core index']
  #allocation1 [shape = 'u32[144,128]{1,0:T(1,128)}', space=vmem, size = 0x12000, scoped, tag = 'internal scratch']
  %s0 = inlined_call_operand.vmem [shape: bf16[16,8,128], index: 0, kind: input, shape index: {}]
  %s1 = inlined_call_operand.vmem [shape: f32[1,128], index: 1, kind: input, shape index: {}]
  %s2 = inlined_call_operand.vmem [shape: f32[1,128], index: 2, kind: input, shape index: {}]
  %s3 = inlined_call_operand.vmem [shape: bf16[16,128], index: 3, kind: output, shape index: {}]
  %s4 = sld [smem:[#allocation0]]
  $region22: #{model_forward.37} parent=0
    _
  %s6 = ssub.s32 1, %s4
  %s7 = scalar_select 0, %s6, %s4
  // Predicated region
  $region2: #{model_forward.37} parent=0 // pred_check
    _
  $region3: #{model_forward.37} parent=0 // pred_check_branch
    %9 = sbr.rel (0) target = $region5
  $region4: #{model_forward.37} parent=0 // pred_region
    _
  $region5: #{model_forward.37} parent=0 // pred_fallthru
    _
  // Predicated region
  $region6: #{model_forward.37} parent=0 // pred_check
    _
  $region7: #{model_forward.37} parent=0 // pred_check_branch
    %11 = sbr.rel (0) target = $region9
  $region8: #{model_forward.37} parent=0 // pred_region
    _
  $region9: #{model_forward.37} parent=0 // pred_fallthru
    _
  // Predicated region
  $region10: #{model_forward.37} parent=0 // pred_check
    _
  $region11: #{model_forward.37} parent=0 // pred_check_branch
    %13 = sbr.rel (0) target = $region13
  $region12: #{model_forward.37} parent=0 // pred_region
    _
  $region13: #{model_forward.37} parent=0 // pred_fallthru
    _
  %v14 = vld [vmem:[%s0] sm:$0xf]
  %v15 = vld [vmem:[%s0 + $0x4] sm:$0xf]
  %v16 = vld [vmem:[%s0 + $0x8] sm:$0xf]
  %v17 = vld [vmem:[%s0 + $0xc] sm:$0xf]
  %v18 = vld [vmem:[%s0 + $0x10] sm:$0xf]
  %v19 = vld [vmem:[%s0 + $0x14] sm:$0xf]
  %v20 = vld [vmem:[%s0 + $0x18] sm:$0xf]
  %v21 = vld [vmem:[%s0 + $0x1c] sm:$0xf]
  %v22 = vld [vmem:[%s0 + $0x20] sm:$0xf]
  %v23 = vld [vmem:[%s0 + $0x24] sm:$0xf]
  %v24 = vld [vmem:[%s0 + $0x28] sm:$0xf]
  %v25 = vld [vmem:[%s0 + $0x2c] sm:$0xf]
  %v26 = vld [vmem:[%s0 + $0x30] sm:$0xf]
  %v27 = vld [vmem:[%s0 + $0x34] sm:$0xf]
  %v28 = vld [vmem:[%s0 + $0x38] sm:$0xf]
  %v29 = vld [vmem:[%s0 + $0x3c] sm:$0xf]
  %v30 = vunpack.c.l.bf16 %v14
  %v31 = vunpack.c.l.bf16 %v15
  %v32 = vunpack.c.l.bf16 %v16
  %v33 = vunpack.c.l.bf16 %v17
  %v34 = vunpack.c.l.bf16 %v18
  %v35 = vunpack.c.l.bf16 %v19
  %v36 = vunpack.c.l.bf16 %v20
  %v37 = vunpack.c.l.bf16 %v21
  %v38 = vunpack.c.l.bf16 %v22
  %v39 = vunpack.c.l.bf16 %v23
  %v40 = vunpack.c.l.bf16 %v24
  %v41 = vunpack.c.l.bf16 %v25
  %v42 = vunpack.c.l.bf16 %v26
  %v43 = vunpack.c.l.bf16 %v27
  %v44 = vunpack.c.l.bf16 %v28
  %v45 = vunpack.c.l.bf16 %v29
  %v46 = vlaneseq
  %v47 = vshrl.u32 %v46, 7
  %vm48 = vcmp.lt.s32.totalorder %v47, 4
  %v49 = vsel %vm48, 1, 0
  %vm50 = vcmp.eq.s32.totalorder %v49, 1
  %v51 = vsel %vm50, %v30, -3e+38
  %v52 = vsel %vm50, %v31, -3e+38
  %v53 = vsel %vm50, %v32, -3e+38
  %v54 = vsel %vm50, %v33, -3e+38
  %v55 = vsel %vm50, %v34, -3e+38
  %v56 = vsel %vm50, %v35, -3e+38
  %v57 = vsel %vm50, %v36, -3e+38
  %v58 = vsel %vm50, %v37, -3e+38
  %v59 = vsel %vm50, %v38, -3e+38
  %v60 = vsel %vm50, %v39, -3e+38
  %v61 = vsel %vm50, %v40, -3e+38
  %v62 = vsel %vm50, %v41, -3e+38
  %v63 = vsel %vm50, %v42, -3e+38
  %v64 = vsel %vm50, %v43, -3e+38
  %v65 = vsel %vm50, %v44, -3e+38
  %v66 = vsel %vm50, %v45, -3e+38
  %v67 = vrot.slane %v51, 4
  %v68 = vmax.f32 %v51, %v67
  %v69 = vrot.slane %v68, 2
  %v70 = vmax.f32 %v68, %v69
  %v71 = vrot.slane %v70, 1
  %v72 = vmax.f32 %v70, %v71
  %v73 = vrot.slane %v52, 4
  %v74 = vmax.f32 %v52, %v73
  %v75 = vrot.slane %v74, 2
  %v76 = vmax.f32 %v74, %v75
  %v77 = vrot.slane %v76, 1
  %v78 = vmax.f32 %v76, %v77
  %v79 = vrot.slane %v53, 4
  %v80 = vmax.f32 %v53, %v79
  %v81 = vrot.slane %v80, 2
  %v82 = vmax.f32 %v80, %v81
  %v83 = vrot.slane %v82, 1
  %v84 = vmax.f32 %v82, %v83
  %v85 = vrot.slane %v54, 4
  %v86 = vmax.f32 %v54, %v85
  %v87 = vrot.slane %v86, 2
  %v88 = vmax.f32 %v86, %v87
  %v89 = vrot.slane %v88, 1
  %v90 = vmax.f32 %v88, %v89
  %v91 = vrot.slane %v55, 4
  %v92 = vmax.f32 %v55, %v91
  %v93 = vrot.slane %v92, 2
  %v94 = vmax.f32 %v92, %v93
  %v95 = vrot.slane %v94, 1
  %v96 = vmax.f32 %v94, %v95
  %v97 = vrot.slane %v56, 4
  %v98 = vmax.f32 %v56, %v97
  %v99 = vrot.slane %v98, 2
  %v100 = vmax.f32 %v98, %v99
  %v101 = vrot.slane %v100, 1
  %v102 = vmax.f32 %v100, %v101
  %v103 = vrot.slane %v57, 4
  %v104 = vmax.f32 %v57, %v103
  %v105 = vrot.slane %v104, 2
  %v106 = vmax.f32 %v104, %v105
  %v107 = vrot.slane %v106, 1
  %v108 = vmax.f32 %v106, %v107
  %v109 = vrot.slane %v58, 4
  %v110 = vmax.f32 %v58, %v109
  %v111 = vrot.slane %v110, 2
  %v112 = vmax.f32 %v110, %v111
  %v113 = vrot.slane %v112, 1
  %v114 = vmax.f32 %v112, %v113
  %v115 = vrot.slane %v59, 4
  %v116 = vmax.f32 %v59, %v115
  %v117 = vrot.slane %v116, 2
  %v118 = vmax.f32 %v116, %v117
  %v119 = vrot.slane %v118, 1
  %v120 = vmax.f32 %v118, %v119
  %v121 = vrot.slane %v60, 4
  %v122 = vmax.f32 %v60, %v121
  %v123 = vrot.slane %v122, 2
  %v124 = vmax.f32 %v122, %v123
  %v125 = vrot.slane %v124, 1
  %v126 = vmax.f32 %v124, %v125
  %v127 = vrot.slane %v61, 4
  %v128 = vmax.f32 %v61, %v127
  %v129 = vrot.slane %v128, 2
  %v130 = vmax.f32 %v128, %v129
  %v131 = vrot.slane %v130, 1
  %v132 = vmax.f32 %v130, %v131
  %v133 = vrot.slane %v62, 4
  %v134 = vmax.f32 %v62, %v133
  %v135 = vrot.slane %v134, 2
  %v136 = vmax.f32 %v134, %v135
  %v137 = vrot.slane %v136, 1
  %v138 = vmax.f32 %v136, %v137
  %v139 = vrot.slane %v63, 4
  %v140 = vmax.f32 %v63, %v139
  %v141 = vrot.slane %v140, 2
  %v142 = vmax.f32 %v140, %v141
  %v143 = vrot.slane %v142, 1
  %v144 = vmax.f32 %v142, %v143
  %v145 = vrot.slane %v64, 4
  %v146 = vmax.f32 %v64, %v145
  %v147 = vrot.slane %v146, 2
  %v148 = vmax.f32 %v146, %v147
  %v149 = vrot.slane %v148, 1
  %v150 = vmax.f32 %v148, %v149
  %v151 = vrot.slane %v65, 4
  %v152 = vmax.f32 %v65, %v151
  %v153 = vrot.slane %v152, 2
  %v154 = vmax.f32 %v152, %v153
  %v155 = vrot.slane %v154, 1
  %v156 = vmax.f32 %v154, %v155
  %v157 = vrot.slane %v66, 4
  %v158 = vmax.f32 %v66, %v157
  %v159 = vrot.slane %v158, 2
  %v160 = vmax.f32 %v158, %v159
  %v161 = vrot.slane %v160, 1
  %v162 = vmax.f32 %v160, %v161
  %v163 = vld [vmem:[%s1] sm:$0x1]
  %v165 = vlaneseq
  %v166 = vshrl.u32 %v165, 7
  %v167 = vsub.s32 0, %v166
  %v168 = vrot.slane %v163, %v167
  %v170 = vsub.f32 %v72, %v168
  %v171 = vsub.f32 %v78, %v168
  %v172 = vsub.f32 %v84, %v168
  %v173 = vsub.f32 %v90, %v168
  %v174 = vsub.f32 %v96, %v168
  %v175 = vsub.f32 %v102, %v168
  %v176 = vsub.f32 %v108, %v168
  %v177 = vsub.f32 %v114, %v168
  %v178 = vsub.f32 %v120, %v168
  %v179 = vsub.f32 %v126, %v168
  %v180 = vsub.f32 %v132, %v168
  %v181 = vsub.f32 %v138, %v168
  %v182 = vsub.f32 %v144, %v168
  %v183 = vsub.f32 %v150, %v168
  %v184 = vsub.f32 %v156, %v168
  %v185 = vsub.f32 %v162, %v168
  %v186 = vld [vmem:[%s2] sm:$0x1]
  %v188 = vlaneseq
  %v189 = vshrl.u32 %v188, 7
  %v190 = vsub.s32 0, %v189
  %v191 = vrot.slane %v186, %v190
  %v193 = vmul.f32 %v170, %v191
  %v194 = vmul.f32 %v171, %v191
  %v195 = vmul.f32 %v172, %v191
  %v196 = vmul.f32 %v173, %v191
  %v197 = vmul.f32 %v174, %v191
  %v198 = vmul.f32 %v175, %v191
  %v199 = vmul.f32 %v176, %v191
  %v200 = vmul.f32 %v177, %v191
  %v201 = vmul.f32 %v178, %v191
  %v202 = vmul.f32 %v179, %v191
  %v203 = vmul.f32 %v180, %v191
  %v204 = vmul.f32 %v181, %v191
  %v205 = vmul.f32 %v182, %v191
  %v206 = vmul.f32 %v183, %v191
  %v207 = vmul.f32 %v184, %v191
  %v208 = vmul.f32 %v185, %v191
  %v209 = vmax.f32 %v193, 0.0
  %v210 = vmax.f32 %v194, 0.0
  %v211 = vmax.f32 %v195, 0.0
  %v212 = vmax.f32 %v196, 0.0
  %v213 = vmax.f32 %v197, 0.0
  %v214 = vmax.f32 %v198, 0.0
  %v215 = vmax.f32 %v199, 0.0
  %v216 = vmax.f32 %v200, 0.0
  %v217 = vmax.f32 %v201, 0.0
  %v218 = vmax.f32 %v202, 0.0
  %v219 = vmax.f32 %v203, 0.0
  %v220 = vmax.f32 %v204, 0.0
  %v221 = vmax.f32 %v205, 0.0
  %v222 = vmax.f32 %v206, 0.0
  %v223 = vmax.f32 %v207, 0.0
  %v224 = vmax.f32 %v208, 0.0
  %v225 = vpack.c.bf16 %v209, %v209
  %v226 = vpack.c.bf16 %v210, %v210
  %v227 = vpack.c.bf16 %v211, %v211
  %v228 = vpack.c.bf16 %v212, %v212
  %v229 = vpack.c.bf16 %v213, %v213
  %v230 = vpack.c.bf16 %v214, %v214
  %v231 = vpack.c.bf16 %v215, %v215
  %v232 = vpack.c.bf16 %v216, %v216
  %v233 = vpack.c.bf16 %v217, %v217
  %v234 = vpack.c.bf16 %v218, %v218
  %v235 = vpack.c.bf16 %v219, %v219
  %v236 = vpack.c.bf16 %v220, %v220
  %v237 = vpack.c.bf16 %v221, %v221
  %v238 = vpack.c.bf16 %v222, %v222
  %v239 = vpack.c.bf16 %v223, %v223
  %v240 = vpack.c.bf16 %v224, %v224
  %v257 = vunpack.c.l.b16 %v225
  %v258 = vunpack.c.l.b16 %v226
  %v259 = vunpack.c.l.b16 %v227
  %v260 = vunpack.c.l.b16 %v228
  %v261 = vunpack.c.l.b16 %v229
  %v262 = vunpack.c.l.b16 %v230
  %v263 = vunpack.c.l.b16 %v231
  %v264 = vunpack.c.l.b16 %v232
  %v265 = vunpack.c.l.b16 %v233
  %v266 = vunpack.c.l.b16 %v234
  %v267 = vunpack.c.l.b16 %v235
  %v268 = vunpack.c.l.b16 %v236
  %v269 = vunpack.c.l.b16 %v237
  %v270 = vunpack.c.l.b16 %v238
  %v271 = vunpack.c.l.b16 %v239
  %v272 = vunpack.c.l.b16 %v240
  %v273 = vpack.c.b16 %v257, %v257
  %v274 = vpack.c.b16 %v258, %v258
  %v275 = vpack.c.b16 %v259, %v259
  %v276 = vpack.c.b16 %v260, %v260
  %v277 = vpack.c.b16 %v261, %v261
  %v278 = vpack.c.b16 %v262, %v262
  %v279 = vpack.c.b16 %v263, %v263
  %v280 = vpack.c.b16 %v264, %v264
  %v281 = vpack.c.b16 %v265, %v265
  %v282 = vpack.c.b16 %v266, %v266
  %v283 = vpack.c.b16 %v267, %v267
  %v284 = vpack.c.b16 %v268, %v268
  %v285 = vpack.c.b16 %v269, %v269
  %v286 = vpack.c.b16 %v270, %v270
  %v287 = vpack.c.b16 %v271, %v271
  %v288 = vpack.c.b16 %v272, %v272
  %v289 = vunpack.c.l.b16 %v273
  %v290 = vunpack.c.l.b16 %v274
  %v291 = vunpack.c.l.b16 %v275
  %v292 = vunpack.c.l.b16 %v276
  %v293 = vunpack.c.l.b16 %v277
  %v294 = vunpack.c.l.b16 %v278
  %v295 = vunpack.c.l.b16 %v279
  %v296 = vunpack.c.l.b16 %v280
  %v297 = vunpack.c.l.b16 %v281
  %v298 = vunpack.c.l.b16 %v282
  %v299 = vunpack.c.l.b16 %v283
  %v300 = vunpack.c.l.b16 %v284
  %v301 = vunpack.c.l.b16 %v285
  %v302 = vunpack.c.l.b16 %v286
  %v303 = vunpack.c.l.b16 %v287
  %v304 = vunpack.c.l.b16 %v288
  %v305 = vrot.slane %v290, 7
  %vm306 = vcmask 1041409
  %v307 = vsel %vm306, %v305, %v289
  %v308 = vrot.slane %v291, 6
  %vm309 = vcmask 1042434
  %v310 = vsel %vm309, %v308, %v307
  %v311 = vrot.slane %v292, 5
  %vm312 = vcmask 1043459
  %v313 = vsel %vm312, %v311, %v310
  %v314 = vrot.slane %v293, 4
  %vm315 = vcmask 1044484
  %v316 = vsel %vm315, %v314, %v313
  %v317 = vrot.slane %v294, 3
  %vm318 = vcmask 1045509
  %v319 = vsel %vm318, %v317, %v316
  %v320 = vrot.slane %v295, 2
  %vm321 = vcmask 1046534
  %v322 = vsel %vm321, %v320, %v319
  %v323 = vrot.slane %v296, 1
  %vm324 = vcmask 1047559
  %v325 = vsel %vm324, %v323, %v322
  %v326 = vrot.slane %v298, 7
  %v327 = vsel %vm306, %v326, %v297
  %v328 = vrot.slane %v299, 6
  %v329 = vsel %vm309, %v328, %v327
  %v330 = vrot.slane %v300, 5
  %v331 = vsel %vm312, %v330, %v329
  %v332 = vrot.slane %v301, 4
  %v333 = vsel %vm315, %v332, %v331
  %v334 = vrot.slane %v302, 3
  %v335 = vsel %vm318, %v334, %v333
  %v336 = vrot.slane %v303, 2
  %v337 = vsel %vm321, %v336, %v335
  %v338 = vrot.slane %v304, 1
  %v339 = vsel %vm324, %v338, %v337
  %v340 = vpack.c.b16 %v325, %v325
  %v341 = vpack.c.b16 %v339, %v339
  %344 = vst [vmem:[%s3] sm:$0xf] %v340
  %345 = vst [vmem:[%s3 + $0x4] sm:$0xf] %v341
  // Predicated region
  $region14: #{model_forward.37} parent=0 // pred_check
    _
  $region15: #{model_forward.37} parent=0 // pred_check_branch
    %347 = sbr.rel (0) target = $region17
  $region16: #{model_forward.37} parent=0 // pred_region
    _
  $region17: #{model_forward.37} parent=0 // pred_fallthru
    _
  // Predicated region
  $region18: #{model_forward.37} parent=0 // pred_check
    _
  $region19: #{model_forward.37} parent=0 // pred_check_branch
    %349 = sbr.rel (0) target = $region21
  $region20: #{model_forward.37} parent=0 // pred_region
    _
  $region21: #{model_forward.37} parent=0 // pred_fallthru
    _

// kernel: model_forward.38
$region0: #{model_forward.38}
  #allocation0 [shape = 'u32[]', space=smem, size = 0x4, offset = 0x4, fixed_abs, tag = 'smem constant byte address 0x4 - core index']
  #allocation1 [shape = 'u32[144,128]{1,0:T(1,128)}', space=vmem, size = 0x12000, scoped, tag = 'internal scratch']
  %s0 = inlined_call_operand.vmem [shape: bf16[16,128], index: 0, kind: input, shape index: {}]
  %s1 = inlined_call_operand.vmem [shape: bf16[128,128], index: 1, kind: input, shape index: {}]
  %s2 = inlined_call_operand.vmem [shape: f32[1,128], index: 2, kind: input, shape index: {}]
  %s3 = inlined_call_operand.vmem [shape: bf16[16,128], index: 3, kind: output, shape index: {}]
  %s4 = sld [smem:[#allocation0]]
  $region22: #{model_forward.38} parent=0
    _
  %s6 = ssub.s32 1, %s4
  %s7 = scalar_select 0, %s6, %s4
  // Predicated region
  $region2: #{model_forward.38} parent=0 // pred_check
    _
  $region3: #{model_forward.38} parent=0 // pred_check_branch
    %9 = sbr.rel (0) target = $region5
  $region4: #{model_forward.38} parent=0 // pred_region
    _
  $region5: #{model_forward.38} parent=0 // pred_fallthru
    _
  // Predicated region
  $region6: #{model_forward.38} parent=0 // pred_check
    _
  $region7: #{model_forward.38} parent=0 // pred_check_branch
    %11 = sbr.rel (0) target = $region9
  $region8: #{model_forward.38} parent=0 // pred_region
    _
  $region9: #{model_forward.38} parent=0 // pred_fallthru
    _
  // Predicated region
  $region10: #{model_forward.38} parent=0 // pred_check
    _
  $region11: #{model_forward.38} parent=0 // pred_check_branch
    %13 = sbr.rel (0) target = $region13
  $region12: #{model_forward.38} parent=0 // pred_region
    _
  $region13: #{model_forward.38} parent=0 // pred_fallthru
    _
  %v15 = vld [vmem:[%s0] sm:$0xf]
  %v16 = vld [vmem:[%s0 + $0x4] sm:$0xf]
  %v17 = vld [vmem:[%s1] sm:$0xf]
  %v18 = vld [vmem:[%s1 + $0x4] sm:$0xf]
  %v19 = vld [vmem:[%s1 + $0x8] sm:$0xf]
  %v20 = vld [vmem:[%s1 + $0xc] sm:$0xf]
  %v21 = vld [vmem:[%s1 + $0x10] sm:$0xf]
  %v22 = vld [vmem:[%s1 + $0x14] sm:$0xf]
  %v23 = vld [vmem:[%s1 + $0x18] sm:$0xf]
  %v24 = vld [vmem:[%s1 + $0x1c] sm:$0xf]
  %v25 = vld [vmem:[%s1 + $0x20] sm:$0xf]
  %v26 = vld [vmem:[%s1 + $0x24] sm:$0xf]
  %v27 = vld [vmem:[%s1 + $0x28] sm:$0xf]
  %v28 = vld [vmem:[%s1 + $0x2c] sm:$0xf]
  %v29 = vld [vmem:[%s1 + $0x30] sm:$0xf]
  %v30 = vld [vmem:[%s1 + $0x34] sm:$0xf]
  %v31 = vld [vmem:[%s1 + $0x38] sm:$0xf]
  %v32 = vld [vmem:[%s1 + $0x3c] sm:$0xf]
  %v33 = vld [vmem:[%s2] sm:$0x1]
  %v35 = vlaneseq
  %v36 = vshrl.u32 %v35, 7
  %v37 = vsub.s32 0, %v36
  %v38 = vrot.slane %v33, %v37
  %v42 = vunpack.c.l.b16 %v15
  %v43 = vunpack.c.l.b16 %v16
  %v44 = vpack.c.b16 %v43, %v42
  %v62 = vunpack.c.l.b16 %v17
  %v63 = vunpack.c.l.b16 %v18
  %v64 = vunpack.c.l.b16 %v19
  %v65 = vunpack.c.l.b16 %v20
  %v66 = vunpack.c.l.b16 %v21
  %v67 = vunpack.c.l.b16 %v22
  %v68 = vunpack.c.l.b16 %v23
  %v69 = vunpack.c.l.b16 %v24
  %v70 = vunpack.c.l.b16 %v25
  %v71 = vunpack.c.l.b16 %v26
  %v72 = vunpack.c.l.b16 %v27
  %v73 = vunpack.c.l.b16 %v28
  %v74 = vunpack.c.l.b16 %v29
  %v75 = vunpack.c.l.b16 %v30
  %v76 = vunpack.c.l.b16 %v31
  %v77 = vunpack.c.l.b16 %v32
  %v78 = vpack.c.b16 %v63, %v62
  %v79 = vpack.c.b16 %v65, %v64
  %v80 = vpack.c.b16 %v67, %v66
  %v81 = vpack.c.b16 %v69, %v68
  %v82 = vpack.c.b16 %v71, %v70
  %v83 = vpack.c.b16 %v73, %v72
  %v84 = vpack.c.b16 %v75, %v74
  %v85 = vpack.c.b16 %v77, %v76
  %94 = vmatprep.subr.bf16.mxu0 0
  %95 = vmatpush1.bf16.msra.mxu0 %v78
  %96 = vmatprep.subr.bf16.mxu0 0
  %97 = vmatpush1.bf16.msra.mxu0 %v79
  %98 = vmatprep.subr.bf16.mxu0 0
  %99 = vmatpush1.bf16.msra.mxu0 %v80
  %100 = vmatprep.subr.bf16.mxu0 0
  %101 = vmatpush1.bf16.msra.mxu0 %v81
  %102 = vmatprep.subr.bf16.mxu0 0
  %103 = vmatpush1.bf16.msra.mxu0 %v82
  %104 = vmatprep.subr.bf16.mxu0 0
  %105 = vmatpush1.bf16.msra.mxu0 %v83
  %106 = vmatprep.subr.bf16.mxu0 0
  %107 = vmatpush1.bf16.msra.mxu0 %v84
  %108 = vmatprep.subr.bf16.mxu0 0
  %109 = vmatpush1.bf16.msra.mxu0 %v85
  %110 = vmatprep.subr.bf16.mxu0 0
  %111 = vmatpush1.bf16.msra.mxu0 0
  %112 = vmatprep.subr.bf16.mxu0 0
  %113 = vmatpush1.bf16.msra.mxu0 0
  %114 = vmatprep.subr.bf16.mxu0 0
  %115 = vmatpush1.bf16.msra.mxu0 0
  %116 = vmatprep.subr.bf16.mxu0 0
  %117 = vmatpush1.bf16.msra.mxu0 0
  %118 = vmatprep.subr.bf16.mxu0 0
  %119 = vmatpush1.bf16.msra.mxu0 0
  %120 = vmatprep.subr.bf16.mxu0 0
  %121 = vmatpush1.bf16.msra.mxu0 0
  %122 = vmatprep.subr.bf16.mxu0 0
  %123 = vmatpush1.bf16.msra.mxu0 0
  %124 = vmatprep.subr.bf16.mxu0 0
  %125 = vmatpush1.bf16.msra.mxu0 0
  %126 = vmatprep.mubr.bf16.mxu0 0
  %127 = vmatmul.mubr.bf16.gmra.mrb[0].mxu0 %v44
  %v128 = vpop.f32.mrb[0].mxu0
  %v129 = vadd.f32 %v38, %v128
  %v130 = vpop.f32.mrb[0].mxu0
  %v131 = vpop.f32.mrb[0].mxu0
  %v132 = vadd.f32 %v38, %v131
  %v133 = vpop.f32.mrb[0].mxu0
  %134 = vdwg.mxu0
  %v135 = vmax.f32 %v129, 0.0
  %v136 = vmax.f32 %v132, 0.0
  %v137 = vpack.c.bf16 %v136, %v135
  %v139 = vunpack.c.l.b16 %v137
  %v140 = vunpack.c.h.b16 %v137
  %v141 = vpack.c.b16 %v139, %v139
  %v142 = vpack.c.b16 %v140, %v140
  %145 = vst [vmem:[%s3] sm:$0xf] %v141
  %146 = vst [vmem:[%s3 + $0x4] sm:$0xf] %v142
  // Predicated region
  $region14: #{model_forward.38} parent=0 // pred_check
    _
  $region15: #{model_forward.38} parent=0 // pred_check_branch
    %148 = sbr.rel (0) target = $region17
  $region16: #{model_forward.38} parent=0 // pred_region
    _
  $region17: #{model_forward.38} parent=0 // pred_fallthru
    _
  // Predicated region
  $region18: #{model_forward.38} parent=0 // pred_check
    _
  $region19: #{model_forward.38} parent=0 // pred_check_branch
    %150 = sbr.rel (0) target = $region21
  $region20: #{model_forward.38} parent=0 // pred_region
    _
  $region21: #{model_forward.38} parent=0 // pred_fallthru
    _

// kernel: model_forward.39
$region0: #{model_forward.39}
  #allocation0 [shape = 'u32[]', space=smem, size = 0x4, offset = 0x4, fixed_abs, tag = 'smem constant byte address 0x4 - core index']
  #allocation1 [shape = 'u32[144,128]{1,0:T(1,128)}', space=vmem, size = 0x12000, scoped, tag = 'internal scratch']
  %s0 = inlined_call_operand.vmem [shape: bf16[16,128], index: 0, kind: input, shape index: {}]
  %s1 = inlined_call_operand.vmem [shape: bf16[128,384], index: 1, kind: input, shape index: {}]
  %s2 = inlined_call_operand.vmem [shape: f32[1,384], index: 2, kind: input, shape index: {}]
  %s3 = inlined_call_operand.vmem [shape: bf16[16,384], index: 3, kind: output, shape index: {}]
  %s4 = sld [smem:[#allocation0]]
  $region22: #{model_forward.39} parent=0
    _
  %s6 = ssub.s32 1, %s4
  %s7 = scalar_select 0, %s6, %s4
  // Predicated region
  $region2: #{model_forward.39} parent=0 // pred_check
    _
  $region3: #{model_forward.39} parent=0 // pred_check_branch
    %9 = sbr.rel (0) target = $region5
  $region4: #{model_forward.39} parent=0 // pred_region
    _
  $region5: #{model_forward.39} parent=0 // pred_fallthru
    _
  // Predicated region
  $region6: #{model_forward.39} parent=0 // pred_check
    _
  $region7: #{model_forward.39} parent=0 // pred_check_branch
    %11 = sbr.rel (0) target = $region9
  $region8: #{model_forward.39} parent=0 // pred_region
    _
  $region9: #{model_forward.39} parent=0 // pred_fallthru
    _
  // Predicated region
  $region10: #{model_forward.39} parent=0 // pred_check
    _
  $region11: #{model_forward.39} parent=0 // pred_check_branch
    %13 = sbr.rel (0) target = $region13
  $region12: #{model_forward.39} parent=0 // pred_region
    _
  $region13: #{model_forward.39} parent=0 // pred_fallthru
    _
  %v15 = vld [vmem:[%s0] sm:$0xf]
  %v16 = vld [vmem:[%s0 + $0x4] sm:$0xf]
  %v17 = vld [vmem:[%s1] sm:$0xff]
  %v18 = vld [vmem:[%s1 + $0x8] sm:$0xf]
  %v19 = vld [vmem:[%s1 + $0xc] sm:$0xff]
  %v20 = vld [vmem:[%s1 + $0x14] sm:$0xf]
  %v21 = vld [vmem:[%s1 + $0x18] sm:$0xff]
  %v22 = vld [vmem:[%s1 + $0x20] sm:$0xf]
  %v23 = vld [vmem:[%s1 + $0x24] sm:$0xff]
  %v24 = vld [vmem:[%s1 + $0x2c] sm:$0xf]
  %v25 = vld [vmem:[%s1 + $0x30] sm:$0xff]
  %v26 = vld [vmem:[%s1 + $0x38] sm:$0xf]
  %v27 = vld [vmem:[%s1 + $0x3c] sm:$0xff]
  %v28 = vld [vmem:[%s1 + $0x44] sm:$0xf]
  %v29 = vld [vmem:[%s1 + $0x48] sm:$0xff]
  %v30 = vld [vmem:[%s1 + $0x50] sm:$0xf]
  %v31 = vld [vmem:[%s1 + $0x54] sm:$0xff]
  %v32 = vld [vmem:[%s1 + $0x5c] sm:$0xf]
  %v33 = vld [vmem:[%s1 + $0x60] sm:$0xff]
  %v34 = vld [vmem:[%s1 + $0x68] sm:$0xf]
  %v35 = vld [vmem:[%s1 + $0x6c] sm:$0xff]
  %v36 = vld [vmem:[%s1 + $0x74] sm:$0xf]
  %v37 = vld [vmem:[%s1 + $0x78] sm:$0xff]
  %v38 = vld [vmem:[%s1 + $0x80] sm:$0xf]
  %v39 = vld [vmem:[%s1 + $0x84] sm:$0xff]
  %v40 = vld [vmem:[%s1 + $0x8c] sm:$0xf]
  %v41 = vld [vmem:[%s1 + $0x90] sm:$0xff]
  %v42 = vld [vmem:[%s1 + $0x98] sm:$0xf]
  %v43 = vld [vmem:[%s1 + $0x9c] sm:$0xff]
  %v44 = vld [vmem:[%s1 + $0xa4] sm:$0xf]
  %v45 = vld [vmem:[%s1 + $0xa8] sm:$0xff]
  %v46 = vld [vmem:[%s1 + $0xb0] sm:$0xf]
  %v47 = vld [vmem:[%s1 + $0xb4] sm:$0xff]
  %v48 = vld [vmem:[%s1 + $0xbc] sm:$0xf]
  %v49 = vld [vmem:[%s2] sm:$0x7]
  %v51 = vlaneseq
  %v52 = vshrl.u32 %v51, 7
  %v53 = vsub.s32 0, %v52
  %v54 = vrot.slane %v49, %v53
  %v55 = vlaneseq
  %v56 = vshrl.u32 %v55, 7
  %v57 = vsub.s32 1, %v56
  %v58 = vrot.slane %v49, %v57
  %v59 = vlaneseq
  %v60 = vshrl.u32 %v59, 7
  %v61 = vsub.s32 2, %v60
  %v62 = vrot.slane %v49, %v61
  %v68 = vunpack.c.l.b16 %v15
  %v69 = vunpack.c.l.b16 %v16
  %v70 = vpack.c.b16 %v69, %v68
  %v104 = vunpack.c.l.b16 %v17
  %v105 = vunpack.c.h.b16 %v17
  %v106 = vunpack.c.l.b16 %v18
  %v107 = vunpack.c.l.b16 %v19
  %v108 = vunpack.c.h.b16 %v19
  %v109 = vunpack.c.l.b16 %v20
  %v110 = vunpack.c.l.b16 %v21
  %v111 = vunpack.c.h.b16 %v21
  %v112 = vunpack.c.l.b16 %v22
  %v113 = vunpack.c.l.b16 %v23
  %v114 = vunpack.c.h.b16 %v23
  %v115 = vunpack.c.l.b16 %v24
  %v116 = vunpack.c.l.b16 %v25
  %v117 = vunpack.c.h.b16 %v25
  %v118 = vunpack.c.l.b16 %v26
  %v119 = vunpack.c.l.b16 %v27
  %v120 = vunpack.c.h.b16 %v27
  %v121 = vunpack.c.l.b16 %v28
  %v122 = vunpack.c.l.b16 %v29
  %v123 = vunpack.c.h.b16 %v29
  %v124 = vunpack.c.l.b16 %v30
  %v125 = vunpack.c.l.b16 %v31
  %v126 = vunpack.c.h.b16 %v31
  %v127 = vunpack.c.l.b16 %v32
  %v128 = vunpack.c.l.b16 %v33
  %v129 = vunpack.c.h.b16 %v33
  %v130 = vunpack.c.l.b16 %v34
  %v131 = vunpack.c.l.b16 %v35
  %v132 = vunpack.c.h.b16 %v35
  %v133 = vunpack.c.l.b16 %v36
  %v134 = vunpack.c.l.b16 %v37
  %v135 = vunpack.c.h.b16 %v37
  %v136 = vunpack.c.l.b16 %v38
  %v137 = vunpack.c.l.b16 %v39
  %v138 = vunpack.c.h.b16 %v39
  %v139 = vunpack.c.l.b16 %v40
  %v140 = vunpack.c.l.b16 %v41
  %v141 = vunpack.c.h.b16 %v41
  %v142 = vunpack.c.l.b16 %v42
  %v143 = vunpack.c.l.b16 %v43
  %v144 = vunpack.c.h.b16 %v43
  %v145 = vunpack.c.l.b16 %v44
  %v146 = vunpack.c.l.b16 %v45
  %v147 = vunpack.c.h.b16 %v45
  %v148 = vunpack.c.l.b16 %v46
  %v149 = vunpack.c.l.b16 %v47
  %v150 = vunpack.c.h.b16 %v47
  %v151 = vunpack.c.l.b16 %v48
  %v152 = vpack.c.b16 %v107, %v104
  %v153 = vpack.c.b16 %v108, %v105
  %v154 = vpack.c.b16 %v109, %v106
  %v155 = vpack.c.b16 %v113, %v110
  %v156 = vpack.c.b16 %v114, %v111
  %v157 = vpack.c.b16 %v115, %v112
  %v158 = vpack.c.b16 %v119, %v116
  %v159 = vpack.c.b16 %v120, %v117
  %v160 = vpack.c.b16 %v121, %v118
  %v161 = vpack.c.b16 %v125, %v122
  %v162 = vpack.c.b16 %v126, %v123
  %v163 = vpack.c.b16 %v127, %v124
  %v164 = vpack.c.b16 %v131, %v128
  %v165 = vpack.c.b16 %v132, %v129
  %v166 = vpack.c.b16 %v133, %v130
  %v167 = vpack.c.b16 %v137, %v134
  %v168 = vpack.c.b16 %v138, %v135
  %v169 = vpack.c.b16 %v139, %v136
  %v170 = vpack.c.b16 %v143, %v140
  %v171 = vpack.c.b16 %v144, %v141
  %v172 = vpack.c.b16 %v145, %v142
  %v173 = vpack.c.b16 %v149, %v146
  %v174 = vpack.c.b16 %v150, %v147
  %v175 = vpack.c.b16 %v151, %v148
  %200 = vmatprep.subr.bf16.mxu0 %v153
  %201 = vmatpush1.bf16.msra.mxu0 %v152
  %202 = vmatprep.subr.bf16.mxu0 %v156
  %203 = vmatpush1.bf16.msra.mxu0 %v155
  %204 = vmatprep.subr.bf16.mxu0 %v159
  %205 = vmatpush1.bf16.msra.mxu0 %v158
  %206 = vmatprep.subr.bf16.mxu0 %v162
  %207 = vmatpush1.bf16.msra.mxu0 %v161
  %208 = vmatprep.subr.bf16.mxu0 %v165
  %209 = vmatpush1.bf16.msra.mxu0 %v164
  %210 = vmatprep.subr.bf16.mxu0 %v168
  %211 = vmatpush1.bf16.msra.mxu0 %v167
  %212 = vmatprep.subr.bf16.mxu0 %v171
  %213 = vmatpush1.bf16.msra.mxu0 %v170
  %214 = vmatprep.subr.bf16.mxu0 %v174
  %215 = vmatpush1.bf16.msra.mxu0 %v173
  %216 = vmatprep.subr.bf16.mxu0 0
  %217 = vmatpush1.bf16.msra.mxu0 0
  %218 = vmatprep.subr.bf16.mxu0 0
  %219 = vmatpush1.bf16.msra.mxu0 0
  %220 = vmatprep.subr.bf16.mxu0 0
  %221 = vmatpush1.bf16.msra.mxu0 0
  %222 = vmatprep.subr.bf16.mxu0 0
  %223 = vmatpush1.bf16.msra.mxu0 0
  %224 = vmatprep.subr.bf16.mxu0 0
  %225 = vmatpush1.bf16.msra.mxu0 0
  %226 = vmatprep.subr.bf16.mxu0 0
  %227 = vmatpush1.bf16.msra.mxu0 0
  %228 = vmatprep.subr.bf16.mxu0 0
  %229 = vmatpush1.bf16.msra.mxu0 0
  %230 = vmatprep.subr.bf16.mxu0 0
  %231 = vmatpush1.bf16.msra.mxu0 0
  %232 = vmatprep.mubr.bf16.mxu0 0
  %233 = vmatmul.mubr.bf16.gmra.mrb[0].mxu0 %v70
  %v234 = vpop.f32.mrb[0].mxu0
  %v235 = vadd.f32 %v54, %v234
  %v236 = vpop.f32.mrb[0].mxu0
  %v237 = vadd.f32 %v58, %v236
  %v238 = vpop.f32.mrb[0].mxu0
  %v239 = vadd.f32 %v54, %v238
  %v240 = vpop.f32.mrb[0].mxu0
  %v241 = vadd.f32 %v58, %v240
  %242 = vdwg.mxu0
  %243 = vmatprep.subr.bf16.mxu0 0
  %244 = vmatpush1.bf16.msra.mxu0 %v154
  %245 = vmatprep.subr.bf16.mxu0 0
  %246 = vmatpush1.bf16.msra.mxu0 %v157
  %247 = vmatprep.subr.bf16.mxu0 0
  %248 = vmatpush1.bf16.msra.mxu0 %v160
  %249 = vmatprep.subr.bf16.mxu0 0
  %250 = vmatpush1.bf16.msra.mxu0 %v163
  %251 = vmatprep.subr.bf16.mxu0 0
  %252 = vmatpush1.bf16.msra.mxu0 %v166
  %253 = vmatprep.subr.bf16.mxu0 0
  %254 = vmatpush1.bf16.msra.mxu0 %v169
  %255 = vmatprep.subr.bf16.mxu0 0
  %256 = vmatpush1.bf16.msra.mxu0 %v172
  %257 = vmatprep.subr.bf16.mxu0 0
  %258 = vmatpush1.bf16.msra.mxu0 %v175
  %259 = vmatprep.subr.bf16.mxu0 0
  %260 = vmatpush1.bf16.msra.mxu0 0
  %261 = vmatprep.subr.bf16.mxu0 0
  %262 = vmatpush1.bf16.msra.mxu0 0
  %263 = vmatprep.subr.bf16.mxu0 0
  %264 = vmatpush1.bf16.msra.mxu0 0
  %265 = vmatprep.subr.bf16.mxu0 0
  %266 = vmatpush1.bf16.msra.mxu0 0
  %267 = vmatprep.subr.bf16.mxu0 0
  %268 = vmatpush1.bf16.msra.mxu0 0
  %269 = vmatprep.subr.bf16.mxu0 0
  %270 = vmatpush1.bf16.msra.mxu0 0
  %271 = vmatprep.subr.bf16.mxu0 0
  %272 = vmatpush1.bf16.msra.mxu0 0
  %273 = vmatprep.subr.bf16.mxu0 0
  %274 = vmatpush1.bf16.msra.mxu0 0
  %275 = vmatprep.mubr.bf16.mxu0 0
  %276 = vmatmul.mubr.bf16.gmra.mrb[0].mxu0 %v70
  %v277 = vpop.f32.mrb[0].mxu0
  %v278 = vadd.f32 %v62, %v277
  %v279 = vpop.f32.mrb[0].mxu0
  %v280 = vpop.f32.mrb[0].mxu0
  %v281 = vadd.f32 %v62, %v280
  %v282 = vpop.f32.mrb[0].mxu0
  %283 = vdwg.mxu0
  %v284 = vpack.c.bf16 %v239, %v235
  %v285 = vpack.c.bf16 %v241, %v237
  %v286 = vpack.c.bf16 %v281, %v278
  %v290 = vunpack.c.l.b16 %v284
  %v291 = vunpack.c.l.b16 %v285
  %v292 = vunpack.c.l.b16 %v286
  %v293 = vunpack.c.h.b16 %v284
  %v294 = vunpack.c.h.b16 %v285
  %v295 = vunpack.c.h.b16 %v286
  %v296 = vpack.c.b16 %v291, %v290
  %v297 = vpack.c.b16 %v292, %v292
  %v298 = vpack.c.b16 %v294, %v293
  %v299 = vpack.c.b16 %v295, %v295
  %304 = vst [vmem:[%s3] sm:$0xff] %v296
  %305 = vst [vmem:[%s3 + $0x8] sm:$0xf] %v297
  %306 = vst [vmem:[%s3 + $0xc] sm:$0xff] %v298
  %307 = vst [vmem:[%s3 + $0x14] sm:$0xf] %v299
  // Predicated region
  $region14: #{model_forward.39} parent=0 // pred_check
    _
  $region15: #{model_forward.39} parent=0 // pred_check_branch
    %309 = sbr.rel (0) target = $region17
  $region16: #{model_forward.39} parent=0 // pred_region
    _
  $region17: #{model_forward.39} parent=0 // pred_fallthru
    _
  // Predicated region
  $region18: #{model_forward.39} parent=0 // pred_check
    _
  $region19: #{model_forward.39} parent=0 // pred_check_branch
    %311 = sbr.rel (0) target = $region21
  $region20: #{model_forward.39} parent=0 // pred_region
    _
  $region21: #{model_forward.39} parent=0 // pred_fallthru
    _

// kernel: model_forward.40
$region0: #{model_forward.40}
  #allocation0 [shape = 'u32[]', space=smem, size = 0x4, offset = 0x4, fixed_abs, tag = 'smem constant byte address 0x4 - core index']
  #allocation1 [shape = 'u32[144,128]{1,0:T(1,128)}', space=vmem, size = 0x12000, scoped, tag = 'internal scratch']
  %s0 = inlined_call_operand.vmem [shape: f32[16,8], index: 0, kind: input, shape index: {}]
  %s1 = inlined_call_operand.vmem [shape: bf16[8,128], index: 1, kind: input, shape index: {}]
  %s2 = inlined_call_operand.vmem [shape: f32[1,128], index: 2, kind: input, shape index: {}]
  %s3 = inlined_call_operand.vmem [shape: bf16[16,128], index: 3, kind: output, shape index: {}]
  %s4 = sld [smem:[#allocation0]]
  $region22: #{model_forward.40} parent=0
    _
  %s6 = ssub.s32 1, %s4
  %s7 = scalar_select 0, %s6, %s4
  // Predicated region
  $region2: #{model_forward.40} parent=0 // pred_check
    _
  $region3: #{model_forward.40} parent=0 // pred_check_branch
    %9 = sbr.rel (0) target = $region5
  $region4: #{model_forward.40} parent=0 // pred_region
    _
  $region5: #{model_forward.40} parent=0 // pred_fallthru
    _
  // Predicated region
  $region6: #{model_forward.40} parent=0 // pred_check
    _
  $region7: #{model_forward.40} parent=0 // pred_check_branch
    %11 = sbr.rel (0) target = $region9
  $region8: #{model_forward.40} parent=0 // pred_region
    _
  $region9: #{model_forward.40} parent=0 // pred_fallthru
    _
  // Predicated region
  $region10: #{model_forward.40} parent=0 // pred_check
    _
  $region11: #{model_forward.40} parent=0 // pred_check_branch
    %13 = sbr.rel (0) target = $region13
  $region12: #{model_forward.40} parent=0 // pred_region
    _
  $region13: #{model_forward.40} parent=0 // pred_fallthru
    _
  %v15 = vld [vmem:[%s0] sm:$0xff]
  %v16 = vld [vmem:[%s0 + $0x8] sm:$0xff]
  %v17 = vpack.c.bf16 %v16, %v15
  %v18 = vld [vmem:[%s1] sm:$0xf]
  %v19 = vld [vmem:[%s2] sm:$0x1]
  %v21 = vlaneseq
  %v22 = vshrl.u32 %v21, 7
  %v23 = vsub.s32 0, %v22
  %v24 = vrot.slane %v19, %v23
  %vm26 = vcmask 64512
  %v28 = vsel %vm26, %v17, 0
  %vm30 = vcmask 1043456
  %v32 = vsel %vm30, %v18, 0
  %34 = vmatprep.subr.bf16.mxu0 0
  %35 = vmatpush1.bf16.msra.mxu0 %v32
  %36 = vmatprep.subr.bf16.mxu0 0
  %37 = vmatpush1.bf16.msra.mxu0 0
  %38 = vmatprep.subr.bf16.mxu0 0
  %39 = vmatpush1.bf16.msra.mxu0 0
  %40 = vmatprep.subr.bf16.mxu0 0
  %41 = vmatpush1.bf16.msra.mxu0 0
  %42 = vmatprep.subr.bf16.mxu0 0
  %43 = vmatpush1.bf16.msra.mxu0 0
  %44 = vmatprep.subr.bf16.mxu0 0
  %45 = vmatpush1.bf16.msra.mxu0 0
  %46 = vmatprep.subr.bf16.mxu0 0
  %47 = vmatpush1.bf16.msra.mxu0 0
  %48 = vmatprep.subr.bf16.mxu0 0
  %49 = vmatpush1.bf16.msra.mxu0 0
  %50 = vmatprep.subr.bf16.mxu0 0
  %51 = vmatpush1.bf16.msra.mxu0 0
  %52 = vmatprep.subr.bf16.mxu0 0
  %53 = vmatpush1.bf16.msra.mxu0 0
  %54 = vmatprep.subr.bf16.mxu0 0
  %55 = vmatpush1.bf16.msra.mxu0 0
  %56 = vmatprep.subr.bf16.mxu0 0
  %57 = vmatpush1.bf16.msra.mxu0 0
  %58 = vmatprep.subr.bf16.mxu0 0
  %59 = vmatpush1.bf16.msra.mxu0 0
  %60 = vmatprep.subr.bf16.mxu0 0
  %61 = vmatpush1.bf16.msra.mxu0 0
  %62 = vmatprep.subr.bf16.mxu0 0
  %63 = vmatpush1.bf16.msra.mxu0 0
  %64 = vmatprep.subr.bf16.mxu0 0
  %65 = vmatpush1.bf16.msra.mxu0 0
  %66 = vmatprep.mubr.bf16.mxu0 0
  %67 = vmatmul.mubr.bf16.gmra.mrb[0].mxu0 %v28
  %v68 = vpop.f32.mrb[0].mxu0
  %v69 = vadd.f32 %v24, %v68
  %v70 = vpop.f32.mrb[0].mxu0
  %v71 = vpop.f32.mrb[0].mxu0
  %v72 = vadd.f32 %v24, %v71
  %v73 = vpop.f32.mrb[0].mxu0
  %74 = vdwg.mxu0
  %v75 = vpack.c.bf16 %v72, %v69
  %v77 = vunpack.c.l.b16 %v75
  %v78 = vunpack.c.h.b16 %v75
  %v79 = vpack.c.b16 %v77, %v77
  %v80 = vpack.c.b16 %v78, %v78
  %83 = vst [vmem:[%s3] sm:$0xf] %v79
  %84 = vst [vmem:[%s3 + $0x4] sm:$0xf] %v80
  // Predicated region
  $region14: #{model_forward.40} parent=0 // pred_check
    _
  $region15: #{model_forward.40} parent=0 // pred_check_branch
    %86 = sbr.rel (0) target = $region17
  $region16: #{model_forward.40} parent=0 // pred_region
    _
  $region17: #{model_forward.40} parent=0 // pred_fallthru
    _
  // Predicated region
  $region18: #{model_forward.40} parent=0 // pred_check
    _
  $region19: #{model_forward.40} parent=0 // pred_check_branch
    %88 = sbr.rel (0) target = $region21
  $region20: #{model_forward.40} parent=0 // pred_region
    _
  $region21: #{model_forward.40} parent=0 // pred_fallthru
    _

// kernel: model_forward.49
$region0: #{model_forward.49}
  #allocation0 [shape = 'u32[]', space=smem, size = 0x4, offset = 0x4, fixed_abs, tag = 'smem constant byte address 0x4 - core index']
  #allocation1 [shape = 'u32[144,128]{1,0:T(1,128)}', space=vmem, size = 0x12000, scoped, tag = 'internal scratch']
  %s0 = inlined_call_operand.vmem [shape: bf16[16,128], index: 0, kind: input, shape index: {}]
  %s1 = inlined_call_operand.vmem [shape: bf16[128,128], index: 1, kind: input, shape index: {}]
  %s2 = inlined_call_operand.vmem [shape: f32[1,128], index: 2, kind: input, shape index: {}]
  %s3 = inlined_call_operand.vmem [shape: bf16[16,128], index: 3, kind: output, shape index: {0}]
  %s4 = inlined_call_operand.vmem [shape: f32[8,128], index: 4, kind: output, shape index: {1}]
  %5 = xla_tuple %s3, %s4
  %s6 = sld [smem:[#allocation0]]
  $region34: #{model_forward.49} parent=0
    _
  %s8 = ssub.s32 1, %s6
  %s9 = scalar_select 0, %s8, %s6
  // Predicated region
  $region2: #{model_forward.49} parent=0 // pred_check
    _
  $region3: #{model_forward.49} parent=0 // pred_check_branch
    %11 = sbr.rel (0) target = $region5
  $region4: #{model_forward.49} parent=0 // pred_region
    _
  $region5: #{model_forward.49} parent=0 // pred_fallthru
    _
  // Predicated region
  $region6: #{model_forward.49} parent=0 // pred_check
    _
  $region7: #{model_forward.49} parent=0 // pred_check_branch
    %13 = sbr.rel (0) target = $region9
  $region8: #{model_forward.49} parent=0 // pred_region
    _
  $region9: #{model_forward.49} parent=0 // pred_fallthru
    _
  // Predicated region
  $region10: #{model_forward.49} parent=0 // pred_check
    _
  $region11: #{model_forward.49} parent=0 // pred_check_branch
    %15 = sbr.rel (0) target = $region13
  $region12: #{model_forward.49} parent=0 // pred_region
    _
  $region13: #{model_forward.49} parent=0 // pred_fallthru
    _
  %v17 = vld [vmem:[%s0] sm:$0xf]
  %v18 = vld [vmem:[%s0 + $0x4] sm:$0xf]
  %v19 = vld [vmem:[%s1] sm:$0xf]
  %v20 = vld [vmem:[%s1 + $0x4] sm:$0xf]
  %v21 = vld [vmem:[%s1 + $0x8] sm:$0xf]
  %v22 = vld [vmem:[%s1 + $0xc] sm:$0xf]
  %v23 = vld [vmem:[%s1 + $0x10] sm:$0xf]
  %v24 = vld [vmem:[%s1 + $0x14] sm:$0xf]
  %v25 = vld [vmem:[%s1 + $0x18] sm:$0xf]
  %v26 = vld [vmem:[%s1 + $0x1c] sm:$0xf]
  %v27 = vld [vmem:[%s1 + $0x20] sm:$0xf]
  %v28 = vld [vmem:[%s1 + $0x24] sm:$0xf]
  %v29 = vld [vmem:[%s1 + $0x28] sm:$0xf]
  %v30 = vld [vmem:[%s1 + $0x2c] sm:$0xf]
  %v31 = vld [vmem:[%s1 + $0x30] sm:$0xf]
  %v32 = vld [vmem:[%s1 + $0x34] sm:$0xf]
  %v33 = vld [vmem:[%s1 + $0x38] sm:$0xf]
  %v34 = vld [vmem:[%s1 + $0x3c] sm:$0xf]
  %v35 = vld [vmem:[%s2] sm:$0x1]
  %v37 = vlaneseq
  %v38 = vshrl.u32 %v37, 7
  %v39 = vsub.s32 0, %v38
  %v40 = vrot.slane %v35, %v39
  %v44 = vunpack.c.l.b16 %v17
  %v45 = vunpack.c.l.b16 %v18
  %v46 = vpack.c.b16 %v45, %v44
  %v64 = vunpack.c.l.b16 %v19
  %v65 = vunpack.c.l.b16 %v20
  %v66 = vunpack.c.l.b16 %v21
  %v67 = vunpack.c.l.b16 %v22
  %v68 = vunpack.c.l.b16 %v23
  %v69 = vunpack.c.l.b16 %v24
  %v70 = vunpack.c.l.b16 %v25
  %v71 = vunpack.c.l.b16 %v26
  %v72 = vunpack.c.l.b16 %v27
  %v73 = vunpack.c.l.b16 %v28
  %v74 = vunpack.c.l.b16 %v29
  %v75 = vunpack.c.l.b16 %v30
  %v76 = vunpack.c.l.b16 %v31
  %v77 = vunpack.c.l.b16 %v32
  %v78 = vunpack.c.l.b16 %v33
  %v79 = vunpack.c.l.b16 %v34
  %v80 = vpack.c.b16 %v65, %v64
  %v81 = vpack.c.b16 %v67, %v66
  %v82 = vpack.c.b16 %v69, %v68
  %v83 = vpack.c.b16 %v71, %v70
  %v84 = vpack.c.b16 %v73, %v72
  %v85 = vpack.c.b16 %v75, %v74
  %v86 = vpack.c.b16 %v77, %v76
  %v87 = vpack.c.b16 %v79, %v78
  %96 = vmatprep.subr.bf16.mxu0 0
  %97 = vmatpush1.bf16.msra.mxu0 %v80
  %98 = vmatprep.subr.bf16.mxu0 0
  %99 = vmatpush1.bf16.msra.mxu0 %v81
  %100 = vmatprep.subr.bf16.mxu0 0
  %101 = vmatpush1.bf16.msra.mxu0 %v82
  %102 = vmatprep.subr.bf16.mxu0 0
  %103 = vmatpush1.bf16.msra.mxu0 %v83
  %104 = vmatprep.subr.bf16.mxu0 0
  %105 = vmatpush1.bf16.msra.mxu0 %v84
  %106 = vmatprep.subr.bf16.mxu0 0
  %107 = vmatpush1.bf16.msra.mxu0 %v85
  %108 = vmatprep.subr.bf16.mxu0 0
  %109 = vmatpush1.bf16.msra.mxu0 %v86
  %110 = vmatprep.subr.bf16.mxu0 0
  %111 = vmatpush1.bf16.msra.mxu0 %v87
  %112 = vmatprep.subr.bf16.mxu0 0
  %113 = vmatpush1.bf16.msra.mxu0 0
  %114 = vmatprep.subr.bf16.mxu0 0
  %115 = vmatpush1.bf16.msra.mxu0 0
  %116 = vmatprep.subr.bf16.mxu0 0
  %117 = vmatpush1.bf16.msra.mxu0 0
  %118 = vmatprep.subr.bf16.mxu0 0
  %119 = vmatpush1.bf16.msra.mxu0 0
  %120 = vmatprep.subr.bf16.mxu0 0
  %121 = vmatpush1.bf16.msra.mxu0 0
  %122 = vmatprep.subr.bf16.mxu0 0
  %123 = vmatpush1.bf16.msra.mxu0 0
  %124 = vmatprep.subr.bf16.mxu0 0
  %125 = vmatpush1.bf16.msra.mxu0 0
  %126 = vmatprep.subr.bf16.mxu0 0
  %127 = vmatpush1.bf16.msra.mxu0 0
  %128 = vmatprep.mubr.bf16.mxu0 0
  %129 = vmatmul.mubr.bf16.gmra.mrb[0].mxu0 %v46
  %v130 = vpop.f32.mrb[0].mxu0
  %v131 = vadd.f32 %v40, %v130
  %v132 = vpop.f32.mrb[0].mxu0
  %v133 = vpop.f32.mrb[0].mxu0
  %v134 = vadd.f32 %v40, %v133
  %v135 = vpop.f32.mrb[0].mxu0
  %136 = vdwg.mxu0
  %s137 = smul.u32 0, 16
  %v138 = vlaneseq
  %v139 = vshrl.u32 %v138, 7
  %v140 = vadd.s32 %v139, 8
  %v141 = vstv %s137
  %v142 = vadd.s32 %v139, %v141
  %v143 = vadd.s32 %v140, %v141
  %vm144 = vcmp.lt.s32.totalorder %v142, 16
  %vm145 = vcmp.lt.s32.totalorder %v143, 16
  %v146 = vsel %vm144, %v131, 0.0
  %v147 = vsel %vm145, %v134, 0.0
  %v148 = vadd.f32 %v146, %v147
  %v149 = vrot.slane %v148, 4
  %v150 = vadd.f32 %v148, %v149
  %v151 = vrot.slane %v150, 2
  %v152 = vadd.f32 %v150, %v151
  %v153 = vrot.slane %v152, 1
  %v154 = vadd.f32 %v152, %v153
  %v155 = vmul.f32 %v146, %v146
  %v156 = vmul.f32 %v147, %v147
  %v157 = vadd.f32 %v155, %v156
  %v158 = vrot.slane %v157, 4
  %v159 = vadd.f32 %v157, %v158
  %v160 = vrot.slane %v159, 2
  %v161 = vadd.f32 %v159, %v160
  %v162 = vrot.slane %v161, 1
  %v163 = vadd.f32 %v161, %v162
  %vm164 = vcmp.eq.s32.totalorder %v139, 0
  %v165 = vsel %vm164, %v154, 0.0
  %vm166 = vcmp.eq.s32.totalorder %v139, 1
  %v167 = vsel %vm166, %v163, 0.0
  %v168 = vadd.f32 %v165, %v167
  %p169 = scmp.eq.s32.totalorder 0, 0
  // Predicated region
  $region14: #{model_forward.49} parent=0 // pred_check
    %p170 = pneg %p169
  $region15: #{model_forward.49} parent=0 // pred_check_branch
    %172 = sbr.rel (%p170) target = $region17
  $region16: #{model_forward.49} parent=0 // pred_region
    %173 = vst [vmem:[%s4] sm:$0xff] 0.0
  $region17: #{model_forward.49} parent=0 // pred_fallthru
    _
  %v174 = vld [vmem:[%s4] sm:$0xff]
  %v175 = vadd.f32 %v174, %v168
  %176 = vst [vmem:[%s4] sm:$0xff] %v175
  %v177 = vpack.c.bf16 %v134, %v131
  %v179 = vunpack.c.l.b16 %v177
  %v180 = vunpack.c.h.b16 %v177
  %v181 = vpack.c.b16 %v179, %v179
  %v182 = vpack.c.b16 %v180, %v180
  %185 = vst [vmem:[%s3] sm:$0xf] %v181
  %186 = vst [vmem:[%s3 + $0x4] sm:$0xf] %v182
  // Predicated region
  $region18: #{model_forward.49} parent=0 // pred_check
    _
  $region19: #{model_forward.49} parent=0 // pred_check_branch
    %188 = sbr.rel (0) target = $region21
  $region20: #{model_forward.49} parent=0 // pred_region
    _
  $region21: #{model_forward.49} parent=0 // pred_fallthru
    _
  // Predicated region
  $region22: #{model_forward.49} parent=0 // pred_check
    _
  $region23: #{model_forward.49} parent=0 // pred_check_branch
    %190 = sbr.rel (0) target = $region25
  $region24: #{model_forward.49} parent=0 // pred_region
    _
  $region25: #{model_forward.49} parent=0 // pred_fallthru
    _
  // Predicated region
  $region26: #{model_forward.49} parent=0 // pred_check
    _
  $region27: #{model_forward.49} parent=0 // pred_check_branch
    %192 = sbr.rel (0) target = $region29
  $region28: #{model_forward.49} parent=0 // pred_region
    _
  $region29: #{model_forward.49} parent=0 // pred_fallthru
    _
  // Predicated region
  $region30: #{model_forward.49} parent=0 // pred_check
    _
  $region31: #{model_forward.49} parent=0 // pred_check_branch
    %194 = sbr.rel (0) target = $region33
  $region32: #{model_forward.49} parent=0 // pred_region
    _
  $region33: #{model_forward.49} parent=0 // pred_fallthru
    _

// kernel: neg.10
$region0: #{neg.10}
  #allocation0 [shape = 's32[1]{0}', space=sflag, size = 0x4, scoped, tag = 'scoped memory for neg.10']
  %s0 = inlined_call_operand.vmem [shape: f32[2,32,8], index: 0, kind: input, shape index: {}]
  %s1 = inlined_call_operand.vmem [shape: f32[2,32,8], index: 1, kind: output, shape index: {}]
  %v2 = vld [vmem:[%s0] sm:$0xff]
  %3 = xla_tuple %v2
  %4 = xla_tuple %3
  %v5 = vxor.u32 %v2, 2147483648
  %6 = xla_tuple %v5
  %7 = vst [vmem:[%s1] sm:$0xff] %v5
  %s8 = scalar_lea.vmem %s0, 8
  %v9 = vld [vmem:[%s8] sm:$0xff]
  %10 = xla_tuple %v9
  %11 = xla_tuple %10
  %v12 = vxor.u32 %v9, 2147483648
  %13 = xla_tuple %v12
  %s14 = scalar_lea.vmem %s1, 8
  %15 = vst [vmem:[%s14] sm:$0xff] %v12

// kernel: model_forward.41
$region0: #{model_forward.41}
  #allocation0 [shape = 'u32[]', space=smem, size = 0x4, offset = 0x4, fixed_abs, tag = 'smem constant byte address 0x4 - core index']
  #allocation1 [shape = 'u32[144,128]{1,0:T(1,128)}', space=vmem, size = 0x12000, scoped, tag = 'internal scratch']
  %s0 = inlined_call_operand.vmem [shape: bf16[16,8,128], index: 0, kind: input, shape index: {}]
  %s1 = inlined_call_operand.vmem [shape: bf16[16,8,128], index: 1, kind: input, shape index: {}]
  %s2 = inlined_call_operand.vmem [shape: bf16[16,8,128], index: 2, kind: input, shape index: {}]
  %s3 = inlined_call_operand.vmem [shape: f32[1,128], index: 3, kind: input, shape index: {}]
  %s4 = inlined_call_operand.vmem [shape: bf16[128,128], index: 4, kind: input, shape index: {}]
  %s5 = inlined_call_operand.vmem [shape: f32[1,128], index: 5, kind: input, shape index: {}]
  %s6 = inlined_call_operand.vmem [shape: bf16[128,128], index: 6, kind: input, shape index: {}]
  %s7 = inlined_call_operand.vmem [shape: f32[1,128], index: 7, kind: input, shape index: {}]
  %s8 = inlined_call_operand.vmem [shape: bf16[128,128], index: 8, kind: input, shape index: {}]
  %s9 = inlined_call_operand.vmem [shape: f32[1,128], index: 9, kind: input, shape index: {}]
  %s10 = inlined_call_operand.vmem [shape: bf16[16,128], index: 10, kind: output, shape index: {}]
  %s11 = sld [smem:[#allocation0]]
  $region50: #{model_forward.41} parent=0
    _
  %s13 = ssub.s32 1, %s11
  %s14 = scalar_select 0, %s13, %s11
  // Predicated region
  $region2: #{model_forward.41} parent=0 // pred_check
    _
  $region3: #{model_forward.41} parent=0 // pred_check_branch
    %16 = sbr.rel (0) target = $region5
  $region4: #{model_forward.41} parent=0 // pred_region
    _
  $region5: #{model_forward.41} parent=0 // pred_fallthru
    _
  // Predicated region
  $region6: #{model_forward.41} parent=0 // pred_check
    _
  $region7: #{model_forward.41} parent=0 // pred_check_branch
    %18 = sbr.rel (0) target = $region9
  $region8: #{model_forward.41} parent=0 // pred_region
    _
  $region9: #{model_forward.41} parent=0 // pred_fallthru
    _
  // Predicated region
  $region10: #{model_forward.41} parent=0 // pred_check
    _
  $region11: #{model_forward.41} parent=0 // pred_check_branch
    %20 = sbr.rel (0) target = $region13
  $region12: #{model_forward.41} parent=0 // pred_region
    _
  $region13: #{model_forward.41} parent=0 // pred_fallthru
    _
  // Predicated region
  $region14: #{model_forward.41} parent=0 // pred_check
    _
  $region15: #{model_forward.41} parent=0 // pred_check_branch
    %22 = sbr.rel (0) target = $region17
  $region16: #{model_forward.41} parent=0 // pred_region
    _
  $region17: #{model_forward.41} parent=0 // pred_fallthru
    _
  // Predicated region
  $region18: #{model_forward.41} parent=0 // pred_check
    _
  $region19: #{model_forward.41} parent=0 // pred_check_branch
    %24 = sbr.rel (0) target = $region21
  $region20: #{model_forward.41} parent=0 // pred_region
    _
  $region21: #{model_forward.41} parent=0 // pred_fallthru
    _
  // Predicated region
  $region22: #{model_forward.41} parent=0 // pred_check
    _
  $region23: #{model_forward.41} parent=0 // pred_check_branch
    %26 = sbr.rel (0) target = $region25
  $region24: #{model_forward.41} parent=0 // pred_region
    _
  $region25: #{model_forward.41} parent=0 // pred_fallthru
    _
  // Predicated region
  $region26: #{model_forward.41} parent=0 // pred_check
    _
  $region27: #{model_forward.41} parent=0 // pred_check_branch
    %28 = sbr.rel (0) target = $region29
  $region28: #{model_forward.41} parent=0 // pred_region
    _
  $region29: #{model_forward.41} parent=0 // pred_fallthru
    _
  // Predicated region
  $region30: #{model_forward.41} parent=0 // pred_check
    _
  $region31: #{model_forward.41} parent=0 // pred_check_branch
    %30 = sbr.rel (0) target = $region33
  $region32: #{model_forward.41} parent=0 // pred_region
    _
  $region33: #{model_forward.41} parent=0 // pred_fallthru
    _
  // Predicated region
  $region34: #{model_forward.41} parent=0 // pred_check
    _
  $region35: #{model_forward.41} parent=0 // pred_check_branch
    %32 = sbr.rel (0) target = $region37
  $region36: #{model_forward.41} parent=0 // pred_region
    _
  $region37: #{model_forward.41} parent=0 // pred_fallthru
    _
  // Predicated region
  $region38: #{model_forward.41} parent=0 // pred_check
    _
  $region39: #{model_forward.41} parent=0 // pred_check_branch
    %34 = sbr.rel (0) target = $region41
  $region40: #{model_forward.41} parent=0 // pred_region
    _
  $region41: #{model_forward.41} parent=0 // pred_fallthru
    _
  %v36 = vld [vmem:[%s0] sm:$0xf]
  %v37 = vld [vmem:[%s0 + $0x4] sm:$0xf]
  %v38 = vld [vmem:[%s0 + $0x8] sm:$0xf]
  %v39 = vld [vmem:[%s0 + $0xc] sm:$0xf]
  %v40 = vld [vmem:[%s0 + $0x10] sm:$0xf]
  %v41 = vld [vmem:[%s0 + $0x14] sm:$0xf]
  %v42 = vld [vmem:[%s0 + $0x18] sm:$0xf]
  %v43 = vld [vmem:[%s0 + $0x1c] sm:$0xf]
  %v44 = vld [vmem:[%s0 + $0x20] sm:$0xf]
  %v45 = vld [vmem:[%s0 + $0x24] sm:$0xf]
  %v46 = vld [vmem:[%s0 + $0x28] sm:$0xf]
  %v47 = vld [vmem:[%s0 + $0x2c] sm:$0xf]
  %v48 = vld [vmem:[%s0 + $0x30] sm:$0xf]
  %v49 = vld [vmem:[%s0 + $0x34] sm:$0xf]
  %v50 = vld [vmem:[%s0 + $0x38] sm:$0xf]
  %v51 = vld [vmem:[%s0 + $0x3c] sm:$0xf]
  %v52 = vunpack.c.l.bf16 %v36
  %v53 = vunpack.c.l.bf16 %v37
  %v54 = vunpack.c.l.bf16 %v38
  %v55 = vunpack.c.l.bf16 %v39
  %v56 = vunpack.c.l.bf16 %v40
  %v57 = vunpack.c.l.bf16 %v41
  %v58 = vunpack.c.l.bf16 %v42
  %v59 = vunpack.c.l.bf16 %v43
  %v60 = vunpack.c.l.bf16 %v44
  %v61 = vunpack.c.l.bf16 %v45
  %v62 = vunpack.c.l.bf16 %v46
  %v63 = vunpack.c.l.bf16 %v47
  %v64 = vunpack.c.l.bf16 %v48
  %v65 = vunpack.c.l.bf16 %v49
  %v66 = vunpack.c.l.bf16 %v50
  %v67 = vunpack.c.l.bf16 %v51
  %v68 = vld [vmem:[%s3] sm:$0x1]
  %v70 = vlaneseq
  %v71 = vshrl.u32 %v70, 7
  %v72 = vsub.s32 0, %v71
  %v73 = vrot.slane %v68, %v72
  %v75 = vadd.f32 %v52, %v73
  %v76 = vadd.f32 %v53, %v73
  %v77 = vadd.f32 %v54, %v73
  %v78 = vadd.f32 %v55, %v73
  %v79 = vadd.f32 %v56, %v73
  %v80 = vadd.f32 %v57, %v73
  %v81 = vadd.f32 %v58, %v73
  %v82 = vadd.f32 %v59, %v73
  %v83 = vadd.f32 %v60, %v73
  %v84 = vadd.f32 %v61, %v73
  %v85 = vadd.f32 %v62, %v73
  %v86 = vadd.f32 %v63, %v73
  %v87 = vadd.f32 %v64, %v73
  %v88 = vadd.f32 %v65, %v73
  %v89 = vadd.f32 %v66, %v73
  %v90 = vadd.f32 %v67, %v73
  %v91 = vmax.f32 %v75, 0.0
  %v92 = vmax.f32 %v76, 0.0
  %v93 = vmax.f32 %v77, 0.0
  %v94 = vmax.f32 %v78, 0.0
  %v95 = vmax.f32 %v79, 0.0
  %v96 = vmax.f32 %v80, 0.0
  %v97 = vmax.f32 %v81, 0.0
  %v98 = vmax.f32 %v82, 0.0
  %v99 = vmax.f32 %v83, 0.0
  %v100 = vmax.f32 %v84, 0.0
  %v101 = vmax.f32 %v85, 0.0
  %v102 = vmax.f32 %v86, 0.0
  %v103 = vmax.f32 %v87, 0.0
  %v104 = vmax.f32 %v88, 0.0
  %v105 = vmax.f32 %v89, 0.0
  %v106 = vmax.f32 %v90, 0.0
  %v107 = vpack.c.bf16 %v92, %v91
  %v108 = vpack.c.bf16 %v94, %v93
  %v109 = vpack.c.bf16 %v96, %v95
  %v110 = vpack.c.bf16 %v98, %v97
  %v111 = vpack.c.bf16 %v100, %v99
  %v112 = vpack.c.bf16 %v102, %v101
  %v113 = vpack.c.bf16 %v104, %v103
  %v114 = vpack.c.bf16 %v106, %v105
  %v115 = vld [vmem:[%s4] sm:$0xf]
  %v116 = vld [vmem:[%s4 + $0x4] sm:$0xf]
  %v117 = vld [vmem:[%s4 + $0x8] sm:$0xf]
  %v118 = vld [vmem:[%s4 + $0xc] sm:$0xf]
  %v119 = vld [vmem:[%s4 + $0x10] sm:$0xf]
  %v120 = vld [vmem:[%s4 + $0x14] sm:$0xf]
  %v121 = vld [vmem:[%s4 + $0x18] sm:$0xf]
  %v122 = vld [vmem:[%s4 + $0x1c] sm:$0xf]
  %v123 = vld [vmem:[%s4 + $0x20] sm:$0xf]
  %v124 = vld [vmem:[%s4 + $0x24] sm:$0xf]
  %v125 = vld [vmem:[%s4 + $0x28] sm:$0xf]
  %v126 = vld [vmem:[%s4 + $0x2c] sm:$0xf]
  %v127 = vld [vmem:[%s4 + $0x30] sm:$0xf]
  %v128 = vld [vmem:[%s4 + $0x34] sm:$0xf]
  %v129 = vld [vmem:[%s4 + $0x38] sm:$0xf]
  %v130 = vld [vmem:[%s4 + $0x3c] sm:$0xf]
  %v131 = vld [vmem:[%s5] sm:$0x1]
  %v133 = vlaneseq
  %v134 = vshrl.u32 %v133, 7
  %v135 = vsub.s32 0, %v134
  %v136 = vrot.slane %v131, %v135
  %v154 = vunpack.c.l.b16 %v115
  %v155 = vunpack.c.l.b16 %v116
  %v156 = vunpack.c.l.b16 %v117
  %v157 = vunpack.c.l.b16 %v118
  %v158 = vunpack.c.l.b16 %v119
  %v159 = vunpack.c.l.b16 %v120
  %v160 = vunpack.c.l.b16 %v121
  %v161 = vunpack.c.l.b16 %v122
  %v162 = vunpack.c.l.b16 %v123
  %v163 = vunpack.c.l.b16 %v124
  %v164 = vunpack.c.l.b16 %v125
  %v165 = vunpack.c.l.b16 %v126
  %v166 = vunpack.c.l.b16 %v127
  %v167 = vunpack.c.l.b16 %v128
  %v168 = vunpack.c.l.b16 %v129
  %v169 = vunpack.c.l.b16 %v130
  %v170 = vpack.c.b16 %v155, %v154
  %v171 = vpack.c.b16 %v157, %v156
  %v172 = vpack.c.b16 %v159, %v158
  %v173 = vpack.c.b16 %v161, %v160
  %v174 = vpack.c.b16 %v163, %v162
  %v175 = vpack.c.b16 %v165, %v164
  %v176 = vpack.c.b16 %v167, %v166
  %v177 = vpack.c.b16 %v169, %v168
  %186 = vmatprep.subr.bf16.mxu0 0
  %187 = vmatpush1.bf16.msra.mxu0 %v170
  %188 = vmatprep.subr.bf16.mxu0 0
  %189 = vmatpush1.bf16.msra.mxu0 %v171
  %190 = vmatprep.subr.bf16.mxu0 0
  %191 = vmatpush1.bf16.msra.mxu0 %v172
  %192 = vmatprep.subr.bf16.mxu0 0
  %193 = vmatpush1.bf16.msra.mxu0 %v173
  %194 = vmatprep.subr.bf16.mxu0 0
  %195 = vmatpush1.bf16.msra.mxu0 %v174
  %196 = vmatprep.subr.bf16.mxu0 0
  %197 = vmatpush1.bf16.msra.mxu0 %v175
  %198 = vmatprep.subr.bf16.mxu0 0
  %199 = vmatpush1.bf16.msra.mxu0 %v176
  %200 = vmatprep.subr.bf16.mxu0 0
  %201 = vmatpush1.bf16.msra.mxu0 %v177
  %202 = vmatprep.subr.bf16.mxu0 0
  %203 = vmatpush1.bf16.msra.mxu0 0
  %204 = vmatprep.subr.bf16.mxu0 0
  %205 = vmatpush1.bf16.msra.mxu0 0
  %206 = vmatprep.subr.bf16.mxu0 0
  %207 = vmatpush1.bf16.msra.mxu0 0
  %208 = vmatprep.subr.bf16.mxu0 0
  %209 = vmatpush1.bf16.msra.mxu0 0
  %210 = vmatprep.subr.bf16.mxu0 0
  %211 = vmatpush1.bf16.msra.mxu0 0
  %212 = vmatprep.subr.bf16.mxu0 0
  %213 = vmatpush1.bf16.msra.mxu0 0
  %214 = vmatprep.subr.bf16.mxu0 0
  %215 = vmatpush1.bf16.msra.mxu0 0
  %216 = vmatprep.subr.bf16.mxu0 0
  %217 = vmatpush1.bf16.msra.mxu0 0
  %218 = vmatprep.mubr.bf16.mxu0 0
  %219 = vmatmul.mubr.bf16.gmra.mrb[0].mxu0 %v107
  %v220 = vpop.f32.mrb[0].mxu0
  %v221 = vadd.f32 %v136, %v220
  %v222 = vpop.f32.mrb[0].mxu0
  %v223 = vpop.f32.mrb[0].mxu0
  %v224 = vadd.f32 %v136, %v223
  %v225 = vpop.f32.mrb[0].mxu0
  %226 = vmatprep.mubr.bf16.mxu0 0
  %227 = vmatmul.mubr.bf16.gmra.mrb[0].mxu0 %v108
  %v228 = vpop.f32.mrb[0].mxu0
  %v229 = vadd.f32 %v136, %v228
  %v230 = vpop.f32.mrb[0].mxu0
  %v231 = vpop.f32.mrb[0].mxu0
  %v232 = vadd.f32 %v136, %v231
  %v233 = vpop.f32.mrb[0].mxu0
  %234 = vmatprep.mubr.bf16.mxu0 0
  %235 = vmatmul.mubr.bf16.gmra.mrb[0].mxu0 %v109
  %v236 = vpop.f32.mrb[0].mxu0
  %v237 = vadd.f32 %v136, %v236
  %v238 = vpop.f32.mrb[0].mxu0
  %v239 = vpop.f32.mrb[0].mxu0
  %v240 = vadd.f32 %v136, %v239
  %v241 = vpop.f32.mrb[0].mxu0
  %242 = vmatprep.mubr.bf16.mxu0 0
  %243 = vmatmul.mubr.bf16.gmra.mrb[0].mxu0 %v110
  %v244 = vpop.f32.mrb[0].mxu0
  %v245 = vadd.f32 %v136, %v244
  %v246 = vpop.f32.mrb[0].mxu0
  %v247 = vpop.f32.mrb[0].mxu0
  %v248 = vadd.f32 %v136, %v247
  %v249 = vpop.f32.mrb[0].mxu0
  %250 = vmatprep.mubr.bf16.mxu0 0
  %251 = vmatmul.mubr.bf16.gmra.mrb[0].mxu0 %v111
  %v252 = vpop.f32.mrb[0].mxu0
  %v253 = vadd.f32 %v136, %v252
  %v254 = vpop.f32.mrb[0].mxu0
  %v255 = vpop.f32.mrb[0].mxu0
  %v256 = vadd.f32 %v136, %v255
  %v257 = vpop.f32.mrb[0].mxu0
  %258 = vmatprep.mubr.bf16.mxu0 0
  %259 = vmatmul.mubr.bf16.gmra.mrb[0].mxu0 %v112
  %v260 = vpop.f32.mrb[0].mxu0
  %v261 = vadd.f32 %v136, %v260
  %v262 = vpop.f32.mrb[0].mxu0
  %v263 = vpop.f32.mrb[0].mxu0
  %v264 = vadd.f32 %v136, %v263
  %v265 = vpop.f32.mrb[0].mxu0
  %266 = vmatprep.mubr.bf16.mxu0 0
  %267 = vmatmul.mubr.bf16.gmra.mrb[0].mxu0 %v113
  %v268 = vpop.f32.mrb[0].mxu0
  %v269 = vadd.f32 %v136, %v268
  %v270 = vpop.f32.mrb[0].mxu0
  %v271 = vpop.f32.mrb[0].mxu0
  %v272 = vadd.f32 %v136, %v271
  %v273 = vpop.f32.mrb[0].mxu0
  %274 = vmatprep.mubr.bf16.mxu0 0
  %275 = vmatmul.mubr.bf16.gmra.mrb[0].mxu0 %v114
  %v276 = vpop.f32.mrb[0].mxu0
  %v277 = vadd.f32 %v136, %v276
  %v278 = vpop.f32.mrb[0].mxu0
  %v279 = vpop.f32.mrb[0].mxu0
  %v280 = vadd.f32 %v136, %v279
  %v281 = vpop.f32.mrb[0].mxu0
  %282 = vdwg.mxu0
  %v283 = vmax.f32 %v221, 0.0
  %v284 = vmax.f32 %v224, 0.0
  %v285 = vmax.f32 %v229, 0.0
  %v286 = vmax.f32 %v232, 0.0
  %v287 = vmax.f32 %v237, 0.0
  %v288 = vmax.f32 %v240, 0.0
  %v289 = vmax.f32 %v245, 0.0
  %v290 = vmax.f32 %v248, 0.0
  %v291 = vmax.f32 %v253, 0.0
  %v292 = vmax.f32 %v256, 0.0
  %v293 = vmax.f32 %v261, 0.0
  %v294 = vmax.f32 %v264, 0.0
  %v295 = vmax.f32 %v269, 0.0
  %v296 = vmax.f32 %v272, 0.0
  %v297 = vmax.f32 %v277, 0.0
  %v298 = vmax.f32 %v280, 0.0
  %v299 = vld [vmem:[%s1] sm:$0xf]
  %v300 = vld [vmem:[%s1 + $0x4] sm:$0xf]
  %v301 = vld [vmem:[%s1 + $0x8] sm:$0xf]
  %v302 = vld [vmem:[%s1 + $0xc] sm:$0xf]
  %v303 = vld [vmem:[%s1 + $0x10] sm:$0xf]
  %v304 = vld [vmem:[%s1 + $0x14] sm:$0xf]
  %v305 = vld [vmem:[%s1 + $0x18] sm:$0xf]
  %v306 = vld [vmem:[%s1 + $0x1c] sm:$0xf]
  %v307 = vld [vmem:[%s1 + $0x20] sm:$0xf]
  %v308 = vld [vmem:[%s1 + $0x24] sm:$0xf]
  %v309 = vld [vmem:[%s1 + $0x28] sm:$0xf]
  %v310 = vld [vmem:[%s1 + $0x2c] sm:$0xf]
  %v311 = vld [vmem:[%s1 + $0x30] sm:$0xf]
  %v312 = vld [vmem:[%s1 + $0x34] sm:$0xf]
  %v313 = vld [vmem:[%s1 + $0x38] sm:$0xf]
  %v314 = vld [vmem:[%s1 + $0x3c] sm:$0xf]
  %v315 = vunpack.c.l.bf16 %v299
  %v316 = vunpack.c.l.bf16 %v300
  %v317 = vunpack.c.l.bf16 %v301
  %v318 = vunpack.c.l.bf16 %v302
  %v319 = vunpack.c.l.bf16 %v303
  %v320 = vunpack.c.l.bf16 %v304
  %v321 = vunpack.c.l.bf16 %v305
  %v322 = vunpack.c.l.bf16 %v306
  %v323 = vunpack.c.l.bf16 %v307
  %v324 = vunpack.c.l.bf16 %v308
  %v325 = vunpack.c.l.bf16 %v309
  %v326 = vunpack.c.l.bf16 %v310
  %v327 = vunpack.c.l.bf16 %v311
  %v328 = vunpack.c.l.bf16 %v312
  %v329 = vunpack.c.l.bf16 %v313
  %v330 = vunpack.c.l.bf16 %v314
  %v331 = vadd.f32 %v315, %v283
  %v332 = vadd.f32 %v316, %v284
  %v333 = vadd.f32 %v317, %v285
  %v334 = vadd.f32 %v318, %v286
  %v335 = vadd.f32 %v319, %v287
  %v336 = vadd.f32 %v320, %v288
  %v337 = vadd.f32 %v321, %v289
  %v338 = vadd.f32 %v322, %v290
  %v339 = vadd.f32 %v323, %v291
  %v340 = vadd.f32 %v324, %v292
  %v341 = vadd.f32 %v325, %v293
  %v342 = vadd.f32 %v326, %v294
  %v343 = vadd.f32 %v327, %v295
  %v344 = vadd.f32 %v328, %v296
  %v345 = vadd.f32 %v329, %v297
  %v346 = vadd.f32 %v330, %v298
  %v347 = vpack.c.bf16 %v332, %v331
  %v348 = vpack.c.bf16 %v334, %v333
  %v349 = vpack.c.bf16 %v336, %v335
  %v350 = vpack.c.bf16 %v338, %v337
  %v351 = vpack.c.bf16 %v340, %v339
  %v352 = vpack.c.bf16 %v342, %v341
  %v353 = vpack.c.bf16 %v344, %v343
  %v354 = vpack.c.bf16 %v346, %v345
  %v355 = vld [vmem:[%s6] sm:$0xf]
  %v356 = vld [vmem:[%s6 + $0x4] sm:$0xf]
  %v357 = vld [vmem:[%s6 + $0x8] sm:$0xf]
  %v358 = vld [vmem:[%s6 + $0xc] sm:$0xf]
  %v359 = vld [vmem:[%s6 + $0x10] sm:$0xf]
  %v360 = vld [vmem:[%s6 + $0x14] sm:$0xf]
  %v361 = vld [vmem:[%s6 + $0x18] sm:$0xf]
  %v362 = vld [vmem:[%s6 + $0x1c] sm:$0xf]
  %v363 = vld [vmem:[%s6 + $0x20] sm:$0xf]
  %v364 = vld [vmem:[%s6 + $0x24] sm:$0xf]
  %v365 = vld [vmem:[%s6 + $0x28] sm:$0xf]
  %v366 = vld [vmem:[%s6 + $0x2c] sm:$0xf]
  %v367 = vld [vmem:[%s6 + $0x30] sm:$0xf]
  %v368 = vld [vmem:[%s6 + $0x34] sm:$0xf]
  %v369 = vld [vmem:[%s6 + $0x38] sm:$0xf]
  %v370 = vld [vmem:[%s6 + $0x3c] sm:$0xf]
  %v371 = vld [vmem:[%s7] sm:$0x1]
  %v373 = vlaneseq
  %v374 = vshrl.u32 %v373, 7
  %v375 = vsub.s32 0, %v374
  %v376 = vrot.slane %v371, %v375
  %v394 = vunpack.c.l.b16 %v355
  %v395 = vunpack.c.l.b16 %v356
  %v396 = vunpack.c.l.b16 %v357
  %v397 = vunpack.c.l.b16 %v358
  %v398 = vunpack.c.l.b16 %v359
  %v399 = vunpack.c.l.b16 %v360
  %v400 = vunpack.c.l.b16 %v361
  %v401 = vunpack.c.l.b16 %v362
  %v402 = vunpack.c.l.b16 %v363
  %v403 = vunpack.c.l.b16 %v364
  %v404 = vunpack.c.l.b16 %v365
  %v405 = vunpack.c.l.b16 %v366
  %v406 = vunpack.c.l.b16 %v367
  %v407 = vunpack.c.l.b16 %v368
  %v408 = vunpack.c.l.b16 %v369
  %v409 = vunpack.c.l.b16 %v370
  %v410 = vpack.c.b16 %v395, %v394
  %v411 = vpack.c.b16 %v397, %v396
  %v412 = vpack.c.b16 %v399, %v398
  %v413 = vpack.c.b16 %v401, %v400
  %v414 = vpack.c.b16 %v403, %v402
  %v415 = vpack.c.b16 %v405, %v404
  %v416 = vpack.c.b16 %v407, %v406
  %v417 = vpack.c.b16 %v409, %v408
  %426 = vmatprep.subr.bf16.mxu0 0
  %427 = vmatpush1.bf16.msra.mxu0 %v410
  %428 = vmatprep.subr.bf16.mxu0 0
  %429 = vmatpush1.bf16.msra.mxu0 %v411
  %430 = vmatprep.subr.bf16.mxu0 0
  %431 = vmatpush1.bf16.msra.mxu0 %v412
  %432 = vmatprep.subr.bf16.mxu0 0
  %433 = vmatpush1.bf16.msra.mxu0 %v413
  %434 = vmatprep.subr.bf16.mxu0 0
  %435 = vmatpush1.bf16.msra.mxu0 %v414
  %436 = vmatprep.subr.bf16.mxu0 0
  %437 = vmatpush1.bf16.msra.mxu0 %v415
  %438 = vmatprep.subr.bf16.mxu0 0
  %439 = vmatpush1.bf16.msra.mxu0 %v416
  %440 = vmatprep.subr.bf16.mxu0 0
  %441 = vmatpush1.bf16.msra.mxu0 %v417
  %442 = vmatprep.subr.bf16.mxu0 0
  %443 = vmatpush1.bf16.msra.mxu0 0
  %444 = vmatprep.subr.bf16.mxu0 0
  %445 = vmatpush1.bf16.msra.mxu0 0
  %446 = vmatprep.subr.bf16.mxu0 0
  %447 = vmatpush1.bf16.msra.mxu0 0
  %448 = vmatprep.subr.bf16.mxu0 0
  %449 = vmatpush1.bf16.msra.mxu0 0
  %450 = vmatprep.subr.bf16.mxu0 0
  %451 = vmatpush1.bf16.msra.mxu0 0
  %452 = vmatprep.subr.bf16.mxu0 0
  %453 = vmatpush1.bf16.msra.mxu0 0
  %454 = vmatprep.subr.bf16.mxu0 0
  %455 = vmatpush1.bf16.msra.mxu0 0
  %456 = vmatprep.subr.bf16.mxu0 0
  %457 = vmatpush1.bf16.msra.mxu0 0
  %458 = vmatprep.mubr.bf16.mxu0 0
  %459 = vmatmul.mubr.bf16.gmra.mrb[0].mxu0 %v347
  %v460 = vpop.f32.mrb[0].mxu0
  %v461 = vadd.f32 %v376, %v460
  %v462 = vpop.f32.mrb[0].mxu0
  %v463 = vpop.f32.mrb[0].mxu0
  %v464 = vadd.f32 %v376, %v463
  %v465 = vpop.f32.mrb[0].mxu0
  %466 = vmatprep.mubr.bf16.mxu0 0
  %467 = vmatmul.mubr.bf16.gmra.mrb[0].mxu0 %v348
  %v468 = vpop.f32.mrb[0].mxu0
  %v469 = vadd.f32 %v376, %v468
  %v470 = vpop.f32.mrb[0].mxu0
  %v471 = vpop.f32.mrb[0].mxu0
  %v472 = vadd.f32 %v376, %v471
  %v473 = vpop.f32.mrb[0].mxu0
  %474 = vmatprep.mubr.bf16.mxu0 0
  %475 = vmatmul.mubr.bf16.gmra.mrb[0].mxu0 %v349
  %v476 = vpop.f32.mrb[0].mxu0
  %v477 = vadd.f32 %v376, %v476
  %v478 = vpop.f32.mrb[0].mxu0
  %v479 = vpop.f32.mrb[0].mxu0
  %v480 = vadd.f32 %v376, %v479
  %v481 = vpop.f32.mrb[0].mxu0
  %482 = vmatprep.mubr.bf16.mxu0 0
  %483 = vmatmul.mubr.bf16.gmra.mrb[0].mxu0 %v350
  %v484 = vpop.f32.mrb[0].mxu0
  %v485 = vadd.f32 %v376, %v484
  %v486 = vpop.f32.mrb[0].mxu0
  %v487 = vpop.f32.mrb[0].mxu0
  %v488 = vadd.f32 %v376, %v487
  %v489 = vpop.f32.mrb[0].mxu0
  %490 = vmatprep.mubr.bf16.mxu0 0
  %491 = vmatmul.mubr.bf16.gmra.mrb[0].mxu0 %v351
  %v492 = vpop.f32.mrb[0].mxu0
  %v493 = vadd.f32 %v376, %v492
  %v494 = vpop.f32.mrb[0].mxu0
  %v495 = vpop.f32.mrb[0].mxu0
  %v496 = vadd.f32 %v376, %v495
  %v497 = vpop.f32.mrb[0].mxu0
  %498 = vmatprep.mubr.bf16.mxu0 0
  %499 = vmatmul.mubr.bf16.gmra.mrb[0].mxu0 %v352
  %v500 = vpop.f32.mrb[0].mxu0
  %v501 = vadd.f32 %v376, %v500
  %v502 = vpop.f32.mrb[0].mxu0
  %v503 = vpop.f32.mrb[0].mxu0
  %v504 = vadd.f32 %v376, %v503
  %v505 = vpop.f32.mrb[0].mxu0
  %506 = vmatprep.mubr.bf16.mxu0 0
  %507 = vmatmul.mubr.bf16.gmra.mrb[0].mxu0 %v353
  %v508 = vpop.f32.mrb[0].mxu0
  %v509 = vadd.f32 %v376, %v508
  %v510 = vpop.f32.mrb[0].mxu0
  %v511 = vpop.f32.mrb[0].mxu0
  %v512 = vadd.f32 %v376, %v511
  %v513 = vpop.f32.mrb[0].mxu0
  %514 = vmatprep.mubr.bf16.mxu0 0
  %515 = vmatmul.mubr.bf16.gmra.mrb[0].mxu0 %v354
  %v516 = vpop.f32.mrb[0].mxu0
  %v517 = vadd.f32 %v376, %v516
  %v518 = vpop.f32.mrb[0].mxu0
  %v519 = vpop.f32.mrb[0].mxu0
  %v520 = vadd.f32 %v376, %v519
  %v521 = vpop.f32.mrb[0].mxu0
  %522 = vdwg.mxu0
  %v523 = vmax.f32 %v461, 0.0
  %v524 = vmax.f32 %v464, 0.0
  %v525 = vmax.f32 %v469, 0.0
  %v526 = vmax.f32 %v472, 0.0
  %v527 = vmax.f32 %v477, 0.0
  %v528 = vmax.f32 %v480, 0.0
  %v529 = vmax.f32 %v485, 0.0
  %v530 = vmax.f32 %v488, 0.0
  %v531 = vmax.f32 %v493, 0.0
  %v532 = vmax.f32 %v496, 0.0
  %v533 = vmax.f32 %v501, 0.0
  %v534 = vmax.f32 %v504, 0.0
  %v535 = vmax.f32 %v509, 0.0
  %v536 = vmax.f32 %v512, 0.0
  %v537 = vmax.f32 %v517, 0.0
  %v538 = vmax.f32 %v520, 0.0
  %v539 = vpack.c.bf16 %v524, %v523
  %v540 = vpack.c.bf16 %v526, %v525
  %v541 = vpack.c.bf16 %v528, %v527
  %v542 = vpack.c.bf16 %v530, %v529
  %v543 = vpack.c.bf16 %v532, %v531
  %v544 = vpack.c.bf16 %v534, %v533
  %v545 = vpack.c.bf16 %v536, %v535
  %v546 = vpack.c.bf16 %v538, %v537
  %v547 = vld [vmem:[%s8] sm:$0xf]
  %v548 = vld [vmem:[%s8 + $0x4] sm:$0xf]
  %v549 = vld [vmem:[%s8 + $0x8] sm:$0xf]
  %v550 = vld [vmem:[%s8 + $0xc] sm:$0xf]
  %v551 = vld [vmem:[%s8 + $0x10] sm:$0xf]
  %v552 = vld [vmem:[%s8 + $0x14] sm:$0xf]
  %v553 = vld [vmem:[%s8 + $0x18] sm:$0xf]
  %v554 = vld [vmem:[%s8 + $0x1c] sm:$0xf]
  %v555 = vld [vmem:[%s8 + $0x20] sm:$0xf]
  %v556 = vld [vmem:[%s8 + $0x24] sm:$0xf]
  %v557 = vld [vmem:[%s8 + $0x28] sm:$0xf]
  %v558 = vld [vmem:[%s8 + $0x2c] sm:$0xf]
  %v559 = vld [vmem:[%s8 + $0x30] sm:$0xf]
  %v560 = vld [vmem:[%s8 + $0x34] sm:$0xf]
  %v561 = vld [vmem:[%s8 + $0x38] sm:$0xf]
  %v562 = vld [vmem:[%s8 + $0x3c] sm:$0xf]
  %v563 = vld [vmem:[%s9] sm:$0x1]
  %v565 = vlaneseq
  %v566 = vshrl.u32 %v565, 7
  %v567 = vsub.s32 0, %v566
  %v568 = vrot.slane %v563, %v567
  %v586 = vunpack.c.l.b16 %v547
  %v587 = vunpack.c.l.b16 %v548
  %v588 = vunpack.c.l.b16 %v549
  %v589 = vunpack.c.l.b16 %v550
  %v590 = vunpack.c.l.b16 %v551
  %v591 = vunpack.c.l.b16 %v552
  %v592 = vunpack.c.l.b16 %v553
  %v593 = vunpack.c.l.b16 %v554
  %v594 = vunpack.c.l.b16 %v555
  %v595 = vunpack.c.l.b16 %v556
  %v596 = vunpack.c.l.b16 %v557
  %v597 = vunpack.c.l.b16 %v558
  %v598 = vunpack.c.l.b16 %v559
  %v599 = vunpack.c.l.b16 %v560
  %v600 = vunpack.c.l.b16 %v561
  %v601 = vunpack.c.l.b16 %v562
  %v602 = vpack.c.b16 %v587, %v586
  %v603 = vpack.c.b16 %v589, %v588
  %v604 = vpack.c.b16 %v591, %v590
  %v605 = vpack.c.b16 %v593, %v592
  %v606 = vpack.c.b16 %v595, %v594
  %v607 = vpack.c.b16 %v597, %v596
  %v608 = vpack.c.b16 %v599, %v598
  %v609 = vpack.c.b16 %v601, %v600
  %618 = vmatprep.subr.bf16.mxu0 0
  %619 = vmatpush1.bf16.msra.mxu0 %v602
  %620 = vmatprep.subr.bf16.mxu0 0
  %621 = vmatpush1.bf16.msra.mxu0 %v603
  %622 = vmatprep.subr.bf16.mxu0 0
  %623 = vmatpush1.bf16.msra.mxu0 %v604
  %624 = vmatprep.subr.bf16.mxu0 0
  %625 = vmatpush1.bf16.msra.mxu0 %v605
  %626 = vmatprep.subr.bf16.mxu0 0
  %627 = vmatpush1.bf16.msra.mxu0 %v606
  %628 = vmatprep.subr.bf16.mxu0 0
  %629 = vmatpush1.bf16.msra.mxu0 %v607
  %630 = vmatprep.subr.bf16.mxu0 0
  %631 = vmatpush1.bf16.msra.mxu0 %v608
  %632 = vmatprep.subr.bf16.mxu0 0
  %633 = vmatpush1.bf16.msra.mxu0 %v609
  %634 = vmatprep.subr.bf16.mxu0 0
  %635 = vmatpush1.bf16.msra.mxu0 0
  %636 = vmatprep.subr.bf16.mxu0 0
  %637 = vmatpush1.bf16.msra.mxu0 0
  %638 = vmatprep.subr.bf16.mxu0 0
  %639 = vmatpush1.bf16.msra.mxu0 0
  %640 = vmatprep.subr.bf16.mxu0 0
  %641 = vmatpush1.bf16.msra.mxu0 0
  %642 = vmatprep.subr.bf16.mxu0 0
  %643 = vmatpush1.bf16.msra.mxu0 0
  %644 = vmatprep.subr.bf16.mxu0 0
  %645 = vmatpush1.bf16.msra.mxu0 0
  %646 = vmatprep.subr.bf16.mxu0 0
  %647 = vmatpush1.bf16.msra.mxu0 0
  %648 = vmatprep.subr.bf16.mxu0 0
  %649 = vmatpush1.bf16.msra.mxu0 0
  %650 = vmatprep.mubr.bf16.mxu0 0
  %651 = vmatmul.mubr.bf16.gmra.mrb[0].mxu0 %v539
  %v652 = vpop.f32.mrb[0].mxu0
  %v653 = vadd.f32 %v568, %v652
  %v654 = vpop.f32.mrb[0].mxu0
  %v655 = vpop.f32.mrb[0].mxu0
  %v656 = vadd.f32 %v568, %v655
  %v657 = vpop.f32.mrb[0].mxu0
  %658 = vmatprep.mubr.bf16.mxu0 0
  %659 = vmatmul.mubr.bf16.gmra.mrb[0].mxu0 %v540
  %v660 = vpop.f32.mrb[0].mxu0
  %v661 = vadd.f32 %v568, %v660
  %v662 = vpop.f32.mrb[0].mxu0
  %v663 = vpop.f32.mrb[0].mxu0
  %v664 = vadd.f32 %v568, %v663
  %v665 = vpop.f32.mrb[0].mxu0
  %666 = vmatprep.mubr.bf16.mxu0 0
  %667 = vmatmul.mubr.bf16.gmra.mrb[0].mxu0 %v541
  %v668 = vpop.f32.mrb[0].mxu0
  %v669 = vadd.f32 %v568, %v668
  %v670 = vpop.f32.mrb[0].mxu0
  %v671 = vpop.f32.mrb[0].mxu0
  %v672 = vadd.f32 %v568, %v671
  %v673 = vpop.f32.mrb[0].mxu0
  %674 = vmatprep.mubr.bf16.mxu0 0
  %675 = vmatmul.mubr.bf16.gmra.mrb[0].mxu0 %v542
  %v676 = vpop.f32.mrb[0].mxu0
  %v677 = vadd.f32 %v568, %v676
  %v678 = vpop.f32.mrb[0].mxu0
  %v679 = vpop.f32.mrb[0].mxu0
  %v680 = vadd.f32 %v568, %v679
  %v681 = vpop.f32.mrb[0].mxu0
  %682 = vmatprep.mubr.bf16.mxu0 0
  %683 = vmatmul.mubr.bf16.gmra.mrb[0].mxu0 %v543
  %v684 = vpop.f32.mrb[0].mxu0
  %v685 = vadd.f32 %v568, %v684
  %v686 = vpop.f32.mrb[0].mxu0
  %v687 = vpop.f32.mrb[0].mxu0
  %v688 = vadd.f32 %v568, %v687
  %v689 = vpop.f32.mrb[0].mxu0
  %690 = vmatprep.mubr.bf16.mxu0 0
  %691 = vmatmul.mubr.bf16.gmra.mrb[0].mxu0 %v544
  %v692 = vpop.f32.mrb[0].mxu0
  %v693 = vadd.f32 %v568, %v692
  %v694 = vpop.f32.mrb[0].mxu0
  %v695 = vpop.f32.mrb[0].mxu0
  %v696 = vadd.f32 %v568, %v695
  %v697 = vpop.f32.mrb[0].mxu0
  %698 = vmatprep.mubr.bf16.mxu0 0
  %699 = vmatmul.mubr.bf16.gmra.mrb[0].mxu0 %v545
  %v700 = vpop.f32.mrb[0].mxu0
  %v701 = vadd.f32 %v568, %v700
  %v702 = vpop.f32.mrb[0].mxu0
  %v703 = vpop.f32.mrb[0].mxu0
  %v704 = vadd.f32 %v568, %v703
  %v705 = vpop.f32.mrb[0].mxu0
  %706 = vmatprep.mubr.bf16.mxu0 0
  %707 = vmatmul.mubr.bf16.gmra.mrb[0].mxu0 %v546
  %v708 = vpop.f32.mrb[0].mxu0
  %v709 = vadd.f32 %v568, %v708
  %v710 = vpop.f32.mrb[0].mxu0
  %v711 = vpop.f32.mrb[0].mxu0
  %v712 = vadd.f32 %v568, %v711
  %v713 = vpop.f32.mrb[0].mxu0
  %714 = vdwg.mxu0
  %v715 = vmax.f32 %v653, 0.0
  %v716 = vmax.f32 %v656, 0.0
  %v717 = vmax.f32 %v661, 0.0
  %v718 = vmax.f32 %v664, 0.0
  %v719 = vmax.f32 %v669, 0.0
  %v720 = vmax.f32 %v672, 0.0
  %v721 = vmax.f32 %v677, 0.0
  %v722 = vmax.f32 %v680, 0.0
  %v723 = vmax.f32 %v685, 0.0
  %v724 = vmax.f32 %v688, 0.0
  %v725 = vmax.f32 %v693, 0.0
  %v726 = vmax.f32 %v696, 0.0
  %v727 = vmax.f32 %v701, 0.0
  %v728 = vmax.f32 %v704, 0.0
  %v729 = vmax.f32 %v709, 0.0
  %v730 = vmax.f32 %v712, 0.0
  %v731 = vld [vmem:[%s2] sm:$0xf]
  %v732 = vld [vmem:[%s2 + $0x4] sm:$0xf]
  %v733 = vld [vmem:[%s2 + $0x8] sm:$0xf]
  %v734 = vld [vmem:[%s2 + $0xc] sm:$0xf]
  %v735 = vld [vmem:[%s2 + $0x10] sm:$0xf]
  %v736 = vld [vmem:[%s2 + $0x14] sm:$0xf]
  %v737 = vld [vmem:[%s2 + $0x18] sm:$0xf]
  %v738 = vld [vmem:[%s2 + $0x1c] sm:$0xf]
  %v739 = vld [vmem:[%s2 + $0x20] sm:$0xf]
  %v740 = vld [vmem:[%s2 + $0x24] sm:$0xf]
  %v741 = vld [vmem:[%s2 + $0x28] sm:$0xf]
  %v742 = vld [vmem:[%s2 + $0x2c] sm:$0xf]
  %v743 = vld [vmem:[%s2 + $0x30] sm:$0xf]
  %v744 = vld [vmem:[%s2 + $0x34] sm:$0xf]
  %v745 = vld [vmem:[%s2 + $0x38] sm:$0xf]
  %v746 = vld [vmem:[%s2 + $0x3c] sm:$0xf]
  %v747 = vunpack.c.l.bf16 %v731
  %v748 = vunpack.c.l.bf16 %v732
  %v749 = vunpack.c.l.bf16 %v733
  %v750 = vunpack.c.l.bf16 %v734
  %v751 = vunpack.c.l.bf16 %v735
  %v752 = vunpack.c.l.bf16 %v736
  %v753 = vunpack.c.l.bf16 %v737
  %v754 = vunpack.c.l.bf16 %v738
  %v755 = vunpack.c.l.bf16 %v739
  %v756 = vunpack.c.l.bf16 %v740
  %v757 = vunpack.c.l.bf16 %v741
  %v758 = vunpack.c.l.bf16 %v742
  %v759 = vunpack.c.l.bf16 %v743
  %v760 = vunpack.c.l.bf16 %v744
  %v761 = vunpack.c.l.bf16 %v745
  %v762 = vunpack.c.l.bf16 %v746
  %v763 = vadd.f32 %v747, %v283
  %v764 = vadd.f32 %v748, %v284
  %v765 = vadd.f32 %v749, %v285
  %v766 = vadd.f32 %v750, %v286
  %v767 = vadd.f32 %v751, %v287
  %v768 = vadd.f32 %v752, %v288
  %v769 = vadd.f32 %v753, %v289
  %v770 = vadd.f32 %v754, %v290
  %v771 = vadd.f32 %v755, %v291
  %v772 = vadd.f32 %v756, %v292
  %v773 = vadd.f32 %v757, %v293
  %v774 = vadd.f32 %v758, %v294
  %v775 = vadd.f32 %v759, %v295
  %v776 = vadd.f32 %v760, %v296
  %v777 = vadd.f32 %v761, %v297
  %v778 = vadd.f32 %v762, %v298
  %v779 = vlaneseq
  %v780 = vshrl.u32 %v779, 7
  %vm781 = vcmp.lt.s32.totalorder %v780, 5
  %v782 = vsel %vm781, 1, 0
  %vm783 = vcmp.eq.s32.totalorder %v782, 1
  %v784 = vsel %vm783, %v715, -1e+30
  %v785 = vsel %vm783, %v716, -1e+30
  %v786 = vsel %vm783, %v717, -1e+30
  %v787 = vsel %vm783, %v718, -1e+30
  %v788 = vsel %vm783, %v719, -1e+30
  %v789 = vsel %vm783, %v720, -1e+30
  %v790 = vsel %vm783, %v721, -1e+30
  %v791 = vsel %vm783, %v722, -1e+30
  %v792 = vsel %vm783, %v723, -1e+30
  %v793 = vsel %vm783, %v724, -1e+30
  %v794 = vsel %vm783, %v725, -1e+30
  %v795 = vsel %vm783, %v726, -1e+30
  %v796 = vsel %vm783, %v727, -1e+30
  %v797 = vsel %vm783, %v728, -1e+30
  %v798 = vsel %vm783, %v729, -1e+30
  %v799 = vsel %vm783, %v730, -1e+30
  %v800 = vrot.slane %v784, 4
  %v801 = vmax.f32 %v784, %v800
  %v802 = vrot.slane %v801, 2
  %v803 = vmax.f32 %v801, %v802
  %v804 = vrot.slane %v803, 1
  %v805 = vmax.f32 %v803, %v804
  %v806 = vrot.slane %v785, 4
  %v807 = vmax.f32 %v785, %v806
  %v808 = vrot.slane %v807, 2
  %v809 = vmax.f32 %v807, %v808
  %v810 = vrot.slane %v809, 1
  %v811 = vmax.f32 %v809, %v810
  %v812 = vrot.slane %v786, 4
  %v813 = vmax.f32 %v786, %v812
  %v814 = vrot.slane %v813, 2
  %v815 = vmax.f32 %v813, %v814
  %v816 = vrot.slane %v815, 1
  %v817 = vmax.f32 %v815, %v816
  %v818 = vrot.slane %v787, 4
  %v819 = vmax.f32 %v787, %v818
  %v820 = vrot.slane %v819, 2
  %v821 = vmax.f32 %v819, %v820
  %v822 = vrot.slane %v821, 1
  %v823 = vmax.f32 %v821, %v822
  %v824 = vrot.slane %v788, 4
  %v825 = vmax.f32 %v788, %v824
  %v826 = vrot.slane %v825, 2
  %v827 = vmax.f32 %v825, %v826
  %v828 = vrot.slane %v827, 1
  %v829 = vmax.f32 %v827, %v828
  %v830 = vrot.slane %v789, 4
  %v831 = vmax.f32 %v789, %v830
  %v832 = vrot.slane %v831, 2
  %v833 = vmax.f32 %v831, %v832
  %v834 = vrot.slane %v833, 1
  %v835 = vmax.f32 %v833, %v834
  %v836 = vrot.slane %v790, 4
  %v837 = vmax.f32 %v790, %v836
  %v838 = vrot.slane %v837, 2
  %v839 = vmax.f32 %v837, %v838
  %v840 = vrot.slane %v839, 1
  %v841 = vmax.f32 %v839, %v840
  %v842 = vrot.slane %v791, 4
  %v843 = vmax.f32 %v791, %v842
  %v844 = vrot.slane %v843, 2
  %v845 = vmax.f32 %v843, %v844
  %v846 = vrot.slane %v845, 1
  %v847 = vmax.f32 %v845, %v846
  %v848 = vrot.slane %v792, 4
  %v849 = vmax.f32 %v792, %v848
  %v850 = vrot.slane %v849, 2
  %v851 = vmax.f32 %v849, %v850
  %v852 = vrot.slane %v851, 1
  %v853 = vmax.f32 %v851, %v852
  %v854 = vrot.slane %v793, 4
  %v855 = vmax.f32 %v793, %v854
  %v856 = vrot.slane %v855, 2
  %v857 = vmax.f32 %v855, %v856
  %v858 = vrot.slane %v857, 1
  %v859 = vmax.f32 %v857, %v858
  %v860 = vrot.slane %v794, 4
  %v861 = vmax.f32 %v794, %v860
  %v862 = vrot.slane %v861, 2
  %v863 = vmax.f32 %v861, %v862
  %v864 = vrot.slane %v863, 1
  %v865 = vmax.f32 %v863, %v864
  %v866 = vrot.slane %v795, 4
  %v867 = vmax.f32 %v795, %v866
  %v868 = vrot.slane %v867, 2
  %v869 = vmax.f32 %v867, %v868
  %v870 = vrot.slane %v869, 1
  %v871 = vmax.f32 %v869, %v870
  %v872 = vrot.slane %v796, 4
  %v873 = vmax.f32 %v796, %v872
  %v874 = vrot.slane %v873, 2
  %v875 = vmax.f32 %v873, %v874
  %v876 = vrot.slane %v875, 1
  %v877 = vmax.f32 %v875, %v876
  %v878 = vrot.slane %v797, 4
  %v879 = vmax.f32 %v797, %v878
  %v880 = vrot.slane %v879, 2
  %v881 = vmax.f32 %v879, %v880
  %v882 = vrot.slane %v881, 1
  %v883 = vmax.f32 %v881, %v882
  %v884 = vrot.slane %v798, 4
  %v885 = vmax.f32 %v798, %v884
  %v886 = vrot.slane %v885, 2
  %v887 = vmax.f32 %v885, %v886
  %v888 = vrot.slane %v887, 1
  %v889 = vmax.f32 %v887, %v888
  %v890 = vrot.slane %v799, 4
  %v891 = vmax.f32 %v799, %v890
  %v892 = vrot.slane %v891, 2
  %v893 = vmax.f32 %v891, %v892
  %v894 = vrot.slane %v893, 1
  %v895 = vmax.f32 %v893, %v894
  %v896 = vsub.f32 %v784, %v805
  %v897 = vsub.f32 %v785, %v811
  %v898 = vsub.f32 %v786, %v817
  %v899 = vsub.f32 %v787, %v823
  %v900 = vsub.f32 %v788, %v829
  %v901 = vsub.f32 %v789, %v835
  %v902 = vsub.f32 %v790, %v841
  %v903 = vsub.f32 %v791, %v847
  %v904 = vsub.f32 %v792, %v853
  %v905 = vsub.f32 %v793, %v859
  %v906 = vsub.f32 %v794, %v865
  %v907 = vsub.f32 %v795, %v871
  %v908 = vsub.f32 %v796, %v877
  %v909 = vsub.f32 %v797, %v883
  %v910 = vsub.f32 %v798, %v889
  %v911 = vsub.f32 %v799, %v895
  %v912 = vmul.f32 %v896, 1.442695
  %v913 = vpow.pop %v912
  %v914 = vmul.f32 %v897, 1.442695
  %v915 = vpow.pop %v914
  %v916 = vmul.f32 %v898, 1.442695
  %v917 = vpow.pop %v916
  %v918 = vmul.f32 %v899, 1.442695
  %v919 = vpow.pop %v918
  %v920 = vmul.f32 %v900, 1.442695
  %v921 = vpow.pop %v920
  %v922 = vmul.f32 %v901, 1.442695
  %v923 = vpow.pop %v922
  %v924 = vmul.f32 %v902, 1.442695
  %v925 = vpow.pop %v924
  %v926 = vmul.f32 %v903, 1.442695
  %v927 = vpow.pop %v926
  %v928 = vmul.f32 %v904, 1.442695
  %v929 = vpow.pop %v928
  %v930 = vmul.f32 %v905, 1.442695
  %v931 = vpow.pop %v930
  %v932 = vmul.f32 %v906, 1.442695
  %v933 = vpow.pop %v932
  %v934 = vmul.f32 %v907, 1.442695
  %v935 = vpow.pop %v934
  %v936 = vmul.f32 %v908, 1.442695
  %v937 = vpow.pop %v936
  %v938 = vmul.f32 %v909, 1.442695
  %v939 = vpow.pop %v938
  %v940 = vmul.f32 %v910, 1.442695
  %v941 = vpow.pop %v940
  %v942 = vmul.f32 %v911, 1.442695
  %v943 = vpow.pop %v942
  %v944 = vrot.slane %v913, 4
  %v945 = vadd.f32 %v913, %v944
  %v946 = vrot.slane %v945, 2
  %v947 = vadd.f32 %v945, %v946
  %v948 = vrot.slane %v947, 1
  %v949 = vadd.f32 %v947, %v948
  %v950 = vrot.slane %v915, 4
  %v951 = vadd.f32 %v915, %v950
  %v952 = vrot.slane %v951, 2
  %v953 = vadd.f32 %v951, %v952
  %v954 = vrot.slane %v953, 1
  %v955 = vadd.f32 %v953, %v954
  %v956 = vrot.slane %v917, 4
  %v957 = vadd.f32 %v917, %v956
  %v958 = vrot.slane %v957, 2
  %v959 = vadd.f32 %v957, %v958
  %v960 = vrot.slane %v959, 1
  %v961 = vadd.f32 %v959, %v960
  %v962 = vrot.slane %v919, 4
  %v963 = vadd.f32 %v919, %v962
  %v964 = vrot.slane %v963, 2
  %v965 = vadd.f32 %v963, %v964
  %v966 = vrot.slane %v965, 1
  %v967 = vadd.f32 %v965, %v966
  %v968 = vrot.slane %v921, 4
  %v969 = vadd.f32 %v921, %v968
  %v970 = vrot.slane %v969, 2
  %v971 = vadd.f32 %v969, %v970
  %v972 = vrot.slane %v971, 1
  %v973 = vadd.f32 %v971, %v972
  %v974 = vrot.slane %v923, 4
  %v975 = vadd.f32 %v923, %v974
  %v976 = vrot.slane %v975, 2
  %v977 = vadd.f32 %v975, %v976
  %v978 = vrot.slane %v977, 1
  %v979 = vadd.f32 %v977, %v978
  %v980 = vrot.slane %v925, 4
  %v981 = vadd.f32 %v925, %v980
  %v982 = vrot.slane %v981, 2
  %v983 = vadd.f32 %v981, %v982
  %v984 = vrot.slane %v983, 1
  %v985 = vadd.f32 %v983, %v984
  %v986 = vrot.slane %v927, 4
  %v987 = vadd.f32 %v927, %v986
  %v988 = vrot.slane %v987, 2
  %v989 = vadd.f32 %v987, %v988
  %v990 = vrot.slane %v989, 1
  %v991 = vadd.f32 %v989, %v990
  %v992 = vrot.slane %v929, 4
  %v993 = vadd.f32 %v929, %v992
  %v994 = vrot.slane %v993, 2
  %v995 = vadd.f32 %v993, %v994
  %v996 = vrot.slane %v995, 1
  %v997 = vadd.f32 %v995, %v996
  %v998 = vrot.slane %v931, 4
  %v999 = vadd.f32 %v931, %v998
  %v1000 = vrot.slane %v999, 2
  %v1001 = vadd.f32 %v999, %v1000
  %v1002 = vrot.slane %v1001, 1
  %v1003 = vadd.f32 %v1001, %v1002
  %v1004 = vrot.slane %v933, 4
  %v1005 = vadd.f32 %v933, %v1004
  %v1006 = vrot.slane %v1005, 2
  %v1007 = vadd.f32 %v1005, %v1006
  %v1008 = vrot.slane %v1007, 1
  %v1009 = vadd.f32 %v1007, %v1008
  %v1010 = vrot.slane %v935, 4
  %v1011 = vadd.f32 %v935, %v1010
  %v1012 = vrot.slane %v1011, 2
  %v1013 = vadd.f32 %v1011, %v1012
  %v1014 = vrot.slane %v1013, 1
  %v1015 = vadd.f32 %v1013, %v1014
  %v1016 = vrot.slane %v937, 4
  %v1017 = vadd.f32 %v937, %v1016
  %v1018 = vrot.slane %v1017, 2
  %v1019 = vadd.f32 %v1017, %v1018
  %v1020 = vrot.slane %v1019, 1
  %v1021 = vadd.f32 %v1019, %v1020
  %v1022 = vrot.slane %v939, 4
  %v1023 = vadd.f32 %v939, %v1022
  %v1024 = vrot.slane %v1023, 2
  %v1025 = vadd.f32 %v1023, %v1024
  %v1026 = vrot.slane %v1025, 1
  %v1027 = vadd.f32 %v1025, %v1026
  %v1028 = vrot.slane %v941, 4
  %v1029 = vadd.f32 %v941, %v1028
  %v1030 = vrot.slane %v1029, 2
  %v1031 = vadd.f32 %v1029, %v1030
  %v1032 = vrot.slane %v1031, 1
  %v1033 = vadd.f32 %v1031, %v1032
  %v1034 = vrot.slane %v943, 4
  %v1035 = vadd.f32 %v943, %v1034
  %v1036 = vrot.slane %v1035, 2
  %v1037 = vadd.f32 %v1035, %v1036
  %v1038 = vrot.slane %v1037, 1
  %v1039 = vadd.f32 %v1037, %v1038
  %v1040 = vrcp.pop %v949
  %v1041 = vrcp.pop %v955
  %v1042 = vrcp.pop %v961
  %v1043 = vrcp.pop %v967
  %v1044 = vrcp.pop %v973
  %v1045 = vrcp.pop %v979
  %v1046 = vrcp.pop %v985
  %v1047 = vrcp.pop %v991
  %v1048 = vrcp.pop %v997
  %v1049 = vrcp.pop %v1003
  %v1050 = vrcp.pop %v1009
  %v1051 = vrcp.pop %v1015
  %v1052 = vrcp.pop %v1021
  %v1053 = vrcp.pop %v1027
  %v1054 = vrcp.pop %v1033
  %v1055 = vrcp.pop %v1039
  %v1056 = vmul.f32 %v913, %v1040
  %v1057 = vmul.f32 %v915, %v1041
  %v1058 = vmul.f32 %v917, %v1042
  %v1059 = vmul.f32 %v919, %v1043
  %v1060 = vmul.f32 %v921, %v1044
  %v1061 = vmul.f32 %v923, %v1045
  %v1062 = vmul.f32 %v925, %v1046
  %v1063 = vmul.f32 %v927, %v1047
  %v1064 = vmul.f32 %v929, %v1048
  %v1065 = vmul.f32 %v931, %v1049
  %v1066 = vmul.f32 %v933, %v1050
  %v1067 = vmul.f32 %v935, %v1051
  %v1068 = vmul.f32 %v937, %v1052
  %v1069 = vmul.f32 %v939, %v1053
  %v1070 = vmul.f32 %v941, %v1054
  %v1071 = vmul.f32 %v943, %v1055
  %v1072 = vmul.f32 %v1056, %v763
  %v1073 = vmul.f32 %v1057, %v764
  %v1074 = vmul.f32 %v1058, %v765
  %v1075 = vmul.f32 %v1059, %v766
  %v1076 = vmul.f32 %v1060, %v767
  %v1077 = vmul.f32 %v1061, %v768
  %v1078 = vmul.f32 %v1062, %v769
  %v1079 = vmul.f32 %v1063, %v770
  %v1080 = vmul.f32 %v1064, %v771
  %v1081 = vmul.f32 %v1065, %v772
  %v1082 = vmul.f32 %v1066, %v773
  %v1083 = vmul.f32 %v1067, %v774
  %v1084 = vmul.f32 %v1068, %v775
  %v1085 = vmul.f32 %v1069, %v776
  %v1086 = vmul.f32 %v1070, %v777
  %v1087 = vmul.f32 %v1071, %v778
  %v1088 = vrot.slane %v1072, 4
  %v1089 = vadd.f32 %v1072, %v1088
  %v1090 = vrot.slane %v1089, 2
  %v1091 = vadd.f32 %v1089, %v1090
  %v1092 = vrot.slane %v1091, 1
  %v1093 = vadd.f32 %v1091, %v1092
  %v1094 = vrot.slane %v1073, 4
  %v1095 = vadd.f32 %v1073, %v1094
  %v1096 = vrot.slane %v1095, 2
  %v1097 = vadd.f32 %v1095, %v1096
  %v1098 = vrot.slane %v1097, 1
  %v1099 = vadd.f32 %v1097, %v1098
  %v1100 = vrot.slane %v1074, 4
  %v1101 = vadd.f32 %v1074, %v1100
  %v1102 = vrot.slane %v1101, 2
  %v1103 = vadd.f32 %v1101, %v1102
  %v1104 = vrot.slane %v1103, 1
  %v1105 = vadd.f32 %v1103, %v1104
  %v1106 = vrot.slane %v1075, 4
  %v1107 = vadd.f32 %v1075, %v1106
  %v1108 = vrot.slane %v1107, 2
  %v1109 = vadd.f32 %v1107, %v1108
  %v1110 = vrot.slane %v1109, 1
  %v1111 = vadd.f32 %v1109, %v1110
  %v1112 = vrot.slane %v1076, 4
  %v1113 = vadd.f32 %v1076, %v1112
  %v1114 = vrot.slane %v1113, 2
  %v1115 = vadd.f32 %v1113, %v1114
  %v1116 = vrot.slane %v1115, 1
  %v1117 = vadd.f32 %v1115, %v1116
  %v1118 = vrot.slane %v1077, 4
  %v1119 = vadd.f32 %v1077, %v1118
  %v1120 = vrot.slane %v1119, 2
  %v1121 = vadd.f32 %v1119, %v1120
  %v1122 = vrot.slane %v1121, 1
  %v1123 = vadd.f32 %v1121, %v1122
  %v1124 = vrot.slane %v1078, 4
  %v1125 = vadd.f32 %v1078, %v1124
  %v1126 = vrot.slane %v1125, 2
  %v1127 = vadd.f32 %v1125, %v1126
  %v1128 = vrot.slane %v1127, 1
  %v1129 = vadd.f32 %v1127, %v1128
  %v1130 = vrot.slane %v1079, 4
  %v1131 = vadd.f32 %v1079, %v1130
  %v1132 = vrot.slane %v1131, 2
  %v1133 = vadd.f32 %v1131, %v1132
  %v1134 = vrot.slane %v1133, 1
  %v1135 = vadd.f32 %v1133, %v1134
  %v1136 = vrot.slane %v1080, 4
  %v1137 = vadd.f32 %v1080, %v1136
  %v1138 = vrot.slane %v1137, 2
  %v1139 = vadd.f32 %v1137, %v1138
  %v1140 = vrot.slane %v1139, 1
  %v1141 = vadd.f32 %v1139, %v1140
  %v1142 = vrot.slane %v1081, 4
  %v1143 = vadd.f32 %v1081, %v1142
  %v1144 = vrot.slane %v1143, 2
  %v1145 = vadd.f32 %v1143, %v1144
  %v1146 = vrot.slane %v1145, 1
  %v1147 = vadd.f32 %v1145, %v1146
  %v1148 = vrot.slane %v1082, 4
  %v1149 = vadd.f32 %v1082, %v1148
  %v1150 = vrot.slane %v1149, 2
  %v1151 = vadd.f32 %v1149, %v1150
  %v1152 = vrot.slane %v1151, 1
  %v1153 = vadd.f32 %v1151, %v1152
  %v1154 = vrot.slane %v1083, 4
  %v1155 = vadd.f32 %v1083, %v1154
  %v1156 = vrot.slane %v1155, 2
  %v1157 = vadd.f32 %v1155, %v1156
  %v1158 = vrot.slane %v1157, 1
  %v1159 = vadd.f32 %v1157, %v1158
  %v1160 = vrot.slane %v1084, 4
  %v1161 = vadd.f32 %v1084, %v1160
  %v1162 = vrot.slane %v1161, 2
  %v1163 = vadd.f32 %v1161, %v1162
  %v1164 = vrot.slane %v1163, 1
  %v1165 = vadd.f32 %v1163, %v1164
  %v1166 = vrot.slane %v1085, 4
  %v1167 = vadd.f32 %v1085, %v1166
  %v1168 = vrot.slane %v1167, 2
  %v1169 = vadd.f32 %v1167, %v1168
  %v1170 = vrot.slane %v1169, 1
  %v1171 = vadd.f32 %v1169, %v1170
  %v1172 = vrot.slane %v1086, 4
  %v1173 = vadd.f32 %v1086, %v1172
  %v1174 = vrot.slane %v1173, 2
  %v1175 = vadd.f32 %v1173, %v1174
  %v1176 = vrot.slane %v1175, 1
  %v1177 = vadd.f32 %v1175, %v1176
  %v1178 = vrot.slane %v1087, 4
  %v1179 = vadd.f32 %v1087, %v1178
  %v1180 = vrot.slane %v1179, 2
  %v1181 = vadd.f32 %v1179, %v1180
  %v1182 = vrot.slane %v1181, 1
  %v1183 = vadd.f32 %v1181, %v1182
  %v1184 = vpack.c.bf16 %v1093, %v1093
  %v1185 = vpack.c.bf16 %v1099, %v1099
  %v1186 = vpack.c.bf16 %v1105, %v1105
  %v1187 = vpack.c.bf16 %v1111, %v1111
  %v1188 = vpack.c.bf16 %v1117, %v1117
  %v1189 = vpack.c.bf16 %v1123, %v1123
  %v1190 = vpack.c.bf16 %v1129, %v1129
  %v1191 = vpack.c.bf16 %v1135, %v1135
  %v1192 = vpack.c.bf16 %v1141, %v1141
  %v1193 = vpack.c.bf16 %v1147, %v1147
  %v1194 = vpack.c.bf16 %v1153, %v1153
  %v1195 = vpack.c.bf16 %v1159, %v1159
  %v1196 = vpack.c.bf16 %v1165, %v1165
  %v1197 = vpack.c.bf16 %v1171, %v1171
  %v1198 = vpack.c.bf16 %v1177, %v1177
  %v1199 = vpack.c.bf16 %v1183, %v1183
  %v1216 = vunpack.c.l.b16 %v1184
  %v1217 = vunpack.c.l.b16 %v1185
  %v1218 = vunpack.c.l.b16 %v1186
  %v1219 = vunpack.c.l.b16 %v1187
  %v1220 = vunpack.c.l.b16 %v1188
  %v1221 = vunpack.c.l.b16 %v1189
  %v1222 = vunpack.c.l.b16 %v1190
  %v1223 = vunpack.c.l.b16 %v1191
  %v1224 = vunpack.c.l.b16 %v1192
  %v1225 = vunpack.c.l.b16 %v1193
  %v1226 = vunpack.c.l.b16 %v1194
  %v1227 = vunpack.c.l.b16 %v1195
  %v1228 = vunpack.c.l.b16 %v1196
  %v1229 = vunpack.c.l.b16 %v1197
  %v1230 = vunpack.c.l.b16 %v1198
  %v1231 = vunpack.c.l.b16 %v1199
  %v1232 = vpack.c.b16 %v1216, %v1216
  %v1233 = vpack.c.b16 %v1217, %v1217
  %v1234 = vpack.c.b16 %v1218, %v1218
  %v1235 = vpack.c.b16 %v1219, %v1219
  %v1236 = vpack.c.b16 %v1220, %v1220
  %v1237 = vpack.c.b16 %v1221, %v1221
  %v1238 = vpack.c.b16 %v1222, %v1222
  %v1239 = vpack.c.b16 %v1223, %v1223
  %v1240 = vpack.c.b16 %v1224, %v1224
  %v1241 = vpack.c.b16 %v1225, %v1225
  %v1242 = vpack.c.b16 %v1226, %v1226
  %v1243 = vpack.c.b16 %v1227, %v1227
  %v1244 = vpack.c.b16 %v1228, %v1228
  %v1245 = vpack.c.b16 %v1229, %v1229
  %v1246 = vpack.c.b16 %v1230, %v1230
  %v1247 = vpack.c.b16 %v1231, %v1231
  %v1248 = vunpack.c.l.b16 %v1232
  %v1249 = vunpack.c.l.b16 %v1233
  %v1250 = vunpack.c.l.b16 %v1234
  %v1251 = vunpack.c.l.b16 %v1235
  %v1252 = vunpack.c.l.b16 %v1236
  %v1253 = vunpack.c.l.b16 %v1237
  %v1254 = vunpack.c.l.b16 %v1238
  %v1255 = vunpack.c.l.b16 %v1239
  %v1256 = vunpack.c.l.b16 %v1240
  %v1257 = vunpack.c.l.b16 %v1241
  %v1258 = vunpack.c.l.b16 %v1242
  %v1259 = vunpack.c.l.b16 %v1243
  %v1260 = vunpack.c.l.b16 %v1244
  %v1261 = vunpack.c.l.b16 %v1245
  %v1262 = vunpack.c.l.b16 %v1246
  %v1263 = vunpack.c.l.b16 %v1247
  %vm1264 = vcmask 1041409
  %v1265 = vsel %vm1264, %v1249, %v1248
  %vm1266 = vcmask 1042434
  %v1267 = vsel %vm1266, %v1250, %v1265
  %vm1268 = vcmask 1043459
  %v1269 = vsel %vm1268, %v1251, %v1267
  %vm1270 = vcmask 1044484
  %v1271 = vsel %vm1270, %v1252, %v1269
  %vm1272 = vcmask 1045509
  %v1273 = vsel %vm1272, %v1253, %v1271
  %vm1274 = vcmask 1046534
  %v1275 = vsel %vm1274, %v1254, %v1273
  %vm1276 = vcmask 1047559
  %v1277 = vsel %vm1276, %v1255, %v1275
  %v1278 = vsel %vm1264, %v1257, %v1256
  %v1279 = vsel %vm1266, %v1258, %v1278
  %v1280 = vsel %vm1268, %v1259, %v1279
  %v1281 = vsel %vm1270, %v1260, %v1280
  %v1282 = vsel %vm1272, %v1261, %v1281
  %v1283 = vsel %vm1274, %v1262, %v1282
  %v1284 = vsel %vm1276, %v1263, %v1283
  %v1285 = vpack.c.b16 %v1277, %v1277
  %v1286 = vpack.c.b16 %v1284, %v1284
  %1289 = vst [vmem:[%s10] sm:$0xf] %v1285
  %1290 = vst [vmem:[%s10 + $0x4] sm:$0xf] %v1286
  // Predicated region
  $region42: #{model_forward.41} parent=0 // pred_check
    _
  $region43: #{model_forward.41} parent=0 // pred_check_branch
    %1292 = sbr.rel (0) target = $region45
  $region44: #{model_forward.41} parent=0 // pred_region
    _
  $region45: #{model_forward.41} parent=0 // pred_fallthru
    _
  // Predicated region
  $region46: #{model_forward.41} parent=0 // pred_check
    _
  $region47: #{model_forward.41} parent=0 // pred_check_branch
    %1294 = sbr.rel (0) target = $region49
  $region48: #{model_forward.41} parent=0 // pred_region
    _
  $region49: #{model_forward.41} parent=0 // pred_fallthru
    _

// kernel: model_forward.50
$region0: #{model_forward.50}
  #allocation0 [shape = 'u32[]', space=smem, size = 0x4, offset = 0x4, fixed_abs, tag = 'smem constant byte address 0x4 - core index']
  #allocation1 [shape = 'u32[144,128]{1,0:T(1,128)}', space=vmem, size = 0x12000, scoped, tag = 'internal scratch']
  %s0 = inlined_call_operand.vmem [shape: bf16[16,128], index: 0, kind: input, shape index: {}]
  %s1 = inlined_call_operand.vmem [shape: f32[1,128], index: 1, kind: input, shape index: {}]
  %s2 = inlined_call_operand.vmem [shape: f32[1,128], index: 2, kind: input, shape index: {}]
  %s3 = inlined_call_operand.vmem [shape: bf16[16,128], index: 3, kind: output, shape index: {}]
  %s4 = sld [smem:[#allocation0]]
  $region22: #{model_forward.50} parent=0
    _
  %s6 = ssub.s32 1, %s4
  %s7 = scalar_select 0, %s6, %s4
  // Predicated region
  $region2: #{model_forward.50} parent=0 // pred_check
    _
  $region3: #{model_forward.50} parent=0 // pred_check_branch
    %9 = sbr.rel (0) target = $region5
  $region4: #{model_forward.50} parent=0 // pred_region
    _
  $region5: #{model_forward.50} parent=0 // pred_fallthru
    _
  // Predicated region
  $region6: #{model_forward.50} parent=0 // pred_check
    _
  $region7: #{model_forward.50} parent=0 // pred_check_branch
    %11 = sbr.rel (0) target = $region9
  $region8: #{model_forward.50} parent=0 // pred_region
    _
  $region9: #{model_forward.50} parent=0 // pred_fallthru
    _
  // Predicated region
  $region10: #{model_forward.50} parent=0 // pred_check
    _
  $region11: #{model_forward.50} parent=0 // pred_check_branch
    %13 = sbr.rel (0) target = $region13
  $region12: #{model_forward.50} parent=0 // pred_region
    _
  $region13: #{model_forward.50} parent=0 // pred_fallthru
    _
  %v14 = vld [vmem:[%s0] sm:$0xf]
  %v15 = vld [vmem:[%s0 + $0x4] sm:$0xf]
  %v16 = vunpack.c.l.bf16 %v14
  %v17 = vunpack.c.l.bf16 %v15
  %v18 = vld [vmem:[%s1] sm:$0x1]
  %v20 = vlaneseq
  %v21 = vshrl.u32 %v20, 7
  %v22 = vsub.s32 0, %v21
  %v23 = vrot.slane %v18, %v22
  %v25 = vsub.f32 %v16, %v23
  %v26 = vsub.f32 %v17, %v23
  %v27 = vld [vmem:[%s2] sm:$0x1]
  %v29 = vlaneseq
  %v30 = vshrl.u32 %v29, 7
  %v31 = vsub.s32 0, %v30
  %v32 = vrot.slane %v27, %v31
  %v34 = vmul.f32 %v25, %v32
  %v35 = vmul.f32 %v26, %v32
  %v36 = vmax.f32 %v34, 0.0
  %v37 = vmax.f32 %v35, 0.0
  %v38 = vpack.c.bf16 %v37, %v36
  %v40 = vunpack.c.l.b16 %v38
  %v41 = vunpack.c.h.b16 %v38
  %v42 = vpack.c.b16 %v40, %v40
  %v43 = vpack.c.b16 %v41, %v41
  %46 = vst [vmem:[%s3] sm:$0xf] %v42
  %47 = vst [vmem:[%s3 + $0x4] sm:$0xf] %v43
  // Predicated region
  $region14: #{model_forward.50} parent=0 // pred_check
    _
  $region15: #{model_forward.50} parent=0 // pred_check_branch
    %49 = sbr.rel (0) target = $region17
  $region16: #{model_forward.50} parent=0 // pred_region
    _
  $region17: #{model_forward.50} parent=0 // pred_fallthru
    _
  // Predicated region
  $region18: #{model_forward.50} parent=0 // pred_check
    _
  $region19: #{model_forward.50} parent=0 // pred_check_branch
    %51 = sbr.rel (0) target = $region21
  $region20: #{model_forward.50} parent=0 // pred_region
    _
  $region21: #{model_forward.50} parent=0 // pred_fallthru
    _

// kernel: model_forward.59
$region0: #{model_forward.59}
  #allocation0 [shape = 'u32[]', space=smem, size = 0x4, offset = 0x4, fixed_abs, tag = 'smem constant byte address 0x4 - core index']
  #allocation1 [shape = 'u32[144,128]{1,0:T(1,128)}', space=vmem, size = 0x12000, scoped, tag = 'internal scratch']
  %s0 = inlined_call_operand.vmem [shape: bf16[64,128], index: 0, kind: input, shape index: {}]
  %s1 = inlined_call_operand.vmem [shape: bf16[128,128], index: 1, kind: input, shape index: {}]
  %s2 = inlined_call_operand.vmem [shape: f32[1,128], index: 2, kind: input, shape index: {}]
  %s3 = inlined_call_operand.vmem [shape: f32[64,128], index: 3, kind: output, shape index: {}]
  %s4 = sld [smem:[#allocation0]]
  $region22: #{model_forward.59} parent=0
    _
  %s6 = ssub.s32 1, %s4
  %s7 = scalar_select 0, %s6, %s4
  // Predicated region
  $region2: #{model_forward.59} parent=0 // pred_check
    _
  $region3: #{model_forward.59} parent=0 // pred_check_branch
    %9 = sbr.rel (0) target = $region5
  $region4: #{model_forward.59} parent=0 // pred_region
    _
  $region5: #{model_forward.59} parent=0 // pred_fallthru
    _
  // Predicated region
  $region6: #{model_forward.59} parent=0 // pred_check
    _
  $region7: #{model_forward.59} parent=0 // pred_check_branch
    %11 = sbr.rel (0) target = $region9
  $region8: #{model_forward.59} parent=0 // pred_region
    _
  $region9: #{model_forward.59} parent=0 // pred_fallthru
    _
  // Predicated region
  $region10: #{model_forward.59} parent=0 // pred_check
    _
  $region11: #{model_forward.59} parent=0 // pred_check_branch
    %13 = sbr.rel (0) target = $region13
  $region12: #{model_forward.59} parent=0 // pred_region
    _
  $region13: #{model_forward.59} parent=0 // pred_fallthru
    _
  %v15 = vld [vmem:[%s0] sm:$0xf]
  %v16 = vld [vmem:[%s0 + $0x4] sm:$0xf]
  %v17 = vld [vmem:[%s0 + $0x8] sm:$0xf]
  %v18 = vld [vmem:[%s0 + $0xc] sm:$0xf]
  %v19 = vld [vmem:[%s0 + $0x10] sm:$0xf]
  %v20 = vld [vmem:[%s0 + $0x14] sm:$0xf]
  %v21 = vld [vmem:[%s0 + $0x18] sm:$0xf]
  %v22 = vld [vmem:[%s0 + $0x1c] sm:$0xf]
  %v23 = vld [vmem:[%s1] sm:$0xf]
  %v24 = vld [vmem:[%s1 + $0x4] sm:$0xf]
  %v25 = vld [vmem:[%s1 + $0x8] sm:$0xf]
  %v26 = vld [vmem:[%s1 + $0xc] sm:$0xf]
  %v27 = vld [vmem:[%s1 + $0x10] sm:$0xf]
  %v28 = vld [vmem:[%s1 + $0x14] sm:$0xf]
  %v29 = vld [vmem:[%s1 + $0x18] sm:$0xf]
  %v30 = vld [vmem:[%s1 + $0x1c] sm:$0xf]
  %v31 = vld [vmem:[%s1 + $0x20] sm:$0xf]
  %v32 = vld [vmem:[%s1 + $0x24] sm:$0xf]
  %v33 = vld [vmem:[%s1 + $0x28] sm:$0xf]
  %v34 = vld [vmem:[%s1 + $0x2c] sm:$0xf]
  %v35 = vld [vmem:[%s1 + $0x30] sm:$0xf]
  %v36 = vld [vmem:[%s1 + $0x34] sm:$0xf]
  %v37 = vld [vmem:[%s1 + $0x38] sm:$0xf]
  %v38 = vld [vmem:[%s1 + $0x3c] sm:$0xf]
  %v39 = vld [vmem:[%s2] sm:$0x1]
  %v41 = vlaneseq
  %v42 = vshrl.u32 %v41, 7
  %v43 = vsub.s32 0, %v42
  %v44 = vrot.slane %v39, %v43
  %v54 = vunpack.c.l.b16 %v15
  %v55 = vunpack.c.l.b16 %v16
  %v56 = vunpack.c.l.b16 %v17
  %v57 = vunpack.c.l.b16 %v18
  %v58 = vunpack.c.l.b16 %v19
  %v59 = vunpack.c.l.b16 %v20
  %v60 = vunpack.c.l.b16 %v21
  %v61 = vunpack.c.l.b16 %v22
  %v62 = vpack.c.b16 %v55, %v54
  %v63 = vpack.c.b16 %v57, %v56
  %v64 = vpack.c.b16 %v59, %v58
  %v65 = vpack.c.b16 %v61, %v60
  %v86 = vunpack.c.l.b16 %v23
  %v87 = vunpack.c.l.b16 %v24
  %v88 = vunpack.c.l.b16 %v25
  %v89 = vunpack.c.l.b16 %v26
  %v90 = vunpack.c.l.b16 %v27
  %v91 = vunpack.c.l.b16 %v28
  %v92 = vunpack.c.l.b16 %v29
  %v93 = vunpack.c.l.b16 %v30
  %v94 = vunpack.c.l.b16 %v31
  %v95 = vunpack.c.l.b16 %v32
  %v96 = vunpack.c.l.b16 %v33
  %v97 = vunpack.c.l.b16 %v34
  %v98 = vunpack.c.l.b16 %v35
  %v99 = vunpack.c.l.b16 %v36
  %v100 = vunpack.c.l.b16 %v37
  %v101 = vunpack.c.l.b16 %v38
  %v102 = vpack.c.b16 %v87, %v86
  %v103 = vpack.c.b16 %v89, %v88
  %v104 = vpack.c.b16 %v91, %v90
  %v105 = vpack.c.b16 %v93, %v92
  %v106 = vpack.c.b16 %v95, %v94
  %v107 = vpack.c.b16 %v97, %v96
  %v108 = vpack.c.b16 %v99, %v98
  %v109 = vpack.c.b16 %v101, %v100
  %118 = vmatprep.subr.bf16.mxu0 0
  %119 = vmatpush1.bf16.msra.mxu0 %v102
  %120 = vmatprep.subr.bf16.mxu0 0
  %121 = vmatpush1.bf16.msra.mxu0 %v103
  %122 = vmatprep.subr.bf16.mxu0 0
  %123 = vmatpush1.bf16.msra.mxu0 %v104
  %124 = vmatprep.subr.bf16.mxu0 0
  %125 = vmatpush1.bf16.msra.mxu0 %v105
  %126 = vmatprep.subr.bf16.mxu0 0
  %127 = vmatpush1.bf16.msra.mxu0 %v106
  %128 = vmatprep.subr.bf16.mxu0 0
  %129 = vmatpush1.bf16.msra.mxu0 %v107
  %130 = vmatprep.subr.bf16.mxu0 0
  %131 = vmatpush1.bf16.msra.mxu0 %v108
  %132 = vmatprep.subr.bf16.mxu0 0
  %133 = vmatpush1.bf16.msra.mxu0 %v109
  %134 = vmatprep.subr.bf16.mxu0 0
  %135 = vmatpush1.bf16.msra.mxu0 0
  %136 = vmatprep.subr.bf16.mxu0 0
  %137 = vmatpush1.bf16.msra.mxu0 0
  %138 = vmatprep.subr.bf16.mxu0 0
  %139 = vmatpush1.bf16.msra.mxu0 0
  %140 = vmatprep.subr.bf16.mxu0 0
  %141 = vmatpush1.bf16.msra.mxu0 0
  %142 = vmatprep.subr.bf16.mxu0 0
  %143 = vmatpush1.bf16.msra.mxu0 0
  %144 = vmatprep.subr.bf16.mxu0 0
  %145 = vmatpush1.bf16.msra.mxu0 0
  %146 = vmatprep.subr.bf16.mxu0 0
  %147 = vmatpush1.bf16.msra.mxu0 0
  %148 = vmatprep.subr.bf16.mxu0 0
  %149 = vmatpush1.bf16.msra.mxu0 0
  %150 = vmatprep.mubr.bf16.mxu0 0
  %151 = vmatmul.mubr.bf16.gmra.mrb[0].mxu0 %v62
  %v152 = vpop.f32.mrb[0].mxu0
  %v153 = vadd.f32 %v44, %v152
  %v154 = vpop.f32.mrb[0].mxu0
  %v155 = vpop.f32.mrb[0].mxu0
  %v156 = vadd.f32 %v44, %v155
  %v157 = vpop.f32.mrb[0].mxu0
  %158 = vmatprep.mubr.bf16.mxu0 0
  %159 = vmatmul.mubr.bf16.gmra.mrb[0].mxu0 %v63
  %v160 = vpop.f32.mrb[0].mxu0
  %v161 = vadd.f32 %v44, %v160
  %v162 = vpop.f32.mrb[0].mxu0
  %v163 = vpop.f32.mrb[0].mxu0
  %v164 = vadd.f32 %v44, %v163
  %v165 = vpop.f32.mrb[0].mxu0
  %166 = vmatprep.mubr.bf16.mxu0 0
  %167 = vmatmul.mubr.bf16.gmra.mrb[0].mxu0 %v64
  %v168 = vpop.f32.mrb[0].mxu0
  %v169 = vadd.f32 %v44, %v168
  %v170 = vpop.f32.mrb[0].mxu0
  %v171 = vpop.f32.mrb[0].mxu0
  %v172 = vadd.f32 %v44, %v171
  %v173 = vpop.f32.mrb[0].mxu0
  %174 = vmatprep.mubr.bf16.mxu0 0
  %175 = vmatmul.mubr.bf16.gmra.mrb[0].mxu0 %v65
  %v176 = vpop.f32.mrb[0].mxu0
  %v177 = vadd.f32 %v44, %v176
  %v178 = vpop.f32.mrb[0].mxu0
  %v179 = vpop.f32.mrb[0].mxu0
  %v180 = vadd.f32 %v44, %v179
  %v181 = vpop.f32.mrb[0].mxu0
  %182 = vdwg.mxu0
  %183 = vst [vmem:[%s3] sm:$0xff] %v153
  %184 = vst [vmem:[%s3 + $0x8] sm:$0xff] %v156
  %185 = vst [vmem:[%s3 + $0x10] sm:$0xff] %v161
  %186 = vst [vmem:[%s3 + $0x18] sm:$0xff] %v164
  %187 = vst [vmem:[%s3 + $0x20] sm:$0xff] %v169
  %188 = vst [vmem:[%s3 + $0x28] sm:$0xff] %v172
  %189 = vst [vmem:[%s3 + $0x30] sm:$0xff] %v177
  %190 = vst [vmem:[%s3 + $0x38] sm:$0xff] %v180
  // Predicated region
  $region14: #{model_forward.59} parent=0 // pred_check
    _
  $region15: #{model_forward.59} parent=0 // pred_check_branch
    %192 = sbr.rel (0) target = $region17
  $region16: #{model_forward.59} parent=0 // pred_region
    _
  $region17: #{model_forward.59} parent=0 // pred_fallthru
    _
  // Predicated region
  $region18: #{model_forward.59} parent=0 // pred_check
    _
  $region19: #{model_forward.59} parent=0 // pred_check_branch
    %194 = sbr.rel (0) target = $region21
  $region20: #{model_forward.59} parent=0 // pred_region
    _
  $region21: #{model_forward.59} parent=0 // pred_fallthru
    _

</llo_original>
